<compile_context>
chip_gen: v6e
topology: v6e:2x2x1
jax: 0.10.0
libtpu: 0.0.40
codegen_flags: <defaults>
</compile_context>

<pallas_src>
import functools

import jax
import jax.numpy as jnp
from jax import lax
from jax.experimental import pallas as pl
from jax.experimental.pallas import tpu as pltpu

EPS = 1e-5
TILE_P = 256                      # rows per grid step (multiple of 16 for bf16 sublanes)
LANE = 128
VMEM_LIMIT = 32 * 1024 * 1024     # explicit scoped limit, safe on v5e/v6e/v7x


def _round_up(x, m):
    return (x + m - 1) // m * m


def _compiler_params():
    return pltpu.CompilerParams(
        dimension_semantics=("parallel",),   # independent row tiles -> v7x megacore
        vmem_limit_bytes=VMEM_LIMIT)


def _row_spec(tile, ncol):
    return pl.BlockSpec((tile, ncol), lambda i: (i, 0))


def _rep_spec(shape):
    nd = len(shape)
    return pl.BlockSpec(shape, lambda i: (0,) * nd)


# -----------------------------------------------------------------------------
# Kernel bodies
# -----------------------------------------------------------------------------
def _make_conv_stats_kernel(tile, valid_rows, padded_rows, split_at=None):
    """conv (matmul+bias), bf16 spill of the result, per-tile partial BN stats."""
    need_mask = padded_rows != valid_rows

    def kernel(xc_ref, w_ref, b_ref, *out_refs):
        y = jnp.dot(xc_ref[...], w_ref[...],
                    preferred_element_type=jnp.float32) + b_ref[...]
        if split_at is None:
            y_ref, stats_ref = out_refs
            y_ref[...] = y.astype(y_ref.dtype)
        else:
            yl_ref, yr_ref, stats_ref = out_refs
            yl_ref[...] = y[:, :split_at].astype(yl_ref.dtype)
            yr_ref[...] = y[:, split_at:].astype(yr_ref.dtype)
        ym = y
        if need_mask:   # mask padded rows out of the statistics
            row = (pl.program_id(0) * tile
                   + lax.broadcasted_iota(jnp.int32, (tile, 1), 0))
            ym = jnp.where(row < valid_rows, y, 0.0)
        s1 = jnp.sum(ym, axis=0, keepdims=True)
        s2 = jnp.sum(ym * ym, axis=0, keepdims=True)
        stats_ref[...] = jnp.concatenate([s1, s2], axis=0)[None]

    return kernel


def _bn_relu_kernel(y_ref, mu_ref, inv_ref, h_ref):
    h = (y_ref[...].astype(jnp.float32) - mu_ref[...]) * inv_ref[...]
    h_ref[...] = jnp.maximum(h, 0.0).astype(h_ref.dtype)


def _make_rel_mid_kernel(tile, valid_rows, padded_rows):
    """BN1 -> square -> CrossChannelPool(1x1x1) + partial stats for BN2."""
    need_mask = padded_rows != valid_rows

    def kernel(yrel_ref, mu_ref, inv_ref, wccp_ref, bccp_ref, ccp_ref, stats_ref):
        z = (yrel_ref[...].astype(jnp.float32) - mu_ref[...]) * inv_ref[...]
        s = z * z                                           # SquarePool
        ccp = jnp.dot(s.astype(jnp.bfloat16), wccp_ref[...],
                      preferred_element_type=jnp.float32) + bccp_ref[...]
        ccp_ref[...] = ccp.astype(ccp_ref.dtype)
        cm = ccp
        if need_mask:
            row = (pl.program_id(0) * tile
                   + lax.broadcasted_iota(jnp.int32, (tile, 1), 0))
            cm = jnp.where(row < valid_rows, ccp, 0.0)
        s1 = jnp.sum(cm, axis=0, keepdims=True)
        s2 = jnp.sum(cm * cm, axis=0, keepdims=True)
        stats_ref[...] = jnp.concatenate([s1, s2], axis=0)[None]

    return kernel


def _final_kernel(ccp_ref, yapp_ref, mu2_ref, inv2_ref, mu3_ref, inv3_ref,
                  wr_ref, wa_ref, out_ref):
    # relu(BN2(ccp)) || relu(BN3(app)), then the 1x1x1 reduction: a single
    # (96 -> 128-padded) matmul, expressed as two partial dots into one f32
    # accumulator (avoids an in-register lane concat); the store itself is one
    # lane-dense 128-wide slab.
    r = jnp.maximum((ccp_ref[...].astype(jnp.float32) - mu2_ref[...]) * inv2_ref[...], 0.0)
    a = jnp.maximum((yapp_ref[...].astype(jnp.float32) - mu3_ref[...]) * inv3_ref[...], 0.0)
    out_ref[...] = (
        jnp.dot(r.astype(jnp.bfloat16), wr_ref[...], preferred_element_type=jnp.float32)
        + jnp.dot(a.astype(jnp.bfloat16), wa_ref[...], preferred_element_type=jnp.float32))


# -----------------------------------------------------------------------------
# pallas_call wrappers (row-tiled grid, double-buffered by BlockSpec)
# -----------------------------------------------------------------------------
def _conv_stats(xc, w, b, valid_rows, split_at=None):
    Pp, K = xc.shape
    C = w.shape[1]
    nt = Pp // TILE_P
    kernel = _make_conv_stats_kernel(TILE_P, valid_rows, Pp, split_at)
    stats_shape = jax.ShapeDtypeStruct((nt, 2, C), jnp.float32)
    stats_spec = pl.BlockSpec((1, 2, C), lambda i: (i, 0, 0))
    if split_at is None:
        out_shape = (jax.ShapeDtypeStruct((Pp, C), jnp.bfloat16), stats_shape)
        out_specs = (_row_spec(TILE_P, C), stats_spec)
    else:
        out_shape = (jax.ShapeDtypeStruct((Pp, split_at), jnp.bfloat16),
                     jax.ShapeDtypeStruct((Pp, C - split_at), jnp.bfloat16),
                     stats_shape)
        out_specs = (_row_spec(TILE_P, split_at),
                     _row_spec(TILE_P, C - split_at),
                     stats_spec)
    return pl.pallas_call(
        kernel,
        grid=(nt,),
        in_specs=[_row_spec(TILE_P, K), _rep_spec(w.shape), _rep_spec(b.shape)],
        out_specs=out_specs,
        out_shape=out_shape,
        compiler_params=_compiler_params(),
    )(xc, w, b)


def _bn_relu(y, mu, inv):
    Pp, C = y.shape
    nt = Pp // TILE_P
    return pl.pallas_call(
        _bn_relu_kernel,
        grid=(nt,),
        in_specs=[_row_spec(TILE_P, C), _rep_spec(mu.shape), _rep_spec(inv.shape)],
        out_specs=_row_spec(TILE_P, C),
        out_shape=jax.ShapeDtypeStruct((Pp, C), jnp.bfloat16),
        compiler_params=_compiler_params(),
    )(y, mu, inv)


def _rel_mid(y_rel, mu1, inv1, wccp, bccp, valid_rows):
    Pp, Crel = y_rel.shape
    C = wccp.shape[1]
    nt = Pp // TILE_P
    kernel = _make_rel_mid_kernel(TILE_P, valid_rows, Pp)
    return pl.pallas_call(
        kernel,
        grid=(nt,),
        in_specs=[_row_spec(TILE_P, Crel),
                  _rep_spec(mu1.shape), _rep_spec(inv1.shape),
                  _rep_spec(wccp.shape), _rep_spec(bccp.shape)],
        out_specs=(_row_spec(TILE_P, C),
                   pl.BlockSpec((1, 2, C), lambda i: (i, 0, 0))),
        out_shape=(jax.ShapeDtypeStruct((Pp, C), jnp.float32),
                   jax.ShapeDtypeStruct((nt, 2, C), jnp.float32)),
        compiler_params=_compiler_params(),
    )(y_rel, mu1, inv1, wccp, bccp)


def _final(ccp, y_app, mu2, inv2, mu3, inv3, wred_rel, wred_app):
    Pp = ccp.shape[0]
    coutp = wred_rel.shape[1]
    nt = Pp // TILE_P
    return pl.pallas_call(
        _final_kernel,
        grid=(nt,),
        in_specs=[_row_spec(TILE_P, ccp.shape[1]), _row_spec(TILE_P, y_app.shape[1]),
                  _rep_spec(mu2.shape), _rep_spec(inv2.shape),
                  _rep_spec(mu3.shape), _rep_spec(inv3.shape),
                  _rep_spec(wred_rel.shape), _rep_spec(wred_app.shape)],
        out_specs=_row_spec(TILE_P, coutp),
        out_shape=jax.ShapeDtypeStruct((Pp, coutp), jnp.float32),
        compiler_params=_compiler_params(),
    )(ccp, y_app, mu2, inv2, mu3, inv3, wred_rel, wred_app)


# -----------------------------------------------------------------------------
# Plain-JAX glue: im2col, row padding, BN stat finalization
# -----------------------------------------------------------------------------
def im2col3d(x, kernel, stride, padding):
    N, C, D, H, W = x.shape
    kD, kH, kW = kernel
    sD, sH, sW = stride
    pD, pH, pW = padding
    xp = jnp.pad(x, ((0, 0), (0, 0), (pD, pD), (pH, pH), (pW, pW)))
    Do = (D + 2 * pD - kD) // sD + 1
    Ho = (H + 2 * pH - kH) // sH + 1
    Wo = (W + 2 * pW - kW) // sW + 1
    patches = []
    for dz in range(kD):
        for dy in range(kH):
            for dx in range(kW):
                patches.append(
                    xp[:, :, dz:dz + Do * sD:sD, dy:dy + Ho * sH:sH, dx:dx + Wo * sW:sW])
    # column order (Cin, kD, kH, kW) matches torch weight.reshape(Cout, -1)
    p = jnp.stack(patches, axis=2).reshape(N, C * kD * kH * kW, Do, Ho, Wo)
    p = jnp.transpose(p, (0, 2, 3, 4, 1)).reshape(N * Do * Ho * Wo, C * kD * kH * kW)
    return p, (Do, Ho, Wo)


def _pad_rows(a, tile):
    P = a.shape[0]
    Pp = _round_up(P, tile)
    if Pp != P:
        a = jnp.pad(a, ((0, Pp - P), (0, 0)))
    return a


def _bn_stats(stats, n_rows):
    s = jnp.sum(stats, axis=0)                       # (2, C): sum, sum_sq
    mu = s[0] / n_rows
    var = jnp.maximum(s[1] / n_rows - mu * mu, 0.0)  # biased batch variance
    inv = lax.rsqrt(var + EPS)
    return mu[None, :], inv[None, :]                 # (1, C) f32 each


# -----------------------------------------------------------------------------
# Full forward
# -----------------------------------------------------------------------------
@functools.partial(jax.jit, static_argnames=("kernel", "stride", "padding"))
def c3d_smart_forward(x, params, kernel, stride, padding):
    N, Cin, D, H, W = x.shape
    kD, kH, kW = kernel
    pD, pH, pW = padding

    Ch = params["w_head"].shape[0]                   # head out channels == SMART in/out
    Cout = params["w_red"].shape[0]

    # ---------------- head: Conv3d -> BN (batch stats) -> ReLU ----------------
    xc0, (D1, H1, W1) = im2col3d(x, kernel, stride, padding)
    P1 = N * D1 * H1 * W1
    xc0 = _pad_rows(xc0.astype(jnp.bfloat16), TILE_P)
    wh = params["w_head"].reshape(Ch, -1).T.astype(jnp.bfloat16)        # (K0, Ch)
    bh = params["b_head"].astype(jnp.float32).reshape(1, Ch)
    y0, st0 = _conv_stats(xc0, wh, bh, P1)
    mu0, inv0 = _bn_stats(st0, P1)
    h = _bn_relu(y0, mu0, inv0)[:P1]                                    # (P1, Ch) bf16
    h = jnp.transpose(h.reshape(N, D1, H1, W1, Ch), (0, 4, 1, 2, 3))    # NCDHW

    # ---------------- SMART: fused relation || appearance conv ----------------
    # appearance kernel (kD,kH,1) / padding (pD,pH,0): with kW == 2*pW + 1 its
    # im2col columns equal the relation columns at dx == pW, so w_app is folded
    # (zero-padded) into the relation column space -> one 128-lane-wide matmul.
    assert kW == 2 * pW + 1, "relation/appearance spatial shapes must match (torch.cat)"
    hc, (D2, H2, W2) = im2col3d(h, kernel, (1, 1, 1), padding)          # (P2, K1) bf16
    P2 = N * D2 * H2 * W2
    hc = _pad_rows(hc, TILE_P)

    w_rel_m = params["w_rel"].reshape(64, -1).T                         # (K1, 64)
    w_app_full = jnp.zeros((64, Ch, kD, kH, kW), jnp.float32)
    w_app_full = w_app_full.at[:, :, :, :, pW].set(params["w_app"][..., 0])
    w_app_m = w_app_full.reshape(64, -1).T                              # (K1, 64)
    w_comb = jnp.concatenate([w_rel_m, w_app_m], axis=1).astype(jnp.bfloat16)  # (K1, 128)
    b_comb = jnp.concatenate(
        [params["b_rel"], params["b_app"]]).astype(jnp.float32).reshape(1, 128)

    y_rel, y_app, st1 = _conv_stats(hc, w_comb, b_comb, P2, split_at=64)
    mu1, inv1 = _bn_stats(st1[:, :, :64], P2)        # BN(64) on relation conv
    mu3, inv3 = _bn_stats(st1[:, :, 64:], P2)        # BN(64) on appearance conv

    # relation tail: BN -> square -> CrossChannelPool (+ stats for its BN)
    wccp = params["w_ccp"].reshape(32, 64).T.astype(jnp.bfloat16)       # (64, 32)
    bccp = params["b_ccp"].astype(jnp.float32).reshape(1, 32)
    ccp, st2 = _rel_mid(y_rel, mu1, inv1, wccp, bccp, P2)
    mu2, inv2 = _bn_stats(st2, P2)

    # cat -> relu -> 1x1x1 reduction, lane-dense 128-wide padded output slab
    coutp = _round_up(Cout, LANE)
    w_red = params["w_red"].reshape(Cout, 96).T                         # (96, Cout)
    w_red_pad = jnp.zeros((96, coutp), jnp.float32).at[:, :Cout].set(w_red)
    wred_rel = w_red_pad[:32].astype(jnp.bfloat16)                      # (32, coutp)
    wred_app = w_red_pad[32:].astype(jnp.bfloat16)                      # (64, coutp)
    outp = _final(ccp, y_app, mu2, inv2, mu3, inv3, wred_rel, wred_app)

    out = outp[:P2, :Cout].reshape(N, D2, H2, W2, Cout)
    return jnp.transpose(out, (0, 4, 1, 2, 3))                          # NCDHW


# -----------------------------------------------------------------------------
# Pure-JAX f32 reference (independent path: lax.conv_general_dilated)
# -----------------------------------------------------------------------------
def reference_forward(x, params, kernel, stride, padding):
    def conv3d(x, w, b, stride, padding):
        out = lax.conv_general_dilated(
            x, w, window_strides=stride, padding=[(p, p) for p in padding],
            dimension_numbers=("NCDHW", "OIDHW", "NCDHW"),
            precision=lax.Precision.HIGHEST)
        if b is not None:
            out = out + b.reshape(1, -1, 1, 1, 1)
        return out

    def bn(x):
        mu = jnp.mean(x, axis=(0, 2, 3, 4), keepdims=True)
        var = jnp.mean((x - mu) ** 2, axis=(0, 2, 3, 4), keepdims=True)
        return (x - mu) / jnp.sqrt(var + EPS)

    app_padding = (padding[0], padding[1], 0)

    h = jnp.maximum(bn(conv3d(x, params["w_head"], params["b_head"], stride, padding)), 0.0)

    rel = conv3d(h, params["w_rel"], params["b_rel"], (1, 1, 1), padding)
    rel = bn(rel) ** 2
    rel = conv3d(rel, params["w_ccp"], params["b_ccp"], (1, 1, 1), (0, 0, 0))
    rel = bn(rel)

    app = conv3d(h, params["w_app"], params["b_app"], (1, 1, 1), app_padding)
    app = bn(app)

    out = jnp.maximum(jnp.concatenate([rel, app], axis=1), 0.0)
    out = conv3d(out, params["w_red"], None, (1, 1, 1), (0, 0, 0))
    return out


# -----------------------------------------------------------------------------
def init_params(key, in_channels, out_channels, kernel):
    kD, kH, kW = kernel
    ks = jax.random.split(key, 8)

    def conv_init(k, shape):
        fan_in = shape[1] * shape[2] * shape[3] * shape[4]
        return jax.random.normal(k, shape, jnp.float32) / jnp.sqrt(fan_in)

    return {
        "w_head": conv_init(ks[0], (out_channels, in_channels, kD, kH, kW)),
        "b_head": 0.01 * jax.random.normal(ks[1], (out_channels,), jnp.float32),
        "w_rel": conv_init(ks[2], (64, out_channels, kD, kH, kW)),
        "b_rel": 0.01 * jax.random.normal(ks[3], (64,), jnp.float32),
        # CrossChannelPool: weight.data.fill_(0.5); bias at (deterministic) init
        "w_ccp": jnp.full((32, 64, 1, 1, 1), 0.5, jnp.float32),
        "b_ccp": 0.01 * jax.random.normal(ks[4], (32,), jnp.float32),
        "w_app": conv_init(ks[5], (64, out_channels, kD, kH, 1)),
        "b_app": 0.01 * jax.random.normal(ks[6], (64,), jnp.float32),
        "w_red": conv_init(ks[7], (out_channels, 96, 1, 1, 1)),
    }


if __name__ == "__main__":
    key = jax.random.PRNGKey(0)
    kx, kp = jax.random.split(key)

    # small shapes: N=2, Cin=4, D=5, H=8, W=8, 32 output channels, 3x3x3 / pad 1.
    # P = 2*5*8*8 = 640 -> padded to 768 rows (3 tiles of 256): exercises both the
    # multi-tile BN-stat accumulation and the padded-row masking path.
    N, Cin, D, H, W = 2, 4, 5, 8, 8
    Cout = 32
    kernel, stride, padding = (3, 3, 3), (1, 1, 1), (1, 1, 1)

    x = jax.random.normal(kx, (N, Cin, D, H, W), jnp.float32)
    params = init_params(kp, Cin, Cout, kernel)

    out = jax.block_until_ready(c3d_smart_forward(x, params, kernel, stride, padding))
    ref = jax.block_until_ready(reference_forward(x, params, kernel, stride, padding))

    assert out.shape == (N, Cout, D, H, W), out.shape
    # bf16 matmul operands + bf16 spills vs. an all-f32 HIGHEST reference: the
    # 0.5-filled CrossChannelPool + BatchNorm stage amplifies rounding noise by
    # roughly mean/std of its pre-BN activation, so tolerance is a few percent
    # of the O(1) outputs (structural bugs would be orders of magnitude larger).
    assert jnp.allclose(out, ref, atol=5e-2, rtol=5e-2), (
        float(jnp.max(jnp.abs(out - ref))))

    print("KERNEL_OK")
</pallas_src>

<mosaic_0001>
module attributes {stable_mosaic.version = 11 : i64} {
  func.func @kernel(%arg0: i32, %arg1: memref<256x108xbf16, #tpu.memory_space<vmem>>, %arg2: memref<108x32xbf16, #tpu.memory_space<vmem>>, %arg3: memref<1x32xf32, #tpu.memory_space<vmem>>, %arg4: memref<256x32xbf16, #tpu.memory_space<vmem>>, %arg5: memref<1x2x32xf32, #tpu.memory_space<vmem>>) attributes {dimension_semantics = [#tpu.dimension_semantics<parallel>], iteration_bounds = array<i64: 3>, scalar_prefetch = 0 : i64, scratch_operands = 0 : i64, tpu.core_type = #tpu.core_type<tc>, window_params = [{transform_indices = @transform_0, window_bounds = array<i64: 256, 108>}, {pipeline_mode = #tpu.pipeline_mode<synchronous>, transform_indices = @transform_1, window_bounds = array<i64: 108, 32>}, {pipeline_mode = #tpu.pipeline_mode<synchronous>, transform_indices = @transform_2, window_bounds = array<i64: 1, 32>}, {transform_indices = @transform_3, window_bounds = array<i64: 256, 32>}, {transform_indices = @transform_4, window_bounds = array<i64: 1, 2, 32>}]} {
    %c0 = arith.constant 0 : index
    %c0_0 = arith.constant 0 : index
    %0 = vector.load %arg1[%c0, %c0_0] : memref<256x108xbf16, #tpu.memory_space<vmem>>, vector<256x108xbf16>
    %c0_1 = arith.constant 0 : index
    %c0_2 = arith.constant 0 : index
    %1 = vector.load %arg2[%c0_1, %c0_2] : memref<108x32xbf16, #tpu.memory_space<vmem>>, vector<108x32xbf16>
    %cst = arith.constant dense<0.000000e+00> : vector<256x32xf32>
    %2 = tpu.matmul %0, %1, %cst {dimension_numbers = #tpu.dot_dimension_numbers<[1], [0], [0], [1], [0, 0, 1, 1], [], []>} : vector<256x108xbf16>, vector<108x32xbf16>, vector<256x32xf32> -> vector<256x32xf32>
    %c0_3 = arith.constant 0 : index
    %c0_4 = arith.constant 0 : index
    %3 = vector.load %arg3[%c0_3, %c0_4] : memref<1x32xf32, #tpu.memory_space<vmem>>, vector<1x32xf32>
    %4 = vector.broadcast %3 : vector<1x32xf32> to vector<256x32xf32>
    %5 = arith.addf %2, %4 : vector<256x32xf32>
    %6 = arith.truncf %5 : vector<256x32xf32> to vector<256x32xbf16>
    %c0_5 = arith.constant 0 : index
    %c0_6 = arith.constant 0 : index
    %7 = vector.load %arg4[%c0_5, %c0_6] : memref<256x32xbf16, #tpu.memory_space<vmem>>, vector<256x32xbf16>
    tpu.vector_store %arg4[%c0_5, %c0_6], %6 {strides = array<i32>} : memref<256x32xbf16, #tpu.memory_space<vmem>>, vector<256x32xbf16>,
    %c256_i32 = arith.constant 256 : i32
    %8 = arith.muli %arg0, %c256_i32 : i32
    %9 = tpu.iota {dimensions = array<i32: 0>} : vector<256x1xi32>
    %10 = vector.broadcast %8 : i32 to vector<256x1xi32>
    %11 = arith.addi %10, %9 : vector<256x1xi32>
    %c640_i32 = arith.constant 640 : i32
    %12 = vector.broadcast %c640_i32 : i32 to vector<256x1xi32>
    %13 = arith.cmpi slt, %11, %12 : vector<256x1xi32>
    %cst_7 = arith.constant 0.000000e+00 : f32
    %14 = vector.shape_cast %13 : vector<256x1xi1> to vector<256x1xi1>
    %15 = vector.broadcast %14 : vector<256x1xi1> to vector<256x32xi1>
    %16 = vector.broadcast %cst_7 : f32 to vector<256x32xf32>
    %17 = arith.select %15, %5, %16 : vector<256x32xi1>, vector<256x32xf32>
    %cst_8 = arith.constant dense<0.000000e+00> : vector<32xf32>
    %18 = vector.multi_reduction <add>, %17, %cst_8 [0] : vector<256x32xf32> to vector<32xf32>
    %19 = vector.shape_cast %18 : vector<32xf32> to vector<1x32xf32>
    %20 = arith.mulf %17, %17 : vector<256x32xf32>
    %cst_9 = arith.constant dense<0.000000e+00> : vector<32xf32>
    %21 = vector.multi_reduction <add>, %20, %cst_9 [0] : vector<256x32xf32> to vector<32xf32>
    %22 = vector.shape_cast %21 : vector<32xf32> to vector<1x32xf32>
    %23 = tpu.concatenate %19, %22 in 0 : vector<1x32xf32>, vector<1x32xf32> -> vector<2x32xf32>
    %24 = vector.shape_cast %23 : vector<2x32xf32> to vector<1x2x32xf32>
    %c0_10 = arith.constant 0 : index
    %c0_11 = arith.constant 0 : index
    %c0_12 = arith.constant 0 : index
    %25 = vector.load %arg5[%c0_10, %c0_11, %c0_12] : memref<1x2x32xf32, #tpu.memory_space<vmem>>, vector<1x2x32xf32>
    tpu.vector_store %arg5[%c0_10, %c0_11, %c0_12], %24 {strides = array<i32>} : memref<1x2x32xf32, #tpu.memory_space<vmem>>, vector<1x2x32xf32>,
    return
  }
  func.func @transform_0(%arg0: i32) -> (i32, i32) {
    %c0_i32 = arith.constant 0 : i32
    %c0_i32_0 = arith.constant 0 : i32
    return %arg0, %c0_i32 : i32, i32
  }
  func.func @transform_1(%arg0: i32) -> (i32, i32) {
    %c0_i32 = arith.constant 0 : i32
    %c0_i32_0 = arith.constant 0 : i32
    %c0_i32_1 = arith.constant 0 : i32
    return %c0_i32, %c0_i32_0 : i32, i32
  }
  func.func @transform_2(%arg0: i32) -> (i32, i32) {
    %c0_i32 = arith.constant 0 : i32
    %c0_i32_0 = arith.constant 0 : i32
    %c0_i32_1 = arith.constant 0 : i32
    return %c0_i32, %c0_i32_0 : i32, i32
  }
  func.func @transform_3(%arg0: i32) -> (i32, i32) {
    %c0_i32 = arith.constant 0 : i32
    %c0_i32_0 = arith.constant 0 : i32
    return %arg0, %c0_i32 : i32, i32
  }
  func.func @transform_4(%arg0: i32) -> (i32, i32, i32) {
    %c0_i32 = arith.constant 0 : i32
    %c0_i32_0 = arith.constant 0 : i32
    %c0_i32_1 = arith.constant 0 : i32
    return %arg0, %c0_i32, %c0_i32_0 : i32, i32, i32
  }
}

module attributes {stable_mosaic.version = 11 : i64} {
  func.func @_bn_relu_kernel(%arg0: i32, %arg1: memref<256x32xbf16, #tpu.memory_space<vmem>>, %arg2: memref<1x32xf32, #tpu.memory_space<vmem>>, %arg3: memref<1x32xf32, #tpu.memory_space<vmem>>, %arg4: memref<256x32xbf16, #tpu.memory_space<vmem>>) attributes {dimension_semantics = [#tpu.dimension_semantics<parallel>], iteration_bounds = array<i64: 3>, scalar_prefetch = 0 : i64, scratch_operands = 0 : i64, tpu.core_type = #tpu.core_type<tc>, window_params = [{transform_indices = @transform_0, window_bounds = array<i64: 256, 32>}, {pipeline_mode = #tpu.pipeline_mode<synchronous>, transform_indices = @transform_1, window_bounds = array<i64: 1, 32>}, {pipeline_mode = #tpu.pipeline_mode<synchronous>, transform_indices = @transform_2, window_bounds = array<i64: 1, 32>}, {transform_indices = @transform_3, window_bounds = array<i64: 256, 32>}]} {
    %c0 = arith.constant 0 : index
    %c0_0 = arith.constant 0 : index
    %0 = vector.load %arg1[%c0, %c0_0] : memref<256x32xbf16, #tpu.memory_space<vmem>>, vector<256x32xbf16>
    %1 = arith.extf %0 : vector<256x32xbf16> to vector<256x32xf32>
    %c0_1 = arith.constant 0 : index
    %c0_2 = arith.constant 0 : index
    %2 = vector.load %arg2[%c0_1, %c0_2] : memref<1x32xf32, #tpu.memory_space<vmem>>, vector<1x32xf32>
    %3 = vector.broadcast %2 : vector<1x32xf32> to vector<256x32xf32>
    %4 = arith.subf %1, %3 : vector<256x32xf32>
    %c0_3 = arith.constant 0 : index
    %c0_4 = arith.constant 0 : index
    %5 = vector.load %arg3[%c0_3, %c0_4] : memref<1x32xf32, #tpu.memory_space<vmem>>, vector<1x32xf32>
    %6 = vector.broadcast %5 : vector<1x32xf32> to vector<256x32xf32>
    %7 = arith.mulf %4, %6 : vector<256x32xf32>
    %cst = arith.constant 0.000000e+00 : f32
    %8 = vector.broadcast %cst : f32 to vector<256x32xf32>
    %9 = arith.maximumf %7, %8 : vector<256x32xf32>
    %10 = arith.truncf %9 : vector<256x32xf32> to vector<256x32xbf16>
    %c0_5 = arith.constant 0 : index
    %c0_6 = arith.constant 0 : index
    %11 = vector.load %arg4[%c0_5, %c0_6] : memref<256x32xbf16, #tpu.memory_space<vmem>>, vector<256x32xbf16>
    tpu.vector_store %arg4[%c0_5, %c0_6], %10 {strides = array<i32>} : memref<256x32xbf16, #tpu.memory_space<vmem>>, vector<256x32xbf16>,
    return
  }
  func.func @transform_0(%arg0: i32) -> (i32, i32) {
    %c0_i32 = arith.constant 0 : i32
    %c0_i32_0 = arith.constant 0 : i32
    return %arg0, %c0_i32 : i32, i32
  }
  func.func @transform_1(%arg0: i32) -> (i32, i32) {
    %c0_i32 = arith.constant 0 : i32
    %c0_i32_0 = arith.constant 0 : i32
    %c0_i32_1 = arith.constant 0 : i32
    return %c0_i32, %c0_i32_0 : i32, i32
  }
  func.func @transform_2(%arg0: i32) -> (i32, i32) {
    %c0_i32 = arith.constant 0 : i32
    %c0_i32_0 = arith.constant 0 : i32
    %c0_i32_1 = arith.constant 0 : i32
    return %c0_i32, %c0_i32_0 : i32, i32
  }
  func.func @transform_3(%arg0: i32) -> (i32, i32) {
    %c0_i32 = arith.constant 0 : i32
    %c0_i32_0 = arith.constant 0 : i32
    return %arg0, %c0_i32 : i32, i32
  }
}

module attributes {stable_mosaic.version = 11 : i64} {
  func.func @kernel(%arg0: i32, %arg1: memref<256x864xbf16, #tpu.memory_space<vmem>>, %arg2: memref<864x128xbf16, #tpu.memory_space<vmem>>, %arg3: memref<1x128xf32, #tpu.memory_space<vmem>>, %arg4: memref<256x64xbf16, #tpu.memory_space<vmem>>, %arg5: memref<256x64xbf16, #tpu.memory_space<vmem>>, %arg6: memref<1x2x128xf32, #tpu.memory_space<vmem>>) attributes {dimension_semantics = [#tpu.dimension_semantics<parallel>], iteration_bounds = array<i64: 3>, scalar_prefetch = 0 : i64, scratch_operands = 0 : i64, tpu.core_type = #tpu.core_type<tc>, window_params = [{transform_indices = @transform_0, window_bounds = array<i64: 256, 864>}, {pipeline_mode = #tpu.pipeline_mode<synchronous>, transform_indices = @transform_1, window_bounds = array<i64: 864, 128>}, {pipeline_mode = #tpu.pipeline_mode<synchronous>, transform_indices = @transform_2, window_bounds = array<i64: 1, 128>}, {transform_indices = @transform_3, window_bounds = array<i64: 256, 64>}, {transform_indices = @transform_4, window_bounds = array<i64: 256, 64>}, {transform_indices = @transform_5, window_bounds = array<i64: 1, 2, 128>}]} {
    %c0 = arith.constant 0 : index
    %c0_0 = arith.constant 0 : index
    %0 = vector.load %arg1[%c0, %c0_0] : memref<256x864xbf16, #tpu.memory_space<vmem>>, vector<256x864xbf16>
    %c0_1 = arith.constant 0 : index
    %c0_2 = arith.constant 0 : index
    %1 = vector.load %arg2[%c0_1, %c0_2] : memref<864x128xbf16, #tpu.memory_space<vmem>>, vector<864x128xbf16>
    %cst = arith.constant dense<0.000000e+00> : vector<256x128xf32>
    %2 = tpu.matmul %0, %1, %cst {dimension_numbers = #tpu.dot_dimension_numbers<[1], [0], [0], [1], [0, 0, 1, 1], [], []>} : vector<256x864xbf16>, vector<864x128xbf16>, vector<256x128xf32> -> vector<256x128xf32>
    %c0_3 = arith.constant 0 : index
    %c0_4 = arith.constant 0 : index
    %3 = vector.load %arg3[%c0_3, %c0_4] : memref<1x128xf32, #tpu.memory_space<vmem>>, vector<1x128xf32>
    %4 = vector.broadcast %3 : vector<1x128xf32> to vector<256x128xf32>
    %5 = arith.addf %2, %4 : vector<256x128xf32>
    %6 = vector.extract_strided_slice %5 {offsets = [0, 0], sizes = [256, 64], strides = [1, 1]} : vector<256x128xf32> to vector<256x64xf32>
    %7 = arith.truncf %6 : vector<256x64xf32> to vector<256x64xbf16>
    %c0_5 = arith.constant 0 : index
    %c0_6 = arith.constant 0 : index
    %8 = vector.load %arg4[%c0_5, %c0_6] : memref<256x64xbf16, #tpu.memory_space<vmem>>, vector<256x64xbf16>
    tpu.vector_store %arg4[%c0_5, %c0_6], %7 {strides = array<i32>} : memref<256x64xbf16, #tpu.memory_space<vmem>>, vector<256x64xbf16>,
    %9 = vector.extract_strided_slice %5 {offsets = [0, 64], sizes = [256, 64], strides = [1, 1]} : vector<256x128xf32> to vector<256x64xf32>
    %10 = arith.truncf %9 : vector<256x64xf32> to vector<256x64xbf16>
    %c0_7 = arith.constant 0 : index
    %c0_8 = arith.constant 0 : index
    %11 = vector.load %arg5[%c0_7, %c0_8] : memref<256x64xbf16, #tpu.memory_space<vmem>>, vector<256x64xbf16>
    tpu.vector_store %arg5[%c0_7, %c0_8], %10 {strides = array<i32>} : memref<256x64xbf16, #tpu.memory_space<vmem>>, vector<256x64xbf16>,
    %c256_i32 = arith.constant 256 : i32
    %12 = arith.muli %arg0, %c256_i32 : i32
    %13 = tpu.iota {dimensions = array<i32: 0>} : vector<256x1xi32>
    %14 = vector.broadcast %12 : i32 to vector<256x1xi32>
    %15 = arith.addi %14, %13 : vector<256x1xi32>
    %c640_i32 = arith.constant 640 : i32
    %16 = vector.broadcast %c640_i32 : i32 to vector<256x1xi32>
    %17 = arith.cmpi slt, %15, %16 : vector<256x1xi32>
    %cst_9 = arith.constant 0.000000e+00 : f32
    %18 = vector.shape_cast %17 : vector<256x1xi1> to vector<256x1xi1>
    %19 = vector.broadcast %18 : vector<256x1xi1> to vector<256x128xi1>
    %20 = vector.broadcast %cst_9 : f32 to vector<256x128xf32>
    %21 = arith.select %19, %5, %20 : vector<256x128xi1>, vector<256x128xf32>
    %cst_10 = arith.constant dense<0.000000e+00> : vector<128xf32>
    %22 = vector.multi_reduction <add>, %21, %cst_10 [0] : vector<256x128xf32> to vector<128xf32>
    %23 = vector.shape_cast %22 : vector<128xf32> to vector<1x128xf32>
    %24 = arith.mulf %21, %21 : vector<256x128xf32>
    %cst_11 = arith.constant dense<0.000000e+00> : vector<128xf32>
    %25 = vector.multi_reduction <add>, %24, %cst_11 [0] : vector<256x128xf32> to vector<128xf32>
    %26 = vector.shape_cast %25 : vector<128xf32> to vector<1x128xf32>
    %27 = tpu.concatenate %23, %26 in 0 : vector<1x128xf32>, vector<1x128xf32> -> vector<2x128xf32>
    %28 = vector.shape_cast %27 : vector<2x128xf32> to vector<1x2x128xf32>
    %c0_12 = arith.constant 0 : index
    %c0_13 = arith.constant 0 : index
    %c0_14 = arith.constant 0 : index
    %29 = vector.load %arg6[%c0_12, %c0_13, %c0_14] : memref<1x2x128xf32, #tpu.memory_space<vmem>>, vector<1x2x128xf32>
    tpu.vector_store %arg6[%c0_12, %c0_13, %c0_14], %28 {strides = array<i32>} : memref<1x2x128xf32, #tpu.memory_space<vmem>>, vector<1x2x128xf32>,
    return
  }
  func.func @transform_0(%arg0: i32) -> (i32, i32) {
    %c0_i32 = arith.constant 0 : i32
    %c0_i32_0 = arith.constant 0 : i32
    return %arg0, %c0_i32 : i32, i32
  }
  func.func @transform_1(%arg0: i32) -> (i32, i32) {
    %c0_i32 = arith.constant 0 : i32
    %c0_i32_0 = arith.constant 0 : i32
    %c0_i32_1 = arith.constant 0 : i32
    return %c0_i32, %c0_i32_0 : i32, i32
  }
  func.func @transform_2(%arg0: i32) -> (i32, i32) {
    %c0_i32 = arith.constant 0 : i32
    %c0_i32_0 = arith.constant 0 : i32
    %c0_i32_1 = arith.constant 0 : i32
    return %c0_i32, %c0_i32_0 : i32, i32
  }
  func.func @transform_3(%arg0: i32) -> (i32, i32) {
    %c0_i32 = arith.constant 0 : i32
    %c0_i32_0 = arith.constant 0 : i32
    return %arg0, %c0_i32 : i32, i32
  }
  func.func @transform_4(%arg0: i32) -> (i32, i32) {
    %c0_i32 = arith.constant 0 : i32
    %c0_i32_0 = arith.constant 0 : i32
    return %arg0, %c0_i32 : i32, i32
  }
  func.func @transform_5(%arg0: i32) -> (i32, i32, i32) {
    %c0_i32 = arith.constant 0 : i32
    %c0_i32_0 = arith.constant 0 : i32
    %c0_i32_1 = arith.constant 0 : i32
    return %arg0, %c0_i32, %c0_i32_0 : i32, i32, i32
  }
}

module attributes {stable_mosaic.version = 11 : i64} {
  func.func @kernel(%arg0: i32, %arg1: memref<256x64xbf16, #tpu.memory_space<vmem>>, %arg2: memref<1x64xf32, #tpu.memory_space<vmem>>, %arg3: memref<1x64xf32, #tpu.memory_space<vmem>>, %arg4: memref<64x32xbf16, #tpu.memory_space<vmem>>, %arg5: memref<1x32xf32, #tpu.memory_space<vmem>>, %arg6: memref<256x32xf32, #tpu.memory_space<vmem>>, %arg7: memref<1x2x32xf32, #tpu.memory_space<vmem>>) attributes {dimension_semantics = [#tpu.dimension_semantics<parallel>], iteration_bounds = array<i64: 3>, scalar_prefetch = 0 : i64, scratch_operands = 0 : i64, tpu.core_type = #tpu.core_type<tc>, window_params = [{transform_indices = @transform_0, window_bounds = array<i64: 256, 64>}, {pipeline_mode = #tpu.pipeline_mode<synchronous>, transform_indices = @transform_1, window_bounds = array<i64: 1, 64>}, {pipeline_mode = #tpu.pipeline_mode<synchronous>, transform_indices = @transform_2, window_bounds = array<i64: 1, 64>}, {pipeline_mode = #tpu.pipeline_mode<synchronous>, transform_indices = @transform_3, window_bounds = array<i64: 64, 32>}, {pipeline_mode = #tpu.pipeline_mode<synchronous>, transform_indices = @transform_4, window_bounds = array<i64: 1, 32>}, {transform_indices = @transform_5, window_bounds = array<i64: 256, 32>}, {transform_indices = @transform_6, window_bounds = array<i64: 1, 2, 32>}]} {
    %c0 = arith.constant 0 : index
    %c0_0 = arith.constant 0 : index
    %0 = vector.load %arg1[%c0, %c0_0] : memref<256x64xbf16, #tpu.memory_space<vmem>>, vector<256x64xbf16>
    %1 = arith.extf %0 : vector<256x64xbf16> to vector<256x64xf32>
    %c0_1 = arith.constant 0 : index
    %c0_2 = arith.constant 0 : index
    %2 = vector.load %arg2[%c0_1, %c0_2] : memref<1x64xf32, #tpu.memory_space<vmem>>, vector<1x64xf32>
    %3 = vector.broadcast %2 : vector<1x64xf32> to vector<256x64xf32>
    %4 = arith.subf %1, %3 : vector<256x64xf32>
    %c0_3 = arith.constant 0 : index
    %c0_4 = arith.constant 0 : index
    %5 = vector.load %arg3[%c0_3, %c0_4] : memref<1x64xf32, #tpu.memory_space<vmem>>, vector<1x64xf32>
    %6 = vector.broadcast %5 : vector<1x64xf32> to vector<256x64xf32>
    %7 = arith.mulf %4, %6 : vector<256x64xf32>
    %8 = arith.mulf %7, %7 : vector<256x64xf32>
    %9 = arith.truncf %8 : vector<256x64xf32> to vector<256x64xbf16>
    %c0_5 = arith.constant 0 : index
    %c0_6 = arith.constant 0 : index
    %10 = vector.load %arg4[%c0_5, %c0_6] : memref<64x32xbf16, #tpu.memory_space<vmem>>, vector<64x32xbf16>
    %cst = arith.constant dense<0.000000e+00> : vector<256x32xf32>
    %11 = tpu.matmul %9, %10, %cst {dimension_numbers = #tpu.dot_dimension_numbers<[1], [0], [0], [1], [0, 0, 1, 1], [], []>} : vector<256x64xbf16>, vector<64x32xbf16>, vector<256x32xf32> -> vector<256x32xf32>
    %c0_7 = arith.constant 0 : index
    %c0_8 = arith.constant 0 : index
    %12 = vector.load %arg5[%c0_7, %c0_8] : memref<1x32xf32, #tpu.memory_space<vmem>>, vector<1x32xf32>
    %13 = vector.broadcast %12 : vector<1x32xf32> to vector<256x32xf32>
    %14 = arith.addf %11, %13 : vector<256x32xf32>
    %c0_9 = arith.constant 0 : index
    %c0_10 = arith.constant 0 : index
    %15 = vector.load %arg6[%c0_9, %c0_10] : memref<256x32xf32, #tpu.memory_space<vmem>>, vector<256x32xf32>
    tpu.vector_store %arg6[%c0_9, %c0_10], %14 {strides = array<i32>} : memref<256x32xf32, #tpu.memory_space<vmem>>, vector<256x32xf32>,
    %c256_i32 = arith.constant 256 : i32
    %16 = arith.muli %arg0, %c256_i32 : i32
    %17 = tpu.iota {dimensions = array<i32: 0>} : vector<256x1xi32>
    %18 = vector.broadcast %16 : i32 to vector<256x1xi32>
    %19 = arith.addi %18, %17 : vector<256x1xi32>
    %c640_i32 = arith.constant 640 : i32
    %20 = vector.broadcast %c640_i32 : i32 to vector<256x1xi32>
    %21 = arith.cmpi slt, %19, %20 : vector<256x1xi32>
    %cst_11 = arith.constant 0.000000e+00 : f32
    %22 = vector.shape_cast %21 : vector<256x1xi1> to vector<256x1xi1>
    %23 = vector.broadcast %22 : vector<256x1xi1> to vector<256x32xi1>
    %24 = vector.broadcast %cst_11 : f32 to vector<256x32xf32>
    %25 = arith.select %23, %14, %24 : vector<256x32xi1>, vector<256x32xf32>
    %cst_12 = arith.constant dense<0.000000e+00> : vector<32xf32>
    %26 = vector.multi_reduction <add>, %25, %cst_12 [0] : vector<256x32xf32> to vector<32xf32>
    %27 = vector.shape_cast %26 : vector<32xf32> to vector<1x32xf32>
    %28 = arith.mulf %25, %25 : vector<256x32xf32>
    %cst_13 = arith.constant dense<0.000000e+00> : vector<32xf32>
    %29 = vector.multi_reduction <add>, %28, %cst_13 [0] : vector<256x32xf32> to vector<32xf32>
    %30 = vector.shape_cast %29 : vector<32xf32> to vector<1x32xf32>
    %31 = tpu.concatenate %27, %30 in 0 : vector<1x32xf32>, vector<1x32xf32> -> vector<2x32xf32>
    %32 = vector.shape_cast %31 : vector<2x32xf32> to vector<1x2x32xf32>
    %c0_14 = arith.constant 0 : index
    %c0_15 = arith.constant 0 : index
    %c0_16 = arith.constant 0 : index
    %33 = vector.load %arg7[%c0_14, %c0_15, %c0_16] : memref<1x2x32xf32, #tpu.memory_space<vmem>>, vector<1x2x32xf32>
    tpu.vector_store %arg7[%c0_14, %c0_15, %c0_16], %32 {strides = array<i32>} : memref<1x2x32xf32, #tpu.memory_space<vmem>>, vector<1x2x32xf32>,
    return
  }
  func.func @transform_0(%arg0: i32) -> (i32, i32) {
    %c0_i32 = arith.constant 0 : i32
    %c0_i32_0 = arith.constant 0 : i32
    return %arg0, %c0_i32 : i32, i32
  }
  func.func @transform_1(%arg0: i32) -> (i32, i32) {
    %c0_i32 = arith.constant 0 : i32
    %c0_i32_0 = arith.constant 0 : i32
    %c0_i32_1 = arith.constant 0 : i32
    return %c0_i32, %c0_i32_0 : i32, i32
  }
  func.func @transform_2(%arg0: i32) -> (i32, i32) {
    %c0_i32 = arith.constant 0 : i32
    %c0_i32_0 = arith.constant 0 : i32
    %c0_i32_1 = arith.constant 0 : i32
    return %c0_i32, %c0_i32_0 : i32, i32
  }
  func.func @transform_3(%arg0: i32) -> (i32, i32) {
    %c0_i32 = arith.constant 0 : i32
    %c0_i32_0 = arith.constant 0 : i32
    %c0_i32_1 = arith.constant 0 : i32
    return %c0_i32, %c0_i32_0 : i32, i32
  }
  func.func @transform_4(%arg0: i32) -> (i32, i32) {
    %c0_i32 = arith.constant 0 : i32
    %c0_i32_0 = arith.constant 0 : i32
    %c0_i32_1 = arith.constant 0 : i32
    return %c0_i32, %c0_i32_0 : i32, i32
  }
  func.func @transform_5(%arg0: i32) -> (i32, i32) {
    %c0_i32 = arith.constant 0 : i32
    %c0_i32_0 = arith.constant 0 : i32
    return %arg0, %c0_i32 : i32, i32
  }
  func.func @transform_6(%arg0: i32) -> (i32, i32, i32) {
    %c0_i32 = arith.constant 0 : i32
    %c0_i32_0 = arith.constant 0 : i32
    %c0_i32_1 = arith.constant 0 : i32
    return %arg0, %c0_i32, %c0_i32_0 : i32, i32, i32
  }
}

module attributes {stable_mosaic.version = 11 : i64} {
  func.func @_final_kernel(%arg0: i32, %arg1: memref<256x32xf32, #tpu.memory_space<vmem>>, %arg2: memref<256x64xbf16, #tpu.memory_space<vmem>>, %arg3: memref<1x32xf32, #tpu.memory_space<vmem>>, %arg4: memref<1x32xf32, #tpu.memory_space<vmem>>, %arg5: memref<1x64xf32, #tpu.memory_space<vmem>>, %arg6: memref<1x64xf32, #tpu.memory_space<vmem>>, %arg7: memref<32x128xbf16, #tpu.memory_space<vmem>>, %arg8: memref<64x128xbf16, #tpu.memory_space<vmem>>, %arg9: memref<256x128xf32, #tpu.memory_space<vmem>>) attributes {dimension_semantics = [#tpu.dimension_semantics<parallel>], iteration_bounds = array<i64: 3>, scalar_prefetch = 0 : i64, scratch_operands = 0 : i64, tpu.core_type = #tpu.core_type<tc>, window_params = [{transform_indices = @transform_0, window_bounds = array<i64: 256, 32>}, {transform_indices = @transform_1, window_bounds = array<i64: 256, 64>}, {pipeline_mode = #tpu.pipeline_mode<synchronous>, transform_indices = @transform_2, window_bounds = array<i64: 1, 32>}, {pipeline_mode = #tpu.pipeline_mode<synchronous>, transform_indices = @transform_3, window_bounds = array<i64: 1, 32>}, {pipeline_mode = #tpu.pipeline_mode<synchronous>, transform_indices = @transform_4, window_bounds = array<i64: 1, 64>}, {pipeline_mode = #tpu.pipeline_mode<synchronous>, transform_indices = @transform_5, window_bounds = array<i64: 1, 64>}, {pipeline_mode = #tpu.pipeline_mode<synchronous>, transform_indices = @transform_6, window_bounds = array<i64: 32, 128>}, {pipeline_mode = #tpu.pipeline_mode<synchronous>, transform_indices = @transform_7, window_bounds = array<i64: 64, 128>}, {transform_indices = @transform_8, window_bounds = array<i64: 256, 128>}]} {
    %c0 = arith.constant 0 : index
    %c0_0 = arith.constant 0 : index
    %0 = vector.load %arg1[%c0, %c0_0] : memref<256x32xf32, #tpu.memory_space<vmem>>, vector<256x32xf32>
    %c0_1 = arith.constant 0 : index
    %c0_2 = arith.constant 0 : index
    %1 = vector.load %arg3[%c0_1, %c0_2] : memref<1x32xf32, #tpu.memory_space<vmem>>, vector<1x32xf32>
    %2 = vector.broadcast %1 : vector<1x32xf32> to vector<256x32xf32>
    %3 = arith.subf %0, %2 : vector<256x32xf32>
    %c0_3 = arith.constant 0 : index
    %c0_4 = arith.constant 0 : index
    %4 = vector.load %arg4[%c0_3, %c0_4] : memref<1x32xf32, #tpu.memory_space<vmem>>, vector<1x32xf32>
    %5 = vector.broadcast %4 : vector<1x32xf32> to vector<256x32xf32>
    %6 = arith.mulf %3, %5 : vector<256x32xf32>
    %cst = arith.constant 0.000000e+00 : f32
    %7 = vector.broadcast %cst : f32 to vector<256x32xf32>
    %8 = arith.maximumf %6, %7 : vector<256x32xf32>
    %c0_5 = arith.constant 0 : index
    %c0_6 = arith.constant 0 : index
    %9 = vector.load %arg2[%c0_5, %c0_6] : memref<256x64xbf16, #tpu.memory_space<vmem>>, vector<256x64xbf16>
    %10 = arith.extf %9 : vector<256x64xbf16> to vector<256x64xf32>
    %c0_7 = arith.constant 0 : index
    %c0_8 = arith.constant 0 : index
    %11 = vector.load %arg5[%c0_7, %c0_8] : memref<1x64xf32, #tpu.memory_space<vmem>>, vector<1x64xf32>
    %12 = vector.broadcast %11 : vector<1x64xf32> to vector<256x64xf32>
    %13 = arith.subf %10, %12 : vector<256x64xf32>
    %c0_9 = arith.constant 0 : index
    %c0_10 = arith.constant 0 : index
    %14 = vector.load %arg6[%c0_9, %c0_10] : memref<1x64xf32, #tpu.memory_space<vmem>>, vector<1x64xf32>
    %15 = vector.broadcast %14 : vector<1x64xf32> to vector<256x64xf32>
    %16 = arith.mulf %13, %15 : vector<256x64xf32>
    %cst_11 = arith.constant 0.000000e+00 : f32
    %17 = vector.broadcast %cst_11 : f32 to vector<256x64xf32>
    %18 = arith.maximumf %16, %17 : vector<256x64xf32>
    %19 = arith.truncf %8 : vector<256x32xf32> to vector<256x32xbf16>
    %c0_12 = arith.constant 0 : index
    %c0_13 = arith.constant 0 : index
    %20 = vector.load %arg7[%c0_12, %c0_13] : memref<32x128xbf16, #tpu.memory_space<vmem>>, vector<32x128xbf16>
    %cst_14 = arith.constant dense<0.000000e+00> : vector<256x128xf32>
    %21 = tpu.matmul %19, %20, %cst_14 {dimension_numbers = #tpu.dot_dimension_numbers<[1], [0], [0], [1], [0, 0, 1, 1], [], []>} : vector<256x32xbf16>, vector<32x128xbf16>, vector<256x128xf32> -> vector<256x128xf32>
    %22 = arith.truncf %18 : vector<256x64xf32> to vector<256x64xbf16>
    %c0_15 = arith.constant 0 : index
    %c0_16 = arith.constant 0 : index
    %23 = vector.load %arg8[%c0_15, %c0_16] : memref<64x128xbf16, #tpu.memory_space<vmem>>, vector<64x128xbf16>
    %cst_17 = arith.constant dense<0.000000e+00> : vector<256x128xf32>
    %24 = tpu.matmul %22, %23, %cst_17 {dimension_numbers = #tpu.dot_dimension_numbers<[1], [0], [0], [1], [0, 0, 1, 1], [], []>} : vector<256x64xbf16>, vector<64x128xbf16>, vector<256x128xf32> -> vector<256x128xf32>
    %25 = arith.addf %21, %24 : vector<256x128xf32>
    %c0_18 = arith.constant 0 : index
    %c0_19 = arith.constant 0 : index
    %26 = vector.load %arg9[%c0_18, %c0_19] : memref<256x128xf32, #tpu.memory_space<vmem>>, vector<256x128xf32>
    tpu.vector_store %arg9[%c0_18, %c0_19], %25 {strides = array<i32>} : memref<256x128xf32, #tpu.memory_space<vmem>>, vector<256x128xf32>,
    return
  }
  func.func @transform_0(%arg0: i32) -> (i32, i32) {
    %c0_i32 = arith.constant 0 : i32
    %c0_i32_0 = arith.constant 0 : i32
    return %arg0, %c0_i32 : i32, i32
  }
  func.func @transform_1(%arg0: i32) -> (i32, i32) {
    %c0_i32 = arith.constant 0 : i32
    %c0_i32_0 = arith.constant 0 : i32
    return %arg0, %c0_i32 : i32, i32
  }
  func.func @transform_2(%arg0: i32) -> (i32, i32) {
    %c0_i32 = arith.constant 0 : i32
    %c0_i32_0 = arith.constant 0 : i32
    %c0_i32_1 = arith.constant 0 : i32
    return %c0_i32, %c0_i32_0 : i32, i32
  }
  func.func @transform_3(%arg0: i32) -> (i32, i32) {
    %c0_i32 = arith.constant 0 : i32
    %c0_i32_0 = arith.constant 0 : i32
    %c0_i32_1 = arith.constant 0 : i32
    return %c0_i32, %c0_i32_0 : i32, i32
  }
  func.func @transform_4(%arg0: i32) -> (i32, i32) {
    %c0_i32 = arith.constant 0 : i32
    %c0_i32_0 = arith.constant 0 : i32
    %c0_i32_1 = arith.constant 0 : i32
    return %c0_i32, %c0_i32_0 : i32, i32
  }
  func.func @transform_5(%arg0: i32) -> (i32, i32) {
    %c0_i32 = arith.constant 0 : i32
    %c0_i32_0 = arith.constant 0 : i32
    %c0_i32_1 = arith.constant 0 : i32
    return %c0_i32, %c0_i32_0 : i32, i32
  }
  func.func @transform_6(%arg0: i32) -> (i32, i32) {
    %c0_i32 = arith.constant 0 : i32
    %c0_i32_0 = arith.constant 0 : i32
    %c0_i32_1 = arith.constant 0 : i32
    return %c0_i32, %c0_i32_0 : i32, i32
  }
  func.func @transform_7(%arg0: i32) -> (i32, i32) {
    %c0_i32 = arith.constant 0 : i32
    %c0_i32_0 = arith.constant 0 : i32
    %c0_i32_1 = arith.constant 0 : i32
    return %c0_i32, %c0_i32_0 : i32, i32
  }
  func.func @transform_8(%arg0: i32) -> (i32, i32) {
    %c0_i32 = arith.constant 0 : i32
    %c0_i32_0 = arith.constant 0 : i32
    return %arg0, %c0_i32 : i32, i32
  }
}

</mosaic_0001>

<llo_original>
// kernel: c3d_smart_forward.6
$region0: #{c3d_smart_forward.6}
  #allocation0 [shape = 'u32[]', space=smem, size = 0x4, offset = 0x4, fixed_abs, tag = 'smem constant byte address 0x4 - core index']
  #allocation1 [shape = 'u32[144,128]{1,0:T(1,128)}', space=vmem, size = 0x12000, scoped, tag = 'internal scratch']
  %s0 = inlined_call_operand.vmem [shape: bf16[768,32], index: 0, kind: input, shape index: {}]
  %s1 = inlined_call_operand.vmem [shape: f32[1,32], index: 1, kind: input, shape index: {}]
  %s2 = inlined_call_operand.vmem [shape: f32[1,32], index: 2, kind: input, shape index: {}]
  %s3 = inlined_call_operand.vmem [shape: bf16[768,32], index: 3, kind: output, shape index: {}]
  %s4 = sld [smem:[#allocation0]]
  $region45: #{c3d_smart_forward.6} parent=0
    _
  %s6 = ssub.s32 1, %s4
  %s7 = scalar_select 0, %s6, %s4
  loop: start=0, step=1, limit=5
  $region2: #{c3d_smart_forward.6} parent=0 // loop_pre_header
    _
  $region3: #{c3d_smart_forward.6} parent=0 // loop_header
    %s9 = sphi 0, %s13
    %p10 = scmp.ge.s32.totalorder %s9, 5
    %s19 = sphi 0, %s21
    %s22 = sphi 0, %s19
    %s23 = sphi 0, %s22
    %s39 = sphi 0, %s23
    %s43 = sphi 0, %s43
    %s45 = sphi 0, %s43
    %s46 = sphi 0, %s45
    %s60 = sphi 0, %s46
    %s64 = sphi 0, %s64
    %s66 = sphi 0, %s64
    %s67 = sphi 0, %s66
    %s81 = sphi 0, %s67
    %s87 = sphi 0, %s89
    %s90 = sphi 0, %s87
    %s91 = sphi 0, %s90
    %s107 = sphi 0, %s91
  $region4: #{c3d_smart_forward.6} parent=0 // loop_header_branch
    %12 = sbr.rel (%p10) target = $region8
  $region5: #{c3d_smart_forward.6} parent=0 // loop_body
    %s14 = ssub.s32 %s9, 1
    %s15 = ssub.s32 %s9, 2
    %s16 = sadd.s32 %s9, 1
    %s17 = ssub.s32 %s9, %s16
    %p18 = scmp.eq.s32.totalorder %s17, 0
    %s20 = sadd.s32 %s19, 1
    %s21 = scalar_select %p18, %s19, %s20
    %p24 = pneg %p18
    %p25 = scmp.eq.s32.totalorder %s9, 2
    %p26 = por %p24, %p25
    %p27 = scmp.ne.s32.totalorder %s19, %s22
    %p28 = scmp.eq.s32.totalorder %s9, 0
    %p29 = por %p27, %p28
    %p30 = scmp.ne.s32.totalorder %s19, %s22
    %p31 = scmp.eq.s32.totalorder %s14, 2
    %p32 = por %p30, %p31
    %p33 = scmp.ne.s32.totalorder %s22, %s23
    %p34 = scmp.eq.s32.totalorder %s14, 0
    %p35 = por %p33, %p34
    %p36 = scmp.ne.s32.totalorder %s22, %s23
    %p37 = scmp.eq.s32.totalorder %s15, 2
    %p38 = por %p36, %p37
    %p40 = scmp.ne.s32.totalorder %s23, %s39
    %p41 = scmp.eq.s32.totalorder %s15, 0
    %p42 = por %p40, %p41
    %s44 = sadd.s32 %s43, 1
    %p47 = scmp.eq.s32.totalorder %s9, 2
    %p48 = scmp.ne.s32.totalorder %s43, %s45
    %p49 = scmp.eq.s32.totalorder %s9, 0
    %p50 = por %p48, %p49
    %p51 = scmp.ne.s32.totalorder %s43, %s45
    %p52 = scmp.eq.s32.totalorder %s14, 2
    %p53 = por %p51, %p52
    %p54 = scmp.ne.s32.totalorder %s45, %s46
    %p55 = scmp.eq.s32.totalorder %s14, 0
    %p56 = por %p54, %p55
    %p57 = scmp.ne.s32.totalorder %s45, %s46
    %p58 = scmp.eq.s32.totalorder %s15, 2
    %p59 = por %p57, %p58
    %p61 = scmp.ne.s32.totalorder %s46, %s60
    %p62 = scmp.eq.s32.totalorder %s15, 0
    %p63 = por %p61, %p62
    %s65 = sadd.s32 %s64, 1
    %p68 = scmp.eq.s32.totalorder %s9, 2
    %p69 = scmp.ne.s32.totalorder %s64, %s66
    %p70 = scmp.eq.s32.totalorder %s9, 0
    %p71 = por %p69, %p70
    %p72 = scmp.ne.s32.totalorder %s64, %s66
    %p73 = scmp.eq.s32.totalorder %s14, 2
    %p74 = por %p72, %p73
    %p75 = scmp.ne.s32.totalorder %s66, %s67
    %p76 = scmp.eq.s32.totalorder %s14, 0
    %p77 = por %p75, %p76
    %p78 = scmp.ne.s32.totalorder %s66, %s67
    %p79 = scmp.eq.s32.totalorder %s15, 2
    %p80 = por %p78, %p79
    %p82 = scmp.ne.s32.totalorder %s67, %s81
    %p83 = scmp.eq.s32.totalorder %s15, 0
    %p84 = por %p82, %p83
    %s85 = ssub.s32 %s9, %s16
    %p86 = scmp.eq.s32.totalorder %s85, 0
    %s88 = sadd.s32 %s87, 1
    %s89 = scalar_select %p86, %s87, %s88
    %p92 = pneg %p86
    %p93 = scmp.eq.s32.totalorder %s9, 2
    %p94 = por %p92, %p93
    %p95 = scmp.ne.s32.totalorder %s87, %s90
    %p96 = scmp.eq.s32.totalorder %s9, 0
    %p97 = por %p95, %p96
    %p98 = scmp.ne.s32.totalorder %s87, %s90
    %p99 = scmp.eq.s32.totalorder %s14, 2
    %p100 = por %p98, %p99
    %p101 = scmp.ne.s32.totalorder %s90, %s91
    %p102 = scmp.eq.s32.totalorder %s14, 0
    %p103 = por %p101, %p102
    %p104 = scmp.ne.s32.totalorder %s90, %s91
    %p105 = scmp.eq.s32.totalorder %s15, 2
    %p106 = por %p104, %p105
    %p108 = scmp.ne.s32.totalorder %s91, %s107
    %p109 = scmp.eq.s32.totalorder %s15, 0
    %p110 = por %p108, %p109
    %p111 = scmp.le.s32.totalorder 1, %s9
    %p112 = scmp.lt.s32.totalorder %s9, 4
    %p113 = pnand %p111, %p112
    %p114 = pneg %p113
    // Predicated region
    $region9: #{c3d_smart_forward.6} parent=5 // pred_check
      _
    $region10: #{c3d_smart_forward.6} parent=5 // pred_check_branch
      %116 = sbr.rel (%p113) target = $region12
    $region11: #{c3d_smart_forward.6} parent=5 // pred_region
      %s117 = ssub.s32 %s9, 1
      // Predicated region
      $region13: #{c3d_smart_forward.6} parent=11 // pred_check
        %p118 = pneg %p56
      $region14: #{c3d_smart_forward.6} parent=11 // pred_check_branch
        %120 = sbr.rel (%p118) target = $region16
      $region15: #{c3d_smart_forward.6} parent=11 // pred_region
        _
      $region16: #{c3d_smart_forward.6} parent=11 // pred_fallthru
        _
      // Predicated region
      $region17: #{c3d_smart_forward.6} parent=11 // pred_check
        %p121 = pneg %p77
      $region18: #{c3d_smart_forward.6} parent=11 // pred_check_branch
        %123 = sbr.rel (%p121) target = $region20
      $region19: #{c3d_smart_forward.6} parent=11 // pred_region
        _
      $region20: #{c3d_smart_forward.6} parent=11 // pred_fallthru
        _
    $region12: #{c3d_smart_forward.6} parent=5 // pred_fallthru
      _
    %p124 = scmp.lt.s32.totalorder %s9, 3
    // Predicated region
    $region21: #{c3d_smart_forward.6} parent=5 // pred_check
      %p125 = pneg %p124
    $region22: #{c3d_smart_forward.6} parent=5 // pred_check_branch
      %127 = sbr.rel (%p125) target = $region24
    $region23: #{c3d_smart_forward.6} parent=5 // pred_region
      // Predicated region
      $region25: #{c3d_smart_forward.6} parent=23 // pred_check
        %p128 = pneg %p29
      $region26: #{c3d_smart_forward.6} parent=23 // pred_check_branch
        %130 = sbr.rel (%p128) target = $region28
      $region27: #{c3d_smart_forward.6} parent=23 // pred_region
        %s131 = smul.u32 32, %s9
        %p132 = scmp.lt.s32.totalorder %s131, 95
        %s133 = scalar_select %p132, %s131, 95
        %s134 = smul.addr %s133, 4
        %s135 = scalar_lea.vmem %s0, %s134
        %s136 = smul.u32 32, %s9
      $region28: #{c3d_smart_forward.6} parent=23 // pred_fallthru
        _
    $region24: #{c3d_smart_forward.6} parent=5 // pred_fallthru
      _
    %p137 = scmp.le.s32.totalorder 1, %s9
    %p138 = scmp.lt.s32.totalorder %s9, 4
    %p139 = pnand %p137, %p138
    %p140 = pneg %p139
    // Predicated region
    $region29: #{c3d_smart_forward.6} parent=5 // pred_check
      _
    $region30: #{c3d_smart_forward.6} parent=5 // pred_check_branch
      %142 = sbr.rel (%p139) target = $region32
    $region31: #{c3d_smart_forward.6} parent=5 // pred_region
      %s143 = ssub.s32 %s9, 1
      %s144 = smul.u32 32, %s14
      %p145 = scmp.lt.s32.totalorder %s144, 95
      %s146 = scalar_select %p145, %s144, 95
      %s147 = smul.addr %s146, 4
      %s148 = scalar_lea.vmem %s0, %s147
      %p149 = pneg %p35
      %p150 = pneg %p32
      %p151 = pneg %p56
      %p152 = pneg %p53
      %p153 = pneg %p77
      %p154 = pneg %p74
      %p155 = pneg %p103
      %p156 = pneg %p100
      %s157 = smul.u32 32, %s14
      %p158 = scmp.lt.s32.totalorder %s157, 95
      %s159 = scalar_select %p158, %s157, 95
      %s160 = smul.addr %s159, 4
      %s161 = scalar_lea.vmem %s3, %s160
      %s162 = smul.u32 32, %s14
      %p163 = scmp.lt.s32.totalorder %s162, 95
      %s164 = scalar_select %p163, %s162, 95
      %s165 = smul.addr %s164, 4
      %s166 = scalar_lea.vmem %s0, %s165
      %s167 = smul.u32 32, %s14
      %s168 = smul.u32 32, %s14
      %p169 = scmp.lt.s32.totalorder %s168, 95
      %s170 = scalar_select %p169, %s168, 95
      %s171 = smul.addr %s170, 4
      %s172 = scalar_lea.vmem %s3, %s171
      %s173 = smul.u32 32, %s14
      %v174 = vld [vmem:[%s166] sm:$0xf]
      %v175 = vld [vmem:[%s166 + $0x4] sm:$0xf]
      %v176 = vld [vmem:[%s166 + $0x8] sm:$0xf]
      %v177 = vld [vmem:[%s166 + $0xc] sm:$0xf]
      %v178 = vld [vmem:[%s166 + $0x10] sm:$0xf]
      %v179 = vld [vmem:[%s166 + $0x14] sm:$0xf]
      %v180 = vld [vmem:[%s166 + $0x18] sm:$0xf]
      %v181 = vld [vmem:[%s166 + $0x1c] sm:$0xf]
      %v182 = vld [vmem:[%s166 + $0x20] sm:$0xf]
      %v183 = vld [vmem:[%s166 + $0x24] sm:$0xf]
      %v184 = vld [vmem:[%s166 + $0x28] sm:$0xf]
      %v185 = vld [vmem:[%s166 + $0x2c] sm:$0xf]
      %v186 = vld [vmem:[%s166 + $0x30] sm:$0xf]
      %v187 = vld [vmem:[%s166 + $0x34] sm:$0xf]
      %v188 = vld [vmem:[%s166 + $0x38] sm:$0xf]
      %v189 = vld [vmem:[%s166 + $0x3c] sm:$0xf]
      %v190 = vld [vmem:[%s166 + $0x40] sm:$0xf]
      %v191 = vld [vmem:[%s166 + $0x44] sm:$0xf]
      %v192 = vld [vmem:[%s166 + $0x48] sm:$0xf]
      %v193 = vld [vmem:[%s166 + $0x4c] sm:$0xf]
      %v194 = vld [vmem:[%s166 + $0x50] sm:$0xf]
      %v195 = vld [vmem:[%s166 + $0x54] sm:$0xf]
      %v196 = vld [vmem:[%s166 + $0x58] sm:$0xf]
      %v197 = vld [vmem:[%s166 + $0x5c] sm:$0xf]
      %v198 = vld [vmem:[%s166 + $0x60] sm:$0xf]
      %v199 = vld [vmem:[%s166 + $0x64] sm:$0xf]
      %v200 = vld [vmem:[%s166 + $0x68] sm:$0xf]
      %v201 = vld [vmem:[%s166 + $0x6c] sm:$0xf]
      %v202 = vld [vmem:[%s166 + $0x70] sm:$0xf]
      %v203 = vld [vmem:[%s166 + $0x74] sm:$0xf]
      %v204 = vld [vmem:[%s166 + $0x78] sm:$0xf]
      %v205 = vld [vmem:[%s166 + $0x7c] sm:$0xf]
      %v206 = vunpack.c.l.bf16 %v174
      %v207 = vunpack.c.l.bf16 %v175
      %v208 = vunpack.c.l.bf16 %v176
      %v209 = vunpack.c.l.bf16 %v177
      %v210 = vunpack.c.l.bf16 %v178
      %v211 = vunpack.c.l.bf16 %v179
      %v212 = vunpack.c.l.bf16 %v180
      %v213 = vunpack.c.l.bf16 %v181
      %v214 = vunpack.c.l.bf16 %v182
      %v215 = vunpack.c.l.bf16 %v183
      %v216 = vunpack.c.l.bf16 %v184
      %v217 = vunpack.c.l.bf16 %v185
      %v218 = vunpack.c.l.bf16 %v186
      %v219 = vunpack.c.l.bf16 %v187
      %v220 = vunpack.c.l.bf16 %v188
      %v221 = vunpack.c.l.bf16 %v189
      %v222 = vunpack.c.l.bf16 %v190
      %v223 = vunpack.c.l.bf16 %v191
      %v224 = vunpack.c.l.bf16 %v192
      %v225 = vunpack.c.l.bf16 %v193
      %v226 = vunpack.c.l.bf16 %v194
      %v227 = vunpack.c.l.bf16 %v195
      %v228 = vunpack.c.l.bf16 %v196
      %v229 = vunpack.c.l.bf16 %v197
      %v230 = vunpack.c.l.bf16 %v198
      %v231 = vunpack.c.l.bf16 %v199
      %v232 = vunpack.c.l.bf16 %v200
      %v233 = vunpack.c.l.bf16 %v201
      %v234 = vunpack.c.l.bf16 %v202
      %v235 = vunpack.c.l.bf16 %v203
      %v236 = vunpack.c.l.bf16 %v204
      %v237 = vunpack.c.l.bf16 %v205
      %v238 = vld [vmem:[%s1] sm:$0x1]
      %v240 = vlaneseq
      %v241 = vshrl.u32 %v240, 7
      %v242 = vsub.s32 0, %v241
      %v243 = vrot.slane %v238, %v242
      %v245 = vsub.f32 %v206, %v243
      %v246 = vsub.f32 %v207, %v243
      %v247 = vsub.f32 %v208, %v243
      %v248 = vsub.f32 %v209, %v243
      %v249 = vsub.f32 %v210, %v243
      %v250 = vsub.f32 %v211, %v243
      %v251 = vsub.f32 %v212, %v243
      %v252 = vsub.f32 %v213, %v243
      %v253 = vsub.f32 %v214, %v243
      %v254 = vsub.f32 %v215, %v243
      %v255 = vsub.f32 %v216, %v243
      %v256 = vsub.f32 %v217, %v243
      %v257 = vsub.f32 %v218, %v243
      %v258 = vsub.f32 %v219, %v243
      %v259 = vsub.f32 %v220, %v243
      %v260 = vsub.f32 %v221, %v243
      %v261 = vsub.f32 %v222, %v243
      %v262 = vsub.f32 %v223, %v243
      %v263 = vsub.f32 %v224, %v243
      %v264 = vsub.f32 %v225, %v243
      %v265 = vsub.f32 %v226, %v243
      %v266 = vsub.f32 %v227, %v243
      %v267 = vsub.f32 %v228, %v243
      %v268 = vsub.f32 %v229, %v243
      %v269 = vsub.f32 %v230, %v243
      %v270 = vsub.f32 %v231, %v243
      %v271 = vsub.f32 %v232, %v243
      %v272 = vsub.f32 %v233, %v243
      %v273 = vsub.f32 %v234, %v243
      %v274 = vsub.f32 %v235, %v243
      %v275 = vsub.f32 %v236, %v243
      %v276 = vsub.f32 %v237, %v243
      %v277 = vld [vmem:[%s2] sm:$0x1]
      %v279 = vlaneseq
      %v280 = vshrl.u32 %v279, 7
      %v281 = vsub.s32 0, %v280
      %v282 = vrot.slane %v277, %v281
      %v284 = vmul.f32 %v245, %v282
      %v285 = vmul.f32 %v246, %v282
      %v286 = vmul.f32 %v247, %v282
      %v287 = vmul.f32 %v248, %v282
      %v288 = vmul.f32 %v249, %v282
      %v289 = vmul.f32 %v250, %v282
      %v290 = vmul.f32 %v251, %v282
      %v291 = vmul.f32 %v252, %v282
      %v292 = vmul.f32 %v253, %v282
      %v293 = vmul.f32 %v254, %v282
      %v294 = vmul.f32 %v255, %v282
      %v295 = vmul.f32 %v256, %v282
      %v296 = vmul.f32 %v257, %v282
      %v297 = vmul.f32 %v258, %v282
      %v298 = vmul.f32 %v259, %v282
      %v299 = vmul.f32 %v260, %v282
      %v300 = vmul.f32 %v261, %v282
      %v301 = vmul.f32 %v262, %v282
      %v302 = vmul.f32 %v263, %v282
      %v303 = vmul.f32 %v264, %v282
      %v304 = vmul.f32 %v265, %v282
      %v305 = vmul.f32 %v266, %v282
      %v306 = vmul.f32 %v267, %v282
      %v307 = vmul.f32 %v268, %v282
      %v308 = vmul.f32 %v269, %v282
      %v309 = vmul.f32 %v270, %v282
      %v310 = vmul.f32 %v271, %v282
      %v311 = vmul.f32 %v272, %v282
      %v312 = vmul.f32 %v273, %v282
      %v313 = vmul.f32 %v274, %v282
      %v314 = vmul.f32 %v275, %v282
      %v315 = vmul.f32 %v276, %v282
      %v316 = vmax.f32 %v284, 0.0
      %v317 = vmax.f32 %v285, 0.0
      %v318 = vmax.f32 %v286, 0.0
      %v319 = vmax.f32 %v287, 0.0
      %v320 = vmax.f32 %v288, 0.0
      %v321 = vmax.f32 %v289, 0.0
      %v322 = vmax.f32 %v290, 0.0
      %v323 = vmax.f32 %v291, 0.0
      %v324 = vmax.f32 %v292, 0.0
      %v325 = vmax.f32 %v293, 0.0
      %v326 = vmax.f32 %v294, 0.0
      %v327 = vmax.f32 %v295, 0.0
      %v328 = vmax.f32 %v296, 0.0
      %v329 = vmax.f32 %v297, 0.0
      %v330 = vmax.f32 %v298, 0.0
      %v331 = vmax.f32 %v299, 0.0
      %v332 = vmax.f32 %v300, 0.0
      %v333 = vmax.f32 %v301, 0.0
      %v334 = vmax.f32 %v302, 0.0
      %v335 = vmax.f32 %v303, 0.0
      %v336 = vmax.f32 %v304, 0.0
      %v337 = vmax.f32 %v305, 0.0
      %v338 = vmax.f32 %v306, 0.0
      %v339 = vmax.f32 %v307, 0.0
      %v340 = vmax.f32 %v308, 0.0
      %v341 = vmax.f32 %v309, 0.0
      %v342 = vmax.f32 %v310, 0.0
      %v343 = vmax.f32 %v311, 0.0
      %v344 = vmax.f32 %v312, 0.0
      %v345 = vmax.f32 %v313, 0.0
      %v346 = vmax.f32 %v314, 0.0
      %v347 = vmax.f32 %v315, 0.0
      %v348 = vpack.c.bf16 %v317, %v316
      %v349 = vpack.c.bf16 %v319, %v318
      %v350 = vpack.c.bf16 %v321, %v320
      %v351 = vpack.c.bf16 %v323, %v322
      %v352 = vpack.c.bf16 %v325, %v324
      %v353 = vpack.c.bf16 %v327, %v326
      %v354 = vpack.c.bf16 %v329, %v328
      %v355 = vpack.c.bf16 %v331, %v330
      %v356 = vpack.c.bf16 %v333, %v332
      %v357 = vpack.c.bf16 %v335, %v334
      %v358 = vpack.c.bf16 %v337, %v336
      %v359 = vpack.c.bf16 %v339, %v338
      %v360 = vpack.c.bf16 %v341, %v340
      %v361 = vpack.c.bf16 %v343, %v342
      %v362 = vpack.c.bf16 %v345, %v344
      %v363 = vpack.c.bf16 %v347, %v346
      %v380 = vunpack.c.l.b16 %v348
      %v381 = vunpack.c.h.b16 %v348
      %v382 = vunpack.c.l.b16 %v349
      %v383 = vunpack.c.h.b16 %v349
      %v384 = vunpack.c.l.b16 %v350
      %v385 = vunpack.c.h.b16 %v350
      %v386 = vunpack.c.l.b16 %v351
      %v387 = vunpack.c.h.b16 %v351
      %v388 = vunpack.c.l.b16 %v352
      %v389 = vunpack.c.h.b16 %v352
      %v390 = vunpack.c.l.b16 %v353
      %v391 = vunpack.c.h.b16 %v353
      %v392 = vunpack.c.l.b16 %v354
      %v393 = vunpack.c.h.b16 %v354
      %v394 = vunpack.c.l.b16 %v355
      %v395 = vunpack.c.h.b16 %v355
      %v396 = vunpack.c.l.b16 %v356
      %v397 = vunpack.c.h.b16 %v356
      %v398 = vunpack.c.l.b16 %v357
      %v399 = vunpack.c.h.b16 %v357
      %v400 = vunpack.c.l.b16 %v358
      %v401 = vunpack.c.h.b16 %v358
      %v402 = vunpack.c.l.b16 %v359
      %v403 = vunpack.c.h.b16 %v359
      %v404 = vunpack.c.l.b16 %v360
      %v405 = vunpack.c.h.b16 %v360
      %v406 = vunpack.c.l.b16 %v361
      %v407 = vunpack.c.h.b16 %v361
      %v408 = vunpack.c.l.b16 %v362
      %v409 = vunpack.c.h.b16 %v362
      %v410 = vunpack.c.l.b16 %v363
      %v411 = vunpack.c.h.b16 %v363
      %v412 = vpack.c.b16 %v380, %v380
      %v413 = vpack.c.b16 %v381, %v381
      %v414 = vpack.c.b16 %v382, %v382
      %v415 = vpack.c.b16 %v383, %v383
      %v416 = vpack.c.b16 %v384, %v384
      %v417 = vpack.c.b16 %v385, %v385
      %v418 = vpack.c.b16 %v386, %v386
      %v419 = vpack.c.b16 %v387, %v387
      %v420 = vpack.c.b16 %v388, %v388
      %v421 = vpack.c.b16 %v389, %v389
      %v422 = vpack.c.b16 %v390, %v390
      %v423 = vpack.c.b16 %v391, %v391
      %v424 = vpack.c.b16 %v392, %v392
      %v425 = vpack.c.b16 %v393, %v393
      %v426 = vpack.c.b16 %v394, %v394
      %v427 = vpack.c.b16 %v395, %v395
      %v428 = vpack.c.b16 %v396, %v396
      %v429 = vpack.c.b16 %v397, %v397
      %v430 = vpack.c.b16 %v398, %v398
      %v431 = vpack.c.b16 %v399, %v399
      %v432 = vpack.c.b16 %v400, %v400
      %v433 = vpack.c.b16 %v401, %v401
      %v434 = vpack.c.b16 %v402, %v402
      %v435 = vpack.c.b16 %v403, %v403
      %v436 = vpack.c.b16 %v404, %v404
      %v437 = vpack.c.b16 %v405, %v405
      %v438 = vpack.c.b16 %v406, %v406
      %v439 = vpack.c.b16 %v407, %v407
      %v440 = vpack.c.b16 %v408, %v408
      %v441 = vpack.c.b16 %v409, %v409
      %v442 = vpack.c.b16 %v410, %v410
      %v443 = vpack.c.b16 %v411, %v411
      %vm476 = vcmask 257024
      %477 = vst.msk [vmem:[%s172] sm:$0xf] %vm476, %v412
      %478 = vst.msk [vmem:[%s172 + $0x4] sm:$0xf] %vm476, %v413
      %479 = vst.msk [vmem:[%s172 + $0x8] sm:$0xf] %vm476, %v414
      %480 = vst.msk [vmem:[%s172 + $0xc] sm:$0xf] %vm476, %v415
      %481 = vst.msk [vmem:[%s172 + $0x10] sm:$0xf] %vm476, %v416
      %482 = vst.msk [vmem:[%s172 + $0x14] sm:$0xf] %vm476, %v417
      %483 = vst.msk [vmem:[%s172 + $0x18] sm:$0xf] %vm476, %v418
      %484 = vst.msk [vmem:[%s172 + $0x1c] sm:$0xf] %vm476, %v419
      %485 = vst.msk [vmem:[%s172 + $0x20] sm:$0xf] %vm476, %v420
      %486 = vst.msk [vmem:[%s172 + $0x24] sm:$0xf] %vm476, %v421
      %487 = vst.msk [vmem:[%s172 + $0x28] sm:$0xf] %vm476, %v422
      %488 = vst.msk [vmem:[%s172 + $0x2c] sm:$0xf] %vm476, %v423
      %489 = vst.msk [vmem:[%s172 + $0x30] sm:$0xf] %vm476, %v424
      %490 = vst.msk [vmem:[%s172 + $0x34] sm:$0xf] %vm476, %v425
      %491 = vst.msk [vmem:[%s172 + $0x38] sm:$0xf] %vm476, %v426
      %492 = vst.msk [vmem:[%s172 + $0x3c] sm:$0xf] %vm476, %v427
      %493 = vst.msk [vmem:[%s172 + $0x40] sm:$0xf] %vm476, %v428
      %494 = vst.msk [vmem:[%s172 + $0x44] sm:$0xf] %vm476, %v429
      %495 = vst.msk [vmem:[%s172 + $0x48] sm:$0xf] %vm476, %v430
      %496 = vst.msk [vmem:[%s172 + $0x4c] sm:$0xf] %vm476, %v431
      %497 = vst.msk [vmem:[%s172 + $0x50] sm:$0xf] %vm476, %v432
      %498 = vst.msk [vmem:[%s172 + $0x54] sm:$0xf] %vm476, %v433
      %499 = vst.msk [vmem:[%s172 + $0x58] sm:$0xf] %vm476, %v434
      %500 = vst.msk [vmem:[%s172 + $0x5c] sm:$0xf] %vm476, %v435
      %501 = vst.msk [vmem:[%s172 + $0x60] sm:$0xf] %vm476, %v436
      %502 = vst.msk [vmem:[%s172 + $0x64] sm:$0xf] %vm476, %v437
      %503 = vst.msk [vmem:[%s172 + $0x68] sm:$0xf] %vm476, %v438
      %504 = vst.msk [vmem:[%s172 + $0x6c] sm:$0xf] %vm476, %v439
      %505 = vst.msk [vmem:[%s172 + $0x70] sm:$0xf] %vm476, %v440
      %506 = vst.msk [vmem:[%s172 + $0x74] sm:$0xf] %vm476, %v441
      %507 = vst.msk [vmem:[%s172 + $0x78] sm:$0xf] %vm476, %v442
      %508 = vst.msk [vmem:[%s172 + $0x7c] sm:$0xf] %vm476, %v443
      %s509 = smul.u32 32, %s14
      %p510 = scmp.lt.s32.totalorder %s509, 95
      %s511 = scalar_select %p510, %s509, 95
      %s512 = smul.addr %s511, 4
      %s513 = scalar_lea.vmem %s3, %s512
      // Predicated region
      $region33: #{c3d_smart_forward.6} parent=31 // pred_check
        %p514 = pneg %p100
      $region34: #{c3d_smart_forward.6} parent=31 // pred_check_branch
        %516 = sbr.rel (%p514) target = $region36
      $region35: #{c3d_smart_forward.6} parent=31 // pred_region
        %s517 = smul.u32 32, %s14
      $region36: #{c3d_smart_forward.6} parent=31 // pred_fallthru
        _
    $region32: #{c3d_smart_forward.6} parent=5 // pred_fallthru
      _
    %p518 = scmp.le.s32.totalorder 2, %s9
    // Predicated region
    $region37: #{c3d_smart_forward.6} parent=5 // pred_check
      %p519 = pneg %p518
    $region38: #{c3d_smart_forward.6} parent=5 // pred_check_branch
      %521 = sbr.rel (%p519) target = $region40
    $region39: #{c3d_smart_forward.6} parent=5 // pred_region
      %s522 = ssub.s32 %s9, 2
      // Predicated region
      $region41: #{c3d_smart_forward.6} parent=39 // pred_check
        %p523 = pneg %p106
      $region42: #{c3d_smart_forward.6} parent=39 // pred_check_branch
        %525 = sbr.rel (%p523) target = $region44
      $region43: #{c3d_smart_forward.6} parent=39 // pred_region
        %s526 = smul.u32 32, %s15
        %p527 = scmp.lt.s32.totalorder %s526, 95
        %s528 = scalar_select %p527, %s526, 95
        %s529 = smul.addr %s528, 4
        %s530 = scalar_lea.vmem %s3, %s529
      $region44: #{c3d_smart_forward.6} parent=39 // pred_fallthru
        _
    $region40: #{c3d_smart_forward.6} parent=5 // pred_fallthru
      _
  $region6: #{c3d_smart_forward.6} parent=0 // loop_footer
    %s13 = sadd.s32 1, %s9
  $region7: #{c3d_smart_forward.6} parent=0 // loop_footer_branch
    %8 = sbr.rel target = $region3
  $region8: #{c3d_smart_forward.6} parent=0 // loop_exit
    _

// kernel: c3d_smart_forward.5
$region0: #{c3d_smart_forward.5}
  #allocation0 [shape = 'u32[]', space=smem, size = 0x4, offset = 0x4, fixed_abs, tag = 'smem constant byte address 0x4 - core index']
  #allocation1 [shape = 'u32[144,128]{1,0:T(1,128)}', space=vmem, size = 0x12000, scoped, tag = 'internal scratch']
  %s0 = inlined_call_operand.vmem [shape: bf16[768,108], index: 0, kind: input, shape index: {}]
  %s1 = inlined_call_operand.vmem [shape: bf16[108,32], index: 1, kind: input, shape index: {}]
  %s2 = inlined_call_operand.vmem [shape: f32[1,32], index: 2, kind: input, shape index: {}]
  %s3 = inlined_call_operand.vmem [shape: bf16[768,32], index: 3, kind: output, shape index: {0}]
  %s4 = inlined_call_operand.vmem [shape: f32[3,2,32], index: 4, kind: output, shape index: {1}]
  %5 = xla_tuple %s3, %s4
  %s6 = sld [smem:[#allocation0]]
  $region53: #{c3d_smart_forward.5} parent=0
    _
  %s8 = ssub.s32 1, %s6
  %s9 = scalar_select 0, %s8, %s6
  loop: start=0, step=1, limit=5
  $region2: #{c3d_smart_forward.5} parent=0 // loop_pre_header
    _
  $region3: #{c3d_smart_forward.5} parent=0 // loop_header
    %s11 = sphi 0, %s15
    %p12 = scmp.ge.s32.totalorder %s11, 5
    %s21 = sphi 0, %s23
    %s24 = sphi 0, %s21
    %s25 = sphi 0, %s24
    %s41 = sphi 0, %s25
    %s45 = sphi 0, %s45
    %s47 = sphi 0, %s45
    %s48 = sphi 0, %s47
    %s62 = sphi 0, %s48
    %s66 = sphi 0, %s66
    %s68 = sphi 0, %s66
    %s69 = sphi 0, %s68
    %s83 = sphi 0, %s69
    %s89 = sphi 0, %s91
    %s92 = sphi 0, %s89
    %s93 = sphi 0, %s92
    %s109 = sphi 0, %s93
    %s115 = sphi 0, %s117
    %s118 = sphi 0, %s115
    %s119 = sphi 0, %s118
    %s135 = sphi 0, %s119
  $region4: #{c3d_smart_forward.5} parent=0 // loop_header_branch
    %14 = sbr.rel (%p12) target = $region8
  $region5: #{c3d_smart_forward.5} parent=0 // loop_body
    %s16 = ssub.s32 %s11, 1
    %s17 = ssub.s32 %s11, 2
    %s18 = sadd.s32 %s11, 1
    %s19 = ssub.s32 %s11, %s18
    %p20 = scmp.eq.s32.totalorder %s19, 0
    %s22 = sadd.s32 %s21, 1
    %s23 = scalar_select %p20, %s21, %s22
    %p26 = pneg %p20
    %p27 = scmp.eq.s32.totalorder %s11, 2
    %p28 = por %p26, %p27
    %p29 = scmp.ne.s32.totalorder %s21, %s24
    %p30 = scmp.eq.s32.totalorder %s11, 0
    %p31 = por %p29, %p30
    %p32 = scmp.ne.s32.totalorder %s21, %s24
    %p33 = scmp.eq.s32.totalorder %s16, 2
    %p34 = por %p32, %p33
    %p35 = scmp.ne.s32.totalorder %s24, %s25
    %p36 = scmp.eq.s32.totalorder %s16, 0
    %p37 = por %p35, %p36
    %p38 = scmp.ne.s32.totalorder %s24, %s25
    %p39 = scmp.eq.s32.totalorder %s17, 2
    %p40 = por %p38, %p39
    %p42 = scmp.ne.s32.totalorder %s25, %s41
    %p43 = scmp.eq.s32.totalorder %s17, 0
    %p44 = por %p42, %p43
    %s46 = sadd.s32 %s45, 1
    %p49 = scmp.eq.s32.totalorder %s11, 2
    %p50 = scmp.ne.s32.totalorder %s45, %s47
    %p51 = scmp.eq.s32.totalorder %s11, 0
    %p52 = por %p50, %p51
    %p53 = scmp.ne.s32.totalorder %s45, %s47
    %p54 = scmp.eq.s32.totalorder %s16, 2
    %p55 = por %p53, %p54
    %p56 = scmp.ne.s32.totalorder %s47, %s48
    %p57 = scmp.eq.s32.totalorder %s16, 0
    %p58 = por %p56, %p57
    %p59 = scmp.ne.s32.totalorder %s47, %s48
    %p60 = scmp.eq.s32.totalorder %s17, 2
    %p61 = por %p59, %p60
    %p63 = scmp.ne.s32.totalorder %s48, %s62
    %p64 = scmp.eq.s32.totalorder %s17, 0
    %p65 = por %p63, %p64
    %s67 = sadd.s32 %s66, 1
    %p70 = scmp.eq.s32.totalorder %s11, 2
    %p71 = scmp.ne.s32.totalorder %s66, %s68
    %p72 = scmp.eq.s32.totalorder %s11, 0
    %p73 = por %p71, %p72
    %p74 = scmp.ne.s32.totalorder %s66, %s68
    %p75 = scmp.eq.s32.totalorder %s16, 2
    %p76 = por %p74, %p75
    %p77 = scmp.ne.s32.totalorder %s68, %s69
    %p78 = scmp.eq.s32.totalorder %s16, 0
    %p79 = por %p77, %p78
    %p80 = scmp.ne.s32.totalorder %s68, %s69
    %p81 = scmp.eq.s32.totalorder %s17, 2
    %p82 = por %p80, %p81
    %p84 = scmp.ne.s32.totalorder %s69, %s83
    %p85 = scmp.eq.s32.totalorder %s17, 0
    %p86 = por %p84, %p85
    %s87 = ssub.s32 %s11, %s18
    %p88 = scmp.eq.s32.totalorder %s87, 0
    %s90 = sadd.s32 %s89, 1
    %s91 = scalar_select %p88, %s89, %s90
    %p94 = pneg %p88
    %p95 = scmp.eq.s32.totalorder %s11, 2
    %p96 = por %p94, %p95
    %p97 = scmp.ne.s32.totalorder %s89, %s92
    %p98 = scmp.eq.s32.totalorder %s11, 0
    %p99 = por %p97, %p98
    %p100 = scmp.ne.s32.totalorder %s89, %s92
    %p101 = scmp.eq.s32.totalorder %s16, 2
    %p102 = por %p100, %p101
    %p103 = scmp.ne.s32.totalorder %s92, %s93
    %p104 = scmp.eq.s32.totalorder %s16, 0
    %p105 = por %p103, %p104
    %p106 = scmp.ne.s32.totalorder %s92, %s93
    %p107 = scmp.eq.s32.totalorder %s17, 2
    %p108 = por %p106, %p107
    %p110 = scmp.ne.s32.totalorder %s93, %s109
    %p111 = scmp.eq.s32.totalorder %s17, 0
    %p112 = por %p110, %p111
    %s113 = ssub.s32 %s11, %s18
    %p114 = scmp.eq.s32.totalorder %s113, 0
    %s116 = sadd.s32 %s115, 1
    %s117 = scalar_select %p114, %s115, %s116
    %p120 = pneg %p114
    %p121 = scmp.eq.s32.totalorder %s11, 2
    %p122 = por %p120, %p121
    %p123 = scmp.ne.s32.totalorder %s115, %s118
    %p124 = scmp.eq.s32.totalorder %s11, 0
    %p125 = por %p123, %p124
    %p126 = scmp.ne.s32.totalorder %s115, %s118
    %p127 = scmp.eq.s32.totalorder %s16, 2
    %p128 = por %p126, %p127
    %p129 = scmp.ne.s32.totalorder %s118, %s119
    %p130 = scmp.eq.s32.totalorder %s16, 0
    %p131 = por %p129, %p130
    %p132 = scmp.ne.s32.totalorder %s118, %s119
    %p133 = scmp.eq.s32.totalorder %s17, 2
    %p134 = por %p132, %p133
    %p136 = scmp.ne.s32.totalorder %s119, %s135
    %p137 = scmp.eq.s32.totalorder %s17, 0
    %p138 = por %p136, %p137
    %p139 = scmp.le.s32.totalorder 1, %s11
    %p140 = scmp.lt.s32.totalorder %s11, 4
    %p141 = pnand %p139, %p140
    %p142 = pneg %p141
    // Predicated region
    $region9: #{c3d_smart_forward.5} parent=5 // pred_check
      _
    $region10: #{c3d_smart_forward.5} parent=5 // pred_check_branch
      %144 = sbr.rel (%p141) target = $region12
    $region11: #{c3d_smart_forward.5} parent=5 // pred_region
      %s145 = ssub.s32 %s11, 1
      // Predicated region
      $region13: #{c3d_smart_forward.5} parent=11 // pred_check
        %p146 = pneg %p58
      $region14: #{c3d_smart_forward.5} parent=11 // pred_check_branch
        %148 = sbr.rel (%p146) target = $region16
      $region15: #{c3d_smart_forward.5} parent=11 // pred_region
        _
      $region16: #{c3d_smart_forward.5} parent=11 // pred_fallthru
        _
      // Predicated region
      $region17: #{c3d_smart_forward.5} parent=11 // pred_check
        %p149 = pneg %p79
      $region18: #{c3d_smart_forward.5} parent=11 // pred_check_branch
        %151 = sbr.rel (%p149) target = $region20
      $region19: #{c3d_smart_forward.5} parent=11 // pred_region
        _
      $region20: #{c3d_smart_forward.5} parent=11 // pred_fallthru
        _
    $region12: #{c3d_smart_forward.5} parent=5 // pred_fallthru
      _
    %p152 = scmp.lt.s32.totalorder %s11, 3
    // Predicated region
    $region21: #{c3d_smart_forward.5} parent=5 // pred_check
      %p153 = pneg %p152
    $region22: #{c3d_smart_forward.5} parent=5 // pred_check_branch
      %155 = sbr.rel (%p153) target = $region24
    $region23: #{c3d_smart_forward.5} parent=5 // pred_region
      // Predicated region
      $region25: #{c3d_smart_forward.5} parent=23 // pred_check
        %p156 = pneg %p31
      $region26: #{c3d_smart_forward.5} parent=23 // pred_check_branch
        %158 = sbr.rel (%p156) target = $region28
      $region27: #{c3d_smart_forward.5} parent=23 // pred_region
        %s159 = smul.u32 32, %s11
        %p160 = scmp.lt.s32.totalorder %s159, 95
        %s161 = scalar_select %p160, %s159, 95
        %s162 = smul.addr %s161, 4
        %s163 = scalar_lea.vmem %s0, %s162
        %s164 = smul.u32 32, %s11
      $region28: #{c3d_smart_forward.5} parent=23 // pred_fallthru
        _
    $region24: #{c3d_smart_forward.5} parent=5 // pred_fallthru
      _
    %p165 = scmp.le.s32.totalorder 1, %s11
    %p166 = scmp.lt.s32.totalorder %s11, 4
    %p167 = pnand %p165, %p166
    %p168 = pneg %p167
    // Predicated region
    $region29: #{c3d_smart_forward.5} parent=5 // pred_check
      _
    $region30: #{c3d_smart_forward.5} parent=5 // pred_check_branch
      %170 = sbr.rel (%p167) target = $region32
    $region31: #{c3d_smart_forward.5} parent=5 // pred_region
      %s171 = ssub.s32 %s11, 1
      %s172 = smul.u32 32, %s16
      %p173 = scmp.lt.s32.totalorder %s172, 95
      %s174 = scalar_select %p173, %s172, 95
      %s175 = smul.addr %s174, 4
      %s176 = scalar_lea.vmem %s0, %s175
      %p177 = pneg %p37
      %p178 = pneg %p34
      %p179 = pneg %p58
      %p180 = pneg %p55
      %p181 = pneg %p79
      %p182 = pneg %p76
      %p183 = pneg %p105
      %p184 = pneg %p102
      %s185 = smul.u32 32, %s16
      %p186 = scmp.lt.s32.totalorder %s185, 95
      %s187 = scalar_select %p186, %s185, 95
      %s188 = smul.addr %s187, 4
      %s189 = scalar_lea.vmem %s3, %s188
      %p190 = pneg %p131
      %p191 = pneg %p128
      %p192 = scmp.lt.s32.totalorder %s16, 2
      %s193 = scalar_select %p192, %s16, 2
      %s194 = smul.addr %s193, 2
      %s195 = scalar_lea.vmem %s4, %s194
      %s196 = smul.u32 32, %s16
      %p197 = scmp.lt.s32.totalorder %s196, 95
      %s198 = scalar_select %p197, %s196, 95
      %s199 = smul.addr %s198, 4
      %s200 = scalar_lea.vmem %s0, %s199
      %s201 = smul.u32 32, %s16
      %s202 = smul.u32 32, %s16
      %p203 = scmp.lt.s32.totalorder %s202, 95
      %s204 = scalar_select %p203, %s202, 95
      %s205 = smul.addr %s204, 4
      %s206 = scalar_lea.vmem %s3, %s205
      %s207 = smul.u32 32, %s16
      %p208 = scmp.lt.s32.totalorder %s16, 2
      %s209 = scalar_select %p208, %s16, 2
      %s210 = smul.addr %s209, 2
      %s211 = scalar_lea.vmem %s4, %s210
      %v213 = vld [vmem:[%s200] sm:$0xf]
      %v214 = vld [vmem:[%s200 + $0x4] sm:$0xf]
      %v215 = vld [vmem:[%s200 + $0x8] sm:$0xf]
      %v216 = vld [vmem:[%s200 + $0xc] sm:$0xf]
      %v217 = vld [vmem:[%s200 + $0x10] sm:$0xf]
      %v218 = vld [vmem:[%s200 + $0x14] sm:$0xf]
      %v219 = vld [vmem:[%s200 + $0x18] sm:$0xf]
      %v220 = vld [vmem:[%s200 + $0x1c] sm:$0xf]
      %v221 = vld [vmem:[%s200 + $0x20] sm:$0xf]
      %v222 = vld [vmem:[%s200 + $0x24] sm:$0xf]
      %v223 = vld [vmem:[%s200 + $0x28] sm:$0xf]
      %v224 = vld [vmem:[%s200 + $0x2c] sm:$0xf]
      %v225 = vld [vmem:[%s200 + $0x30] sm:$0xf]
      %v226 = vld [vmem:[%s200 + $0x34] sm:$0xf]
      %v227 = vld [vmem:[%s200 + $0x38] sm:$0xf]
      %v228 = vld [vmem:[%s200 + $0x3c] sm:$0xf]
      %v229 = vld [vmem:[%s200 + $0x40] sm:$0xf]
      %v230 = vld [vmem:[%s200 + $0x44] sm:$0xf]
      %v231 = vld [vmem:[%s200 + $0x48] sm:$0xf]
      %v232 = vld [vmem:[%s200 + $0x4c] sm:$0xf]
      %v233 = vld [vmem:[%s200 + $0x50] sm:$0xf]
      %v234 = vld [vmem:[%s200 + $0x54] sm:$0xf]
      %v235 = vld [vmem:[%s200 + $0x58] sm:$0xf]
      %v236 = vld [vmem:[%s200 + $0x5c] sm:$0xf]
      %v237 = vld [vmem:[%s200 + $0x60] sm:$0xf]
      %v238 = vld [vmem:[%s200 + $0x64] sm:$0xf]
      %v239 = vld [vmem:[%s200 + $0x68] sm:$0xf]
      %v240 = vld [vmem:[%s200 + $0x6c] sm:$0xf]
      %v241 = vld [vmem:[%s200 + $0x70] sm:$0xf]
      %v242 = vld [vmem:[%s200 + $0x74] sm:$0xf]
      %v243 = vld [vmem:[%s200 + $0x78] sm:$0xf]
      %v244 = vld [vmem:[%s200 + $0x7c] sm:$0xf]
      %v245 = vld [vmem:[%s1] sm:$0xf]
      %v246 = vld [vmem:[%s1 + $0x4] sm:$0xf]
      %v247 = vld [vmem:[%s1 + $0x8] sm:$0xf]
      %v248 = vld [vmem:[%s1 + $0xc] sm:$0xf]
      %v249 = vld [vmem:[%s1 + $0x10] sm:$0xf]
      %v250 = vld [vmem:[%s1 + $0x14] sm:$0xf]
      %v251 = vld [vmem:[%s1 + $0x18] sm:$0xf]
      %v252 = vld [vmem:[%s1 + $0x1c] sm:$0xf]
      %v253 = vld [vmem:[%s1 + $0x20] sm:$0xf]
      %v254 = vld [vmem:[%s1 + $0x24] sm:$0xf]
      %v255 = vld [vmem:[%s1 + $0x28] sm:$0xf]
      %v256 = vld [vmem:[%s1 + $0x2c] sm:$0xf]
      %v257 = vld [vmem:[%s1 + $0x30] sm:$0xf]
      %v258 = vld [vmem:[%s1 + $0x34] sm:$0x3]
      %v259 = vld [vmem:[%s2] sm:$0x1]
      %v261 = vlaneseq
      %v262 = vshrl.u32 %v261, 7
      %v263 = vsub.s32 0, %v262
      %v264 = vrot.slane %v259, %v263
      %v298 = vunpack.c.l.b16 %v213
      %v299 = vunpack.c.l.b16 %v214
      %v300 = vunpack.c.l.b16 %v215
      %v301 = vunpack.c.l.b16 %v216
      %v302 = vunpack.c.l.b16 %v217
      %v303 = vunpack.c.l.b16 %v218
      %v304 = vunpack.c.l.b16 %v219
      %v305 = vunpack.c.l.b16 %v220
      %v306 = vunpack.c.l.b16 %v221
      %v307 = vunpack.c.l.b16 %v222
      %v308 = vunpack.c.l.b16 %v223
      %v309 = vunpack.c.l.b16 %v224
      %v310 = vunpack.c.l.b16 %v225
      %v311 = vunpack.c.l.b16 %v226
      %v312 = vunpack.c.l.b16 %v227
      %v313 = vunpack.c.l.b16 %v228
      %v314 = vunpack.c.l.b16 %v229
      %v315 = vunpack.c.l.b16 %v230
      %v316 = vunpack.c.l.b16 %v231
      %v317 = vunpack.c.l.b16 %v232
      %v318 = vunpack.c.l.b16 %v233
      %v319 = vunpack.c.l.b16 %v234
      %v320 = vunpack.c.l.b16 %v235
      %v321 = vunpack.c.l.b16 %v236
      %v322 = vunpack.c.l.b16 %v237
      %v323 = vunpack.c.l.b16 %v238
      %v324 = vunpack.c.l.b16 %v239
      %v325 = vunpack.c.l.b16 %v240
      %v326 = vunpack.c.l.b16 %v241
      %v327 = vunpack.c.l.b16 %v242
      %v328 = vunpack.c.l.b16 %v243
      %v329 = vunpack.c.l.b16 %v244
      %v330 = vpack.c.b16 %v299, %v298
      %v331 = vpack.c.b16 %v301, %v300
      %v332 = vpack.c.b16 %v303, %v302
      %v333 = vpack.c.b16 %v305, %v304
      %v334 = vpack.c.b16 %v307, %v306
      %v335 = vpack.c.b16 %v309, %v308
      %v336 = vpack.c.b16 %v311, %v310
      %v337 = vpack.c.b16 %v313, %v312
      %v338 = vpack.c.b16 %v315, %v314
      %v339 = vpack.c.b16 %v317, %v316
      %v340 = vpack.c.b16 %v319, %v318
      %v341 = vpack.c.b16 %v321, %v320
      %v342 = vpack.c.b16 %v323, %v322
      %v343 = vpack.c.b16 %v325, %v324
      %v344 = vpack.c.b16 %v327, %v326
      %v345 = vpack.c.b16 %v329, %v328
      %v360 = vunpack.c.l.b16 %v245
      %v361 = vunpack.c.l.b16 %v246
      %v362 = vunpack.c.l.b16 %v247
      %v363 = vunpack.c.l.b16 %v248
      %v364 = vunpack.c.l.b16 %v249
      %v365 = vunpack.c.l.b16 %v250
      %v366 = vunpack.c.l.b16 %v251
      %v367 = vunpack.c.l.b16 %v252
      %v368 = vunpack.c.l.b16 %v253
      %v369 = vunpack.c.l.b16 %v254
      %v370 = vunpack.c.l.b16 %v255
      %v371 = vunpack.c.l.b16 %v256
      %v372 = vunpack.c.l.b16 %v257
      %v373 = vunpack.c.l.b16 %v258
      %v374 = vpack.c.b16 %v361, %v360
      %v375 = vpack.c.b16 %v363, %v362
      %v376 = vpack.c.b16 %v365, %v364
      %v377 = vpack.c.b16 %v367, %v366
      %v378 = vpack.c.b16 %v369, %v368
      %v379 = vpack.c.b16 %v371, %v370
      %v380 = vpack.c.b16 %v373, %v372
      %vm387 = vcmask 883712
      %v389 = vsel %vm387, %v330, 0
      %v392 = vsel %vm387, %v331, 0
      %v395 = vsel %vm387, %v332, 0
      %v398 = vsel %vm387, %v333, 0
      %v401 = vsel %vm387, %v334, 0
      %v404 = vsel %vm387, %v335, 0
      %v407 = vsel %vm387, %v336, 0
      %v410 = vsel %vm387, %v337, 0
      %v413 = vsel %vm387, %v338, 0
      %v416 = vsel %vm387, %v339, 0
      %v419 = vsel %vm387, %v340, 0
      %v422 = vsel %vm387, %v341, 0
      %v425 = vsel %vm387, %v342, 0
      %v428 = vsel %vm387, %v343, 0
      %v431 = vsel %vm387, %v344, 0
      %v434 = vsel %vm387, %v345, 0
      %vm436 = vcmask 1045504
      %v438 = vsel %vm436, %v380, 0
      %440 = vmatprep.subr.bf16.mxu0 0
      %441 = vmatpush1.bf16.msra.mxu0 0
      %442 = vmatprep.subr.bf16.mxu0 0
      %443 = vmatpush1.bf16.msra.mxu0 %v438
      %444 = vmatprep.subr.bf16.mxu0 0
      %445 = vmatpush1.bf16.msra.mxu0 %v379
      %446 = vmatprep.subr.bf16.mxu0 0
      %447 = vmatpush1.bf16.msra.mxu0 %v378
      %448 = vmatprep.subr.bf16.mxu0 0
      %449 = vmatpush1.bf16.msra.mxu0 %v377
      %450 = vmatprep.subr.bf16.mxu0 0
      %451 = vmatpush1.bf16.msra.mxu0 %v376
      %452 = vmatprep.subr.bf16.mxu0 0
      %453 = vmatpush1.bf16.msra.mxu0 %v375
      %454 = vmatprep.subr.bf16.mxu0 0
      %455 = vmatpush1.bf16.msra.mxu0 %v374
      %456 = vmatprep.subr.bf16.mxu0 0
      %457 = vmatpush2.bf16.msra.mxu0 0
      %458 = vmatprep.subr.bf16.mxu0 0
      %459 = vmatpush2.bf16.msra.mxu0 0
      %460 = vmatprep.subr.bf16.mxu0 0
      %461 = vmatpush2.bf16.msra.mxu0 0
      %462 = vmatprep.subr.bf16.mxu0 0
      %463 = vmatpush2.bf16.msra.mxu0 0
      %464 = vmatprep.subr.bf16.mxu0 0
      %465 = vmatpush2.bf16.msra.mxu0 0
      %466 = vmatprep.subr.bf16.mxu0 0
      %467 = vmatpush2.bf16.msra.mxu0 0
      %468 = vmatprep.subr.bf16.mxu0 0
      %469 = vmatpush2.bf16.msra.mxu0 0
      %470 = vmatprep.subr.bf16.mxu0 0
      %471 = vmatpush2.bf16.msra.mxu0 0
      %472 = vmatprep.mubr.bf16.mxu0 0
      %473 = vmatmul.mubr.bf16.gmra.mxu0 %v389
      %v474 = vpop.f32.mrf.mxu0
      %v475 = vadd.f32 %v264, %v474
      %v476 = vpop.f32.mrf.mxu0
      %v477 = vpop.f32.mrf.mxu0
      %v478 = vadd.f32 %v264, %v477
      %v479 = vpop.f32.mrf.mxu0
      %480 = vmatprep.mubr.bf16.mxu0 0
      %481 = vmatmul.mubr.bf16.gmra.mxu0 %v392
      %v482 = vpop.f32.mrf.mxu0
      %v483 = vadd.f32 %v264, %v482
      %v484 = vpop.f32.mrf.mxu0
      %v485 = vpop.f32.mrf.mxu0
      %v486 = vadd.f32 %v264, %v485
      %v487 = vpop.f32.mrf.mxu0
      %488 = vmatprep.mubr.bf16.mxu0 0
      %489 = vmatmul.mubr.bf16.gmra.mxu0 %v395
      %v490 = vpop.f32.mrf.mxu0
      %v491 = vadd.f32 %v264, %v490
      %v492 = vpop.f32.mrf.mxu0
      %v493 = vpop.f32.mrf.mxu0
      %v494 = vadd.f32 %v264, %v493
      %v495 = vpop.f32.mrf.mxu0
      %496 = vmatprep.mubr.bf16.mxu0 0
      %497 = vmatmul.mubr.bf16.gmra.mxu0 %v398
      %v498 = vpop.f32.mrf.mxu0
      %v499 = vadd.f32 %v264, %v498
      %v500 = vpop.f32.mrf.mxu0
      %v501 = vpop.f32.mrf.mxu0
      %v502 = vadd.f32 %v264, %v501
      %v503 = vpop.f32.mrf.mxu0
      %504 = vmatprep.mubr.bf16.mxu0 0
      %505 = vmatmul.mubr.bf16.gmra.mxu0 %v401
      %v506 = vpop.f32.mrf.mxu0
      %v507 = vadd.f32 %v264, %v506
      %v508 = vpop.f32.mrf.mxu0
      %v509 = vpop.f32.mrf.mxu0
      %v510 = vadd.f32 %v264, %v509
      %v511 = vpop.f32.mrf.mxu0
      %512 = vmatprep.mubr.bf16.mxu0 0
      %513 = vmatmul.mubr.bf16.gmra.mxu0 %v404
      %v514 = vpop.f32.mrf.mxu0
      %v515 = vadd.f32 %v264, %v514
      %v516 = vpop.f32.mrf.mxu0
      %v517 = vpop.f32.mrf.mxu0
      %v518 = vadd.f32 %v264, %v517
      %v519 = vpop.f32.mrf.mxu0
      %520 = vmatprep.mubr.bf16.mxu0 0
      %521 = vmatmul.mubr.bf16.gmra.mxu0 %v407
      %v522 = vpop.f32.mrf.mxu0
      %v523 = vadd.f32 %v264, %v522
      %v524 = vpop.f32.mrf.mxu0
      %v525 = vpop.f32.mrf.mxu0
      %v526 = vadd.f32 %v264, %v525
      %v527 = vpop.f32.mrf.mxu0
      %528 = vmatprep.mubr.bf16.mxu0 0
      %529 = vmatmul.mubr.bf16.gmra.mxu0 %v410
      %v530 = vpop.f32.mrf.mxu0
      %v531 = vadd.f32 %v264, %v530
      %v532 = vpop.f32.mrf.mxu0
      %v533 = vpop.f32.mrf.mxu0
      %v534 = vadd.f32 %v264, %v533
      %v535 = vpop.f32.mrf.mxu0
      %536 = vmatprep.mubr.bf16.mxu0 0
      %537 = vmatmul.mubr.bf16.gmra.mxu0 %v413
      %v538 = vpop.f32.mrf.mxu0
      %v539 = vadd.f32 %v264, %v538
      %v540 = vpop.f32.mrf.mxu0
      %v541 = vpop.f32.mrf.mxu0
      %v542 = vadd.f32 %v264, %v541
      %v543 = vpop.f32.mrf.mxu0
      %544 = vmatprep.mubr.bf16.mxu0 0
      %545 = vmatmul.mubr.bf16.gmra.mxu0 %v416
      %v546 = vpop.f32.mrf.mxu0
      %v547 = vadd.f32 %v264, %v546
      %v548 = vpop.f32.mrf.mxu0
      %v549 = vpop.f32.mrf.mxu0
      %v550 = vadd.f32 %v264, %v549
      %v551 = vpop.f32.mrf.mxu0
      %552 = vmatprep.mubr.bf16.mxu0 0
      %553 = vmatmul.mubr.bf16.gmra.mxu0 %v419
      %v554 = vpop.f32.mrf.mxu0
      %v555 = vadd.f32 %v264, %v554
      %v556 = vpop.f32.mrf.mxu0
      %v557 = vpop.f32.mrf.mxu0
      %v558 = vadd.f32 %v264, %v557
      %v559 = vpop.f32.mrf.mxu0
      %560 = vmatprep.mubr.bf16.mxu0 0
      %561 = vmatmul.mubr.bf16.gmra.mxu0 %v422
      %v562 = vpop.f32.mrf.mxu0
      %v563 = vadd.f32 %v264, %v562
      %v564 = vpop.f32.mrf.mxu0
      %v565 = vpop.f32.mrf.mxu0
      %v566 = vadd.f32 %v264, %v565
      %v567 = vpop.f32.mrf.mxu0
      %568 = vmatprep.mubr.bf16.mxu0 0
      %569 = vmatmul.mubr.bf16.gmra.mxu0 %v425
      %v570 = vpop.f32.mrf.mxu0
      %v571 = vadd.f32 %v264, %v570
      %v572 = vpop.f32.mrf.mxu0
      %v573 = vpop.f32.mrf.mxu0
      %v574 = vadd.f32 %v264, %v573
      %v575 = vpop.f32.mrf.mxu0
      %576 = vmatprep.mubr.bf16.mxu0 0
      %577 = vmatmul.mubr.bf16.gmra.mxu0 %v428
      %v578 = vpop.f32.mrf.mxu0
      %v579 = vadd.f32 %v264, %v578
      %v580 = vpop.f32.mrf.mxu0
      %v581 = vpop.f32.mrf.mxu0
      %v582 = vadd.f32 %v264, %v581
      %v583 = vpop.f32.mrf.mxu0
      %584 = vmatprep.mubr.bf16.mxu0 0
      %585 = vmatmul.mubr.bf16.gmra.mxu0 %v431
      %v586 = vpop.f32.mrf.mxu0
      %v587 = vadd.f32 %v264, %v586
      %v588 = vpop.f32.mrf.mxu0
      %v589 = vpop.f32.mrf.mxu0
      %v590 = vadd.f32 %v264, %v589
      %v591 = vpop.f32.mrf.mxu0
      %592 = vmatprep.mubr.bf16.mxu0 0
      %593 = vmatmul.mubr.bf16.gmra.mxu0 %v434
      %v594 = vpop.f32.mrf.mxu0
      %v595 = vadd.f32 %v264, %v594
      %v596 = vpop.f32.mrf.mxu0
      %v597 = vpop.f32.mrf.mxu0
      %v598 = vadd.f32 %v264, %v597
      %v599 = vpop.f32.mrf.mxu0
      %600 = vdwg.mxu0
      %v601 = vpack.c.bf16 %v478, %v475
      %v602 = vpack.c.bf16 %v486, %v483
      %v603 = vpack.c.bf16 %v494, %v491
      %v604 = vpack.c.bf16 %v502, %v499
      %v605 = vpack.c.bf16 %v510, %v507
      %v606 = vpack.c.bf16 %v518, %v515
      %v607 = vpack.c.bf16 %v526, %v523
      %v608 = vpack.c.bf16 %v534, %v531
      %v609 = vpack.c.bf16 %v542, %v539
      %v610 = vpack.c.bf16 %v550, %v547
      %v611 = vpack.c.bf16 %v558, %v555
      %v612 = vpack.c.bf16 %v566, %v563
      %v613 = vpack.c.bf16 %v574, %v571
      %v614 = vpack.c.bf16 %v582, %v579
      %v615 = vpack.c.bf16 %v590, %v587
      %v616 = vpack.c.bf16 %v598, %v595
      %v633 = vunpack.c.l.b16 %v601
      %v634 = vunpack.c.h.b16 %v601
      %v635 = vunpack.c.l.b16 %v602
      %v636 = vunpack.c.h.b16 %v602
      %v637 = vunpack.c.l.b16 %v603
      %v638 = vunpack.c.h.b16 %v603
      %v639 = vunpack.c.l.b16 %v604
      %v640 = vunpack.c.h.b16 %v604
      %v641 = vunpack.c.l.b16 %v605
      %v642 = vunpack.c.h.b16 %v605
      %v643 = vunpack.c.l.b16 %v606
      %v644 = vunpack.c.h.b16 %v606
      %v645 = vunpack.c.l.b16 %v607
      %v646 = vunpack.c.h.b16 %v607
      %v647 = vunpack.c.l.b16 %v608
      %v648 = vunpack.c.h.b16 %v608
      %v649 = vunpack.c.l.b16 %v609
      %v650 = vunpack.c.h.b16 %v609
      %v651 = vunpack.c.l.b16 %v610
      %v652 = vunpack.c.h.b16 %v610
      %v653 = vunpack.c.l.b16 %v611
      %v654 = vunpack.c.h.b16 %v611
      %v655 = vunpack.c.l.b16 %v612
      %v656 = vunpack.c.h.b16 %v612
      %v657 = vunpack.c.l.b16 %v613
      %v658 = vunpack.c.h.b16 %v613
      %v659 = vunpack.c.l.b16 %v614
      %v660 = vunpack.c.h.b16 %v614
      %v661 = vunpack.c.l.b16 %v615
      %v662 = vunpack.c.h.b16 %v615
      %v663 = vunpack.c.l.b16 %v616
      %v664 = vunpack.c.h.b16 %v616
      %v665 = vpack.c.b16 %v633, %v633
      %v666 = vpack.c.b16 %v634, %v634
      %v667 = vpack.c.b16 %v635, %v635
      %v668 = vpack.c.b16 %v636, %v636
      %v669 = vpack.c.b16 %v637, %v637
      %v670 = vpack.c.b16 %v638, %v638
      %v671 = vpack.c.b16 %v639, %v639
      %v672 = vpack.c.b16 %v640, %v640
      %v673 = vpack.c.b16 %v641, %v641
      %v674 = vpack.c.b16 %v642, %v642
      %v675 = vpack.c.b16 %v643, %v643
      %v676 = vpack.c.b16 %v644, %v644
      %v677 = vpack.c.b16 %v645, %v645
      %v678 = vpack.c.b16 %v646, %v646
      %v679 = vpack.c.b16 %v647, %v647
      %v680 = vpack.c.b16 %v648, %v648
      %v681 = vpack.c.b16 %v649, %v649
      %v682 = vpack.c.b16 %v650, %v650
      %v683 = vpack.c.b16 %v651, %v651
      %v684 = vpack.c.b16 %v652, %v652
      %v685 = vpack.c.b16 %v653, %v653
      %v686 = vpack.c.b16 %v654, %v654
      %v687 = vpack.c.b16 %v655, %v655
      %v688 = vpack.c.b16 %v656, %v656
      %v689 = vpack.c.b16 %v657, %v657
      %v690 = vpack.c.b16 %v658, %v658
      %v691 = vpack.c.b16 %v659, %v659
      %v692 = vpack.c.b16 %v660, %v660
      %v693 = vpack.c.b16 %v661, %v661
      %v694 = vpack.c.b16 %v662, %v662
      %v695 = vpack.c.b16 %v663, %v663
      %v696 = vpack.c.b16 %v664, %v664
      %vm729 = vcmask 257024
      %730 = vst.msk [vmem:[%s206] sm:$0xf] %vm729, %v665
      %731 = vst.msk [vmem:[%s206 + $0x4] sm:$0xf] %vm729, %v666
      %732 = vst.msk [vmem:[%s206 + $0x8] sm:$0xf] %vm729, %v667
      %733 = vst.msk [vmem:[%s206 + $0xc] sm:$0xf] %vm729, %v668
      %734 = vst.msk [vmem:[%s206 + $0x10] sm:$0xf] %vm729, %v669
      %735 = vst.msk [vmem:[%s206 + $0x14] sm:$0xf] %vm729, %v670
      %736 = vst.msk [vmem:[%s206 + $0x18] sm:$0xf] %vm729, %v671
      %737 = vst.msk [vmem:[%s206 + $0x1c] sm:$0xf] %vm729, %v672
      %738 = vst.msk [vmem:[%s206 + $0x20] sm:$0xf] %vm729, %v673
      %739 = vst.msk [vmem:[%s206 + $0x24] sm:$0xf] %vm729, %v674
      %740 = vst.msk [vmem:[%s206 + $0x28] sm:$0xf] %vm729, %v675
      %741 = vst.msk [vmem:[%s206 + $0x2c] sm:$0xf] %vm729, %v676
      %742 = vst.msk [vmem:[%s206 + $0x30] sm:$0xf] %vm729, %v677
      %743 = vst.msk [vmem:[%s206 + $0x34] sm:$0xf] %vm729, %v678
      %744 = vst.msk [vmem:[%s206 + $0x38] sm:$0xf] %vm729, %v679
      %745 = vst.msk [vmem:[%s206 + $0x3c] sm:$0xf] %vm729, %v680
      %746 = vst.msk [vmem:[%s206 + $0x40] sm:$0xf] %vm729, %v681
      %747 = vst.msk [vmem:[%s206 + $0x44] sm:$0xf] %vm729, %v682
      %748 = vst.msk [vmem:[%s206 + $0x48] sm:$0xf] %vm729, %v683
      %749 = vst.msk [vmem:[%s206 + $0x4c] sm:$0xf] %vm729, %v684
      %750 = vst.msk [vmem:[%s206 + $0x50] sm:$0xf] %vm729, %v685
      %751 = vst.msk [vmem:[%s206 + $0x54] sm:$0xf] %vm729, %v686
      %752 = vst.msk [vmem:[%s206 + $0x58] sm:$0xf] %vm729, %v687
      %753 = vst.msk [vmem:[%s206 + $0x5c] sm:$0xf] %vm729, %v688
      %754 = vst.msk [vmem:[%s206 + $0x60] sm:$0xf] %vm729, %v689
      %755 = vst.msk [vmem:[%s206 + $0x64] sm:$0xf] %vm729, %v690
      %756 = vst.msk [vmem:[%s206 + $0x68] sm:$0xf] %vm729, %v691
      %757 = vst.msk [vmem:[%s206 + $0x6c] sm:$0xf] %vm729, %v692
      %758 = vst.msk [vmem:[%s206 + $0x70] sm:$0xf] %vm729, %v693
      %759 = vst.msk [vmem:[%s206 + $0x74] sm:$0xf] %vm729, %v694
      %760 = vst.msk [vmem:[%s206 + $0x78] sm:$0xf] %vm729, %v695
      %761 = vst.msk [vmem:[%s206 + $0x7c] sm:$0xf] %vm729, %v696
      %s762 = smul.u32 %s16, 256
      %v763 = vlaneseq
      %v764 = vshrl.u32 %v763, 7
      %v765 = vadd.s32 %v764, 8
      %v766 = vadd.s32 %v764, 16
      %v767 = vadd.s32 %v764, 24
      %v768 = vadd.s32 %v764, 32
      %v769 = vadd.s32 %v764, 40
      %v770 = vadd.s32 %v764, 48
      %v771 = vadd.s32 %v764, 56
      %v772 = vadd.s32 %v764, 64
      %v773 = vadd.s32 %v764, 72
      %v774 = vadd.s32 %v764, 80
      %v775 = vadd.s32 %v764, 88
      %v776 = vadd.s32 %v764, 96
      %v777 = vadd.s32 %v764, 104
      %v778 = vadd.s32 %v764, 112
      %v779 = vadd.s32 %v764, 120
      %v780 = vadd.s32 %v764, 128
      %v781 = vadd.s32 %v764, 136
      %v782 = vadd.s32 %v764, 144
      %v783 = vadd.s32 %v764, 152
      %v784 = vadd.s32 %v764, 160
      %v785 = vadd.s32 %v764, 168
      %v786 = vadd.s32 %v764, 176
      %v787 = vadd.s32 %v764, 184
      %v788 = vadd.s32 %v764, 192
      %v789 = vadd.s32 %v764, 200
      %v790 = vadd.s32 %v764, 208
      %v791 = vadd.s32 %v764, 216
      %v792 = vadd.s32 %v764, 224
      %v793 = vadd.s32 %v764, 232
      %v794 = vadd.s32 %v764, 240
      %v795 = vadd.s32 %v764, 248
      %v796 = vstv %s762
      %v797 = vadd.s32 %v796, %v764
      %v798 = vadd.s32 %v796, %v765
      %v799 = vadd.s32 %v796, %v766
      %v800 = vadd.s32 %v796, %v767
      %v801 = vadd.s32 %v796, %v768
      %v802 = vadd.s32 %v796, %v769
      %v803 = vadd.s32 %v796, %v770
      %v804 = vadd.s32 %v796, %v771
      %v805 = vadd.s32 %v796, %v772
      %v806 = vadd.s32 %v796, %v773
      %v807 = vadd.s32 %v796, %v774
      %v808 = vadd.s32 %v796, %v775
      %v809 = vadd.s32 %v796, %v776
      %v810 = vadd.s32 %v796, %v777
      %v811 = vadd.s32 %v796, %v778
      %v812 = vadd.s32 %v796, %v779
      %v813 = vadd.s32 %v796, %v780
      %v814 = vadd.s32 %v796, %v781
      %v815 = vadd.s32 %v796, %v782
      %v816 = vadd.s32 %v796, %v783
      %v817 = vadd.s32 %v796, %v784
      %v818 = vadd.s32 %v796, %v785
      %v819 = vadd.s32 %v796, %v786
      %v820 = vadd.s32 %v796, %v787
      %v821 = vadd.s32 %v796, %v788
      %v822 = vadd.s32 %v796, %v789
      %v823 = vadd.s32 %v796, %v790
      %v824 = vadd.s32 %v796, %v791
      %v825 = vadd.s32 %v796, %v792
      %v826 = vadd.s32 %v796, %v793
      %v827 = vadd.s32 %v796, %v794
      %v828 = vadd.s32 %v796, %v795
      %vm829 = vcmp.lt.s32.totalorder %v797, 640
      %vm830 = vcmp.lt.s32.totalorder %v798, 640
      %vm831 = vcmp.lt.s32.totalorder %v799, 640
      %vm832 = vcmp.lt.s32.totalorder %v800, 640
      %vm833 = vcmp.lt.s32.totalorder %v801, 640
      %vm834 = vcmp.lt.s32.totalorder %v802, 640
      %vm835 = vcmp.lt.s32.totalorder %v803, 640
      %vm836 = vcmp.lt.s32.totalorder %v804, 640
      %vm837 = vcmp.lt.s32.totalorder %v805, 640
      %vm838 = vcmp.lt.s32.totalorder %v806, 640
      %vm839 = vcmp.lt.s32.totalorder %v807, 640
      %vm840 = vcmp.lt.s32.totalorder %v808, 640
      %vm841 = vcmp.lt.s32.totalorder %v809, 640
      %vm842 = vcmp.lt.s32.totalorder %v810, 640
      %vm843 = vcmp.lt.s32.totalorder %v811, 640
      %vm844 = vcmp.lt.s32.totalorder %v812, 640
      %vm845 = vcmp.lt.s32.totalorder %v813, 640
      %vm846 = vcmp.lt.s32.totalorder %v814, 640
      %vm847 = vcmp.lt.s32.totalorder %v815, 640
      %vm848 = vcmp.lt.s32.totalorder %v816, 640
      %vm849 = vcmp.lt.s32.totalorder %v817, 640
      %vm850 = vcmp.lt.s32.totalorder %v818, 640
      %vm851 = vcmp.lt.s32.totalorder %v819, 640
      %vm852 = vcmp.lt.s32.totalorder %v820, 640
      %vm853 = vcmp.lt.s32.totalorder %v821, 640
      %vm854 = vcmp.lt.s32.totalorder %v822, 640
      %vm855 = vcmp.lt.s32.totalorder %v823, 640
      %vm856 = vcmp.lt.s32.totalorder %v824, 640
      %vm857 = vcmp.lt.s32.totalorder %v825, 640
      %vm858 = vcmp.lt.s32.totalorder %v826, 640
      %vm859 = vcmp.lt.s32.totalorder %v827, 640
      %vm860 = vcmp.lt.s32.totalorder %v828, 640
      %v861 = vsel %vm829, 1, 0
      %v862 = vsel %vm830, 1, 0
      %v863 = vsel %vm831, 1, 0
      %v864 = vsel %vm832, 1, 0
      %v865 = vsel %vm833, 1, 0
      %v866 = vsel %vm834, 1, 0
      %v867 = vsel %vm835, 1, 0
      %v868 = vsel %vm836, 1, 0
      %v869 = vsel %vm837, 1, 0
      %v870 = vsel %vm838, 1, 0
      %v871 = vsel %vm839, 1, 0
      %v872 = vsel %vm840, 1, 0
      %v873 = vsel %vm841, 1, 0
      %v874 = vsel %vm842, 1, 0
      %v875 = vsel %vm843, 1, 0
      %v876 = vsel %vm844, 1, 0
      %v877 = vsel %vm845, 1, 0
      %v878 = vsel %vm846, 1, 0
      %v879 = vsel %vm847, 1, 0
      %v880 = vsel %vm848, 1, 0
      %v881 = vsel %vm849, 1, 0
      %v882 = vsel %vm850, 1, 0
      %v883 = vsel %vm851, 1, 0
      %v884 = vsel %vm852, 1, 0
      %v885 = vsel %vm853, 1, 0
      %v886 = vsel %vm854, 1, 0
      %v887 = vsel %vm855, 1, 0
      %v888 = vsel %vm856, 1, 0
      %v889 = vsel %vm857, 1, 0
      %v890 = vsel %vm858, 1, 0
      %v891 = vsel %vm859, 1, 0
      %v892 = vsel %vm860, 1, 0
      %vm893 = vcmp.eq.s32.totalorder %v861, 1
      %vm894 = vcmp.eq.s32.totalorder %v862, 1
      %vm895 = vcmp.eq.s32.totalorder %v863, 1
      %vm896 = vcmp.eq.s32.totalorder %v864, 1
      %vm897 = vcmp.eq.s32.totalorder %v865, 1
      %vm898 = vcmp.eq.s32.totalorder %v866, 1
      %vm899 = vcmp.eq.s32.totalorder %v867, 1
      %vm900 = vcmp.eq.s32.totalorder %v868, 1
      %vm901 = vcmp.eq.s32.totalorder %v869, 1
      %vm902 = vcmp.eq.s32.totalorder %v870, 1
      %vm903 = vcmp.eq.s32.totalorder %v871, 1
      %vm904 = vcmp.eq.s32.totalorder %v872, 1
      %vm905 = vcmp.eq.s32.totalorder %v873, 1
      %vm906 = vcmp.eq.s32.totalorder %v874, 1
      %vm907 = vcmp.eq.s32.totalorder %v875, 1
      %vm908 = vcmp.eq.s32.totalorder %v876, 1
      %vm909 = vcmp.eq.s32.totalorder %v877, 1
      %vm910 = vcmp.eq.s32.totalorder %v878, 1
      %vm911 = vcmp.eq.s32.totalorder %v879, 1
      %vm912 = vcmp.eq.s32.totalorder %v880, 1
      %vm913 = vcmp.eq.s32.totalorder %v881, 1
      %vm914 = vcmp.eq.s32.totalorder %v882, 1
      %vm915 = vcmp.eq.s32.totalorder %v883, 1
      %vm916 = vcmp.eq.s32.totalorder %v884, 1
      %vm917 = vcmp.eq.s32.totalorder %v885, 1
      %vm918 = vcmp.eq.s32.totalorder %v886, 1
      %vm919 = vcmp.eq.s32.totalorder %v887, 1
      %vm920 = vcmp.eq.s32.totalorder %v888, 1
      %vm921 = vcmp.eq.s32.totalorder %v889, 1
      %vm922 = vcmp.eq.s32.totalorder %v890, 1
      %vm923 = vcmp.eq.s32.totalorder %v891, 1
      %vm924 = vcmp.eq.s32.totalorder %v892, 1
      %v925 = vsel %vm893, %v475, 0.0
      %v926 = vsel %vm894, %v478, 0.0
      %v927 = vsel %vm895, %v483, 0.0
      %v928 = vsel %vm896, %v486, 0.0
      %v929 = vsel %vm897, %v491, 0.0
      %v930 = vsel %vm898, %v494, 0.0
      %v931 = vsel %vm899, %v499, 0.0
      %v932 = vsel %vm900, %v502, 0.0
      %v933 = vsel %vm901, %v507, 0.0
      %v934 = vsel %vm902, %v510, 0.0
      %v935 = vsel %vm903, %v515, 0.0
      %v936 = vsel %vm904, %v518, 0.0
      %v937 = vsel %vm905, %v523, 0.0
      %v938 = vsel %vm906, %v526, 0.0
      %v939 = vsel %vm907, %v531, 0.0
      %v940 = vsel %vm908, %v534, 0.0
      %v941 = vsel %vm909, %v539, 0.0
      %v942 = vsel %vm910, %v542, 0.0
      %v943 = vsel %vm911, %v547, 0.0
      %v944 = vsel %vm912, %v550, 0.0
      %v945 = vsel %vm913, %v555, 0.0
      %v946 = vsel %vm914, %v558, 0.0
      %v947 = vsel %vm915, %v563, 0.0
      %v948 = vsel %vm916, %v566, 0.0
      %v949 = vsel %vm917, %v571, 0.0
      %v950 = vsel %vm918, %v574, 0.0
      %v951 = vsel %vm919, %v579, 0.0
      %v952 = vsel %vm920, %v582, 0.0
      %v953 = vsel %vm921, %v587, 0.0
      %v954 = vsel %vm922, %v590, 0.0
      %v955 = vsel %vm923, %v595, 0.0
      %v956 = vsel %vm924, %v598, 0.0
      %vm957 = vcmask 261120
      %v958 = vsel %vm957, %v925, 0.0
      %v959 = vsel %vm957, %v926, 0.0
      %v960 = vadd.f32 %v958, %v959
      %v961 = vsel %vm957, %v927, 0.0
      %v962 = vadd.f32 %v960, %v961
      %v963 = vsel %vm957, %v928, 0.0
      %v964 = vadd.f32 %v962, %v963
      %v965 = vsel %vm957, %v929, 0.0
      %v966 = vadd.f32 %v964, %v965
      %v967 = vsel %vm957, %v930, 0.0
      %v968 = vadd.f32 %v966, %v967
      %v969 = vsel %vm957, %v931, 0.0
      %v970 = vadd.f32 %v968, %v969
      %v971 = vsel %vm957, %v932, 0.0
      %v972 = vadd.f32 %v970, %v971
      %v973 = vsel %vm957, %v933, 0.0
      %v974 = vadd.f32 %v972, %v973
      %v975 = vsel %vm957, %v934, 0.0
      %v976 = vadd.f32 %v974, %v975
      %v977 = vsel %vm957, %v935, 0.0
      %v978 = vadd.f32 %v976, %v977
      %v979 = vsel %vm957, %v936, 0.0
      %v980 = vadd.f32 %v978, %v979
      %v981 = vsel %vm957, %v937, 0.0
      %v982 = vadd.f32 %v980, %v981
      %v983 = vsel %vm957, %v938, 0.0
      %v984 = vadd.f32 %v982, %v983
      %v985 = vsel %vm957, %v939, 0.0
      %v986 = vadd.f32 %v984, %v985
      %v987 = vsel %vm957, %v940, 0.0
      %v988 = vadd.f32 %v986, %v987
      %v989 = vsel %vm957, %v941, 0.0
      %v990 = vadd.f32 %v988, %v989
      %v991 = vsel %vm957, %v942, 0.0
      %v992 = vadd.f32 %v990, %v991
      %v993 = vsel %vm957, %v943, 0.0
      %v994 = vadd.f32 %v992, %v993
      %v995 = vsel %vm957, %v944, 0.0
      %v996 = vadd.f32 %v994, %v995
      %v997 = vsel %vm957, %v945, 0.0
      %v998 = vadd.f32 %v996, %v997
      %v999 = vsel %vm957, %v946, 0.0
      %v1000 = vadd.f32 %v998, %v999
      %v1001 = vsel %vm957, %v947, 0.0
      %v1002 = vadd.f32 %v1000, %v1001
      %v1003 = vsel %vm957, %v948, 0.0
      %v1004 = vadd.f32 %v1002, %v1003
      %v1005 = vsel %vm957, %v949, 0.0
      %v1006 = vadd.f32 %v1004, %v1005
      %v1007 = vsel %vm957, %v950, 0.0
      %v1008 = vadd.f32 %v1006, %v1007
      %v1009 = vsel %vm957, %v951, 0.0
      %v1010 = vadd.f32 %v1008, %v1009
      %v1011 = vsel %vm957, %v952, 0.0
      %v1012 = vadd.f32 %v1010, %v1011
      %v1013 = vsel %vm957, %v953, 0.0
      %v1014 = vadd.f32 %v1012, %v1013
      %v1015 = vsel %vm957, %v954, 0.0
      %v1016 = vadd.f32 %v1014, %v1015
      %v1017 = vsel %vm957, %v955, 0.0
      %v1018 = vadd.f32 %v1016, %v1017
      %v1019 = vsel %vm957, %v956, 0.0
      %v1020 = vadd.f32 %v1018, %v1019
      %v1021 = vrot.slane %v1020, 4
      %v1022 = vadd.f32 %v1020, %v1021
      %v1023 = vrot.slane %v1022, 2
      %v1024 = vadd.f32 %v1022, %v1023
      %v1025 = vrot.slane %v1024, 1
      %v1026 = vadd.f32 %v1024, %v1025
      %v1027 = vmul.f32 %v925, %v925
      %v1028 = vmul.f32 %v926, %v926
      %v1029 = vmul.f32 %v927, %v927
      %v1030 = vmul.f32 %v928, %v928
      %v1031 = vmul.f32 %v929, %v929
      %v1032 = vmul.f32 %v930, %v930
      %v1033 = vmul.f32 %v931, %v931
      %v1034 = vmul.f32 %v932, %v932
      %v1035 = vmul.f32 %v933, %v933
      %v1036 = vmul.f32 %v934, %v934
      %v1037 = vmul.f32 %v935, %v935
      %v1038 = vmul.f32 %v936, %v936
      %v1039 = vmul.f32 %v937, %v937
      %v1040 = vmul.f32 %v938, %v938
      %v1041 = vmul.f32 %v939, %v939
      %v1042 = vmul.f32 %v940, %v940
      %v1043 = vmul.f32 %v941, %v941
      %v1044 = vmul.f32 %v942, %v942
      %v1045 = vmul.f32 %v943, %v943
      %v1046 = vmul.f32 %v944, %v944
      %v1047 = vmul.f32 %v945, %v945
      %v1048 = vmul.f32 %v946, %v946
      %v1049 = vmul.f32 %v947, %v947
      %v1050 = vmul.f32 %v948, %v948
      %v1051 = vmul.f32 %v949, %v949
      %v1052 = vmul.f32 %v950, %v950
      %v1053 = vmul.f32 %v951, %v951
      %v1054 = vmul.f32 %v952, %v952
      %v1055 = vmul.f32 %v953, %v953
      %v1056 = vmul.f32 %v954, %v954
      %v1057 = vmul.f32 %v955, %v955
      %v1058 = vmul.f32 %v956, %v956
      %v1059 = vsel %vm957, %v1027, 0.0
      %v1060 = vsel %vm957, %v1028, 0.0
      %v1061 = vadd.f32 %v1059, %v1060
      %v1062 = vsel %vm957, %v1029, 0.0
      %v1063 = vadd.f32 %v1061, %v1062
      %v1064 = vsel %vm957, %v1030, 0.0
      %v1065 = vadd.f32 %v1063, %v1064
      %v1066 = vsel %vm957, %v1031, 0.0
      %v1067 = vadd.f32 %v1065, %v1066
      %v1068 = vsel %vm957, %v1032, 0.0
      %v1069 = vadd.f32 %v1067, %v1068
      %v1070 = vsel %vm957, %v1033, 0.0
      %v1071 = vadd.f32 %v1069, %v1070
      %v1072 = vsel %vm957, %v1034, 0.0
      %v1073 = vadd.f32 %v1071, %v1072
      %v1074 = vsel %vm957, %v1035, 0.0
      %v1075 = vadd.f32 %v1073, %v1074
      %v1076 = vsel %vm957, %v1036, 0.0
      %v1077 = vadd.f32 %v1075, %v1076
      %v1078 = vsel %vm957, %v1037, 0.0
      %v1079 = vadd.f32 %v1077, %v1078
      %v1080 = vsel %vm957, %v1038, 0.0
      %v1081 = vadd.f32 %v1079, %v1080
      %v1082 = vsel %vm957, %v1039, 0.0
      %v1083 = vadd.f32 %v1081, %v1082
      %v1084 = vsel %vm957, %v1040, 0.0
      %v1085 = vadd.f32 %v1083, %v1084
      %v1086 = vsel %vm957, %v1041, 0.0
      %v1087 = vadd.f32 %v1085, %v1086
      %v1088 = vsel %vm957, %v1042, 0.0
      %v1089 = vadd.f32 %v1087, %v1088
      %v1090 = vsel %vm957, %v1043, 0.0
      %v1091 = vadd.f32 %v1089, %v1090
      %v1092 = vsel %vm957, %v1044, 0.0
      %v1093 = vadd.f32 %v1091, %v1092
      %v1094 = vsel %vm957, %v1045, 0.0
      %v1095 = vadd.f32 %v1093, %v1094
      %v1096 = vsel %vm957, %v1046, 0.0
      %v1097 = vadd.f32 %v1095, %v1096
      %v1098 = vsel %vm957, %v1047, 0.0
      %v1099 = vadd.f32 %v1097, %v1098
      %v1100 = vsel %vm957, %v1048, 0.0
      %v1101 = vadd.f32 %v1099, %v1100
      %v1102 = vsel %vm957, %v1049, 0.0
      %v1103 = vadd.f32 %v1101, %v1102
      %v1104 = vsel %vm957, %v1050, 0.0
      %v1105 = vadd.f32 %v1103, %v1104
      %v1106 = vsel %vm957, %v1051, 0.0
      %v1107 = vadd.f32 %v1105, %v1106
      %v1108 = vsel %vm957, %v1052, 0.0
      %v1109 = vadd.f32 %v1107, %v1108
      %v1110 = vsel %vm957, %v1053, 0.0
      %v1111 = vadd.f32 %v1109, %v1110
      %v1112 = vsel %vm957, %v1054, 0.0
      %v1113 = vadd.f32 %v1111, %v1112
      %v1114 = vsel %vm957, %v1055, 0.0
      %v1115 = vadd.f32 %v1113, %v1114
      %v1116 = vsel %vm957, %v1056, 0.0
      %v1117 = vadd.f32 %v1115, %v1116
      %v1118 = vsel %vm957, %v1057, 0.0
      %v1119 = vadd.f32 %v1117, %v1118
      %v1120 = vsel %vm957, %v1058, 0.0
      %v1121 = vadd.f32 %v1119, %v1120
      %v1122 = vrot.slane %v1121, 4
      %v1123 = vadd.f32 %v1121, %v1122
      %v1124 = vrot.slane %v1123, 2
      %v1125 = vadd.f32 %v1123, %v1124
      %v1126 = vrot.slane %v1125, 1
      %v1127 = vadd.f32 %v1125, %v1126
      %vm1128 = vcmask 1040384
      %v1129 = vsel %vm1128, %v1026, %v1127
      %vm1130 = vcmask 254976
      %1131 = vst.msk [vmem:[%s211] sm:$0x3] %vm1130, %v1129
      %s1132 = smul.u32 32, %s16
      %p1133 = scmp.lt.s32.totalorder %s1132, 95
      %s1134 = scalar_select %p1133, %s1132, 95
      %s1135 = smul.addr %s1134, 4
      %s1136 = scalar_lea.vmem %s3, %s1135
      %p1137 = scmp.lt.s32.totalorder %s16, 2
      %s1138 = scalar_select %p1137, %s16, 2
      %s1139 = smul.addr %s1138, 2
      %s1140 = scalar_lea.vmem %s4, %s1139
      // Predicated region
      $region33: #{c3d_smart_forward.5} parent=31 // pred_check
        %p1141 = pneg %p102
      $region34: #{c3d_smart_forward.5} parent=31 // pred_check_branch
        %1143 = sbr.rel (%p1141) target = $region36
      $region35: #{c3d_smart_forward.5} parent=31 // pred_region
        %s1144 = smul.u32 32, %s16
      $region36: #{c3d_smart_forward.5} parent=31 // pred_fallthru
        _
      // Predicated region
      $region37: #{c3d_smart_forward.5} parent=31 // pred_check
        %p1145 = pneg %p128
      $region38: #{c3d_smart_forward.5} parent=31 // pred_check_branch
        %1147 = sbr.rel (%p1145) target = $region40
      $region39: #{c3d_smart_forward.5} parent=31 // pred_region
        _
      $region40: #{c3d_smart_forward.5} parent=31 // pred_fallthru
        _
    $region32: #{c3d_smart_forward.5} parent=5 // pred_fallthru
      _
    %p1148 = scmp.le.s32.totalorder 2, %s11
    // Predicated region
    $region41: #{c3d_smart_forward.5} parent=5 // pred_check
      %p1149 = pneg %p1148
    $region42: #{c3d_smart_forward.5} parent=5 // pred_check_branch
      %1151 = sbr.rel (%p1149) target = $region44
    $region43: #{c3d_smart_forward.5} parent=5 // pred_region
      %s1152 = ssub.s32 %s11, 2
      // Predicated region
      $region45: #{c3d_smart_forward.5} parent=43 // pred_check
        %p1153 = pneg %p108
      $region46: #{c3d_smart_forward.5} parent=43 // pred_check_branch
        %1155 = sbr.rel (%p1153) target = $region48
      $region47: #{c3d_smart_forward.5} parent=43 // pred_region
        %s1156 = smul.u32 32, %s17
        %p1157 = scmp.lt.s32.totalorder %s1156, 95
        %s1158 = scalar_select %p1157, %s1156, 95
        %s1159 = smul.addr %s1158, 4
        %s1160 = scalar_lea.vmem %s3, %s1159
      $region48: #{c3d_smart_forward.5} parent=43 // pred_fallthru
        _
      // Predicated region
      $region49: #{c3d_smart_forward.5} parent=43 // pred_check
        %p1161 = pneg %p134
      $region50: #{c3d_smart_forward.5} parent=43 // pred_check_branch
        %1163 = sbr.rel (%p1161) target = $region52
      $region51: #{c3d_smart_forward.5} parent=43 // pred_region
        %p1164 = scmp.lt.s32.totalorder %s17, 2
        %s1165 = scalar_select %p1164, %s17, 2
        %s1166 = smul.addr %s1165, 2
        %s1167 = scalar_lea.vmem %s4, %s1166
      $region52: #{c3d_smart_forward.5} parent=43 // pred_fallthru
        _
    $region44: #{c3d_smart_forward.5} parent=5 // pred_fallthru
      _
  $region6: #{c3d_smart_forward.5} parent=0 // loop_footer
    %s15 = sadd.s32 1, %s11
  $region7: #{c3d_smart_forward.5} parent=0 // loop_footer_branch
    %10 = sbr.rel target = $region3
  $region8: #{c3d_smart_forward.5} parent=0 // loop_exit
    _

// kernel: c3d_smart_forward.7
$region0: #{c3d_smart_forward.7}
  #allocation0 [shape = 'u32[]', space=smem, size = 0x4, offset = 0x4, fixed_abs, tag = 'smem constant byte address 0x4 - core index']
  #allocation1 [shape = 'u32[144,128]{1,0:T(1,128)}', space=vmem, size = 0x12000, scoped, tag = 'internal scratch']
  %s0 = inlined_call_operand.vmem [shape: bf16[768,864], index: 0, kind: input, shape index: {}]
  %s1 = inlined_call_operand.vmem [shape: bf16[864,128], index: 1, kind: input, shape index: {}]
  %s2 = inlined_call_operand.vmem [shape: f32[1,128], index: 2, kind: input, shape index: {}]
  %s3 = inlined_call_operand.vmem [shape: bf16[768,64], index: 3, kind: output, shape index: {0}]
  %s4 = inlined_call_operand.vmem [shape: bf16[768,64], index: 4, kind: output, shape index: {1}]
  %s5 = inlined_call_operand.vmem [shape: f32[3,2,128], index: 5, kind: output, shape index: {2}]
  %6 = xla_tuple %s3, %s4, %s5
  %s7 = sld [smem:[#allocation0]]
  $region61: #{c3d_smart_forward.7} parent=0
    _
  %s9 = ssub.s32 1, %s7
  %s10 = scalar_select 0, %s9, %s7
  loop: start=0, step=1, limit=5
  $region2: #{c3d_smart_forward.7} parent=0 // loop_pre_header
    _
  $region3: #{c3d_smart_forward.7} parent=0 // loop_header
    %s12 = sphi 0, %s16
    %p13 = scmp.ge.s32.totalorder %s12, 5
    %s22 = sphi 0, %s24
    %s25 = sphi 0, %s22
    %s26 = sphi 0, %s25
    %s42 = sphi 0, %s26
    %s46 = sphi 0, %s46
    %s48 = sphi 0, %s46
    %s49 = sphi 0, %s48
    %s63 = sphi 0, %s49
    %s67 = sphi 0, %s67
    %s69 = sphi 0, %s67
    %s70 = sphi 0, %s69
    %s84 = sphi 0, %s70
    %s90 = sphi 0, %s92
    %s93 = sphi 0, %s90
    %s94 = sphi 0, %s93
    %s110 = sphi 0, %s94
    %s116 = sphi 0, %s118
    %s119 = sphi 0, %s116
    %s120 = sphi 0, %s119
    %s136 = sphi 0, %s120
    %s142 = sphi 0, %s144
    %s145 = sphi 0, %s142
    %s146 = sphi 0, %s145
    %s162 = sphi 0, %s146
  $region4: #{c3d_smart_forward.7} parent=0 // loop_header_branch
    %15 = sbr.rel (%p13) target = $region8
  $region5: #{c3d_smart_forward.7} parent=0 // loop_body
    %s17 = ssub.s32 %s12, 1
    %s18 = ssub.s32 %s12, 2
    %s19 = sadd.s32 %s12, 1
    %s20 = ssub.s32 %s12, %s19
    %p21 = scmp.eq.s32.totalorder %s20, 0
    %s23 = sadd.s32 %s22, 1
    %s24 = scalar_select %p21, %s22, %s23
    %p27 = pneg %p21
    %p28 = scmp.eq.s32.totalorder %s12, 2
    %p29 = por %p27, %p28
    %p30 = scmp.ne.s32.totalorder %s22, %s25
    %p31 = scmp.eq.s32.totalorder %s12, 0
    %p32 = por %p30, %p31
    %p33 = scmp.ne.s32.totalorder %s22, %s25
    %p34 = scmp.eq.s32.totalorder %s17, 2
    %p35 = por %p33, %p34
    %p36 = scmp.ne.s32.totalorder %s25, %s26
    %p37 = scmp.eq.s32.totalorder %s17, 0
    %p38 = por %p36, %p37
    %p39 = scmp.ne.s32.totalorder %s25, %s26
    %p40 = scmp.eq.s32.totalorder %s18, 2
    %p41 = por %p39, %p40
    %p43 = scmp.ne.s32.totalorder %s26, %s42
    %p44 = scmp.eq.s32.totalorder %s18, 0
    %p45 = por %p43, %p44
    %s47 = sadd.s32 %s46, 1
    %p50 = scmp.eq.s32.totalorder %s12, 2
    %p51 = scmp.ne.s32.totalorder %s46, %s48
    %p52 = scmp.eq.s32.totalorder %s12, 0
    %p53 = por %p51, %p52
    %p54 = scmp.ne.s32.totalorder %s46, %s48
    %p55 = scmp.eq.s32.totalorder %s17, 2
    %p56 = por %p54, %p55
    %p57 = scmp.ne.s32.totalorder %s48, %s49
    %p58 = scmp.eq.s32.totalorder %s17, 0
    %p59 = por %p57, %p58
    %p60 = scmp.ne.s32.totalorder %s48, %s49
    %p61 = scmp.eq.s32.totalorder %s18, 2
    %p62 = por %p60, %p61
    %p64 = scmp.ne.s32.totalorder %s49, %s63
    %p65 = scmp.eq.s32.totalorder %s18, 0
    %p66 = por %p64, %p65
    %s68 = sadd.s32 %s67, 1
    %p71 = scmp.eq.s32.totalorder %s12, 2
    %p72 = scmp.ne.s32.totalorder %s67, %s69
    %p73 = scmp.eq.s32.totalorder %s12, 0
    %p74 = por %p72, %p73
    %p75 = scmp.ne.s32.totalorder %s67, %s69
    %p76 = scmp.eq.s32.totalorder %s17, 2
    %p77 = por %p75, %p76
    %p78 = scmp.ne.s32.totalorder %s69, %s70
    %p79 = scmp.eq.s32.totalorder %s17, 0
    %p80 = por %p78, %p79
    %p81 = scmp.ne.s32.totalorder %s69, %s70
    %p82 = scmp.eq.s32.totalorder %s18, 2
    %p83 = por %p81, %p82
    %p85 = scmp.ne.s32.totalorder %s70, %s84
    %p86 = scmp.eq.s32.totalorder %s18, 0
    %p87 = por %p85, %p86
    %s88 = ssub.s32 %s12, %s19
    %p89 = scmp.eq.s32.totalorder %s88, 0
    %s91 = sadd.s32 %s90, 1
    %s92 = scalar_select %p89, %s90, %s91
    %p95 = pneg %p89
    %p96 = scmp.eq.s32.totalorder %s12, 2
    %p97 = por %p95, %p96
    %p98 = scmp.ne.s32.totalorder %s90, %s93
    %p99 = scmp.eq.s32.totalorder %s12, 0
    %p100 = por %p98, %p99
    %p101 = scmp.ne.s32.totalorder %s90, %s93
    %p102 = scmp.eq.s32.totalorder %s17, 2
    %p103 = por %p101, %p102
    %p104 = scmp.ne.s32.totalorder %s93, %s94
    %p105 = scmp.eq.s32.totalorder %s17, 0
    %p106 = por %p104, %p105
    %p107 = scmp.ne.s32.totalorder %s93, %s94
    %p108 = scmp.eq.s32.totalorder %s18, 2
    %p109 = por %p107, %p108
    %p111 = scmp.ne.s32.totalorder %s94, %s110
    %p112 = scmp.eq.s32.totalorder %s18, 0
    %p113 = por %p111, %p112
    %s114 = ssub.s32 %s12, %s19
    %p115 = scmp.eq.s32.totalorder %s114, 0
    %s117 = sadd.s32 %s116, 1
    %s118 = scalar_select %p115, %s116, %s117
    %p121 = pneg %p115
    %p122 = scmp.eq.s32.totalorder %s12, 2
    %p123 = por %p121, %p122
    %p124 = scmp.ne.s32.totalorder %s116, %s119
    %p125 = scmp.eq.s32.totalorder %s12, 0
    %p126 = por %p124, %p125
    %p127 = scmp.ne.s32.totalorder %s116, %s119
    %p128 = scmp.eq.s32.totalorder %s17, 2
    %p129 = por %p127, %p128
    %p130 = scmp.ne.s32.totalorder %s119, %s120
    %p131 = scmp.eq.s32.totalorder %s17, 0
    %p132 = por %p130, %p131
    %p133 = scmp.ne.s32.totalorder %s119, %s120
    %p134 = scmp.eq.s32.totalorder %s18, 2
    %p135 = por %p133, %p134
    %p137 = scmp.ne.s32.totalorder %s120, %s136
    %p138 = scmp.eq.s32.totalorder %s18, 0
    %p139 = por %p137, %p138
    %s140 = ssub.s32 %s12, %s19
    %p141 = scmp.eq.s32.totalorder %s140, 0
    %s143 = sadd.s32 %s142, 1
    %s144 = scalar_select %p141, %s142, %s143
    %p147 = pneg %p141
    %p148 = scmp.eq.s32.totalorder %s12, 2
    %p149 = por %p147, %p148
    %p150 = scmp.ne.s32.totalorder %s142, %s145
    %p151 = scmp.eq.s32.totalorder %s12, 0
    %p152 = por %p150, %p151
    %p153 = scmp.ne.s32.totalorder %s142, %s145
    %p154 = scmp.eq.s32.totalorder %s17, 2
    %p155 = por %p153, %p154
    %p156 = scmp.ne.s32.totalorder %s145, %s146
    %p157 = scmp.eq.s32.totalorder %s17, 0
    %p158 = por %p156, %p157
    %p159 = scmp.ne.s32.totalorder %s145, %s146
    %p160 = scmp.eq.s32.totalorder %s18, 2
    %p161 = por %p159, %p160
    %p163 = scmp.ne.s32.totalorder %s146, %s162
    %p164 = scmp.eq.s32.totalorder %s18, 0
    %p165 = por %p163, %p164
    %p166 = scmp.le.s32.totalorder 1, %s12
    %p167 = scmp.lt.s32.totalorder %s12, 4
    %p168 = pnand %p166, %p167
    %p169 = pneg %p168
    // Predicated region
    $region9: #{c3d_smart_forward.7} parent=5 // pred_check
      _
    $region10: #{c3d_smart_forward.7} parent=5 // pred_check_branch
      %171 = sbr.rel (%p168) target = $region12
    $region11: #{c3d_smart_forward.7} parent=5 // pred_region
      %s172 = ssub.s32 %s12, 1
      // Predicated region
      $region13: #{c3d_smart_forward.7} parent=11 // pred_check
        %p173 = pneg %p59
      $region14: #{c3d_smart_forward.7} parent=11 // pred_check_branch
        %175 = sbr.rel (%p173) target = $region16
      $region15: #{c3d_smart_forward.7} parent=11 // pred_region
        _
      $region16: #{c3d_smart_forward.7} parent=11 // pred_fallthru
        _
      // Predicated region
      $region17: #{c3d_smart_forward.7} parent=11 // pred_check
        %p176 = pneg %p80
      $region18: #{c3d_smart_forward.7} parent=11 // pred_check_branch
        %178 = sbr.rel (%p176) target = $region20
      $region19: #{c3d_smart_forward.7} parent=11 // pred_region
        _
      $region20: #{c3d_smart_forward.7} parent=11 // pred_fallthru
        _
    $region12: #{c3d_smart_forward.7} parent=5 // pred_fallthru
      _
    %p179 = scmp.lt.s32.totalorder %s12, 3
    // Predicated region
    $region21: #{c3d_smart_forward.7} parent=5 // pred_check
      %p180 = pneg %p179
    $region22: #{c3d_smart_forward.7} parent=5 // pred_check_branch
      %182 = sbr.rel (%p180) target = $region24
    $region23: #{c3d_smart_forward.7} parent=5 // pred_region
      // Predicated region
      $region25: #{c3d_smart_forward.7} parent=23 // pred_check
        %p183 = pneg %p32
      $region26: #{c3d_smart_forward.7} parent=23 // pred_check_branch
        %185 = sbr.rel (%p183) target = $region28
      $region27: #{c3d_smart_forward.7} parent=23 // pred_region
        %s186 = smul.u32 32, %s12
        %p187 = scmp.lt.s32.totalorder %s186, 95
        %s188 = scalar_select %p187, %s186, 95
        %s189 = smul.addr %s188, 7
        %s190 = smul.addr %s189, 4
        %s191 = scalar_lea.vmem %s0, %s190
        %s192 = smul.u32 32, %s12
      $region28: #{c3d_smart_forward.7} parent=23 // pred_fallthru
        _
    $region24: #{c3d_smart_forward.7} parent=5 // pred_fallthru
      _
    %p193 = scmp.le.s32.totalorder 1, %s12
    %p194 = scmp.lt.s32.totalorder %s12, 4
    %p195 = pnand %p193, %p194
    %p196 = pneg %p195
    // Predicated region
    $region29: #{c3d_smart_forward.7} parent=5 // pred_check
      _
    $region30: #{c3d_smart_forward.7} parent=5 // pred_check_branch
      %198 = sbr.rel (%p195) target = $region32
    $region31: #{c3d_smart_forward.7} parent=5 // pred_region
      %s199 = ssub.s32 %s12, 1
      %s200 = smul.u32 32, %s17
      %p201 = scmp.lt.s32.totalorder %s200, 95
      %s202 = scalar_select %p201, %s200, 95
      %s203 = smul.addr %s202, 7
      %s204 = smul.addr %s203, 4
      %s205 = scalar_lea.vmem %s0, %s204
      %p206 = pneg %p38
      %p207 = pneg %p35
      %p208 = pneg %p59
      %p209 = pneg %p56
      %p210 = pneg %p80
      %p211 = pneg %p77
      %p212 = pneg %p106
      %p213 = pneg %p103
      %s214 = smul.u32 32, %s17
      %p215 = scmp.lt.s32.totalorder %s214, 95
      %s216 = scalar_select %p215, %s214, 95
      %s217 = smul.addr %s216, 4
      %s218 = scalar_lea.vmem %s3, %s217
      %p219 = pneg %p132
      %p220 = pneg %p129
      %s221 = smul.u32 32, %s17
      %p222 = scmp.lt.s32.totalorder %s221, 95
      %s223 = scalar_select %p222, %s221, 95
      %s224 = smul.addr %s223, 4
      %s225 = scalar_lea.vmem %s4, %s224
      %p226 = pneg %p158
      %p227 = pneg %p155
      %p228 = scmp.lt.s32.totalorder %s17, 2
      %s229 = scalar_select %p228, %s17, 2
      %s230 = smul.addr %s229, 2
      %s231 = scalar_lea.vmem %s5, %s230
      %s232 = smul.u32 32, %s17
      %p233 = scmp.lt.s32.totalorder %s232, 95
      %s234 = scalar_select %p233, %s232, 95
      %s235 = smul.addr %s234, 7
      %s236 = smul.addr %s235, 4
      %s237 = scalar_lea.vmem %s0, %s236
      %s238 = smul.u32 32, %s17
      %s239 = smul.u32 32, %s17
      %p240 = scmp.lt.s32.totalorder %s239, 95
      %s241 = scalar_select %p240, %s239, 95
      %s242 = smul.addr %s241, 4
      %s243 = scalar_lea.vmem %s3, %s242
      %s244 = smul.u32 32, %s17
      %s245 = smul.u32 32, %s17
      %p246 = scmp.lt.s32.totalorder %s245, 95
      %s247 = scalar_select %p246, %s245, 95
      %s248 = smul.addr %s247, 4
      %s249 = scalar_lea.vmem %s4, %s248
      %s250 = smul.u32 32, %s17
      %p251 = scmp.lt.s32.totalorder %s17, 2
      %s252 = scalar_select %p251, %s17, 2
      %s253 = smul.addr %s252, 2
      %s254 = scalar_lea.vmem %s5, %s253
      %v256 = vld [vmem:[%s237] sm:$0xff]
      %v257 = vld [vmem:[%s237 + $0x8] sm:$0xff]
      %v258 = vld [vmem:[%s237 + $0x10] sm:$0xff]
      %v259 = vld [vmem:[%s237 + $0x18] sm:$0xf]
      %v260 = vld [vmem:[%s237 + $0x1c] sm:$0xff]
      %v261 = vld [vmem:[%s237 + $0x24] sm:$0xff]
      %v262 = vld [vmem:[%s237 + $0x2c] sm:$0xff]
      %v263 = vld [vmem:[%s237 + $0x34] sm:$0xf]
      %v264 = vld [vmem:[%s237 + $0x38] sm:$0xff]
      %v265 = vld [vmem:[%s237 + $0x40] sm:$0xff]
      %v266 = vld [vmem:[%s237 + $0x48] sm:$0xff]
      %v267 = vld [vmem:[%s237 + $0x50] sm:$0xf]
      %v268 = vld [vmem:[%s237 + $0x54] sm:$0xff]
      %v269 = vld [vmem:[%s237 + $0x5c] sm:$0xff]
      %v270 = vld [vmem:[%s237 + $0x64] sm:$0xff]
      %v271 = vld [vmem:[%s237 + $0x6c] sm:$0xf]
      %v272 = vld [vmem:[%s237 + $0x70] sm:$0xff]
      %v273 = vld [vmem:[%s237 + $0x78] sm:$0xff]
      %v274 = vld [vmem:[%s237 + $0x80] sm:$0xff]
      %v275 = vld [vmem:[%s237 + $0x88] sm:$0xf]
      %v276 = vld [vmem:[%s237 + $0x8c] sm:$0xff]
      %v277 = vld [vmem:[%s237 + $0x94] sm:$0xff]
      %v278 = vld [vmem:[%s237 + $0x9c] sm:$0xff]
      %v279 = vld [vmem:[%s237 + $0xa4] sm:$0xf]
      %v280 = vld [vmem:[%s237 + $0xa8] sm:$0xff]
      %v281 = vld [vmem:[%s237 + $0xb0] sm:$0xff]
      %v282 = vld [vmem:[%s237 + $0xb8] sm:$0xff]
      %v283 = vld [vmem:[%s237 + $0xc0] sm:$0xf]
      %v284 = vld [vmem:[%s237 + $0xc4] sm:$0xff]
      %v285 = vld [vmem:[%s237 + $0xcc] sm:$0xff]
      %v286 = vld [vmem:[%s237 + $0xd4] sm:$0xff]
      %v287 = vld [vmem:[%s237 + $0xdc] sm:$0xf]
      %v288 = vld [vmem:[%s237 + $0xe0] sm:$0xff]
      %v289 = vld [vmem:[%s237 + $0xe8] sm:$0xff]
      %v290 = vld [vmem:[%s237 + $0xf0] sm:$0xff]
      %v291 = vld [vmem:[%s237 + $0xf8] sm:$0xf]
      %v292 = vld [vmem:[%s237 + $0xfc] sm:$0xff]
      %v293 = vld [vmem:[%s237 + $0x104] sm:$0xff]
      %v294 = vld [vmem:[%s237 + $0x10c] sm:$0xff]
      %v295 = vld [vmem:[%s237 + $0x114] sm:$0xf]
      %v296 = vld [vmem:[%s237 + $0x118] sm:$0xff]
      %v297 = vld [vmem:[%s237 + $0x120] sm:$0xff]
      %v298 = vld [vmem:[%s237 + $0x128] sm:$0xff]
      %v299 = vld [vmem:[%s237 + $0x130] sm:$0xf]
      %v300 = vld [vmem:[%s237 + $0x134] sm:$0xff]
      %v301 = vld [vmem:[%s237 + $0x13c] sm:$0xff]
      %v302 = vld [vmem:[%s237 + $0x144] sm:$0xff]
      %v303 = vld [vmem:[%s237 + $0x14c] sm:$0xf]
      %v304 = vld [vmem:[%s237 + $0x150] sm:$0xff]
      %v305 = vld [vmem:[%s237 + $0x158] sm:$0xff]
      %v306 = vld [vmem:[%s237 + $0x160] sm:$0xff]
      %v307 = vld [vmem:[%s237 + $0x168] sm:$0xf]
      %v308 = vld [vmem:[%s237 + $0x16c] sm:$0xff]
      %v309 = vld [vmem:[%s237 + $0x174] sm:$0xff]
      %v310 = vld [vmem:[%s237 + $0x17c] sm:$0xff]
      %v311 = vld [vmem:[%s237 + $0x184] sm:$0xf]
      %v312 = vld [vmem:[%s237 + $0x188] sm:$0xff]
      %v313 = vld [vmem:[%s237 + $0x190] sm:$0xff]
      %v314 = vld [vmem:[%s237 + $0x198] sm:$0xff]
      %v315 = vld [vmem:[%s237 + $0x1a0] sm:$0xf]
      %v316 = vld [vmem:[%s237 + $0x1a4] sm:$0xff]
      %v317 = vld [vmem:[%s237 + $0x1ac] sm:$0xff]
      %v318 = vld [vmem:[%s237 + $0x1b4] sm:$0xff]
      %v319 = vld [vmem:[%s237 + $0x1bc] sm:$0xf]
      %v320 = vld [vmem:[%s237 + $0x1c0] sm:$0xff]
      %v321 = vld [vmem:[%s237 + $0x1c8] sm:$0xff]
      %v322 = vld [vmem:[%s237 + $0x1d0] sm:$0xff]
      %v323 = vld [vmem:[%s237 + $0x1d8] sm:$0xf]
      %v324 = vld [vmem:[%s237 + $0x1dc] sm:$0xff]
      %v325 = vld [vmem:[%s237 + $0x1e4] sm:$0xff]
      %v326 = vld [vmem:[%s237 + $0x1ec] sm:$0xff]
      %v327 = vld [vmem:[%s237 + $0x1f4] sm:$0xf]
      %v328 = vld [vmem:[%s237 + $0x1f8] sm:$0xff]
      %v329 = vld [vmem:[%s237 + $0x200] sm:$0xff]
      %v330 = vld [vmem:[%s237 + $0x208] sm:$0xff]
      %v331 = vld [vmem:[%s237 + $0x210] sm:$0xf]
      %v332 = vld [vmem:[%s237 + $0x214] sm:$0xff]
      %v333 = vld [vmem:[%s237 + $0x21c] sm:$0xff]
      %v334 = vld [vmem:[%s237 + $0x224] sm:$0xff]
      %v335 = vld [vmem:[%s237 + $0x22c] sm:$0xf]
      %v336 = vld [vmem:[%s237 + $0x230] sm:$0xff]
      %v337 = vld [vmem:[%s237 + $0x238] sm:$0xff]
      %v338 = vld [vmem:[%s237 + $0x240] sm:$0xff]
      %v339 = vld [vmem:[%s237 + $0x248] sm:$0xf]
      %v340 = vld [vmem:[%s237 + $0x24c] sm:$0xff]
      %v341 = vld [vmem:[%s237 + $0x254] sm:$0xff]
      %v342 = vld [vmem:[%s237 + $0x25c] sm:$0xff]
      %v343 = vld [vmem:[%s237 + $0x264] sm:$0xf]
      %v344 = vld [vmem:[%s237 + $0x268] sm:$0xff]
      %v345 = vld [vmem:[%s237 + $0x270] sm:$0xff]
      %v346 = vld [vmem:[%s237 + $0x278] sm:$0xff]
      %v347 = vld [vmem:[%s237 + $0x280] sm:$0xf]
      %v348 = vld [vmem:[%s237 + $0x284] sm:$0xff]
      %v349 = vld [vmem:[%s237 + $0x28c] sm:$0xff]
      %v350 = vld [vmem:[%s237 + $0x294] sm:$0xff]
      %v351 = vld [vmem:[%s237 + $0x29c] sm:$0xf]
      %v352 = vld [vmem:[%s237 + $0x2a0] sm:$0xff]
      %v353 = vld [vmem:[%s237 + $0x2a8] sm:$0xff]
      %v354 = vld [vmem:[%s237 + $0x2b0] sm:$0xff]
      %v355 = vld [vmem:[%s237 + $0x2b8] sm:$0xf]
      %v356 = vld [vmem:[%s237 + $0x2bc] sm:$0xff]
      %v357 = vld [vmem:[%s237 + $0x2c4] sm:$0xff]
      %v358 = vld [vmem:[%s237 + $0x2cc] sm:$0xff]
      %v359 = vld [vmem:[%s237 + $0x2d4] sm:$0xf]
      %v360 = vld [vmem:[%s237 + $0x2d8] sm:$0xff]
      %v361 = vld [vmem:[%s237 + $0x2e0] sm:$0xff]
      %v362 = vld [vmem:[%s237 + $0x2e8] sm:$0xff]
      %v363 = vld [vmem:[%s237 + $0x2f0] sm:$0xf]
      %v364 = vld [vmem:[%s237 + $0x2f4] sm:$0xff]
      %v365 = vld [vmem:[%s237 + $0x2fc] sm:$0xff]
      %v366 = vld [vmem:[%s237 + $0x304] sm:$0xff]
      %v367 = vld [vmem:[%s237 + $0x30c] sm:$0xf]
      %v368 = vld [vmem:[%s237 + $0x310] sm:$0xff]
      %v369 = vld [vmem:[%s237 + $0x318] sm:$0xff]
      %v370 = vld [vmem:[%s237 + $0x320] sm:$0xff]
      %v371 = vld [vmem:[%s237 + $0x328] sm:$0xf]
      %v372 = vld [vmem:[%s237 + $0x32c] sm:$0xff]
      %v373 = vld [vmem:[%s237 + $0x334] sm:$0xff]
      %v374 = vld [vmem:[%s237 + $0x33c] sm:$0xff]
      %v375 = vld [vmem:[%s237 + $0x344] sm:$0xf]
      %v376 = vld [vmem:[%s237 + $0x348] sm:$0xff]
      %v377 = vld [vmem:[%s237 + $0x350] sm:$0xff]
      %v378 = vld [vmem:[%s237 + $0x358] sm:$0xff]
      %v379 = vld [vmem:[%s237 + $0x360] sm:$0xf]
      %v380 = vld [vmem:[%s237 + $0x364] sm:$0xff]
      %v381 = vld [vmem:[%s237 + $0x36c] sm:$0xff]
      %v382 = vld [vmem:[%s237 + $0x374] sm:$0xff]
      %v383 = vld [vmem:[%s237 + $0x37c] sm:$0xf]
      %v384 = vld [vmem:[%s1] sm:$0xf]
      %v385 = vld [vmem:[%s1 + $0x4] sm:$0xf]
      %v386 = vld [vmem:[%s1 + $0x8] sm:$0xf]
      %v387 = vld [vmem:[%s1 + $0xc] sm:$0xf]
      %v388 = vld [vmem:[%s1 + $0x10] sm:$0xf]
      %v389 = vld [vmem:[%s1 + $0x14] sm:$0xf]
      %v390 = vld [vmem:[%s1 + $0x18] sm:$0xf]
      %v391 = vld [vmem:[%s1 + $0x1c] sm:$0xf]
      %v392 = vld [vmem:[%s1 + $0x20] sm:$0xf]
      %v393 = vld [vmem:[%s1 + $0x24] sm:$0xf]
      %v394 = vld [vmem:[%s1 + $0x28] sm:$0xf]
      %v395 = vld [vmem:[%s1 + $0x2c] sm:$0xf]
      %v396 = vld [vmem:[%s1 + $0x30] sm:$0xf]
      %v397 = vld [vmem:[%s1 + $0x34] sm:$0xf]
      %v398 = vld [vmem:[%s1 + $0x38] sm:$0xf]
      %v399 = vld [vmem:[%s1 + $0x3c] sm:$0xf]
      %v400 = vld [vmem:[%s1 + $0x40] sm:$0xf]
      %v401 = vld [vmem:[%s1 + $0x44] sm:$0xf]
      %v402 = vld [vmem:[%s1 + $0x48] sm:$0xf]
      %v403 = vld [vmem:[%s1 + $0x4c] sm:$0xf]
      %v404 = vld [vmem:[%s1 + $0x50] sm:$0xf]
      %v405 = vld [vmem:[%s1 + $0x54] sm:$0xf]
      %v406 = vld [vmem:[%s1 + $0x58] sm:$0xf]
      %v407 = vld [vmem:[%s1 + $0x5c] sm:$0xf]
      %v408 = vld [vmem:[%s1 + $0x60] sm:$0xf]
      %v409 = vld [vmem:[%s1 + $0x64] sm:$0xf]
      %v410 = vld [vmem:[%s1 + $0x68] sm:$0xf]
      %v411 = vld [vmem:[%s1 + $0x6c] sm:$0xf]
      %v412 = vld [vmem:[%s1 + $0x70] sm:$0xf]
      %v413 = vld [vmem:[%s1 + $0x74] sm:$0xf]
      %v414 = vld [vmem:[%s1 + $0x78] sm:$0xf]
      %v415 = vld [vmem:[%s1 + $0x7c] sm:$0xf]
      %v416 = vld [vmem:[%s1 + $0x80] sm:$0xf]
      %v417 = vld [vmem:[%s1 + $0x84] sm:$0xf]
      %v418 = vld [vmem:[%s1 + $0x88] sm:$0xf]
      %v419 = vld [vmem:[%s1 + $0x8c] sm:$0xf]
      %v420 = vld [vmem:[%s1 + $0x90] sm:$0xf]
      %v421 = vld [vmem:[%s1 + $0x94] sm:$0xf]
      %v422 = vld [vmem:[%s1 + $0x98] sm:$0xf]
      %v423 = vld [vmem:[%s1 + $0x9c] sm:$0xf]
      %v424 = vld [vmem:[%s1 + $0xa0] sm:$0xf]
      %v425 = vld [vmem:[%s1 + $0xa4] sm:$0xf]
      %v426 = vld [vmem:[%s1 + $0xa8] sm:$0xf]
      %v427 = vld [vmem:[%s1 + $0xac] sm:$0xf]
      %v428 = vld [vmem:[%s1 + $0xb0] sm:$0xf]
      %v429 = vld [vmem:[%s1 + $0xb4] sm:$0xf]
      %v430 = vld [vmem:[%s1 + $0xb8] sm:$0xf]
      %v431 = vld [vmem:[%s1 + $0xbc] sm:$0xf]
      %v432 = vld [vmem:[%s1 + $0xc0] sm:$0xf]
      %v433 = vld [vmem:[%s1 + $0xc4] sm:$0xf]
      %v434 = vld [vmem:[%s1 + $0xc8] sm:$0xf]
      %v435 = vld [vmem:[%s1 + $0xcc] sm:$0xf]
      %v436 = vld [vmem:[%s1 + $0xd0] sm:$0xf]
      %v437 = vld [vmem:[%s1 + $0xd4] sm:$0xf]
      %v438 = vld [vmem:[%s1 + $0xd8] sm:$0xf]
      %v439 = vld [vmem:[%s1 + $0xdc] sm:$0xf]
      %v440 = vld [vmem:[%s1 + $0xe0] sm:$0xf]
      %v441 = vld [vmem:[%s1 + $0xe4] sm:$0xf]
      %v442 = vld [vmem:[%s1 + $0xe8] sm:$0xf]
      %v443 = vld [vmem:[%s1 + $0xec] sm:$0xf]
      %v444 = vld [vmem:[%s1 + $0xf0] sm:$0xf]
      %v445 = vld [vmem:[%s1 + $0xf4] sm:$0xf]
      %v446 = vld [vmem:[%s1 + $0xf8] sm:$0xf]
      %v447 = vld [vmem:[%s1 + $0xfc] sm:$0xf]
      %v448 = vld [vmem:[%s1 + $0x100] sm:$0xf]
      %v449 = vld [vmem:[%s1 + $0x104] sm:$0xf]
      %v450 = vld [vmem:[%s1 + $0x108] sm:$0xf]
      %v451 = vld [vmem:[%s1 + $0x10c] sm:$0xf]
      %v452 = vld [vmem:[%s1 + $0x110] sm:$0xf]
      %v453 = vld [vmem:[%s1 + $0x114] sm:$0xf]
      %v454 = vld [vmem:[%s1 + $0x118] sm:$0xf]
      %v455 = vld [vmem:[%s1 + $0x11c] sm:$0xf]
      %v456 = vld [vmem:[%s1 + $0x120] sm:$0xf]
      %v457 = vld [vmem:[%s1 + $0x124] sm:$0xf]
      %v458 = vld [vmem:[%s1 + $0x128] sm:$0xf]
      %v459 = vld [vmem:[%s1 + $0x12c] sm:$0xf]
      %v460 = vld [vmem:[%s1 + $0x130] sm:$0xf]
      %v461 = vld [vmem:[%s1 + $0x134] sm:$0xf]
      %v462 = vld [vmem:[%s1 + $0x138] sm:$0xf]
      %v463 = vld [vmem:[%s1 + $0x13c] sm:$0xf]
      %v464 = vld [vmem:[%s1 + $0x140] sm:$0xf]
      %v465 = vld [vmem:[%s1 + $0x144] sm:$0xf]
      %v466 = vld [vmem:[%s1 + $0x148] sm:$0xf]
      %v467 = vld [vmem:[%s1 + $0x14c] sm:$0xf]
      %v468 = vld [vmem:[%s1 + $0x150] sm:$0xf]
      %v469 = vld [vmem:[%s1 + $0x154] sm:$0xf]
      %v470 = vld [vmem:[%s1 + $0x158] sm:$0xf]
      %v471 = vld [vmem:[%s1 + $0x15c] sm:$0xf]
      %v472 = vld [vmem:[%s1 + $0x160] sm:$0xf]
      %v473 = vld [vmem:[%s1 + $0x164] sm:$0xf]
      %v474 = vld [vmem:[%s1 + $0x168] sm:$0xf]
      %v475 = vld [vmem:[%s1 + $0x16c] sm:$0xf]
      %v476 = vld [vmem:[%s1 + $0x170] sm:$0xf]
      %v477 = vld [vmem:[%s1 + $0x174] sm:$0xf]
      %v478 = vld [vmem:[%s1 + $0x178] sm:$0xf]
      %v479 = vld [vmem:[%s1 + $0x17c] sm:$0xf]
      %v480 = vld [vmem:[%s1 + $0x180] sm:$0xf]
      %v481 = vld [vmem:[%s1 + $0x184] sm:$0xf]
      %v482 = vld [vmem:[%s1 + $0x188] sm:$0xf]
      %v483 = vld [vmem:[%s1 + $0x18c] sm:$0xf]
      %v484 = vld [vmem:[%s1 + $0x190] sm:$0xf]
      %v485 = vld [vmem:[%s1 + $0x194] sm:$0xf]
      %v486 = vld [vmem:[%s1 + $0x198] sm:$0xf]
      %v487 = vld [vmem:[%s1 + $0x19c] sm:$0xf]
      %v488 = vld [vmem:[%s1 + $0x1a0] sm:$0xf]
      %v489 = vld [vmem:[%s1 + $0x1a4] sm:$0xf]
      %v490 = vld [vmem:[%s1 + $0x1a8] sm:$0xf]
      %v491 = vld [vmem:[%s1 + $0x1ac] sm:$0xf]
      %v492 = vld [vmem:[%s2] sm:$0x1]
      %v494 = vlaneseq
      %v495 = vshrl.u32 %v494, 7
      %v496 = vsub.s32 0, %v495
      %v497 = vrot.slane %v492, %v496
      %v627 = vunpack.c.l.b16 %v256
      %v628 = vunpack.c.h.b16 %v256
      %v629 = vunpack.c.l.b16 %v257
      %v630 = vunpack.c.h.b16 %v257
      %v631 = vunpack.c.l.b16 %v258
      %v632 = vunpack.c.h.b16 %v258
      %v633 = vunpack.c.l.b16 %v259
      %v634 = vunpack.c.l.b16 %v260
      %v635 = vunpack.c.h.b16 %v260
      %v636 = vunpack.c.l.b16 %v261
      %v637 = vunpack.c.h.b16 %v261
      %v638 = vunpack.c.l.b16 %v262
      %v639 = vunpack.c.h.b16 %v262
      %v640 = vunpack.c.l.b16 %v263
      %v641 = vunpack.c.l.b16 %v264
      %v642 = vunpack.c.h.b16 %v264
      %v643 = vunpack.c.l.b16 %v265
      %v644 = vunpack.c.h.b16 %v265
      %v645 = vunpack.c.l.b16 %v266
      %v646 = vunpack.c.h.b16 %v266
      %v647 = vunpack.c.l.b16 %v267
      %v648 = vunpack.c.l.b16 %v268
      %v649 = vunpack.c.h.b16 %v268
      %v650 = vunpack.c.l.b16 %v269
      %v651 = vunpack.c.h.b16 %v269
      %v652 = vunpack.c.l.b16 %v270
      %v653 = vunpack.c.h.b16 %v270
      %v654 = vunpack.c.l.b16 %v271
      %v655 = vunpack.c.l.b16 %v272
      %v656 = vunpack.c.h.b16 %v272
      %v657 = vunpack.c.l.b16 %v273
      %v658 = vunpack.c.h.b16 %v273
      %v659 = vunpack.c.l.b16 %v274
      %v660 = vunpack.c.h.b16 %v274
      %v661 = vunpack.c.l.b16 %v275
      %v662 = vunpack.c.l.b16 %v276
      %v663 = vunpack.c.h.b16 %v276
      %v664 = vunpack.c.l.b16 %v277
      %v665 = vunpack.c.h.b16 %v277
      %v666 = vunpack.c.l.b16 %v278
      %v667 = vunpack.c.h.b16 %v278
      %v668 = vunpack.c.l.b16 %v279
      %v669 = vunpack.c.l.b16 %v280
      %v670 = vunpack.c.h.b16 %v280
      %v671 = vunpack.c.l.b16 %v281
      %v672 = vunpack.c.h.b16 %v281
      %v673 = vunpack.c.l.b16 %v282
      %v674 = vunpack.c.h.b16 %v282
      %v675 = vunpack.c.l.b16 %v283
      %v676 = vunpack.c.l.b16 %v284
      %v677 = vunpack.c.h.b16 %v284
      %v678 = vunpack.c.l.b16 %v285
      %v679 = vunpack.c.h.b16 %v285
      %v680 = vunpack.c.l.b16 %v286
      %v681 = vunpack.c.h.b16 %v286
      %v682 = vunpack.c.l.b16 %v287
      %v683 = vunpack.c.l.b16 %v288
      %v684 = vunpack.c.h.b16 %v288
      %v685 = vunpack.c.l.b16 %v289
      %v686 = vunpack.c.h.b16 %v289
      %v687 = vunpack.c.l.b16 %v290
      %v688 = vunpack.c.h.b16 %v290
      %v689 = vunpack.c.l.b16 %v291
      %v690 = vunpack.c.l.b16 %v292
      %v691 = vunpack.c.h.b16 %v292
      %v692 = vunpack.c.l.b16 %v293
      %v693 = vunpack.c.h.b16 %v293
      %v694 = vunpack.c.l.b16 %v294
      %v695 = vunpack.c.h.b16 %v294
      %v696 = vunpack.c.l.b16 %v295
      %v697 = vunpack.c.l.b16 %v296
      %v698 = vunpack.c.h.b16 %v296
      %v699 = vunpack.c.l.b16 %v297
      %v700 = vunpack.c.h.b16 %v297
      %v701 = vunpack.c.l.b16 %v298
      %v702 = vunpack.c.h.b16 %v298
      %v703 = vunpack.c.l.b16 %v299
      %v704 = vunpack.c.l.b16 %v300
      %v705 = vunpack.c.h.b16 %v300
      %v706 = vunpack.c.l.b16 %v301
      %v707 = vunpack.c.h.b16 %v301
      %v708 = vunpack.c.l.b16 %v302
      %v709 = vunpack.c.h.b16 %v302
      %v710 = vunpack.c.l.b16 %v303
      %v711 = vunpack.c.l.b16 %v304
      %v712 = vunpack.c.h.b16 %v304
      %v713 = vunpack.c.l.b16 %v305
      %v714 = vunpack.c.h.b16 %v305
      %v715 = vunpack.c.l.b16 %v306
      %v716 = vunpack.c.h.b16 %v306
      %v717 = vunpack.c.l.b16 %v307
      %v718 = vunpack.c.l.b16 %v308
      %v719 = vunpack.c.h.b16 %v308
      %v720 = vunpack.c.l.b16 %v309
      %v721 = vunpack.c.h.b16 %v309
      %v722 = vunpack.c.l.b16 %v310
      %v723 = vunpack.c.h.b16 %v310
      %v724 = vunpack.c.l.b16 %v311
      %v725 = vunpack.c.l.b16 %v312
      %v726 = vunpack.c.h.b16 %v312
      %v727 = vunpack.c.l.b16 %v313
      %v728 = vunpack.c.h.b16 %v313
      %v729 = vunpack.c.l.b16 %v314
      %v730 = vunpack.c.h.b16 %v314
      %v731 = vunpack.c.l.b16 %v315
      %v732 = vunpack.c.l.b16 %v316
      %v733 = vunpack.c.h.b16 %v316
      %v734 = vunpack.c.l.b16 %v317
      %v735 = vunpack.c.h.b16 %v317
      %v736 = vunpack.c.l.b16 %v318
      %v737 = vunpack.c.h.b16 %v318
      %v738 = vunpack.c.l.b16 %v319
      %v739 = vunpack.c.l.b16 %v320
      %v740 = vunpack.c.h.b16 %v320
      %v741 = vunpack.c.l.b16 %v321
      %v742 = vunpack.c.h.b16 %v321
      %v743 = vunpack.c.l.b16 %v322
      %v744 = vunpack.c.h.b16 %v322
      %v745 = vunpack.c.l.b16 %v323
      %v746 = vunpack.c.l.b16 %v324
      %v747 = vunpack.c.h.b16 %v324
      %v748 = vunpack.c.l.b16 %v325
      %v749 = vunpack.c.h.b16 %v325
      %v750 = vunpack.c.l.b16 %v326
      %v751 = vunpack.c.h.b16 %v326
      %v752 = vunpack.c.l.b16 %v327
      %v753 = vunpack.c.l.b16 %v328
      %v754 = vunpack.c.h.b16 %v328
      %v755 = vunpack.c.l.b16 %v329
      %v756 = vunpack.c.h.b16 %v329
      %v757 = vunpack.c.l.b16 %v330
      %v758 = vunpack.c.h.b16 %v330
      %v759 = vunpack.c.l.b16 %v331
      %v760 = vunpack.c.l.b16 %v332
      %v761 = vunpack.c.h.b16 %v332
      %v762 = vunpack.c.l.b16 %v333
      %v763 = vunpack.c.h.b16 %v333
      %v764 = vunpack.c.l.b16 %v334
      %v765 = vunpack.c.h.b16 %v334
      %v766 = vunpack.c.l.b16 %v335
      %v767 = vunpack.c.l.b16 %v336
      %v768 = vunpack.c.h.b16 %v336
      %v769 = vunpack.c.l.b16 %v337
      %v770 = vunpack.c.h.b16 %v337
      %v771 = vunpack.c.l.b16 %v338
      %v772 = vunpack.c.h.b16 %v338
      %v773 = vunpack.c.l.b16 %v339
      %v774 = vunpack.c.l.b16 %v340
      %v775 = vunpack.c.h.b16 %v340
      %v776 = vunpack.c.l.b16 %v341
      %v777 = vunpack.c.h.b16 %v341
      %v778 = vunpack.c.l.b16 %v342
      %v779 = vunpack.c.h.b16 %v342
      %v780 = vunpack.c.l.b16 %v343
      %v781 = vunpack.c.l.b16 %v344
      %v782 = vunpack.c.h.b16 %v344
      %v783 = vunpack.c.l.b16 %v345
      %v784 = vunpack.c.h.b16 %v345
      %v785 = vunpack.c.l.b16 %v346
      %v786 = vunpack.c.h.b16 %v346
      %v787 = vunpack.c.l.b16 %v347
      %v788 = vunpack.c.l.b16 %v348
      %v789 = vunpack.c.h.b16 %v348
      %v790 = vunpack.c.l.b16 %v349
      %v791 = vunpack.c.h.b16 %v349
      %v792 = vunpack.c.l.b16 %v350
      %v793 = vunpack.c.h.b16 %v350
      %v794 = vunpack.c.l.b16 %v351
      %v795 = vunpack.c.l.b16 %v352
      %v796 = vunpack.c.h.b16 %v352
      %v797 = vunpack.c.l.b16 %v353
      %v798 = vunpack.c.h.b16 %v353
      %v799 = vunpack.c.l.b16 %v354
      %v800 = vunpack.c.h.b16 %v354
      %v801 = vunpack.c.l.b16 %v355
      %v802 = vunpack.c.l.b16 %v356
      %v803 = vunpack.c.h.b16 %v356
      %v804 = vunpack.c.l.b16 %v357
      %v805 = vunpack.c.h.b16 %v357
      %v806 = vunpack.c.l.b16 %v358
      %v807 = vunpack.c.h.b16 %v358
      %v808 = vunpack.c.l.b16 %v359
      %v809 = vunpack.c.l.b16 %v360
      %v810 = vunpack.c.h.b16 %v360
      %v811 = vunpack.c.l.b16 %v361
      %v812 = vunpack.c.h.b16 %v361
      %v813 = vunpack.c.l.b16 %v362
      %v814 = vunpack.c.h.b16 %v362
      %v815 = vunpack.c.l.b16 %v363
      %v816 = vunpack.c.l.b16 %v364
      %v817 = vunpack.c.h.b16 %v364
      %v818 = vunpack.c.l.b16 %v365
      %v819 = vunpack.c.h.b16 %v365
      %v820 = vunpack.c.l.b16 %v366
      %v821 = vunpack.c.h.b16 %v366
      %v822 = vunpack.c.l.b16 %v367
      %v823 = vunpack.c.l.b16 %v368
      %v824 = vunpack.c.h.b16 %v368
      %v825 = vunpack.c.l.b16 %v369
      %v826 = vunpack.c.h.b16 %v369
      %v827 = vunpack.c.l.b16 %v370
      %v828 = vunpack.c.h.b16 %v370
      %v829 = vunpack.c.l.b16 %v371
      %v830 = vunpack.c.l.b16 %v372
      %v831 = vunpack.c.h.b16 %v372
      %v832 = vunpack.c.l.b16 %v373
      %v833 = vunpack.c.h.b16 %v373
      %v834 = vunpack.c.l.b16 %v374
      %v835 = vunpack.c.h.b16 %v374
      %v836 = vunpack.c.l.b16 %v375
      %v837 = vunpack.c.l.b16 %v376
      %v838 = vunpack.c.h.b16 %v376
      %v839 = vunpack.c.l.b16 %v377
      %v840 = vunpack.c.h.b16 %v377
      %v841 = vunpack.c.l.b16 %v378
      %v842 = vunpack.c.h.b16 %v378
      %v843 = vunpack.c.l.b16 %v379
      %v844 = vunpack.c.l.b16 %v380
      %v845 = vunpack.c.h.b16 %v380
      %v846 = vunpack.c.l.b16 %v381
      %v847 = vunpack.c.h.b16 %v381
      %v848 = vunpack.c.l.b16 %v382
      %v849 = vunpack.c.h.b16 %v382
      %v850 = vunpack.c.l.b16 %v383
      %v851 = vpack.c.b16 %v634, %v627
      %v852 = vpack.c.b16 %v635, %v628
      %v853 = vpack.c.b16 %v636, %v629
      %v854 = vpack.c.b16 %v637, %v630
      %v855 = vpack.c.b16 %v638, %v631
      %v856 = vpack.c.b16 %v639, %v632
      %v857 = vpack.c.b16 %v640, %v633
      %v858 = vpack.c.b16 %v648, %v641
      %v859 = vpack.c.b16 %v649, %v642
      %v860 = vpack.c.b16 %v650, %v643
      %v861 = vpack.c.b16 %v651, %v644
      %v862 = vpack.c.b16 %v652, %v645
      %v863 = vpack.c.b16 %v653, %v646
      %v864 = vpack.c.b16 %v654, %v647
      %v865 = vpack.c.b16 %v662, %v655
      %v866 = vpack.c.b16 %v663, %v656
      %v867 = vpack.c.b16 %v664, %v657
      %v868 = vpack.c.b16 %v665, %v658
      %v869 = vpack.c.b16 %v666, %v659
      %v870 = vpack.c.b16 %v667, %v660
      %v871 = vpack.c.b16 %v668, %v661
      %v872 = vpack.c.b16 %v676, %v669
      %v873 = vpack.c.b16 %v677, %v670
      %v874 = vpack.c.b16 %v678, %v671
      %v875 = vpack.c.b16 %v679, %v672
      %v876 = vpack.c.b16 %v680, %v673
      %v877 = vpack.c.b16 %v681, %v674
      %v878 = vpack.c.b16 %v682, %v675
      %v879 = vpack.c.b16 %v690, %v683
      %v880 = vpack.c.b16 %v691, %v684
      %v881 = vpack.c.b16 %v692, %v685
      %v882 = vpack.c.b16 %v693, %v686
      %v883 = vpack.c.b16 %v694, %v687
      %v884 = vpack.c.b16 %v695, %v688
      %v885 = vpack.c.b16 %v696, %v689
      %v886 = vpack.c.b16 %v704, %v697
      %v887 = vpack.c.b16 %v705, %v698
      %v888 = vpack.c.b16 %v706, %v699
      %v889 = vpack.c.b16 %v707, %v700
      %v890 = vpack.c.b16 %v708, %v701
      %v891 = vpack.c.b16 %v709, %v702
      %v892 = vpack.c.b16 %v710, %v703
      %v893 = vpack.c.b16 %v718, %v711
      %v894 = vpack.c.b16 %v719, %v712
      %v895 = vpack.c.b16 %v720, %v713
      %v896 = vpack.c.b16 %v721, %v714
      %v897 = vpack.c.b16 %v722, %v715
      %v898 = vpack.c.b16 %v723, %v716
      %v899 = vpack.c.b16 %v724, %v717
      %v900 = vpack.c.b16 %v732, %v725
      %v901 = vpack.c.b16 %v733, %v726
      %v902 = vpack.c.b16 %v734, %v727
      %v903 = vpack.c.b16 %v735, %v728
      %v904 = vpack.c.b16 %v736, %v729
      %v905 = vpack.c.b16 %v737, %v730
      %v906 = vpack.c.b16 %v738, %v731
      %v907 = vpack.c.b16 %v746, %v739
      %v908 = vpack.c.b16 %v747, %v740
      %v909 = vpack.c.b16 %v748, %v741
      %v910 = vpack.c.b16 %v749, %v742
      %v911 = vpack.c.b16 %v750, %v743
      %v912 = vpack.c.b16 %v751, %v744
      %v913 = vpack.c.b16 %v752, %v745
      %v914 = vpack.c.b16 %v760, %v753
      %v915 = vpack.c.b16 %v761, %v754
      %v916 = vpack.c.b16 %v762, %v755
      %v917 = vpack.c.b16 %v763, %v756
      %v918 = vpack.c.b16 %v764, %v757
      %v919 = vpack.c.b16 %v765, %v758
      %v920 = vpack.c.b16 %v766, %v759
      %v921 = vpack.c.b16 %v774, %v767
      %v922 = vpack.c.b16 %v775, %v768
      %v923 = vpack.c.b16 %v776, %v769
      %v924 = vpack.c.b16 %v777, %v770
      %v925 = vpack.c.b16 %v778, %v771
      %v926 = vpack.c.b16 %v779, %v772
      %v927 = vpack.c.b16 %v780, %v773
      %v928 = vpack.c.b16 %v788, %v781
      %v929 = vpack.c.b16 %v789, %v782
      %v930 = vpack.c.b16 %v790, %v783
      %v931 = vpack.c.b16 %v791, %v784
      %v932 = vpack.c.b16 %v792, %v785
      %v933 = vpack.c.b16 %v793, %v786
      %v934 = vpack.c.b16 %v794, %v787
      %v935 = vpack.c.b16 %v802, %v795
      %v936 = vpack.c.b16 %v803, %v796
      %v937 = vpack.c.b16 %v804, %v797
      %v938 = vpack.c.b16 %v805, %v798
      %v939 = vpack.c.b16 %v806, %v799
      %v940 = vpack.c.b16 %v807, %v800
      %v941 = vpack.c.b16 %v808, %v801
      %v942 = vpack.c.b16 %v816, %v809
      %v943 = vpack.c.b16 %v817, %v810
      %v944 = vpack.c.b16 %v818, %v811
      %v945 = vpack.c.b16 %v819, %v812
      %v946 = vpack.c.b16 %v820, %v813
      %v947 = vpack.c.b16 %v821, %v814
      %v948 = vpack.c.b16 %v822, %v815
      %v949 = vpack.c.b16 %v830, %v823
      %v950 = vpack.c.b16 %v831, %v824
      %v951 = vpack.c.b16 %v832, %v825
      %v952 = vpack.c.b16 %v833, %v826
      %v953 = vpack.c.b16 %v834, %v827
      %v954 = vpack.c.b16 %v835, %v828
      %v955 = vpack.c.b16 %v836, %v829
      %v956 = vpack.c.b16 %v844, %v837
      %v957 = vpack.c.b16 %v845, %v838
      %v958 = vpack.c.b16 %v846, %v839
      %v959 = vpack.c.b16 %v847, %v840
      %v960 = vpack.c.b16 %v848, %v841
      %v961 = vpack.c.b16 %v849, %v842
      %v962 = vpack.c.b16 %v850, %v843
      %v1167 = vunpack.c.l.b16 %v384
      %v1168 = vunpack.c.l.b16 %v385
      %v1169 = vunpack.c.l.b16 %v386
      %v1170 = vunpack.c.l.b16 %v387
      %v1171 = vunpack.c.l.b16 %v388
      %v1172 = vunpack.c.l.b16 %v389
      %v1173 = vunpack.c.l.b16 %v390
      %v1174 = vunpack.c.l.b16 %v391
      %v1175 = vunpack.c.l.b16 %v392
      %v1176 = vunpack.c.l.b16 %v393
      %v1177 = vunpack.c.l.b16 %v394
      %v1178 = vunpack.c.l.b16 %v395
      %v1179 = vunpack.c.l.b16 %v396
      %v1180 = vunpack.c.l.b16 %v397
      %v1181 = vunpack.c.l.b16 %v398
      %v1182 = vunpack.c.l.b16 %v399
      %v1183 = vunpack.c.l.b16 %v400
      %v1184 = vunpack.c.l.b16 %v401
      %v1185 = vunpack.c.l.b16 %v402
      %v1186 = vunpack.c.l.b16 %v403
      %v1187 = vunpack.c.l.b16 %v404
      %v1188 = vunpack.c.l.b16 %v405
      %v1189 = vunpack.c.l.b16 %v406
      %v1190 = vunpack.c.l.b16 %v407
      %v1191 = vunpack.c.l.b16 %v408
      %v1192 = vunpack.c.l.b16 %v409
      %v1193 = vunpack.c.l.b16 %v410
      %v1194 = vunpack.c.l.b16 %v411
      %v1195 = vunpack.c.l.b16 %v412
      %v1196 = vunpack.c.l.b16 %v413
      %v1197 = vunpack.c.l.b16 %v414
      %v1198 = vunpack.c.l.b16 %v415
      %v1199 = vunpack.c.l.b16 %v416
      %v1200 = vunpack.c.l.b16 %v417
      %v1201 = vunpack.c.l.b16 %v418
      %v1202 = vunpack.c.l.b16 %v419
      %v1203 = vunpack.c.l.b16 %v420
      %v1204 = vunpack.c.l.b16 %v421
      %v1205 = vunpack.c.l.b16 %v422
      %v1206 = vunpack.c.l.b16 %v423
      %v1207 = vunpack.c.l.b16 %v424
      %v1208 = vunpack.c.l.b16 %v425
      %v1209 = vunpack.c.l.b16 %v426
      %v1210 = vunpack.c.l.b16 %v427
      %v1211 = vunpack.c.l.b16 %v428
      %v1212 = vunpack.c.l.b16 %v429
      %v1213 = vunpack.c.l.b16 %v430
      %v1214 = vunpack.c.l.b16 %v431
      %v1215 = vunpack.c.l.b16 %v432
      %v1216 = vunpack.c.l.b16 %v433
      %v1217 = vunpack.c.l.b16 %v434
      %v1218 = vunpack.c.l.b16 %v435
      %v1219 = vunpack.c.l.b16 %v436
      %v1220 = vunpack.c.l.b16 %v437
      %v1221 = vunpack.c.l.b16 %v438
      %v1222 = vunpack.c.l.b16 %v439
      %v1223 = vunpack.c.l.b16 %v440
      %v1224 = vunpack.c.l.b16 %v441
      %v1225 = vunpack.c.l.b16 %v442
      %v1226 = vunpack.c.l.b16 %v443
      %v1227 = vunpack.c.l.b16 %v444
      %v1228 = vunpack.c.l.b16 %v445
      %v1229 = vunpack.c.l.b16 %v446
      %v1230 = vunpack.c.l.b16 %v447
      %v1231 = vunpack.c.l.b16 %v448
      %v1232 = vunpack.c.l.b16 %v449
      %v1233 = vunpack.c.l.b16 %v450
      %v1234 = vunpack.c.l.b16 %v451
      %v1235 = vunpack.c.l.b16 %v452
      %v1236 = vunpack.c.l.b16 %v453
      %v1237 = vunpack.c.l.b16 %v454
      %v1238 = vunpack.c.l.b16 %v455
      %v1239 = vunpack.c.l.b16 %v456
      %v1240 = vunpack.c.l.b16 %v457
      %v1241 = vunpack.c.l.b16 %v458
      %v1242 = vunpack.c.l.b16 %v459
      %v1243 = vunpack.c.l.b16 %v460
      %v1244 = vunpack.c.l.b16 %v461
      %v1245 = vunpack.c.l.b16 %v462
      %v1246 = vunpack.c.l.b16 %v463
      %v1247 = vunpack.c.l.b16 %v464
      %v1248 = vunpack.c.l.b16 %v465
      %v1249 = vunpack.c.l.b16 %v466
      %v1250 = vunpack.c.l.b16 %v467
      %v1251 = vunpack.c.l.b16 %v468
      %v1252 = vunpack.c.l.b16 %v469
      %v1253 = vunpack.c.l.b16 %v470
      %v1254 = vunpack.c.l.b16 %v471
      %v1255 = vunpack.c.l.b16 %v472
      %v1256 = vunpack.c.l.b16 %v473
      %v1257 = vunpack.c.l.b16 %v474
      %v1258 = vunpack.c.l.b16 %v475
      %v1259 = vunpack.c.l.b16 %v476
      %v1260 = vunpack.c.l.b16 %v477
      %v1261 = vunpack.c.l.b16 %v478
      %v1262 = vunpack.c.l.b16 %v479
      %v1263 = vunpack.c.l.b16 %v480
      %v1264 = vunpack.c.l.b16 %v481
      %v1265 = vunpack.c.l.b16 %v482
      %v1266 = vunpack.c.l.b16 %v483
      %v1267 = vunpack.c.l.b16 %v484
      %v1268 = vunpack.c.l.b16 %v485
      %v1269 = vunpack.c.l.b16 %v486
      %v1270 = vunpack.c.l.b16 %v487
      %v1271 = vunpack.c.l.b16 %v488
      %v1272 = vunpack.c.l.b16 %v489
      %v1273 = vunpack.c.l.b16 %v490
      %v1274 = vunpack.c.l.b16 %v491
      %v1275 = vpack.c.b16 %v1168, %v1167
      %v1276 = vpack.c.b16 %v1170, %v1169
      %v1277 = vpack.c.b16 %v1172, %v1171
      %v1278 = vpack.c.b16 %v1174, %v1173
      %v1279 = vpack.c.b16 %v1176, %v1175
      %v1280 = vpack.c.b16 %v1178, %v1177
      %v1281 = vpack.c.b16 %v1180, %v1179
      %v1282 = vpack.c.b16 %v1182, %v1181
      %v1283 = vpack.c.b16 %v1184, %v1183
      %v1284 = vpack.c.b16 %v1186, %v1185
      %v1285 = vpack.c.b16 %v1188, %v1187
      %v1286 = vpack.c.b16 %v1190, %v1189
      %v1287 = vpack.c.b16 %v1192, %v1191
      %v1288 = vpack.c.b16 %v1194, %v1193
      %v1289 = vpack.c.b16 %v1196, %v1195
      %v1290 = vpack.c.b16 %v1198, %v1197
      %v1291 = vpack.c.b16 %v1200, %v1199
      %v1292 = vpack.c.b16 %v1202, %v1201
      %v1293 = vpack.c.b16 %v1204, %v1203
      %v1294 = vpack.c.b16 %v1206, %v1205
      %v1295 = vpack.c.b16 %v1208, %v1207
      %v1296 = vpack.c.b16 %v1210, %v1209
      %v1297 = vpack.c.b16 %v1212, %v1211
      %v1298 = vpack.c.b16 %v1214, %v1213
      %v1299 = vpack.c.b16 %v1216, %v1215
      %v1300 = vpack.c.b16 %v1218, %v1217
      %v1301 = vpack.c.b16 %v1220, %v1219
      %v1302 = vpack.c.b16 %v1222, %v1221
      %v1303 = vpack.c.b16 %v1224, %v1223
      %v1304 = vpack.c.b16 %v1226, %v1225
      %v1305 = vpack.c.b16 %v1228, %v1227
      %v1306 = vpack.c.b16 %v1230, %v1229
      %v1307 = vpack.c.b16 %v1232, %v1231
      %v1308 = vpack.c.b16 %v1234, %v1233
      %v1309 = vpack.c.b16 %v1236, %v1235
      %v1310 = vpack.c.b16 %v1238, %v1237
      %v1311 = vpack.c.b16 %v1240, %v1239
      %v1312 = vpack.c.b16 %v1242, %v1241
      %v1313 = vpack.c.b16 %v1244, %v1243
      %v1314 = vpack.c.b16 %v1246, %v1245
      %v1315 = vpack.c.b16 %v1248, %v1247
      %v1316 = vpack.c.b16 %v1250, %v1249
      %v1317 = vpack.c.b16 %v1252, %v1251
      %v1318 = vpack.c.b16 %v1254, %v1253
      %v1319 = vpack.c.b16 %v1256, %v1255
      %v1320 = vpack.c.b16 %v1258, %v1257
      %v1321 = vpack.c.b16 %v1260, %v1259
      %v1322 = vpack.c.b16 %v1262, %v1261
      %v1323 = vpack.c.b16 %v1264, %v1263
      %v1324 = vpack.c.b16 %v1266, %v1265
      %v1325 = vpack.c.b16 %v1268, %v1267
      %v1326 = vpack.c.b16 %v1270, %v1269
      %v1327 = vpack.c.b16 %v1272, %v1271
      %v1328 = vpack.c.b16 %v1274, %v1273
      %vm1383 = vcmask 785408
      %v1385 = vsel %vm1383, %v857, 0
      %v1388 = vsel %vm1383, %v864, 0
      %v1391 = vsel %vm1383, %v871, 0
      %v1394 = vsel %vm1383, %v878, 0
      %v1397 = vsel %vm1383, %v885, 0
      %v1400 = vsel %vm1383, %v892, 0
      %v1403 = vsel %vm1383, %v899, 0
      %v1406 = vsel %vm1383, %v906, 0
      %v1409 = vsel %vm1383, %v913, 0
      %v1412 = vsel %vm1383, %v920, 0
      %v1415 = vsel %vm1383, %v927, 0
      %v1418 = vsel %vm1383, %v934, 0
      %v1421 = vsel %vm1383, %v941, 0
      %v1424 = vsel %vm1383, %v948, 0
      %v1427 = vsel %vm1383, %v955, 0
      %v1430 = vsel %vm1383, %v962, 0
      %1432 = vmatprep.subr.bf16.mxu0 0
      %1433 = vmatpush1.bf16.msra.mxu0 %v1282
      %1434 = vmatprep.subr.bf16.mxu0 0
      %1435 = vmatpush1.bf16.msra.mxu0 %v1281
      %1436 = vmatprep.subr.bf16.mxu0 0
      %1437 = vmatpush1.bf16.msra.mxu0 %v1280
      %1438 = vmatprep.subr.bf16.mxu0 0
      %1439 = vmatpush1.bf16.msra.mxu0 %v1279
      %1440 = vmatprep.subr.bf16.mxu0 0
      %1441 = vmatpush1.bf16.msra.mxu0 %v1278
      %1442 = vmatprep.subr.bf16.mxu0 0
      %1443 = vmatpush1.bf16.msra.mxu0 %v1277
      %1444 = vmatprep.subr.bf16.mxu0 0
      %1445 = vmatpush1.bf16.msra.mxu0 %v1276
      %1446 = vmatprep.subr.bf16.mxu0 0
      %1447 = vmatpush1.bf16.msra.mxu0 %v1275
      %1448 = vmatprep.subr.bf16.mxu0 0
      %1449 = vmatpush2.bf16.msra.mxu0 %v1290
      %1450 = vmatprep.subr.bf16.mxu0 0
      %1451 = vmatpush2.bf16.msra.mxu0 %v1289
      %1452 = vmatprep.subr.bf16.mxu0 0
      %1453 = vmatpush2.bf16.msra.mxu0 %v1288
      %1454 = vmatprep.subr.bf16.mxu0 0
      %1455 = vmatpush2.bf16.msra.mxu0 %v1287
      %1456 = vmatprep.subr.bf16.mxu0 0
      %1457 = vmatpush2.bf16.msra.mxu0 %v1286
      %1458 = vmatprep.subr.bf16.mxu0 0
      %1459 = vmatpush2.bf16.msra.mxu0 %v1285
      %1460 = vmatprep.subr.bf16.mxu0 0
      %1461 = vmatpush2.bf16.msra.mxu0 %v1284
      %1462 = vmatprep.subr.bf16.mxu0 0
      %1463 = vmatpush2.bf16.msra.mxu0 %v1283
      %1464 = vmatprep.mubr.bf16.mxu0 %v852
      %1465 = vmatmul.mubr.bf16.gmra.mxu0 %v851
      %v1466 = vpop.f32.mrf.mxu0
      %v1467 = vadd.f32 %v497, %v1466
      %v1468 = vpop.f32.mrf.mxu0
      %v1469 = vpop.f32.mrf.mxu0
      %v1470 = vadd.f32 %v497, %v1469
      %v1471 = vpop.f32.mrf.mxu0
      %1472 = vmatprep.mubr.bf16.mxu0 %v859
      %1473 = vmatmul.mubr.bf16.gmra.mxu0 %v858
      %v1474 = vpop.f32.mrf.mxu0
      %v1475 = vadd.f32 %v497, %v1474
      %v1476 = vpop.f32.mrf.mxu0
      %v1477 = vpop.f32.mrf.mxu0
      %v1478 = vadd.f32 %v497, %v1477
      %v1479 = vpop.f32.mrf.mxu0
      %1480 = vmatprep.mubr.bf16.mxu0 %v866
      %1481 = vmatmul.mubr.bf16.gmra.mxu0 %v865
      %v1482 = vpop.f32.mrf.mxu0
      %v1483 = vadd.f32 %v497, %v1482
      %v1484 = vpop.f32.mrf.mxu0
      %v1485 = vpop.f32.mrf.mxu0
      %v1486 = vadd.f32 %v497, %v1485
      %v1487 = vpop.f32.mrf.mxu0
      %1488 = vmatprep.mubr.bf16.mxu0 %v873
      %1489 = vmatmul.mubr.bf16.gmra.mxu0 %v872
      %v1490 = vpop.f32.mrf.mxu0
      %v1491 = vadd.f32 %v497, %v1490
      %v1492 = vpop.f32.mrf.mxu0
      %v1493 = vpop.f32.mrf.mxu0
      %v1494 = vadd.f32 %v497, %v1493
      %v1495 = vpop.f32.mrf.mxu0
      %1496 = vmatprep.mubr.bf16.mxu0 %v880
      %1497 = vmatmul.mubr.bf16.gmra.mxu0 %v879
      %v1498 = vpop.f32.mrf.mxu0
      %v1499 = vadd.f32 %v497, %v1498
      %v1500 = vpop.f32.mrf.mxu0
      %v1501 = vpop.f32.mrf.mxu0
      %v1502 = vadd.f32 %v497, %v1501
      %v1503 = vpop.f32.mrf.mxu0
      %1504 = vmatprep.mubr.bf16.mxu0 %v887
      %1505 = vmatmul.mubr.bf16.gmra.mxu0 %v886
      %v1506 = vpop.f32.mrf.mxu0
      %v1507 = vadd.f32 %v497, %v1506
      %v1508 = vpop.f32.mrf.mxu0
      %v1509 = vpop.f32.mrf.mxu0
      %v1510 = vadd.f32 %v497, %v1509
      %v1511 = vpop.f32.mrf.mxu0
      %1512 = vmatprep.mubr.bf16.mxu0 %v894
      %1513 = vmatmul.mubr.bf16.gmra.mxu0 %v893
      %v1514 = vpop.f32.mrf.mxu0
      %v1515 = vadd.f32 %v497, %v1514
      %v1516 = vpop.f32.mrf.mxu0
      %v1517 = vpop.f32.mrf.mxu0
      %v1518 = vadd.f32 %v497, %v1517
      %v1519 = vpop.f32.mrf.mxu0
      %1520 = vmatprep.mubr.bf16.mxu0 %v901
      %1521 = vmatmul.mubr.bf16.gmra.mxu0 %v900
      %v1522 = vpop.f32.mrf.mxu0
      %v1523 = vadd.f32 %v497, %v1522
      %v1524 = vpop.f32.mrf.mxu0
      %v1525 = vpop.f32.mrf.mxu0
      %v1526 = vadd.f32 %v497, %v1525
      %v1527 = vpop.f32.mrf.mxu0
      %1528 = vmatprep.mubr.bf16.mxu0 %v908
      %1529 = vmatmul.mubr.bf16.gmra.mxu0 %v907
      %v1530 = vpop.f32.mrf.mxu0
      %v1531 = vadd.f32 %v497, %v1530
      %v1532 = vpop.f32.mrf.mxu0
      %v1533 = vpop.f32.mrf.mxu0
      %v1534 = vadd.f32 %v497, %v1533
      %v1535 = vpop.f32.mrf.mxu0
      %1536 = vmatprep.mubr.bf16.mxu0 %v915
      %1537 = vmatmul.mubr.bf16.gmra.mxu0 %v914
      %v1538 = vpop.f32.mrf.mxu0
      %v1539 = vadd.f32 %v497, %v1538
      %v1540 = vpop.f32.mrf.mxu0
      %v1541 = vpop.f32.mrf.mxu0
      %v1542 = vadd.f32 %v497, %v1541
      %v1543 = vpop.f32.mrf.mxu0
      %1544 = vmatprep.mubr.bf16.mxu0 %v922
      %1545 = vmatmul.mubr.bf16.gmra.mxu0 %v921
      %v1546 = vpop.f32.mrf.mxu0
      %v1547 = vadd.f32 %v497, %v1546
      %v1548 = vpop.f32.mrf.mxu0
      %v1549 = vpop.f32.mrf.mxu0
      %v1550 = vadd.f32 %v497, %v1549
      %v1551 = vpop.f32.mrf.mxu0
      %1552 = vmatprep.mubr.bf16.mxu0 %v929
      %1553 = vmatmul.mubr.bf16.gmra.mxu0 %v928
      %v1554 = vpop.f32.mrf.mxu0
      %v1555 = vadd.f32 %v497, %v1554
      %v1556 = vpop.f32.mrf.mxu0
      %v1557 = vpop.f32.mrf.mxu0
      %v1558 = vadd.f32 %v497, %v1557
      %v1559 = vpop.f32.mrf.mxu0
      %1560 = vmatprep.mubr.bf16.mxu0 %v936
      %1561 = vmatmul.mubr.bf16.gmra.mxu0 %v935
      %v1562 = vpop.f32.mrf.mxu0
      %v1563 = vadd.f32 %v497, %v1562
      %v1564 = vpop.f32.mrf.mxu0
      %v1565 = vpop.f32.mrf.mxu0
      %v1566 = vadd.f32 %v497, %v1565
      %v1567 = vpop.f32.mrf.mxu0
      %1568 = vmatprep.mubr.bf16.mxu0 %v943
      %1569 = vmatmul.mubr.bf16.gmra.mxu0 %v942
      %v1570 = vpop.f32.mrf.mxu0
      %v1571 = vadd.f32 %v497, %v1570
      %v1572 = vpop.f32.mrf.mxu0
      %v1573 = vpop.f32.mrf.mxu0
      %v1574 = vadd.f32 %v497, %v1573
      %v1575 = vpop.f32.mrf.mxu0
      %1576 = vmatprep.mubr.bf16.mxu0 %v950
      %1577 = vmatmul.mubr.bf16.gmra.mxu0 %v949
      %v1578 = vpop.f32.mrf.mxu0
      %v1579 = vadd.f32 %v497, %v1578
      %v1580 = vpop.f32.mrf.mxu0
      %v1581 = vpop.f32.mrf.mxu0
      %v1582 = vadd.f32 %v497, %v1581
      %v1583 = vpop.f32.mrf.mxu0
      %1584 = vmatprep.mubr.bf16.mxu0 %v957
      %1585 = vmatmul.mubr.bf16.gmra.mxu0 %v956
      %v1586 = vpop.f32.mrf.mxu0
      %v1587 = vadd.f32 %v497, %v1586
      %v1588 = vpop.f32.mrf.mxu0
      %v1589 = vpop.f32.mrf.mxu0
      %v1590 = vadd.f32 %v497, %v1589
      %v1591 = vpop.f32.mrf.mxu0
      %1592 = vdwg.mxu0
      %1593 = vmatprep.subr.bf16.mxu0 0
      %1594 = vmatpush1.bf16.msra.mxu0 %v1298
      %1595 = vmatprep.subr.bf16.mxu0 0
      %1596 = vmatpush1.bf16.msra.mxu0 %v1297
      %1597 = vmatprep.subr.bf16.mxu0 0
      %1598 = vmatpush1.bf16.msra.mxu0 %v1296
      %1599 = vmatprep.subr.bf16.mxu0 0
      %1600 = vmatpush1.bf16.msra.mxu0 %v1295
      %1601 = vmatprep.subr.bf16.mxu0 0
      %1602 = vmatpush1.bf16.msra.mxu0 %v1294
      %1603 = vmatprep.subr.bf16.mxu0 0
      %1604 = vmatpush1.bf16.msra.mxu0 %v1293
      %1605 = vmatprep.subr.bf16.mxu0 0
      %1606 = vmatpush1.bf16.msra.mxu0 %v1292
      %1607 = vmatprep.subr.bf16.mxu0 0
      %1608 = vmatpush1.bf16.msra.mxu0 %v1291
      %1609 = vmatprep.subr.bf16.mxu0 0
      %1610 = vmatpush2.bf16.msra.mxu0 %v1306
      %1611 = vmatprep.subr.bf16.mxu0 0
      %1612 = vmatpush2.bf16.msra.mxu0 %v1305
      %1613 = vmatprep.subr.bf16.mxu0 0
      %1614 = vmatpush2.bf16.msra.mxu0 %v1304
      %1615 = vmatprep.subr.bf16.mxu0 0
      %1616 = vmatpush2.bf16.msra.mxu0 %v1303
      %1617 = vmatprep.subr.bf16.mxu0 0
      %1618 = vmatpush2.bf16.msra.mxu0 %v1302
      %1619 = vmatprep.subr.bf16.mxu0 0
      %1620 = vmatpush2.bf16.msra.mxu0 %v1301
      %1621 = vmatprep.subr.bf16.mxu0 0
      %1622 = vmatpush2.bf16.msra.mxu0 %v1300
      %1623 = vmatprep.subr.bf16.mxu0 0
      %1624 = vmatpush2.bf16.msra.mxu0 %v1299
      %1625 = vmatprep.mubr.bf16.mxu0 %v854
      %1626 = vmatmul.mubr.bf16.gmra.mxu0 %v853
      %v1627 = vpop.f32.mrf.mxu0
      %v1628 = vadd.f32 %v1467, %v1627
      %v1629 = vpop.f32.mrf.mxu0
      %v1630 = vpop.f32.mrf.mxu0
      %v1631 = vadd.f32 %v1470, %v1630
      %v1632 = vpop.f32.mrf.mxu0
      %1633 = vmatprep.mubr.bf16.mxu0 %v861
      %1634 = vmatmul.mubr.bf16.gmra.mxu0 %v860
      %v1635 = vpop.f32.mrf.mxu0
      %v1636 = vadd.f32 %v1475, %v1635
      %v1637 = vpop.f32.mrf.mxu0
      %v1638 = vpop.f32.mrf.mxu0
      %v1639 = vadd.f32 %v1478, %v1638
      %v1640 = vpop.f32.mrf.mxu0
      %1641 = vmatprep.mubr.bf16.mxu0 %v868
      %1642 = vmatmul.mubr.bf16.gmra.mxu0 %v867
      %v1643 = vpop.f32.mrf.mxu0
      %v1644 = vadd.f32 %v1483, %v1643
      %v1645 = vpop.f32.mrf.mxu0
      %v1646 = vpop.f32.mrf.mxu0
      %v1647 = vadd.f32 %v1486, %v1646
      %v1648 = vpop.f32.mrf.mxu0
      %1649 = vmatprep.mubr.bf16.mxu0 %v875
      %1650 = vmatmul.mubr.bf16.gmra.mxu0 %v874
      %v1651 = vpop.f32.mrf.mxu0
      %v1652 = vadd.f32 %v1491, %v1651
      %v1653 = vpop.f32.mrf.mxu0
      %v1654 = vpop.f32.mrf.mxu0
      %v1655 = vadd.f32 %v1494, %v1654
      %v1656 = vpop.f32.mrf.mxu0
      %1657 = vmatprep.mubr.bf16.mxu0 %v882
      %1658 = vmatmul.mubr.bf16.gmra.mxu0 %v881
      %v1659 = vpop.f32.mrf.mxu0
      %v1660 = vadd.f32 %v1499, %v1659
      %v1661 = vpop.f32.mrf.mxu0
      %v1662 = vpop.f32.mrf.mxu0
      %v1663 = vadd.f32 %v1502, %v1662
      %v1664 = vpop.f32.mrf.mxu0
      %1665 = vmatprep.mubr.bf16.mxu0 %v889
      %1666 = vmatmul.mubr.bf16.gmra.mxu0 %v888
      %v1667 = vpop.f32.mrf.mxu0
      %v1668 = vadd.f32 %v1507, %v1667
      %v1669 = vpop.f32.mrf.mxu0
      %v1670 = vpop.f32.mrf.mxu0
      %v1671 = vadd.f32 %v1510, %v1670
      %v1672 = vpop.f32.mrf.mxu0
      %1673 = vmatprep.mubr.bf16.mxu0 %v896
      %1674 = vmatmul.mubr.bf16.gmra.mxu0 %v895
      %v1675 = vpop.f32.mrf.mxu0
      %v1676 = vadd.f32 %v1515, %v1675
      %v1677 = vpop.f32.mrf.mxu0
      %v1678 = vpop.f32.mrf.mxu0
      %v1679 = vadd.f32 %v1518, %v1678
      %v1680 = vpop.f32.mrf.mxu0
      %1681 = vmatprep.mubr.bf16.mxu0 %v903
      %1682 = vmatmul.mubr.bf16.gmra.mxu0 %v902
      %v1683 = vpop.f32.mrf.mxu0
      %v1684 = vadd.f32 %v1523, %v1683
      %v1685 = vpop.f32.mrf.mxu0
      %v1686 = vpop.f32.mrf.mxu0
      %v1687 = vadd.f32 %v1526, %v1686
      %v1688 = vpop.f32.mrf.mxu0
      %1689 = vmatprep.mubr.bf16.mxu0 %v910
      %1690 = vmatmul.mubr.bf16.gmra.mxu0 %v909
      %v1691 = vpop.f32.mrf.mxu0
      %v1692 = vadd.f32 %v1531, %v1691
      %v1693 = vpop.f32.mrf.mxu0
      %v1694 = vpop.f32.mrf.mxu0
      %v1695 = vadd.f32 %v1534, %v1694
      %v1696 = vpop.f32.mrf.mxu0
      %1697 = vmatprep.mubr.bf16.mxu0 %v917
      %1698 = vmatmul.mubr.bf16.gmra.mxu0 %v916
      %v1699 = vpop.f32.mrf.mxu0
      %v1700 = vadd.f32 %v1539, %v1699
      %v1701 = vpop.f32.mrf.mxu0
      %v1702 = vpop.f32.mrf.mxu0
      %v1703 = vadd.f32 %v1542, %v1702
      %v1704 = vpop.f32.mrf.mxu0
      %1705 = vmatprep.mubr.bf16.mxu0 %v924
      %1706 = vmatmul.mubr.bf16.gmra.mxu0 %v923
      %v1707 = vpop.f32.mrf.mxu0
      %v1708 = vadd.f32 %v1547, %v1707
      %v1709 = vpop.f32.mrf.mxu0
      %v1710 = vpop.f32.mrf.mxu0
      %v1711 = vadd.f32 %v1550, %v1710
      %v1712 = vpop.f32.mrf.mxu0
      %1713 = vmatprep.mubr.bf16.mxu0 %v931
      %1714 = vmatmul.mubr.bf16.gmra.mxu0 %v930
      %v1715 = vpop.f32.mrf.mxu0
      %v1716 = vadd.f32 %v1555, %v1715
      %v1717 = vpop.f32.mrf.mxu0
      %v1718 = vpop.f32.mrf.mxu0
      %v1719 = vadd.f32 %v1558, %v1718
      %v1720 = vpop.f32.mrf.mxu0
      %1721 = vmatprep.mubr.bf16.mxu0 %v938
      %1722 = vmatmul.mubr.bf16.gmra.mxu0 %v937
      %v1723 = vpop.f32.mrf.mxu0
      %v1724 = vadd.f32 %v1563, %v1723
      %v1725 = vpop.f32.mrf.mxu0
      %v1726 = vpop.f32.mrf.mxu0
      %v1727 = vadd.f32 %v1566, %v1726
      %v1728 = vpop.f32.mrf.mxu0
      %1729 = vmatprep.mubr.bf16.mxu0 %v945
      %1730 = vmatmul.mubr.bf16.gmra.mxu0 %v944
      %v1731 = vpop.f32.mrf.mxu0
      %v1732 = vadd.f32 %v1571, %v1731
      %v1733 = vpop.f32.mrf.mxu0
      %v1734 = vpop.f32.mrf.mxu0
      %v1735 = vadd.f32 %v1574, %v1734
      %v1736 = vpop.f32.mrf.mxu0
      %1737 = vmatprep.mubr.bf16.mxu0 %v952
      %1738 = vmatmul.mubr.bf16.gmra.mxu0 %v951
      %v1739 = vpop.f32.mrf.mxu0
      %v1740 = vadd.f32 %v1579, %v1739
      %v1741 = vpop.f32.mrf.mxu0
      %v1742 = vpop.f32.mrf.mxu0
      %v1743 = vadd.f32 %v1582, %v1742
      %v1744 = vpop.f32.mrf.mxu0
      %1745 = vmatprep.mubr.bf16.mxu0 %v959
      %1746 = vmatmul.mubr.bf16.gmra.mxu0 %v958
      %v1747 = vpop.f32.mrf.mxu0
      %v1748 = vadd.f32 %v1587, %v1747
      %v1749 = vpop.f32.mrf.mxu0
      %v1750 = vpop.f32.mrf.mxu0
      %v1751 = vadd.f32 %v1590, %v1750
      %v1752 = vpop.f32.mrf.mxu0
      %1753 = vdwg.mxu0
      %1754 = vmatprep.subr.bf16.mxu0 0
      %1755 = vmatpush1.bf16.msra.mxu0 %v1314
      %1756 = vmatprep.subr.bf16.mxu0 0
      %1757 = vmatpush1.bf16.msra.mxu0 %v1313
      %1758 = vmatprep.subr.bf16.mxu0 0
      %1759 = vmatpush1.bf16.msra.mxu0 %v1312
      %1760 = vmatprep.subr.bf16.mxu0 0
      %1761 = vmatpush1.bf16.msra.mxu0 %v1311
      %1762 = vmatprep.subr.bf16.mxu0 0
      %1763 = vmatpush1.bf16.msra.mxu0 %v1310
      %1764 = vmatprep.subr.bf16.mxu0 0
      %1765 = vmatpush1.bf16.msra.mxu0 %v1309
      %1766 = vmatprep.subr.bf16.mxu0 0
      %1767 = vmatpush1.bf16.msra.mxu0 %v1308
      %1768 = vmatprep.subr.bf16.mxu0 0
      %1769 = vmatpush1.bf16.msra.mxu0 %v1307
      %1770 = vmatprep.subr.bf16.mxu0 0
      %1771 = vmatpush2.bf16.msra.mxu0 %v1322
      %1772 = vmatprep.subr.bf16.mxu0 0
      %1773 = vmatpush2.bf16.msra.mxu0 %v1321
      %1774 = vmatprep.subr.bf16.mxu0 0
      %1775 = vmatpush2.bf16.msra.mxu0 %v1320
      %1776 = vmatprep.subr.bf16.mxu0 0
      %1777 = vmatpush2.bf16.msra.mxu0 %v1319
      %1778 = vmatprep.subr.bf16.mxu0 0
      %1779 = vmatpush2.bf16.msra.mxu0 %v1318
      %1780 = vmatprep.subr.bf16.mxu0 0
      %1781 = vmatpush2.bf16.msra.mxu0 %v1317
      %1782 = vmatprep.subr.bf16.mxu0 0
      %1783 = vmatpush2.bf16.msra.mxu0 %v1316
      %1784 = vmatprep.subr.bf16.mxu0 0
      %1785 = vmatpush2.bf16.msra.mxu0 %v1315
      %1786 = vmatprep.mubr.bf16.mxu0 %v856
      %1787 = vmatmul.mubr.bf16.gmra.mxu0 %v855
      %v1788 = vpop.f32.mrf.mxu0
      %v1789 = vadd.f32 %v1628, %v1788
      %v1790 = vpop.f32.mrf.mxu0
      %v1791 = vpop.f32.mrf.mxu0
      %v1792 = vadd.f32 %v1631, %v1791
      %v1793 = vpop.f32.mrf.mxu0
      %1794 = vmatprep.mubr.bf16.mxu0 %v863
      %1795 = vmatmul.mubr.bf16.gmra.mxu0 %v862
      %v1796 = vpop.f32.mrf.mxu0
      %v1797 = vadd.f32 %v1636, %v1796
      %v1798 = vpop.f32.mrf.mxu0
      %v1799 = vpop.f32.mrf.mxu0
      %v1800 = vadd.f32 %v1639, %v1799
      %v1801 = vpop.f32.mrf.mxu0
      %1802 = vmatprep.mubr.bf16.mxu0 %v870
      %1803 = vmatmul.mubr.bf16.gmra.mxu0 %v869
      %v1804 = vpop.f32.mrf.mxu0
      %v1805 = vadd.f32 %v1644, %v1804
      %v1806 = vpop.f32.mrf.mxu0
      %v1807 = vpop.f32.mrf.mxu0
      %v1808 = vadd.f32 %v1647, %v1807
      %v1809 = vpop.f32.mrf.mxu0
      %1810 = vmatprep.mubr.bf16.mxu0 %v877
      %1811 = vmatmul.mubr.bf16.gmra.mxu0 %v876
      %v1812 = vpop.f32.mrf.mxu0
      %v1813 = vadd.f32 %v1652, %v1812
      %v1814 = vpop.f32.mrf.mxu0
      %v1815 = vpop.f32.mrf.mxu0
      %v1816 = vadd.f32 %v1655, %v1815
      %v1817 = vpop.f32.mrf.mxu0
      %1818 = vmatprep.mubr.bf16.mxu0 %v884
      %1819 = vmatmul.mubr.bf16.gmra.mxu0 %v883
      %v1820 = vpop.f32.mrf.mxu0
      %v1821 = vadd.f32 %v1660, %v1820
      %v1822 = vpop.f32.mrf.mxu0
      %v1823 = vpop.f32.mrf.mxu0
      %v1824 = vadd.f32 %v1663, %v1823
      %v1825 = vpop.f32.mrf.mxu0
      %1826 = vmatprep.mubr.bf16.mxu0 %v891
      %1827 = vmatmul.mubr.bf16.gmra.mxu0 %v890
      %v1828 = vpop.f32.mrf.mxu0
      %v1829 = vadd.f32 %v1668, %v1828
      %v1830 = vpop.f32.mrf.mxu0
      %v1831 = vpop.f32.mrf.mxu0
      %v1832 = vadd.f32 %v1671, %v1831
      %v1833 = vpop.f32.mrf.mxu0
      %1834 = vmatprep.mubr.bf16.mxu0 %v898
      %1835 = vmatmul.mubr.bf16.gmra.mxu0 %v897
      %v1836 = vpop.f32.mrf.mxu0
      %v1837 = vadd.f32 %v1676, %v1836
      %v1838 = vpop.f32.mrf.mxu0
      %v1839 = vpop.f32.mrf.mxu0
      %v1840 = vadd.f32 %v1679, %v1839
      %v1841 = vpop.f32.mrf.mxu0
      %1842 = vmatprep.mubr.bf16.mxu0 %v905
      %1843 = vmatmul.mubr.bf16.gmra.mxu0 %v904
      %v1844 = vpop.f32.mrf.mxu0
      %v1845 = vadd.f32 %v1684, %v1844
      %v1846 = vpop.f32.mrf.mxu0
      %v1847 = vpop.f32.mrf.mxu0
      %v1848 = vadd.f32 %v1687, %v1847
      %v1849 = vpop.f32.mrf.mxu0
      %1850 = vmatprep.mubr.bf16.mxu0 %v912
      %1851 = vmatmul.mubr.bf16.gmra.mxu0 %v911
      %v1852 = vpop.f32.mrf.mxu0
      %v1853 = vadd.f32 %v1692, %v1852
      %v1854 = vpop.f32.mrf.mxu0
      %v1855 = vpop.f32.mrf.mxu0
      %v1856 = vadd.f32 %v1695, %v1855
      %v1857 = vpop.f32.mrf.mxu0
      %1858 = vmatprep.mubr.bf16.mxu0 %v919
      %1859 = vmatmul.mubr.bf16.gmra.mxu0 %v918
      %v1860 = vpop.f32.mrf.mxu0
      %v1861 = vadd.f32 %v1700, %v1860
      %v1862 = vpop.f32.mrf.mxu0
      %v1863 = vpop.f32.mrf.mxu0
      %v1864 = vadd.f32 %v1703, %v1863
      %v1865 = vpop.f32.mrf.mxu0
      %1866 = vmatprep.mubr.bf16.mxu0 %v926
      %1867 = vmatmul.mubr.bf16.gmra.mxu0 %v925
      %v1868 = vpop.f32.mrf.mxu0
      %v1869 = vadd.f32 %v1708, %v1868
      %v1870 = vpop.f32.mrf.mxu0
      %v1871 = vpop.f32.mrf.mxu0
      %v1872 = vadd.f32 %v1711, %v1871
      %v1873 = vpop.f32.mrf.mxu0
      %1874 = vmatprep.mubr.bf16.mxu0 %v933
      %1875 = vmatmul.mubr.bf16.gmra.mxu0 %v932
      %v1876 = vpop.f32.mrf.mxu0
      %v1877 = vadd.f32 %v1716, %v1876
      %v1878 = vpop.f32.mrf.mxu0
      %v1879 = vpop.f32.mrf.mxu0
      %v1880 = vadd.f32 %v1719, %v1879
      %v1881 = vpop.f32.mrf.mxu0
      %1882 = vmatprep.mubr.bf16.mxu0 %v940
      %1883 = vmatmul.mubr.bf16.gmra.mxu0 %v939
      %v1884 = vpop.f32.mrf.mxu0
      %v1885 = vadd.f32 %v1724, %v1884
      %v1886 = vpop.f32.mrf.mxu0
      %v1887 = vpop.f32.mrf.mxu0
      %v1888 = vadd.f32 %v1727, %v1887
      %v1889 = vpop.f32.mrf.mxu0
      %1890 = vmatprep.mubr.bf16.mxu0 %v947
      %1891 = vmatmul.mubr.bf16.gmra.mxu0 %v946
      %v1892 = vpop.f32.mrf.mxu0
      %v1893 = vadd.f32 %v1732, %v1892
      %v1894 = vpop.f32.mrf.mxu0
      %v1895 = vpop.f32.mrf.mxu0
      %v1896 = vadd.f32 %v1735, %v1895
      %v1897 = vpop.f32.mrf.mxu0
      %1898 = vmatprep.mubr.bf16.mxu0 %v954
      %1899 = vmatmul.mubr.bf16.gmra.mxu0 %v953
      %v1900 = vpop.f32.mrf.mxu0
      %v1901 = vadd.f32 %v1740, %v1900
      %v1902 = vpop.f32.mrf.mxu0
      %v1903 = vpop.f32.mrf.mxu0
      %v1904 = vadd.f32 %v1743, %v1903
      %v1905 = vpop.f32.mrf.mxu0
      %1906 = vmatprep.mubr.bf16.mxu0 %v961
      %1907 = vmatmul.mubr.bf16.gmra.mxu0 %v960
      %v1908 = vpop.f32.mrf.mxu0
      %v1909 = vadd.f32 %v1748, %v1908
      %v1910 = vpop.f32.mrf.mxu0
      %v1911 = vpop.f32.mrf.mxu0
      %v1912 = vadd.f32 %v1751, %v1911
      %v1913 = vpop.f32.mrf.mxu0
      %1914 = vdwg.mxu0
      %1915 = vmatprep.subr.bf16.mxu0 0
      %1916 = vmatpush1.bf16.msra.mxu0 0
      %1917 = vmatprep.subr.bf16.mxu0 0
      %1918 = vmatpush1.bf16.msra.mxu0 0
      %1919 = vmatprep.subr.bf16.mxu0 0
      %1920 = vmatpush1.bf16.msra.mxu0 %v1328
      %1921 = vmatprep.subr.bf16.mxu0 0
      %1922 = vmatpush1.bf16.msra.mxu0 %v1327
      %1923 = vmatprep.subr.bf16.mxu0 0
      %1924 = vmatpush1.bf16.msra.mxu0 %v1326
      %1925 = vmatprep.subr.bf16.mxu0 0
      %1926 = vmatpush1.bf16.msra.mxu0 %v1325
      %1927 = vmatprep.subr.bf16.mxu0 0
      %1928 = vmatpush1.bf16.msra.mxu0 %v1324
      %1929 = vmatprep.subr.bf16.mxu0 0
      %1930 = vmatpush1.bf16.msra.mxu0 %v1323
      %1931 = vmatprep.subr.bf16.mxu0 0
      %1932 = vmatpush2.bf16.msra.mxu0 0
      %1933 = vmatprep.subr.bf16.mxu0 0
      %1934 = vmatpush2.bf16.msra.mxu0 0
      %1935 = vmatprep.subr.bf16.mxu0 0
      %1936 = vmatpush2.bf16.msra.mxu0 0
      %1937 = vmatprep.subr.bf16.mxu0 0
      %1938 = vmatpush2.bf16.msra.mxu0 0
      %1939 = vmatprep.subr.bf16.mxu0 0
      %1940 = vmatpush2.bf16.msra.mxu0 0
      %1941 = vmatprep.subr.bf16.mxu0 0
      %1942 = vmatpush2.bf16.msra.mxu0 0
      %1943 = vmatprep.subr.bf16.mxu0 0
      %1944 = vmatpush2.bf16.msra.mxu0 0
      %1945 = vmatprep.subr.bf16.mxu0 0
      %1946 = vmatpush2.bf16.msra.mxu0 0
      %1947 = vmatprep.mubr.bf16.mxu0 0
      %1948 = vmatmul.mubr.bf16.gmra.mxu0 %v1385
      %v1949 = vpop.f32.mrf.mxu0
      %v1950 = vadd.f32 %v1789, %v1949
      %v1951 = vpop.f32.mrf.mxu0
      %v1952 = vpop.f32.mrf.mxu0
      %v1953 = vadd.f32 %v1792, %v1952
      %v1954 = vpop.f32.mrf.mxu0
      %1955 = vmatprep.mubr.bf16.mxu0 0
      %1956 = vmatmul.mubr.bf16.gmra.mxu0 %v1388
      %v1957 = vpop.f32.mrf.mxu0
      %v1958 = vadd.f32 %v1797, %v1957
      %v1959 = vpop.f32.mrf.mxu0
      %v1960 = vpop.f32.mrf.mxu0
      %v1961 = vadd.f32 %v1800, %v1960
      %v1962 = vpop.f32.mrf.mxu0
      %1963 = vmatprep.mubr.bf16.mxu0 0
      %1964 = vmatmul.mubr.bf16.gmra.mxu0 %v1391
      %v1965 = vpop.f32.mrf.mxu0
      %v1966 = vadd.f32 %v1805, %v1965
      %v1967 = vpop.f32.mrf.mxu0
      %v1968 = vpop.f32.mrf.mxu0
      %v1969 = vadd.f32 %v1808, %v1968
      %v1970 = vpop.f32.mrf.mxu0
      %1971 = vmatprep.mubr.bf16.mxu0 0
      %1972 = vmatmul.mubr.bf16.gmra.mxu0 %v1394
      %v1973 = vpop.f32.mrf.mxu0
      %v1974 = vadd.f32 %v1813, %v1973
      %v1975 = vpop.f32.mrf.mxu0
      %v1976 = vpop.f32.mrf.mxu0
      %v1977 = vadd.f32 %v1816, %v1976
      %v1978 = vpop.f32.mrf.mxu0
      %1979 = vmatprep.mubr.bf16.mxu0 0
      %1980 = vmatmul.mubr.bf16.gmra.mxu0 %v1397
      %v1981 = vpop.f32.mrf.mxu0
      %v1982 = vadd.f32 %v1821, %v1981
      %v1983 = vpop.f32.mrf.mxu0
      %v1984 = vpop.f32.mrf.mxu0
      %v1985 = vadd.f32 %v1824, %v1984
      %v1986 = vpop.f32.mrf.mxu0
      %1987 = vmatprep.mubr.bf16.mxu0 0
      %1988 = vmatmul.mubr.bf16.gmra.mxu0 %v1400
      %v1989 = vpop.f32.mrf.mxu0
      %v1990 = vadd.f32 %v1829, %v1989
      %v1991 = vpop.f32.mrf.mxu0
      %v1992 = vpop.f32.mrf.mxu0
      %v1993 = vadd.f32 %v1832, %v1992
      %v1994 = vpop.f32.mrf.mxu0
      %1995 = vmatprep.mubr.bf16.mxu0 0
      %1996 = vmatmul.mubr.bf16.gmra.mxu0 %v1403
      %v1997 = vpop.f32.mrf.mxu0
      %v1998 = vadd.f32 %v1837, %v1997
      %v1999 = vpop.f32.mrf.mxu0
      %v2000 = vpop.f32.mrf.mxu0
      %v2001 = vadd.f32 %v1840, %v2000
      %v2002 = vpop.f32.mrf.mxu0
      %2003 = vmatprep.mubr.bf16.mxu0 0
      %2004 = vmatmul.mubr.bf16.gmra.mxu0 %v1406
      %v2005 = vpop.f32.mrf.mxu0
      %v2006 = vadd.f32 %v1845, %v2005
      %v2007 = vpop.f32.mrf.mxu0
      %v2008 = vpop.f32.mrf.mxu0
      %v2009 = vadd.f32 %v1848, %v2008
      %v2010 = vpop.f32.mrf.mxu0
      %2011 = vmatprep.mubr.bf16.mxu0 0
      %2012 = vmatmul.mubr.bf16.gmra.mxu0 %v1409
      %v2013 = vpop.f32.mrf.mxu0
      %v2014 = vadd.f32 %v1853, %v2013
      %v2015 = vpop.f32.mrf.mxu0
      %v2016 = vpop.f32.mrf.mxu0
      %v2017 = vadd.f32 %v1856, %v2016
      %v2018 = vpop.f32.mrf.mxu0
      %2019 = vmatprep.mubr.bf16.mxu0 0
      %2020 = vmatmul.mubr.bf16.gmra.mxu0 %v1412
      %v2021 = vpop.f32.mrf.mxu0
      %v2022 = vadd.f32 %v1861, %v2021
      %v2023 = vpop.f32.mrf.mxu0
      %v2024 = vpop.f32.mrf.mxu0
      %v2025 = vadd.f32 %v1864, %v2024
      %v2026 = vpop.f32.mrf.mxu0
      %2027 = vmatprep.mubr.bf16.mxu0 0
      %2028 = vmatmul.mubr.bf16.gmra.mxu0 %v1415
      %v2029 = vpop.f32.mrf.mxu0
      %v2030 = vadd.f32 %v1869, %v2029
      %v2031 = vpop.f32.mrf.mxu0
      %v2032 = vpop.f32.mrf.mxu0
      %v2033 = vadd.f32 %v1872, %v2032
      %v2034 = vpop.f32.mrf.mxu0
      %2035 = vmatprep.mubr.bf16.mxu0 0
      %2036 = vmatmul.mubr.bf16.gmra.mxu0 %v1418
      %v2037 = vpop.f32.mrf.mxu0
      %v2038 = vadd.f32 %v1877, %v2037
      %v2039 = vpop.f32.mrf.mxu0
      %v2040 = vpop.f32.mrf.mxu0
      %v2041 = vadd.f32 %v1880, %v2040
      %v2042 = vpop.f32.mrf.mxu0
      %2043 = vmatprep.mubr.bf16.mxu0 0
      %2044 = vmatmul.mubr.bf16.gmra.mxu0 %v1421
      %v2045 = vpop.f32.mrf.mxu0
      %v2046 = vadd.f32 %v1885, %v2045
      %v2047 = vpop.f32.mrf.mxu0
      %v2048 = vpop.f32.mrf.mxu0
      %v2049 = vadd.f32 %v1888, %v2048
      %v2050 = vpop.f32.mrf.mxu0
      %2051 = vmatprep.mubr.bf16.mxu0 0
      %2052 = vmatmul.mubr.bf16.gmra.mxu0 %v1424
      %v2053 = vpop.f32.mrf.mxu0
      %v2054 = vadd.f32 %v1893, %v2053
      %v2055 = vpop.f32.mrf.mxu0
      %v2056 = vpop.f32.mrf.mxu0
      %v2057 = vadd.f32 %v1896, %v2056
      %v2058 = vpop.f32.mrf.mxu0
      %2059 = vmatprep.mubr.bf16.mxu0 0
      %2060 = vmatmul.mubr.bf16.gmra.mxu0 %v1427
      %v2061 = vpop.f32.mrf.mxu0
      %v2062 = vadd.f32 %v1901, %v2061
      %v2063 = vpop.f32.mrf.mxu0
      %v2064 = vpop.f32.mrf.mxu0
      %v2065 = vadd.f32 %v1904, %v2064
      %v2066 = vpop.f32.mrf.mxu0
      %2067 = vmatprep.mubr.bf16.mxu0 0
      %2068 = vmatmul.mubr.bf16.gmra.mxu0 %v1430
      %v2069 = vpop.f32.mrf.mxu0
      %v2070 = vadd.f32 %v1909, %v2069
      %v2071 = vpop.f32.mrf.mxu0
      %v2072 = vpop.f32.mrf.mxu0
      %v2073 = vadd.f32 %v1912, %v2072
      %v2074 = vpop.f32.mrf.mxu0
      %2075 = vdwg.mxu0
      %v2076 = vpack.c.bf16 %v1953, %v1950
      %v2077 = vpack.c.bf16 %v1961, %v1958
      %v2078 = vpack.c.bf16 %v1969, %v1966
      %v2079 = vpack.c.bf16 %v1977, %v1974
      %v2080 = vpack.c.bf16 %v1985, %v1982
      %v2081 = vpack.c.bf16 %v1993, %v1990
      %v2082 = vpack.c.bf16 %v2001, %v1998
      %v2083 = vpack.c.bf16 %v2009, %v2006
      %v2084 = vpack.c.bf16 %v2017, %v2014
      %v2085 = vpack.c.bf16 %v2025, %v2022
      %v2086 = vpack.c.bf16 %v2033, %v2030
      %v2087 = vpack.c.bf16 %v2041, %v2038
      %v2088 = vpack.c.bf16 %v2049, %v2046
      %v2089 = vpack.c.bf16 %v2057, %v2054
      %v2090 = vpack.c.bf16 %v2065, %v2062
      %v2091 = vpack.c.bf16 %v2073, %v2070
      %v2108 = vunpack.c.l.b16 %v2076
      %v2109 = vunpack.c.h.b16 %v2076
      %v2110 = vunpack.c.l.b16 %v2077
      %v2111 = vunpack.c.h.b16 %v2077
      %v2112 = vunpack.c.l.b16 %v2078
      %v2113 = vunpack.c.h.b16 %v2078
      %v2114 = vunpack.c.l.b16 %v2079
      %v2115 = vunpack.c.h.b16 %v2079
      %v2116 = vunpack.c.l.b16 %v2080
      %v2117 = vunpack.c.h.b16 %v2080
      %v2118 = vunpack.c.l.b16 %v2081
      %v2119 = vunpack.c.h.b16 %v2081
      %v2120 = vunpack.c.l.b16 %v2082
      %v2121 = vunpack.c.h.b16 %v2082
      %v2122 = vunpack.c.l.b16 %v2083
      %v2123 = vunpack.c.h.b16 %v2083
      %v2124 = vunpack.c.l.b16 %v2084
      %v2125 = vunpack.c.h.b16 %v2084
      %v2126 = vunpack.c.l.b16 %v2085
      %v2127 = vunpack.c.h.b16 %v2085
      %v2128 = vunpack.c.l.b16 %v2086
      %v2129 = vunpack.c.h.b16 %v2086
      %v2130 = vunpack.c.l.b16 %v2087
      %v2131 = vunpack.c.h.b16 %v2087
      %v2132 = vunpack.c.l.b16 %v2088
      %v2133 = vunpack.c.h.b16 %v2088
      %v2134 = vunpack.c.l.b16 %v2089
      %v2135 = vunpack.c.h.b16 %v2089
      %v2136 = vunpack.c.l.b16 %v2090
      %v2137 = vunpack.c.h.b16 %v2090
      %v2138 = vunpack.c.l.b16 %v2091
      %v2139 = vunpack.c.h.b16 %v2091
      %v2140 = vpack.c.b16 %v2108, %v2108
      %v2141 = vpack.c.b16 %v2109, %v2109
      %v2142 = vpack.c.b16 %v2110, %v2110
      %v2143 = vpack.c.b16 %v2111, %v2111
      %v2144 = vpack.c.b16 %v2112, %v2112
      %v2145 = vpack.c.b16 %v2113, %v2113
      %v2146 = vpack.c.b16 %v2114, %v2114
      %v2147 = vpack.c.b16 %v2115, %v2115
      %v2148 = vpack.c.b16 %v2116, %v2116
      %v2149 = vpack.c.b16 %v2117, %v2117
      %v2150 = vpack.c.b16 %v2118, %v2118
      %v2151 = vpack.c.b16 %v2119, %v2119
      %v2152 = vpack.c.b16 %v2120, %v2120
      %v2153 = vpack.c.b16 %v2121, %v2121
      %v2154 = vpack.c.b16 %v2122, %v2122
      %v2155 = vpack.c.b16 %v2123, %v2123
      %v2156 = vpack.c.b16 %v2124, %v2124
      %v2157 = vpack.c.b16 %v2125, %v2125
      %v2158 = vpack.c.b16 %v2126, %v2126
      %v2159 = vpack.c.b16 %v2127, %v2127
      %v2160 = vpack.c.b16 %v2128, %v2128
      %v2161 = vpack.c.b16 %v2129, %v2129
      %v2162 = vpack.c.b16 %v2130, %v2130
      %v2163 = vpack.c.b16 %v2131, %v2131
      %v2164 = vpack.c.b16 %v2132, %v2132
      %v2165 = vpack.c.b16 %v2133, %v2133
      %v2166 = vpack.c.b16 %v2134, %v2134
      %v2167 = vpack.c.b16 %v2135, %v2135
      %v2168 = vpack.c.b16 %v2136, %v2136
      %v2169 = vpack.c.b16 %v2137, %v2137
      %v2170 = vpack.c.b16 %v2138, %v2138
      %v2171 = vpack.c.b16 %v2139, %v2139
      %vm2204 = vcmask 519168
      %2205 = vst.msk [vmem:[%s243] sm:$0xf] %vm2204, %v2140
      %2206 = vst.msk [vmem:[%s243 + $0x4] sm:$0xf] %vm2204, %v2141
      %2207 = vst.msk [vmem:[%s243 + $0x8] sm:$0xf] %vm2204, %v2142
      %2208 = vst.msk [vmem:[%s243 + $0xc] sm:$0xf] %vm2204, %v2143
      %2209 = vst.msk [vmem:[%s243 + $0x10] sm:$0xf] %vm2204, %v2144
      %2210 = vst.msk [vmem:[%s243 + $0x14] sm:$0xf] %vm2204, %v2145
      %2211 = vst.msk [vmem:[%s243 + $0x18] sm:$0xf] %vm2204, %v2146
      %2212 = vst.msk [vmem:[%s243 + $0x1c] sm:$0xf] %vm2204, %v2147
      %2213 = vst.msk [vmem:[%s243 + $0x20] sm:$0xf] %vm2204, %v2148
      %2214 = vst.msk [vmem:[%s243 + $0x24] sm:$0xf] %vm2204, %v2149
      %2215 = vst.msk [vmem:[%s243 + $0x28] sm:$0xf] %vm2204, %v2150
      %2216 = vst.msk [vmem:[%s243 + $0x2c] sm:$0xf] %vm2204, %v2151
      %2217 = vst.msk [vmem:[%s243 + $0x30] sm:$0xf] %vm2204, %v2152
      %2218 = vst.msk [vmem:[%s243 + $0x34] sm:$0xf] %vm2204, %v2153
      %2219 = vst.msk [vmem:[%s243 + $0x38] sm:$0xf] %vm2204, %v2154
      %2220 = vst.msk [vmem:[%s243 + $0x3c] sm:$0xf] %vm2204, %v2155
      %2221 = vst.msk [vmem:[%s243 + $0x40] sm:$0xf] %vm2204, %v2156
      %2222 = vst.msk [vmem:[%s243 + $0x44] sm:$0xf] %vm2204, %v2157
      %2223 = vst.msk [vmem:[%s243 + $0x48] sm:$0xf] %vm2204, %v2158
      %2224 = vst.msk [vmem:[%s243 + $0x4c] sm:$0xf] %vm2204, %v2159
      %2225 = vst.msk [vmem:[%s243 + $0x50] sm:$0xf] %vm2204, %v2160
      %2226 = vst.msk [vmem:[%s243 + $0x54] sm:$0xf] %vm2204, %v2161
      %2227 = vst.msk [vmem:[%s243 + $0x58] sm:$0xf] %vm2204, %v2162
      %2228 = vst.msk [vmem:[%s243 + $0x5c] sm:$0xf] %vm2204, %v2163
      %2229 = vst.msk [vmem:[%s243 + $0x60] sm:$0xf] %vm2204, %v2164
      %2230 = vst.msk [vmem:[%s243 + $0x64] sm:$0xf] %vm2204, %v2165
      %2231 = vst.msk [vmem:[%s243 + $0x68] sm:$0xf] %vm2204, %v2166
      %2232 = vst.msk [vmem:[%s243 + $0x6c] sm:$0xf] %vm2204, %v2167
      %2233 = vst.msk [vmem:[%s243 + $0x70] sm:$0xf] %vm2204, %v2168
      %2234 = vst.msk [vmem:[%s243 + $0x74] sm:$0xf] %vm2204, %v2169
      %2235 = vst.msk [vmem:[%s243 + $0x78] sm:$0xf] %vm2204, %v2170
      %2236 = vst.msk [vmem:[%s243 + $0x7c] sm:$0xf] %vm2204, %v2171
      %2237 = vrot.lane.b32.xlu0 %v2140, 64
      %v2238 = vpop.permute.xlu0 %2237
      %2239 = vrot.lane.b32.xlu0 %v2141, 64
      %v2240 = vpop.permute.xlu0 %2239
      %2241 = vrot.lane.b32.xlu0 %v2142, 64
      %v2242 = vpop.permute.xlu0 %2241
      %2243 = vrot.lane.b32.xlu0 %v2143, 64
      %v2244 = vpop.permute.xlu0 %2243
      %2245 = vrot.lane.b32.xlu0 %v2144, 64
      %v2246 = vpop.permute.xlu0 %2245
      %2247 = vrot.lane.b32.xlu0 %v2145, 64
      %v2248 = vpop.permute.xlu0 %2247
      %2249 = vrot.lane.b32.xlu0 %v2146, 64
      %v2250 = vpop.permute.xlu0 %2249
      %2251 = vrot.lane.b32.xlu0 %v2147, 64
      %v2252 = vpop.permute.xlu0 %2251
      %2253 = vrot.lane.b32.xlu0 %v2148, 64
      %v2254 = vpop.permute.xlu0 %2253
      %2255 = vrot.lane.b32.xlu0 %v2149, 64
      %v2256 = vpop.permute.xlu0 %2255
      %2257 = vrot.lane.b32.xlu0 %v2150, 64
      %v2258 = vpop.permute.xlu0 %2257
      %2259 = vrot.lane.b32.xlu0 %v2151, 64
      %v2260 = vpop.permute.xlu0 %2259
      %2261 = vrot.lane.b32.xlu0 %v2152, 64
      %v2262 = vpop.permute.xlu0 %2261
      %2263 = vrot.lane.b32.xlu0 %v2153, 64
      %v2264 = vpop.permute.xlu0 %2263
      %2265 = vrot.lane.b32.xlu0 %v2154, 64
      %v2266 = vpop.permute.xlu0 %2265
      %2267 = vrot.lane.b32.xlu0 %v2155, 64
      %v2268 = vpop.permute.xlu0 %2267
      %2269 = vrot.lane.b32.xlu0 %v2156, 64
      %v2270 = vpop.permute.xlu0 %2269
      %2271 = vrot.lane.b32.xlu0 %v2157, 64
      %v2272 = vpop.permute.xlu0 %2271
      %2273 = vrot.lane.b32.xlu0 %v2158, 64
      %v2274 = vpop.permute.xlu0 %2273
      %2275 = vrot.lane.b32.xlu0 %v2159, 64
      %v2276 = vpop.permute.xlu0 %2275
      %2277 = vrot.lane.b32.xlu0 %v2160, 64
      %v2278 = vpop.permute.xlu0 %2277
      %2279 = vrot.lane.b32.xlu0 %v2161, 64
      %v2280 = vpop.permute.xlu0 %2279
      %2281 = vrot.lane.b32.xlu0 %v2162, 64
      %v2282 = vpop.permute.xlu0 %2281
      %2283 = vrot.lane.b32.xlu0 %v2163, 64
      %v2284 = vpop.permute.xlu0 %2283
      %2285 = vrot.lane.b32.xlu0 %v2164, 64
      %v2286 = vpop.permute.xlu0 %2285
      %2287 = vrot.lane.b32.xlu0 %v2165, 64
      %v2288 = vpop.permute.xlu0 %2287
      %2289 = vrot.lane.b32.xlu0 %v2166, 64
      %v2290 = vpop.permute.xlu0 %2289
      %2291 = vrot.lane.b32.xlu0 %v2167, 64
      %v2292 = vpop.permute.xlu0 %2291
      %2293 = vrot.lane.b32.xlu0 %v2168, 64
      %v2294 = vpop.permute.xlu0 %2293
      %2295 = vrot.lane.b32.xlu0 %v2169, 64
      %v2296 = vpop.permute.xlu0 %2295
      %2297 = vrot.lane.b32.xlu0 %v2170, 64
      %v2298 = vpop.permute.xlu0 %2297
      %2299 = vrot.lane.b32.xlu0 %v2171, 64
      %v2300 = vpop.permute.xlu0 %2299
      %2333 = vst.msk [vmem:[%s249] sm:$0xf] %vm2204, %v2238
      %2334 = vst.msk [vmem:[%s249 + $0x4] sm:$0xf] %vm2204, %v2240
      %2335 = vst.msk [vmem:[%s249 + $0x8] sm:$0xf] %vm2204, %v2242
      %2336 = vst.msk [vmem:[%s249 + $0xc] sm:$0xf] %vm2204, %v2244
      %2337 = vst.msk [vmem:[%s249 + $0x10] sm:$0xf] %vm2204, %v2246
      %2338 = vst.msk [vmem:[%s249 + $0x14] sm:$0xf] %vm2204, %v2248
      %2339 = vst.msk [vmem:[%s249 + $0x18] sm:$0xf] %vm2204, %v2250
      %2340 = vst.msk [vmem:[%s249 + $0x1c] sm:$0xf] %vm2204, %v2252
      %2341 = vst.msk [vmem:[%s249 + $0x20] sm:$0xf] %vm2204, %v2254
      %2342 = vst.msk [vmem:[%s249 + $0x24] sm:$0xf] %vm2204, %v2256
      %2343 = vst.msk [vmem:[%s249 + $0x28] sm:$0xf] %vm2204, %v2258
      %2344 = vst.msk [vmem:[%s249 + $0x2c] sm:$0xf] %vm2204, %v2260
      %2345 = vst.msk [vmem:[%s249 + $0x30] sm:$0xf] %vm2204, %v2262
      %2346 = vst.msk [vmem:[%s249 + $0x34] sm:$0xf] %vm2204, %v2264
      %2347 = vst.msk [vmem:[%s249 + $0x38] sm:$0xf] %vm2204, %v2266
      %2348 = vst.msk [vmem:[%s249 + $0x3c] sm:$0xf] %vm2204, %v2268
      %2349 = vst.msk [vmem:[%s249 + $0x40] sm:$0xf] %vm2204, %v2270
      %2350 = vst.msk [vmem:[%s249 + $0x44] sm:$0xf] %vm2204, %v2272
      %2351 = vst.msk [vmem:[%s249 + $0x48] sm:$0xf] %vm2204, %v2274
      %2352 = vst.msk [vmem:[%s249 + $0x4c] sm:$0xf] %vm2204, %v2276
      %2353 = vst.msk [vmem:[%s249 + $0x50] sm:$0xf] %vm2204, %v2278
      %2354 = vst.msk [vmem:[%s249 + $0x54] sm:$0xf] %vm2204, %v2280
      %2355 = vst.msk [vmem:[%s249 + $0x58] sm:$0xf] %vm2204, %v2282
      %2356 = vst.msk [vmem:[%s249 + $0x5c] sm:$0xf] %vm2204, %v2284
      %2357 = vst.msk [vmem:[%s249 + $0x60] sm:$0xf] %vm2204, %v2286
      %2358 = vst.msk [vmem:[%s249 + $0x64] sm:$0xf] %vm2204, %v2288
      %2359 = vst.msk [vmem:[%s249 + $0x68] sm:$0xf] %vm2204, %v2290
      %2360 = vst.msk [vmem:[%s249 + $0x6c] sm:$0xf] %vm2204, %v2292
      %2361 = vst.msk [vmem:[%s249 + $0x70] sm:$0xf] %vm2204, %v2294
      %2362 = vst.msk [vmem:[%s249 + $0x74] sm:$0xf] %vm2204, %v2296
      %2363 = vst.msk [vmem:[%s249 + $0x78] sm:$0xf] %vm2204, %v2298
      %2364 = vst.msk [vmem:[%s249 + $0x7c] sm:$0xf] %vm2204, %v2300
      %s2365 = smul.u32 %s17, 256
      %v2366 = vlaneseq
      %v2367 = vshrl.u32 %v2366, 7
      %v2368 = vadd.s32 %v2367, 8
      %v2369 = vadd.s32 %v2367, 16
      %v2370 = vadd.s32 %v2367, 24
      %v2371 = vadd.s32 %v2367, 32
      %v2372 = vadd.s32 %v2367, 40
      %v2373 = vadd.s32 %v2367, 48
      %v2374 = vadd.s32 %v2367, 56
      %v2375 = vadd.s32 %v2367, 64
      %v2376 = vadd.s32 %v2367, 72
      %v2377 = vadd.s32 %v2367, 80
      %v2378 = vadd.s32 %v2367, 88
      %v2379 = vadd.s32 %v2367, 96
      %v2380 = vadd.s32 %v2367, 104
      %v2381 = vadd.s32 %v2367, 112
      %v2382 = vadd.s32 %v2367, 120
      %v2383 = vadd.s32 %v2367, 128
      %v2384 = vadd.s32 %v2367, 136
      %v2385 = vadd.s32 %v2367, 144
      %v2386 = vadd.s32 %v2367, 152
      %v2387 = vadd.s32 %v2367, 160
      %v2388 = vadd.s32 %v2367, 168
      %v2389 = vadd.s32 %v2367, 176
      %v2390 = vadd.s32 %v2367, 184
      %v2391 = vadd.s32 %v2367, 192
      %v2392 = vadd.s32 %v2367, 200
      %v2393 = vadd.s32 %v2367, 208
      %v2394 = vadd.s32 %v2367, 216
      %v2395 = vadd.s32 %v2367, 224
      %v2396 = vadd.s32 %v2367, 232
      %v2397 = vadd.s32 %v2367, 240
      %v2398 = vadd.s32 %v2367, 248
      %v2399 = vstv %s2365
      %v2400 = vadd.s32 %v2399, %v2367
      %v2401 = vadd.s32 %v2399, %v2368
      %v2402 = vadd.s32 %v2399, %v2369
      %v2403 = vadd.s32 %v2399, %v2370
      %v2404 = vadd.s32 %v2399, %v2371
      %v2405 = vadd.s32 %v2399, %v2372
      %v2406 = vadd.s32 %v2399, %v2373
      %v2407 = vadd.s32 %v2399, %v2374
      %v2408 = vadd.s32 %v2399, %v2375
      %v2409 = vadd.s32 %v2399, %v2376
      %v2410 = vadd.s32 %v2399, %v2377
      %v2411 = vadd.s32 %v2399, %v2378
      %v2412 = vadd.s32 %v2399, %v2379
      %v2413 = vadd.s32 %v2399, %v2380
      %v2414 = vadd.s32 %v2399, %v2381
      %v2415 = vadd.s32 %v2399, %v2382
      %v2416 = vadd.s32 %v2399, %v2383
      %v2417 = vadd.s32 %v2399, %v2384
      %v2418 = vadd.s32 %v2399, %v2385
      %v2419 = vadd.s32 %v2399, %v2386
      %v2420 = vadd.s32 %v2399, %v2387
      %v2421 = vadd.s32 %v2399, %v2388
      %v2422 = vadd.s32 %v2399, %v2389
      %v2423 = vadd.s32 %v2399, %v2390
      %v2424 = vadd.s32 %v2399, %v2391
      %v2425 = vadd.s32 %v2399, %v2392
      %v2426 = vadd.s32 %v2399, %v2393
      %v2427 = vadd.s32 %v2399, %v2394
      %v2428 = vadd.s32 %v2399, %v2395
      %v2429 = vadd.s32 %v2399, %v2396
      %v2430 = vadd.s32 %v2399, %v2397
      %v2431 = vadd.s32 %v2399, %v2398
      %vm2432 = vcmp.lt.s32.totalorder %v2400, 640
      %vm2433 = vcmp.lt.s32.totalorder %v2401, 640
      %vm2434 = vcmp.lt.s32.totalorder %v2402, 640
      %vm2435 = vcmp.lt.s32.totalorder %v2403, 640
      %vm2436 = vcmp.lt.s32.totalorder %v2404, 640
      %vm2437 = vcmp.lt.s32.totalorder %v2405, 640
      %vm2438 = vcmp.lt.s32.totalorder %v2406, 640
      %vm2439 = vcmp.lt.s32.totalorder %v2407, 640
      %vm2440 = vcmp.lt.s32.totalorder %v2408, 640
      %vm2441 = vcmp.lt.s32.totalorder %v2409, 640
      %vm2442 = vcmp.lt.s32.totalorder %v2410, 640
      %vm2443 = vcmp.lt.s32.totalorder %v2411, 640
      %vm2444 = vcmp.lt.s32.totalorder %v2412, 640
      %vm2445 = vcmp.lt.s32.totalorder %v2413, 640
      %vm2446 = vcmp.lt.s32.totalorder %v2414, 640
      %vm2447 = vcmp.lt.s32.totalorder %v2415, 640
      %vm2448 = vcmp.lt.s32.totalorder %v2416, 640
      %vm2449 = vcmp.lt.s32.totalorder %v2417, 640
      %vm2450 = vcmp.lt.s32.totalorder %v2418, 640
      %vm2451 = vcmp.lt.s32.totalorder %v2419, 640
      %vm2452 = vcmp.lt.s32.totalorder %v2420, 640
      %vm2453 = vcmp.lt.s32.totalorder %v2421, 640
      %vm2454 = vcmp.lt.s32.totalorder %v2422, 640
      %vm2455 = vcmp.lt.s32.totalorder %v2423, 640
      %vm2456 = vcmp.lt.s32.totalorder %v2424, 640
      %vm2457 = vcmp.lt.s32.totalorder %v2425, 640
      %vm2458 = vcmp.lt.s32.totalorder %v2426, 640
      %vm2459 = vcmp.lt.s32.totalorder %v2427, 640
      %vm2460 = vcmp.lt.s32.totalorder %v2428, 640
      %vm2461 = vcmp.lt.s32.totalorder %v2429, 640
      %vm2462 = vcmp.lt.s32.totalorder %v2430, 640
      %vm2463 = vcmp.lt.s32.totalorder %v2431, 640
      %v2464 = vsel %vm2432, 1, 0
      %v2465 = vsel %vm2433, 1, 0
      %v2466 = vsel %vm2434, 1, 0
      %v2467 = vsel %vm2435, 1, 0
      %v2468 = vsel %vm2436, 1, 0
      %v2469 = vsel %vm2437, 1, 0
      %v2470 = vsel %vm2438, 1, 0
      %v2471 = vsel %vm2439, 1, 0
      %v2472 = vsel %vm2440, 1, 0
      %v2473 = vsel %vm2441, 1, 0
      %v2474 = vsel %vm2442, 1, 0
      %v2475 = vsel %vm2443, 1, 0
      %v2476 = vsel %vm2444, 1, 0
      %v2477 = vsel %vm2445, 1, 0
      %v2478 = vsel %vm2446, 1, 0
      %v2479 = vsel %vm2447, 1, 0
      %v2480 = vsel %vm2448, 1, 0
      %v2481 = vsel %vm2449, 1, 0
      %v2482 = vsel %vm2450, 1, 0
      %v2483 = vsel %vm2451, 1, 0
      %v2484 = vsel %vm2452, 1, 0
      %v2485 = vsel %vm2453, 1, 0
      %v2486 = vsel %vm2454, 1, 0
      %v2487 = vsel %vm2455, 1, 0
      %v2488 = vsel %vm2456, 1, 0
      %v2489 = vsel %vm2457, 1, 0
      %v2490 = vsel %vm2458, 1, 0
      %v2491 = vsel %vm2459, 1, 0
      %v2492 = vsel %vm2460, 1, 0
      %v2493 = vsel %vm2461, 1, 0
      %v2494 = vsel %vm2462, 1, 0
      %v2495 = vsel %vm2463, 1, 0
      %vm2496 = vcmp.eq.s32.totalorder %v2464, 1
      %vm2497 = vcmp.eq.s32.totalorder %v2465, 1
      %vm2498 = vcmp.eq.s32.totalorder %v2466, 1
      %vm2499 = vcmp.eq.s32.totalorder %v2467, 1
      %vm2500 = vcmp.eq.s32.totalorder %v2468, 1
      %vm2501 = vcmp.eq.s32.totalorder %v2469, 1
      %vm2502 = vcmp.eq.s32.totalorder %v2470, 1
      %vm2503 = vcmp.eq.s32.totalorder %v2471, 1
      %vm2504 = vcmp.eq.s32.totalorder %v2472, 1
      %vm2505 = vcmp.eq.s32.totalorder %v2473, 1
      %vm2506 = vcmp.eq.s32.totalorder %v2474, 1
      %vm2507 = vcmp.eq.s32.totalorder %v2475, 1
      %vm2508 = vcmp.eq.s32.totalorder %v2476, 1
      %vm2509 = vcmp.eq.s32.totalorder %v2477, 1
      %vm2510 = vcmp.eq.s32.totalorder %v2478, 1
      %vm2511 = vcmp.eq.s32.totalorder %v2479, 1
      %vm2512 = vcmp.eq.s32.totalorder %v2480, 1
      %vm2513 = vcmp.eq.s32.totalorder %v2481, 1
      %vm2514 = vcmp.eq.s32.totalorder %v2482, 1
      %vm2515 = vcmp.eq.s32.totalorder %v2483, 1
      %vm2516 = vcmp.eq.s32.totalorder %v2484, 1
      %vm2517 = vcmp.eq.s32.totalorder %v2485, 1
      %vm2518 = vcmp.eq.s32.totalorder %v2486, 1
      %vm2519 = vcmp.eq.s32.totalorder %v2487, 1
      %vm2520 = vcmp.eq.s32.totalorder %v2488, 1
      %vm2521 = vcmp.eq.s32.totalorder %v2489, 1
      %vm2522 = vcmp.eq.s32.totalorder %v2490, 1
      %vm2523 = vcmp.eq.s32.totalorder %v2491, 1
      %vm2524 = vcmp.eq.s32.totalorder %v2492, 1
      %vm2525 = vcmp.eq.s32.totalorder %v2493, 1
      %vm2526 = vcmp.eq.s32.totalorder %v2494, 1
      %vm2527 = vcmp.eq.s32.totalorder %v2495, 1
      %v2528 = vsel %vm2496, %v1950, 0.0
      %v2529 = vsel %vm2497, %v1953, 0.0
      %v2530 = vsel %vm2498, %v1958, 0.0
      %v2531 = vsel %vm2499, %v1961, 0.0
      %v2532 = vsel %vm2500, %v1966, 0.0
      %v2533 = vsel %vm2501, %v1969, 0.0
      %v2534 = vsel %vm2502, %v1974, 0.0
      %v2535 = vsel %vm2503, %v1977, 0.0
      %v2536 = vsel %vm2504, %v1982, 0.0
      %v2537 = vsel %vm2505, %v1985, 0.0
      %v2538 = vsel %vm2506, %v1990, 0.0
      %v2539 = vsel %vm2507, %v1993, 0.0
      %v2540 = vsel %vm2508, %v1998, 0.0
      %v2541 = vsel %vm2509, %v2001, 0.0
      %v2542 = vsel %vm2510, %v2006, 0.0
      %v2543 = vsel %vm2511, %v2009, 0.0
      %v2544 = vsel %vm2512, %v2014, 0.0
      %v2545 = vsel %vm2513, %v2017, 0.0
      %v2546 = vsel %vm2514, %v2022, 0.0
      %v2547 = vsel %vm2515, %v2025, 0.0
      %v2548 = vsel %vm2516, %v2030, 0.0
      %v2549 = vsel %vm2517, %v2033, 0.0
      %v2550 = vsel %vm2518, %v2038, 0.0
      %v2551 = vsel %vm2519, %v2041, 0.0
      %v2552 = vsel %vm2520, %v2046, 0.0
      %v2553 = vsel %vm2521, %v2049, 0.0
      %v2554 = vsel %vm2522, %v2054, 0.0
      %v2555 = vsel %vm2523, %v2057, 0.0
      %v2556 = vsel %vm2524, %v2062, 0.0
      %v2557 = vsel %vm2525, %v2065, 0.0
      %v2558 = vsel %vm2526, %v2070, 0.0
      %v2559 = vsel %vm2527, %v2073, 0.0
      %v2560 = vadd.f32 %v2528, %v2529
      %v2561 = vadd.f32 %v2560, %v2530
      %v2562 = vadd.f32 %v2561, %v2531
      %v2563 = vadd.f32 %v2562, %v2532
      %v2564 = vadd.f32 %v2563, %v2533
      %v2565 = vadd.f32 %v2564, %v2534
      %v2566 = vadd.f32 %v2565, %v2535
      %v2567 = vadd.f32 %v2566, %v2536
      %v2568 = vadd.f32 %v2567, %v2537
      %v2569 = vadd.f32 %v2568, %v2538
      %v2570 = vadd.f32 %v2569, %v2539
      %v2571 = vadd.f32 %v2570, %v2540
      %v2572 = vadd.f32 %v2571, %v2541
      %v2573 = vadd.f32 %v2572, %v2542
      %v2574 = vadd.f32 %v2573, %v2543
      %v2575 = vadd.f32 %v2574, %v2544
      %v2576 = vadd.f32 %v2575, %v2545
      %v2577 = vadd.f32 %v2576, %v2546
      %v2578 = vadd.f32 %v2577, %v2547
      %v2579 = vadd.f32 %v2578, %v2548
      %v2580 = vadd.f32 %v2579, %v2549
      %v2581 = vadd.f32 %v2580, %v2550
      %v2582 = vadd.f32 %v2581, %v2551
      %v2583 = vadd.f32 %v2582, %v2552
      %v2584 = vadd.f32 %v2583, %v2553
      %v2585 = vadd.f32 %v2584, %v2554
      %v2586 = vadd.f32 %v2585, %v2555
      %v2587 = vadd.f32 %v2586, %v2556
      %v2588 = vadd.f32 %v2587, %v2557
      %v2589 = vadd.f32 %v2588, %v2558
      %v2590 = vadd.f32 %v2589, %v2559
      %v2591 = vrot.slane %v2590, 4
      %v2592 = vadd.f32 %v2590, %v2591
      %v2593 = vrot.slane %v2592, 2
      %v2594 = vadd.f32 %v2592, %v2593
      %v2595 = vrot.slane %v2594, 1
      %v2596 = vadd.f32 %v2594, %v2595
      %v2597 = vmul.f32 %v2528, %v2528
      %v2598 = vmul.f32 %v2529, %v2529
      %v2599 = vmul.f32 %v2530, %v2530
      %v2600 = vmul.f32 %v2531, %v2531
      %v2601 = vmul.f32 %v2532, %v2532
      %v2602 = vmul.f32 %v2533, %v2533
      %v2603 = vmul.f32 %v2534, %v2534
      %v2604 = vmul.f32 %v2535, %v2535
      %v2605 = vmul.f32 %v2536, %v2536
      %v2606 = vmul.f32 %v2537, %v2537
      %v2607 = vmul.f32 %v2538, %v2538
      %v2608 = vmul.f32 %v2539, %v2539
      %v2609 = vmul.f32 %v2540, %v2540
      %v2610 = vmul.f32 %v2541, %v2541
      %v2611 = vmul.f32 %v2542, %v2542
      %v2612 = vmul.f32 %v2543, %v2543
      %v2613 = vmul.f32 %v2544, %v2544
      %v2614 = vmul.f32 %v2545, %v2545
      %v2615 = vmul.f32 %v2546, %v2546
      %v2616 = vmul.f32 %v2547, %v2547
      %v2617 = vmul.f32 %v2548, %v2548
      %v2618 = vmul.f32 %v2549, %v2549
      %v2619 = vmul.f32 %v2550, %v2550
      %v2620 = vmul.f32 %v2551, %v2551
      %v2621 = vmul.f32 %v2552, %v2552
      %v2622 = vmul.f32 %v2553, %v2553
      %v2623 = vmul.f32 %v2554, %v2554
      %v2624 = vmul.f32 %v2555, %v2555
      %v2625 = vmul.f32 %v2556, %v2556
      %v2626 = vmul.f32 %v2557, %v2557
      %v2627 = vmul.f32 %v2558, %v2558
      %v2628 = vmul.f32 %v2559, %v2559
      %v2629 = vadd.f32 %v2597, %v2598
      %v2630 = vadd.f32 %v2629, %v2599
      %v2631 = vadd.f32 %v2630, %v2600
      %v2632 = vadd.f32 %v2631, %v2601
      %v2633 = vadd.f32 %v2632, %v2602
      %v2634 = vadd.f32 %v2633, %v2603
      %v2635 = vadd.f32 %v2634, %v2604
      %v2636 = vadd.f32 %v2635, %v2605
      %v2637 = vadd.f32 %v2636, %v2606
      %v2638 = vadd.f32 %v2637, %v2607
      %v2639 = vadd.f32 %v2638, %v2608
      %v2640 = vadd.f32 %v2639, %v2609
      %v2641 = vadd.f32 %v2640, %v2610
      %v2642 = vadd.f32 %v2641, %v2611
      %v2643 = vadd.f32 %v2642, %v2612
      %v2644 = vadd.f32 %v2643, %v2613
      %v2645 = vadd.f32 %v2644, %v2614
      %v2646 = vadd.f32 %v2645, %v2615
      %v2647 = vadd.f32 %v2646, %v2616
      %v2648 = vadd.f32 %v2647, %v2617
      %v2649 = vadd.f32 %v2648, %v2618
      %v2650 = vadd.f32 %v2649, %v2619
      %v2651 = vadd.f32 %v2650, %v2620
      %v2652 = vadd.f32 %v2651, %v2621
      %v2653 = vadd.f32 %v2652, %v2622
      %v2654 = vadd.f32 %v2653, %v2623
      %v2655 = vadd.f32 %v2654, %v2624
      %v2656 = vadd.f32 %v2655, %v2625
      %v2657 = vadd.f32 %v2656, %v2626
      %v2658 = vadd.f32 %v2657, %v2627
      %v2659 = vadd.f32 %v2658, %v2628
      %v2660 = vrot.slane %v2659, 4
      %v2661 = vadd.f32 %v2659, %v2660
      %v2662 = vrot.slane %v2661, 2
      %v2663 = vadd.f32 %v2661, %v2662
      %v2664 = vrot.slane %v2663, 1
      %v2665 = vadd.f32 %v2663, %v2664
      %vm2666 = vcmask 1040384
      %v2667 = vsel %vm2666, %v2596, %v2665
      %2668 = vst [vmem:[%s254] sm:$0x3] %v2667
      %s2669 = smul.u32 32, %s17
      %p2670 = scmp.lt.s32.totalorder %s2669, 95
      %s2671 = scalar_select %p2670, %s2669, 95
      %s2672 = smul.addr %s2671, 4
      %s2673 = scalar_lea.vmem %s3, %s2672
      %s2674 = smul.u32 32, %s17
      %p2675 = scmp.lt.s32.totalorder %s2674, 95
      %s2676 = scalar_select %p2675, %s2674, 95
      %s2677 = smul.addr %s2676, 4
      %s2678 = scalar_lea.vmem %s4, %s2677
      %p2679 = scmp.lt.s32.totalorder %s17, 2
      %s2680 = scalar_select %p2679, %s17, 2
      %s2681 = smul.addr %s2680, 2
      %s2682 = scalar_lea.vmem %s5, %s2681
      // Predicated region
      $region33: #{c3d_smart_forward.7} parent=31 // pred_check
        %p2683 = pneg %p103
      $region34: #{c3d_smart_forward.7} parent=31 // pred_check_branch
        %2685 = sbr.rel (%p2683) target = $region36
      $region35: #{c3d_smart_forward.7} parent=31 // pred_region
        %s2686 = smul.u32 32, %s17
      $region36: #{c3d_smart_forward.7} parent=31 // pred_fallthru
        _
      // Predicated region
      $region37: #{c3d_smart_forward.7} parent=31 // pred_check
        %p2687 = pneg %p129
      $region38: #{c3d_smart_forward.7} parent=31 // pred_check_branch
        %2689 = sbr.rel (%p2687) target = $region40
      $region39: #{c3d_smart_forward.7} parent=31 // pred_region
        %s2690 = smul.u32 32, %s17
      $region40: #{c3d_smart_forward.7} parent=31 // pred_fallthru
        _
      // Predicated region
      $region41: #{c3d_smart_forward.7} parent=31 // pred_check
        %p2691 = pneg %p155
      $region42: #{c3d_smart_forward.7} parent=31 // pred_check_branch
        %2693 = sbr.rel (%p2691) target = $region44
      $region43: #{c3d_smart_forward.7} parent=31 // pred_region
        _
      $region44: #{c3d_smart_forward.7} parent=31 // pred_fallthru
        _
    $region32: #{c3d_smart_forward.7} parent=5 // pred_fallthru
      _
    %p2694 = scmp.le.s32.totalorder 2, %s12
    // Predicated region
    $region45: #{c3d_smart_forward.7} parent=5 // pred_check
      %p2695 = pneg %p2694
    $region46: #{c3d_smart_forward.7} parent=5 // pred_check_branch
      %2697 = sbr.rel (%p2695) target = $region48
    $region47: #{c3d_smart_forward.7} parent=5 // pred_region
      %s2698 = ssub.s32 %s12, 2
      // Predicated region
      $region49: #{c3d_smart_forward.7} parent=47 // pred_check
        %p2699 = pneg %p109
      $region50: #{c3d_smart_forward.7} parent=47 // pred_check_branch
        %2701 = sbr.rel (%p2699) target = $region52
      $region51: #{c3d_smart_forward.7} parent=47 // pred_region
        %s2702 = smul.u32 32, %s18
        %p2703 = scmp.lt.s32.totalorder %s2702, 95
        %s2704 = scalar_select %p2703, %s2702, 95
        %s2705 = smul.addr %s2704, 4
        %s2706 = scalar_lea.vmem %s3, %s2705
      $region52: #{c3d_smart_forward.7} parent=47 // pred_fallthru
        _
      // Predicated region
      $region53: #{c3d_smart_forward.7} parent=47 // pred_check
        %p2707 = pneg %p135
      $region54: #{c3d_smart_forward.7} parent=47 // pred_check_branch
        %2709 = sbr.rel (%p2707) target = $region56
      $region55: #{c3d_smart_forward.7} parent=47 // pred_region
        %s2710 = smul.u32 32, %s18
        %p2711 = scmp.lt.s32.totalorder %s2710, 95
        %s2712 = scalar_select %p2711, %s2710, 95
        %s2713 = smul.addr %s2712, 4
        %s2714 = scalar_lea.vmem %s4, %s2713
      $region56: #{c3d_smart_forward.7} parent=47 // pred_fallthru
        _
      // Predicated region
      $region57: #{c3d_smart_forward.7} parent=47 // pred_check
        %p2715 = pneg %p161
      $region58: #{c3d_smart_forward.7} parent=47 // pred_check_branch
        %2717 = sbr.rel (%p2715) target = $region60
      $region59: #{c3d_smart_forward.7} parent=47 // pred_region
        %p2718 = scmp.lt.s32.totalorder %s18, 2
        %s2719 = scalar_select %p2718, %s18, 2
        %s2720 = smul.addr %s2719, 2
        %s2721 = scalar_lea.vmem %s5, %s2720
      $region60: #{c3d_smart_forward.7} parent=47 // pred_fallthru
        _
    $region48: #{c3d_smart_forward.7} parent=5 // pred_fallthru
      _
  $region6: #{c3d_smart_forward.7} parent=0 // loop_footer
    %s16 = sadd.s32 1, %s12
  $region7: #{c3d_smart_forward.7} parent=0 // loop_footer_branch
    %11 = sbr.rel target = $region3
  $region8: #{c3d_smart_forward.7} parent=0 // loop_exit
    _

// kernel: c3d_smart_forward.8
$region0: #{c3d_smart_forward.8}
  #allocation0 [shape = 'u32[]', space=smem, size = 0x4, offset = 0x4, fixed_abs, tag = 'smem constant byte address 0x4 - core index']
  #allocation1 [shape = 'u32[144,128]{1,0:T(1,128)}', space=vmem, size = 0x12000, scoped, tag = 'internal scratch']
  %s0 = inlined_call_operand.vmem [shape: bf16[768,64], index: 0, kind: input, shape index: {}]
  %s1 = inlined_call_operand.vmem [shape: f32[1,64], index: 1, kind: input, shape index: {}]
  %s2 = inlined_call_operand.vmem [shape: f32[1,64], index: 2, kind: input, shape index: {}]
  %s3 = inlined_call_operand.vmem [shape: bf16[64,32], index: 3, kind: input, shape index: {}]
  %s4 = inlined_call_operand.vmem [shape: f32[1,32], index: 4, kind: input, shape index: {}]
  %s5 = inlined_call_operand.vmem [shape: f32[768,32], index: 5, kind: output, shape index: {0}]
  %s6 = inlined_call_operand.vmem [shape: f32[3,2,32], index: 6, kind: output, shape index: {1}]
  %7 = xla_tuple %s5, %s6
  %s8 = sld [smem:[#allocation0]]
  $region61: #{c3d_smart_forward.8} parent=0
    _
  %s10 = ssub.s32 1, %s8
  %s11 = scalar_select 0, %s10, %s8
  loop: start=0, step=1, limit=5
  $region2: #{c3d_smart_forward.8} parent=0 // loop_pre_header
    _
  $region3: #{c3d_smart_forward.8} parent=0 // loop_header
    %s13 = sphi 0, %s17
    %p14 = scmp.ge.s32.totalorder %s13, 5
    %s23 = sphi 0, %s25
    %s26 = sphi 0, %s23
    %s27 = sphi 0, %s26
    %s43 = sphi 0, %s27
    %s47 = sphi 0, %s47
    %s49 = sphi 0, %s47
    %s50 = sphi 0, %s49
    %s64 = sphi 0, %s50
    %s68 = sphi 0, %s68
    %s70 = sphi 0, %s68
    %s71 = sphi 0, %s70
    %s85 = sphi 0, %s71
    %s89 = sphi 0, %s89
    %s91 = sphi 0, %s89
    %s92 = sphi 0, %s91
    %s106 = sphi 0, %s92
    %s110 = sphi 0, %s110
    %s112 = sphi 0, %s110
    %s113 = sphi 0, %s112
    %s127 = sphi 0, %s113
    %s133 = sphi 0, %s135
    %s136 = sphi 0, %s133
    %s137 = sphi 0, %s136
    %s153 = sphi 0, %s137
    %s159 = sphi 0, %s161
    %s162 = sphi 0, %s159
    %s163 = sphi 0, %s162
    %s179 = sphi 0, %s163
  $region4: #{c3d_smart_forward.8} parent=0 // loop_header_branch
    %16 = sbr.rel (%p14) target = $region8
  $region5: #{c3d_smart_forward.8} parent=0 // loop_body
    %s18 = ssub.s32 %s13, 1
    %s19 = ssub.s32 %s13, 2
    %s20 = sadd.s32 %s13, 1
    %s21 = ssub.s32 %s13, %s20
    %p22 = scmp.eq.s32.totalorder %s21, 0
    %s24 = sadd.s32 %s23, 1
    %s25 = scalar_select %p22, %s23, %s24
    %p28 = pneg %p22
    %p29 = scmp.eq.s32.totalorder %s13, 2
    %p30 = por %p28, %p29
    %p31 = scmp.ne.s32.totalorder %s23, %s26
    %p32 = scmp.eq.s32.totalorder %s13, 0
    %p33 = por %p31, %p32
    %p34 = scmp.ne.s32.totalorder %s23, %s26
    %p35 = scmp.eq.s32.totalorder %s18, 2
    %p36 = por %p34, %p35
    %p37 = scmp.ne.s32.totalorder %s26, %s27
    %p38 = scmp.eq.s32.totalorder %s18, 0
    %p39 = por %p37, %p38
    %p40 = scmp.ne.s32.totalorder %s26, %s27
    %p41 = scmp.eq.s32.totalorder %s19, 2
    %p42 = por %p40, %p41
    %p44 = scmp.ne.s32.totalorder %s27, %s43
    %p45 = scmp.eq.s32.totalorder %s19, 0
    %p46 = por %p44, %p45
    %s48 = sadd.s32 %s47, 1
    %p51 = scmp.eq.s32.totalorder %s13, 2
    %p52 = scmp.ne.s32.totalorder %s47, %s49
    %p53 = scmp.eq.s32.totalorder %s13, 0
    %p54 = por %p52, %p53
    %p55 = scmp.ne.s32.totalorder %s47, %s49
    %p56 = scmp.eq.s32.totalorder %s18, 2
    %p57 = por %p55, %p56
    %p58 = scmp.ne.s32.totalorder %s49, %s50
    %p59 = scmp.eq.s32.totalorder %s18, 0
    %p60 = por %p58, %p59
    %p61 = scmp.ne.s32.totalorder %s49, %s50
    %p62 = scmp.eq.s32.totalorder %s19, 2
    %p63 = por %p61, %p62
    %p65 = scmp.ne.s32.totalorder %s50, %s64
    %p66 = scmp.eq.s32.totalorder %s19, 0
    %p67 = por %p65, %p66
    %s69 = sadd.s32 %s68, 1
    %p72 = scmp.eq.s32.totalorder %s13, 2
    %p73 = scmp.ne.s32.totalorder %s68, %s70
    %p74 = scmp.eq.s32.totalorder %s13, 0
    %p75 = por %p73, %p74
    %p76 = scmp.ne.s32.totalorder %s68, %s70
    %p77 = scmp.eq.s32.totalorder %s18, 2
    %p78 = por %p76, %p77
    %p79 = scmp.ne.s32.totalorder %s70, %s71
    %p80 = scmp.eq.s32.totalorder %s18, 0
    %p81 = por %p79, %p80
    %p82 = scmp.ne.s32.totalorder %s70, %s71
    %p83 = scmp.eq.s32.totalorder %s19, 2
    %p84 = por %p82, %p83
    %p86 = scmp.ne.s32.totalorder %s71, %s85
    %p87 = scmp.eq.s32.totalorder %s19, 0
    %p88 = por %p86, %p87
    %s90 = sadd.s32 %s89, 1
    %p93 = scmp.eq.s32.totalorder %s13, 2
    %p94 = scmp.ne.s32.totalorder %s89, %s91
    %p95 = scmp.eq.s32.totalorder %s13, 0
    %p96 = por %p94, %p95
    %p97 = scmp.ne.s32.totalorder %s89, %s91
    %p98 = scmp.eq.s32.totalorder %s18, 2
    %p99 = por %p97, %p98
    %p100 = scmp.ne.s32.totalorder %s91, %s92
    %p101 = scmp.eq.s32.totalorder %s18, 0
    %p102 = por %p100, %p101
    %p103 = scmp.ne.s32.totalorder %s91, %s92
    %p104 = scmp.eq.s32.totalorder %s19, 2
    %p105 = por %p103, %p104
    %p107 = scmp.ne.s32.totalorder %s92, %s106
    %p108 = scmp.eq.s32.totalorder %s19, 0
    %p109 = por %p107, %p108
    %s111 = sadd.s32 %s110, 1
    %p114 = scmp.eq.s32.totalorder %s13, 2
    %p115 = scmp.ne.s32.totalorder %s110, %s112
    %p116 = scmp.eq.s32.totalorder %s13, 0
    %p117 = por %p115, %p116
    %p118 = scmp.ne.s32.totalorder %s110, %s112
    %p119 = scmp.eq.s32.totalorder %s18, 2
    %p120 = por %p118, %p119
    %p121 = scmp.ne.s32.totalorder %s112, %s113
    %p122 = scmp.eq.s32.totalorder %s18, 0
    %p123 = por %p121, %p122
    %p124 = scmp.ne.s32.totalorder %s112, %s113
    %p125 = scmp.eq.s32.totalorder %s19, 2
    %p126 = por %p124, %p125
    %p128 = scmp.ne.s32.totalorder %s113, %s127
    %p129 = scmp.eq.s32.totalorder %s19, 0
    %p130 = por %p128, %p129
    %s131 = ssub.s32 %s13, %s20
    %p132 = scmp.eq.s32.totalorder %s131, 0
    %s134 = sadd.s32 %s133, 1
    %s135 = scalar_select %p132, %s133, %s134
    %p138 = pneg %p132
    %p139 = scmp.eq.s32.totalorder %s13, 2
    %p140 = por %p138, %p139
    %p141 = scmp.ne.s32.totalorder %s133, %s136
    %p142 = scmp.eq.s32.totalorder %s13, 0
    %p143 = por %p141, %p142
    %p144 = scmp.ne.s32.totalorder %s133, %s136
    %p145 = scmp.eq.s32.totalorder %s18, 2
    %p146 = por %p144, %p145
    %p147 = scmp.ne.s32.totalorder %s136, %s137
    %p148 = scmp.eq.s32.totalorder %s18, 0
    %p149 = por %p147, %p148
    %p150 = scmp.ne.s32.totalorder %s136, %s137
    %p151 = scmp.eq.s32.totalorder %s19, 2
    %p152 = por %p150, %p151
    %p154 = scmp.ne.s32.totalorder %s137, %s153
    %p155 = scmp.eq.s32.totalorder %s19, 0
    %p156 = por %p154, %p155
    %s157 = ssub.s32 %s13, %s20
    %p158 = scmp.eq.s32.totalorder %s157, 0
    %s160 = sadd.s32 %s159, 1
    %s161 = scalar_select %p158, %s159, %s160
    %p164 = pneg %p158
    %p165 = scmp.eq.s32.totalorder %s13, 2
    %p166 = por %p164, %p165
    %p167 = scmp.ne.s32.totalorder %s159, %s162
    %p168 = scmp.eq.s32.totalorder %s13, 0
    %p169 = por %p167, %p168
    %p170 = scmp.ne.s32.totalorder %s159, %s162
    %p171 = scmp.eq.s32.totalorder %s18, 2
    %p172 = por %p170, %p171
    %p173 = scmp.ne.s32.totalorder %s162, %s163
    %p174 = scmp.eq.s32.totalorder %s18, 0
    %p175 = por %p173, %p174
    %p176 = scmp.ne.s32.totalorder %s162, %s163
    %p177 = scmp.eq.s32.totalorder %s19, 2
    %p178 = por %p176, %p177
    %p180 = scmp.ne.s32.totalorder %s163, %s179
    %p181 = scmp.eq.s32.totalorder %s19, 0
    %p182 = por %p180, %p181
    %p183 = scmp.le.s32.totalorder 1, %s13
    %p184 = scmp.lt.s32.totalorder %s13, 4
    %p185 = pnand %p183, %p184
    %p186 = pneg %p185
    // Predicated region
    $region9: #{c3d_smart_forward.8} parent=5 // pred_check
      _
    $region10: #{c3d_smart_forward.8} parent=5 // pred_check_branch
      %188 = sbr.rel (%p185) target = $region12
    $region11: #{c3d_smart_forward.8} parent=5 // pred_region
      %s189 = ssub.s32 %s13, 1
      // Predicated region
      $region13: #{c3d_smart_forward.8} parent=11 // pred_check
        %p190 = pneg %p60
      $region14: #{c3d_smart_forward.8} parent=11 // pred_check_branch
        %192 = sbr.rel (%p190) target = $region16
      $region15: #{c3d_smart_forward.8} parent=11 // pred_region
        _
      $region16: #{c3d_smart_forward.8} parent=11 // pred_fallthru
        _
      // Predicated region
      $region17: #{c3d_smart_forward.8} parent=11 // pred_check
        %p193 = pneg %p81
      $region18: #{c3d_smart_forward.8} parent=11 // pred_check_branch
        %195 = sbr.rel (%p193) target = $region20
      $region19: #{c3d_smart_forward.8} parent=11 // pred_region
        _
      $region20: #{c3d_smart_forward.8} parent=11 // pred_fallthru
        _
      // Predicated region
      $region21: #{c3d_smart_forward.8} parent=11 // pred_check
        %p196 = pneg %p102
      $region22: #{c3d_smart_forward.8} parent=11 // pred_check_branch
        %198 = sbr.rel (%p196) target = $region24
      $region23: #{c3d_smart_forward.8} parent=11 // pred_region
        _
      $region24: #{c3d_smart_forward.8} parent=11 // pred_fallthru
        _
      // Predicated region
      $region25: #{c3d_smart_forward.8} parent=11 // pred_check
        %p199 = pneg %p123
      $region26: #{c3d_smart_forward.8} parent=11 // pred_check_branch
        %201 = sbr.rel (%p199) target = $region28
      $region27: #{c3d_smart_forward.8} parent=11 // pred_region
        _
      $region28: #{c3d_smart_forward.8} parent=11 // pred_fallthru
        _
    $region12: #{c3d_smart_forward.8} parent=5 // pred_fallthru
      _
    %p202 = scmp.lt.s32.totalorder %s13, 3
    // Predicated region
    $region29: #{c3d_smart_forward.8} parent=5 // pred_check
      %p203 = pneg %p202
    $region30: #{c3d_smart_forward.8} parent=5 // pred_check_branch
      %205 = sbr.rel (%p203) target = $region32
    $region31: #{c3d_smart_forward.8} parent=5 // pred_region
      // Predicated region
      $region33: #{c3d_smart_forward.8} parent=31 // pred_check
        %p206 = pneg %p33
      $region34: #{c3d_smart_forward.8} parent=31 // pred_check_branch
        %208 = sbr.rel (%p206) target = $region36
      $region35: #{c3d_smart_forward.8} parent=31 // pred_region
        %s209 = smul.u32 32, %s13
        %p210 = scmp.lt.s32.totalorder %s209, 95
        %s211 = scalar_select %p210, %s209, 95
        %s212 = smul.addr %s211, 4
        %s213 = scalar_lea.vmem %s0, %s212
        %s214 = smul.u32 32, %s13
      $region36: #{c3d_smart_forward.8} parent=31 // pred_fallthru
        _
    $region32: #{c3d_smart_forward.8} parent=5 // pred_fallthru
      _
    %p215 = scmp.le.s32.totalorder 1, %s13
    %p216 = scmp.lt.s32.totalorder %s13, 4
    %p217 = pnand %p215, %p216
    %p218 = pneg %p217
    // Predicated region
    $region37: #{c3d_smart_forward.8} parent=5 // pred_check
      _
    $region38: #{c3d_smart_forward.8} parent=5 // pred_check_branch
      %220 = sbr.rel (%p217) target = $region40
    $region39: #{c3d_smart_forward.8} parent=5 // pred_region
      %s221 = ssub.s32 %s13, 1
      %s222 = smul.u32 32, %s18
      %p223 = scmp.lt.s32.totalorder %s222, 95
      %s224 = scalar_select %p223, %s222, 95
      %s225 = smul.addr %s224, 4
      %s226 = scalar_lea.vmem %s0, %s225
      %p227 = pneg %p39
      %p228 = pneg %p36
      %p229 = pneg %p60
      %p230 = pneg %p57
      %p231 = pneg %p81
      %p232 = pneg %p78
      %p233 = pneg %p102
      %p234 = pneg %p99
      %p235 = pneg %p123
      %p236 = pneg %p120
      %p237 = pneg %p149
      %p238 = pneg %p146
      %s239 = smul.u32 32, %s18
      %p240 = scmp.lt.s32.totalorder %s239, 95
      %s241 = scalar_select %p240, %s239, 95
      %s242 = smul.addr %s241, 8
      %s243 = scalar_lea.vmem %s5, %s242
      %p244 = pneg %p175
      %p245 = pneg %p172
      %p246 = scmp.lt.s32.totalorder %s18, 2
      %s247 = scalar_select %p246, %s18, 2
      %s248 = smul.addr %s247, 2
      %s249 = scalar_lea.vmem %s6, %s248
      %s250 = smul.u32 32, %s18
      %p251 = scmp.lt.s32.totalorder %s250, 95
      %s252 = scalar_select %p251, %s250, 95
      %s253 = smul.addr %s252, 4
      %s254 = scalar_lea.vmem %s0, %s253
      %s255 = smul.u32 32, %s18
      %s256 = smul.u32 32, %s18
      %p257 = scmp.lt.s32.totalorder %s256, 95
      %s258 = scalar_select %p257, %s256, 95
      %s259 = smul.addr %s258, 8
      %s260 = scalar_lea.vmem %s5, %s259
      %s261 = smul.u32 32, %s18
      %p262 = scmp.lt.s32.totalorder %s18, 2
      %s263 = scalar_select %p262, %s18, 2
      %s264 = smul.addr %s263, 2
      %s265 = scalar_lea.vmem %s6, %s264
      %v267 = vld [vmem:[%s254] sm:$0xf]
      %v268 = vld [vmem:[%s254 + $0x4] sm:$0xf]
      %v269 = vld [vmem:[%s254 + $0x8] sm:$0xf]
      %v270 = vld [vmem:[%s254 + $0xc] sm:$0xf]
      %v271 = vld [vmem:[%s254 + $0x10] sm:$0xf]
      %v272 = vld [vmem:[%s254 + $0x14] sm:$0xf]
      %v273 = vld [vmem:[%s254 + $0x18] sm:$0xf]
      %v274 = vld [vmem:[%s254 + $0x1c] sm:$0xf]
      %v275 = vld [vmem:[%s254 + $0x20] sm:$0xf]
      %v276 = vld [vmem:[%s254 + $0x24] sm:$0xf]
      %v277 = vld [vmem:[%s254 + $0x28] sm:$0xf]
      %v278 = vld [vmem:[%s254 + $0x2c] sm:$0xf]
      %v279 = vld [vmem:[%s254 + $0x30] sm:$0xf]
      %v280 = vld [vmem:[%s254 + $0x34] sm:$0xf]
      %v281 = vld [vmem:[%s254 + $0x38] sm:$0xf]
      %v282 = vld [vmem:[%s254 + $0x3c] sm:$0xf]
      %v283 = vld [vmem:[%s254 + $0x40] sm:$0xf]
      %v284 = vld [vmem:[%s254 + $0x44] sm:$0xf]
      %v285 = vld [vmem:[%s254 + $0x48] sm:$0xf]
      %v286 = vld [vmem:[%s254 + $0x4c] sm:$0xf]
      %v287 = vld [vmem:[%s254 + $0x50] sm:$0xf]
      %v288 = vld [vmem:[%s254 + $0x54] sm:$0xf]
      %v289 = vld [vmem:[%s254 + $0x58] sm:$0xf]
      %v290 = vld [vmem:[%s254 + $0x5c] sm:$0xf]
      %v291 = vld [vmem:[%s254 + $0x60] sm:$0xf]
      %v292 = vld [vmem:[%s254 + $0x64] sm:$0xf]
      %v293 = vld [vmem:[%s254 + $0x68] sm:$0xf]
      %v294 = vld [vmem:[%s254 + $0x6c] sm:$0xf]
      %v295 = vld [vmem:[%s254 + $0x70] sm:$0xf]
      %v296 = vld [vmem:[%s254 + $0x74] sm:$0xf]
      %v297 = vld [vmem:[%s254 + $0x78] sm:$0xf]
      %v298 = vld [vmem:[%s254 + $0x7c] sm:$0xf]
      %v299 = vunpack.c.l.bf16 %v267
      %v300 = vunpack.c.l.bf16 %v268
      %v301 = vunpack.c.l.bf16 %v269
      %v302 = vunpack.c.l.bf16 %v270
      %v303 = vunpack.c.l.bf16 %v271
      %v304 = vunpack.c.l.bf16 %v272
      %v305 = vunpack.c.l.bf16 %v273
      %v306 = vunpack.c.l.bf16 %v274
      %v307 = vunpack.c.l.bf16 %v275
      %v308 = vunpack.c.l.bf16 %v276
      %v309 = vunpack.c.l.bf16 %v277
      %v310 = vunpack.c.l.bf16 %v278
      %v311 = vunpack.c.l.bf16 %v279
      %v312 = vunpack.c.l.bf16 %v280
      %v313 = vunpack.c.l.bf16 %v281
      %v314 = vunpack.c.l.bf16 %v282
      %v315 = vunpack.c.l.bf16 %v283
      %v316 = vunpack.c.l.bf16 %v284
      %v317 = vunpack.c.l.bf16 %v285
      %v318 = vunpack.c.l.bf16 %v286
      %v319 = vunpack.c.l.bf16 %v287
      %v320 = vunpack.c.l.bf16 %v288
      %v321 = vunpack.c.l.bf16 %v289
      %v322 = vunpack.c.l.bf16 %v290
      %v323 = vunpack.c.l.bf16 %v291
      %v324 = vunpack.c.l.bf16 %v292
      %v325 = vunpack.c.l.bf16 %v293
      %v326 = vunpack.c.l.bf16 %v294
      %v327 = vunpack.c.l.bf16 %v295
      %v328 = vunpack.c.l.bf16 %v296
      %v329 = vunpack.c.l.bf16 %v297
      %v330 = vunpack.c.l.bf16 %v298
      %v331 = vld [vmem:[%s1] sm:$0x1]
      %v333 = vlaneseq
      %v334 = vshrl.u32 %v333, 7
      %v335 = vsub.s32 0, %v334
      %v336 = vrot.slane %v331, %v335
      %v338 = vsub.f32 %v299, %v336
      %v339 = vsub.f32 %v300, %v336
      %v340 = vsub.f32 %v301, %v336
      %v341 = vsub.f32 %v302, %v336
      %v342 = vsub.f32 %v303, %v336
      %v343 = vsub.f32 %v304, %v336
      %v344 = vsub.f32 %v305, %v336
      %v345 = vsub.f32 %v306, %v336
      %v346 = vsub.f32 %v307, %v336
      %v347 = vsub.f32 %v308, %v336
      %v348 = vsub.f32 %v309, %v336
      %v349 = vsub.f32 %v310, %v336
      %v350 = vsub.f32 %v311, %v336
      %v351 = vsub.f32 %v312, %v336
      %v352 = vsub.f32 %v313, %v336
      %v353 = vsub.f32 %v314, %v336
      %v354 = vsub.f32 %v315, %v336
      %v355 = vsub.f32 %v316, %v336
      %v356 = vsub.f32 %v317, %v336
      %v357 = vsub.f32 %v318, %v336
      %v358 = vsub.f32 %v319, %v336
      %v359 = vsub.f32 %v320, %v336
      %v360 = vsub.f32 %v321, %v336
      %v361 = vsub.f32 %v322, %v336
      %v362 = vsub.f32 %v323, %v336
      %v363 = vsub.f32 %v324, %v336
      %v364 = vsub.f32 %v325, %v336
      %v365 = vsub.f32 %v326, %v336
      %v366 = vsub.f32 %v327, %v336
      %v367 = vsub.f32 %v328, %v336
      %v368 = vsub.f32 %v329, %v336
      %v369 = vsub.f32 %v330, %v336
      %v370 = vld [vmem:[%s2] sm:$0x1]
      %v372 = vlaneseq
      %v373 = vshrl.u32 %v372, 7
      %v374 = vsub.s32 0, %v373
      %v375 = vrot.slane %v370, %v374
      %v377 = vmul.f32 %v338, %v375
      %v378 = vmul.f32 %v339, %v375
      %v379 = vmul.f32 %v340, %v375
      %v380 = vmul.f32 %v341, %v375
      %v381 = vmul.f32 %v342, %v375
      %v382 = vmul.f32 %v343, %v375
      %v383 = vmul.f32 %v344, %v375
      %v384 = vmul.f32 %v345, %v375
      %v385 = vmul.f32 %v346, %v375
      %v386 = vmul.f32 %v347, %v375
      %v387 = vmul.f32 %v348, %v375
      %v388 = vmul.f32 %v349, %v375
      %v389 = vmul.f32 %v350, %v375
      %v390 = vmul.f32 %v351, %v375
      %v391 = vmul.f32 %v352, %v375
      %v392 = vmul.f32 %v353, %v375
      %v393 = vmul.f32 %v354, %v375
      %v394 = vmul.f32 %v355, %v375
      %v395 = vmul.f32 %v356, %v375
      %v396 = vmul.f32 %v357, %v375
      %v397 = vmul.f32 %v358, %v375
      %v398 = vmul.f32 %v359, %v375
      %v399 = vmul.f32 %v360, %v375
      %v400 = vmul.f32 %v361, %v375
      %v401 = vmul.f32 %v362, %v375
      %v402 = vmul.f32 %v363, %v375
      %v403 = vmul.f32 %v364, %v375
      %v404 = vmul.f32 %v365, %v375
      %v405 = vmul.f32 %v366, %v375
      %v406 = vmul.f32 %v367, %v375
      %v407 = vmul.f32 %v368, %v375
      %v408 = vmul.f32 %v369, %v375
      %v409 = vmul.f32 %v377, %v377
      %v410 = vmul.f32 %v378, %v378
      %v411 = vmul.f32 %v379, %v379
      %v412 = vmul.f32 %v380, %v380
      %v413 = vmul.f32 %v381, %v381
      %v414 = vmul.f32 %v382, %v382
      %v415 = vmul.f32 %v383, %v383
      %v416 = vmul.f32 %v384, %v384
      %v417 = vmul.f32 %v385, %v385
      %v418 = vmul.f32 %v386, %v386
      %v419 = vmul.f32 %v387, %v387
      %v420 = vmul.f32 %v388, %v388
      %v421 = vmul.f32 %v389, %v389
      %v422 = vmul.f32 %v390, %v390
      %v423 = vmul.f32 %v391, %v391
      %v424 = vmul.f32 %v392, %v392
      %v425 = vmul.f32 %v393, %v393
      %v426 = vmul.f32 %v394, %v394
      %v427 = vmul.f32 %v395, %v395
      %v428 = vmul.f32 %v396, %v396
      %v429 = vmul.f32 %v397, %v397
      %v430 = vmul.f32 %v398, %v398
      %v431 = vmul.f32 %v399, %v399
      %v432 = vmul.f32 %v400, %v400
      %v433 = vmul.f32 %v401, %v401
      %v434 = vmul.f32 %v402, %v402
      %v435 = vmul.f32 %v403, %v403
      %v436 = vmul.f32 %v404, %v404
      %v437 = vmul.f32 %v405, %v405
      %v438 = vmul.f32 %v406, %v406
      %v439 = vmul.f32 %v407, %v407
      %v440 = vmul.f32 %v408, %v408
      %v441 = vpack.c.bf16 %v410, %v409
      %v442 = vpack.c.bf16 %v412, %v411
      %v443 = vpack.c.bf16 %v414, %v413
      %v444 = vpack.c.bf16 %v416, %v415
      %v445 = vpack.c.bf16 %v418, %v417
      %v446 = vpack.c.bf16 %v420, %v419
      %v447 = vpack.c.bf16 %v422, %v421
      %v448 = vpack.c.bf16 %v424, %v423
      %v449 = vpack.c.bf16 %v426, %v425
      %v450 = vpack.c.bf16 %v428, %v427
      %v451 = vpack.c.bf16 %v430, %v429
      %v452 = vpack.c.bf16 %v432, %v431
      %v453 = vpack.c.bf16 %v434, %v433
      %v454 = vpack.c.bf16 %v436, %v435
      %v455 = vpack.c.bf16 %v438, %v437
      %v456 = vpack.c.bf16 %v440, %v439
      %v457 = vld [vmem:[%s3] sm:$0xf]
      %v458 = vld [vmem:[%s3 + $0x4] sm:$0xf]
      %v459 = vld [vmem:[%s3 + $0x8] sm:$0xf]
      %v460 = vld [vmem:[%s3 + $0xc] sm:$0xf]
      %v461 = vld [vmem:[%s3 + $0x10] sm:$0xf]
      %v462 = vld [vmem:[%s3 + $0x14] sm:$0xf]
      %v463 = vld [vmem:[%s3 + $0x18] sm:$0xf]
      %v464 = vld [vmem:[%s3 + $0x1c] sm:$0xf]
      %v465 = vld [vmem:[%s4] sm:$0x1]
      %v467 = vlaneseq
      %v468 = vshrl.u32 %v467, 7
      %v469 = vsub.s32 0, %v468
      %v470 = vrot.slane %v465, %v469
      %v480 = vunpack.c.l.b16 %v457
      %v481 = vunpack.c.l.b16 %v458
      %v482 = vunpack.c.l.b16 %v459
      %v483 = vunpack.c.l.b16 %v460
      %v484 = vunpack.c.l.b16 %v461
      %v485 = vunpack.c.l.b16 %v462
      %v486 = vunpack.c.l.b16 %v463
      %v487 = vunpack.c.l.b16 %v464
      %v488 = vpack.c.b16 %v481, %v480
      %v489 = vpack.c.b16 %v483, %v482
      %v490 = vpack.c.b16 %v485, %v484
      %v491 = vpack.c.b16 %v487, %v486
      %vm496 = vcmask 523264
      %v498 = vsel %vm496, %v441, 0
      %v501 = vsel %vm496, %v442, 0
      %v504 = vsel %vm496, %v443, 0
      %v507 = vsel %vm496, %v444, 0
      %v510 = vsel %vm496, %v445, 0
      %v513 = vsel %vm496, %v446, 0
      %v516 = vsel %vm496, %v447, 0
      %v519 = vsel %vm496, %v448, 0
      %v522 = vsel %vm496, %v449, 0
      %v525 = vsel %vm496, %v450, 0
      %v528 = vsel %vm496, %v451, 0
      %v531 = vsel %vm496, %v452, 0
      %v534 = vsel %vm496, %v453, 0
      %v537 = vsel %vm496, %v454, 0
      %v540 = vsel %vm496, %v455, 0
      %v543 = vsel %vm496, %v456, 0
      %545 = vmatprep.subr.bf16.mxu0 0
      %546 = vmatpush1.bf16.msra.mxu0 0
      %547 = vmatprep.subr.bf16.mxu0 0
      %548 = vmatpush1.bf16.msra.mxu0 0
      %549 = vmatprep.subr.bf16.mxu0 0
      %550 = vmatpush1.bf16.msra.mxu0 0
      %551 = vmatprep.subr.bf16.mxu0 0
      %552 = vmatpush1.bf16.msra.mxu0 0
      %553 = vmatprep.subr.bf16.mxu0 0
      %554 = vmatpush1.bf16.msra.mxu0 %v491
      %555 = vmatprep.subr.bf16.mxu0 0
      %556 = vmatpush1.bf16.msra.mxu0 %v490
      %557 = vmatprep.subr.bf16.mxu0 0
      %558 = vmatpush1.bf16.msra.mxu0 %v489
      %559 = vmatprep.subr.bf16.mxu0 0
      %560 = vmatpush1.bf16.msra.mxu0 %v488
      %561 = vmatprep.subr.bf16.mxu0 0
      %562 = vmatpush2.bf16.msra.mxu0 0
      %563 = vmatprep.subr.bf16.mxu0 0
      %564 = vmatpush2.bf16.msra.mxu0 0
      %565 = vmatprep.subr.bf16.mxu0 0
      %566 = vmatpush2.bf16.msra.mxu0 0
      %567 = vmatprep.subr.bf16.mxu0 0
      %568 = vmatpush2.bf16.msra.mxu0 0
      %569 = vmatprep.subr.bf16.mxu0 0
      %570 = vmatpush2.bf16.msra.mxu0 0
      %571 = vmatprep.subr.bf16.mxu0 0
      %572 = vmatpush2.bf16.msra.mxu0 0
      %573 = vmatprep.subr.bf16.mxu0 0
      %574 = vmatpush2.bf16.msra.mxu0 0
      %575 = vmatprep.subr.bf16.mxu0 0
      %576 = vmatpush2.bf16.msra.mxu0 0
      %577 = vmatprep.mubr.bf16.mxu0 0
      %578 = vmatmul.mubr.bf16.gmra.mxu0 %v498
      %v579 = vpop.f32.mrf.mxu0
      %v580 = vadd.f32 %v470, %v579
      %v581 = vpop.f32.mrf.mxu0
      %v582 = vpop.f32.mrf.mxu0
      %v583 = vadd.f32 %v470, %v582
      %v584 = vpop.f32.mrf.mxu0
      %585 = vmatprep.mubr.bf16.mxu0 0
      %586 = vmatmul.mubr.bf16.gmra.mxu0 %v501
      %v587 = vpop.f32.mrf.mxu0
      %v588 = vadd.f32 %v470, %v587
      %v589 = vpop.f32.mrf.mxu0
      %v590 = vpop.f32.mrf.mxu0
      %v591 = vadd.f32 %v470, %v590
      %v592 = vpop.f32.mrf.mxu0
      %593 = vmatprep.mubr.bf16.mxu0 0
      %594 = vmatmul.mubr.bf16.gmra.mxu0 %v504
      %v595 = vpop.f32.mrf.mxu0
      %v596 = vadd.f32 %v470, %v595
      %v597 = vpop.f32.mrf.mxu0
      %v598 = vpop.f32.mrf.mxu0
      %v599 = vadd.f32 %v470, %v598
      %v600 = vpop.f32.mrf.mxu0
      %601 = vmatprep.mubr.bf16.mxu0 0
      %602 = vmatmul.mubr.bf16.gmra.mxu0 %v507
      %v603 = vpop.f32.mrf.mxu0
      %v604 = vadd.f32 %v470, %v603
      %v605 = vpop.f32.mrf.mxu0
      %v606 = vpop.f32.mrf.mxu0
      %v607 = vadd.f32 %v470, %v606
      %v608 = vpop.f32.mrf.mxu0
      %609 = vmatprep.mubr.bf16.mxu0 0
      %610 = vmatmul.mubr.bf16.gmra.mxu0 %v510
      %v611 = vpop.f32.mrf.mxu0
      %v612 = vadd.f32 %v470, %v611
      %v613 = vpop.f32.mrf.mxu0
      %v614 = vpop.f32.mrf.mxu0
      %v615 = vadd.f32 %v470, %v614
      %v616 = vpop.f32.mrf.mxu0
      %617 = vmatprep.mubr.bf16.mxu0 0
      %618 = vmatmul.mubr.bf16.gmra.mxu0 %v513
      %v619 = vpop.f32.mrf.mxu0
      %v620 = vadd.f32 %v470, %v619
      %v621 = vpop.f32.mrf.mxu0
      %v622 = vpop.f32.mrf.mxu0
      %v623 = vadd.f32 %v470, %v622
      %v624 = vpop.f32.mrf.mxu0
      %625 = vmatprep.mubr.bf16.mxu0 0
      %626 = vmatmul.mubr.bf16.gmra.mxu0 %v516
      %v627 = vpop.f32.mrf.mxu0
      %v628 = vadd.f32 %v470, %v627
      %v629 = vpop.f32.mrf.mxu0
      %v630 = vpop.f32.mrf.mxu0
      %v631 = vadd.f32 %v470, %v630
      %v632 = vpop.f32.mrf.mxu0
      %633 = vmatprep.mubr.bf16.mxu0 0
      %634 = vmatmul.mubr.bf16.gmra.mxu0 %v519
      %v635 = vpop.f32.mrf.mxu0
      %v636 = vadd.f32 %v470, %v635
      %v637 = vpop.f32.mrf.mxu0
      %v638 = vpop.f32.mrf.mxu0
      %v639 = vadd.f32 %v470, %v638
      %v640 = vpop.f32.mrf.mxu0
      %641 = vmatprep.mubr.bf16.mxu0 0
      %642 = vmatmul.mubr.bf16.gmra.mxu0 %v522
      %v643 = vpop.f32.mrf.mxu0
      %v644 = vadd.f32 %v470, %v643
      %v645 = vpop.f32.mrf.mxu0
      %v646 = vpop.f32.mrf.mxu0
      %v647 = vadd.f32 %v470, %v646
      %v648 = vpop.f32.mrf.mxu0
      %649 = vmatprep.mubr.bf16.mxu0 0
      %650 = vmatmul.mubr.bf16.gmra.mxu0 %v525
      %v651 = vpop.f32.mrf.mxu0
      %v652 = vadd.f32 %v470, %v651
      %v653 = vpop.f32.mrf.mxu0
      %v654 = vpop.f32.mrf.mxu0
      %v655 = vadd.f32 %v470, %v654
      %v656 = vpop.f32.mrf.mxu0
      %657 = vmatprep.mubr.bf16.mxu0 0
      %658 = vmatmul.mubr.bf16.gmra.mxu0 %v528
      %v659 = vpop.f32.mrf.mxu0
      %v660 = vadd.f32 %v470, %v659
      %v661 = vpop.f32.mrf.mxu0
      %v662 = vpop.f32.mrf.mxu0
      %v663 = vadd.f32 %v470, %v662
      %v664 = vpop.f32.mrf.mxu0
      %665 = vmatprep.mubr.bf16.mxu0 0
      %666 = vmatmul.mubr.bf16.gmra.mxu0 %v531
      %v667 = vpop.f32.mrf.mxu0
      %v668 = vadd.f32 %v470, %v667
      %v669 = vpop.f32.mrf.mxu0
      %v670 = vpop.f32.mrf.mxu0
      %v671 = vadd.f32 %v470, %v670
      %v672 = vpop.f32.mrf.mxu0
      %673 = vmatprep.mubr.bf16.mxu0 0
      %674 = vmatmul.mubr.bf16.gmra.mxu0 %v534
      %v675 = vpop.f32.mrf.mxu0
      %v676 = vadd.f32 %v470, %v675
      %v677 = vpop.f32.mrf.mxu0
      %v678 = vpop.f32.mrf.mxu0
      %v679 = vadd.f32 %v470, %v678
      %v680 = vpop.f32.mrf.mxu0
      %681 = vmatprep.mubr.bf16.mxu0 0
      %682 = vmatmul.mubr.bf16.gmra.mxu0 %v537
      %v683 = vpop.f32.mrf.mxu0
      %v684 = vadd.f32 %v470, %v683
      %v685 = vpop.f32.mrf.mxu0
      %v686 = vpop.f32.mrf.mxu0
      %v687 = vadd.f32 %v470, %v686
      %v688 = vpop.f32.mrf.mxu0
      %689 = vmatprep.mubr.bf16.mxu0 0
      %690 = vmatmul.mubr.bf16.gmra.mxu0 %v540
      %v691 = vpop.f32.mrf.mxu0
      %v692 = vadd.f32 %v470, %v691
      %v693 = vpop.f32.mrf.mxu0
      %v694 = vpop.f32.mrf.mxu0
      %v695 = vadd.f32 %v470, %v694
      %v696 = vpop.f32.mrf.mxu0
      %697 = vmatprep.mubr.bf16.mxu0 0
      %698 = vmatmul.mubr.bf16.gmra.mxu0 %v543
      %v699 = vpop.f32.mrf.mxu0
      %v700 = vadd.f32 %v470, %v699
      %v701 = vpop.f32.mrf.mxu0
      %v702 = vpop.f32.mrf.mxu0
      %v703 = vadd.f32 %v470, %v702
      %v704 = vpop.f32.mrf.mxu0
      %705 = vdwg.mxu0
      %vm706 = vcmask 261120
      %707 = vst.msk [vmem:[%s260] sm:$0xff] %vm706, %v580
      %708 = vst.msk [vmem:[%s260 + $0x8] sm:$0xff] %vm706, %v583
      %709 = vst.msk [vmem:[%s260 + $0x10] sm:$0xff] %vm706, %v588
      %710 = vst.msk [vmem:[%s260 + $0x18] sm:$0xff] %vm706, %v591
      %711 = vst.msk [vmem:[%s260 + $0x20] sm:$0xff] %vm706, %v596
      %712 = vst.msk [vmem:[%s260 + $0x28] sm:$0xff] %vm706, %v599
      %713 = vst.msk [vmem:[%s260 + $0x30] sm:$0xff] %vm706, %v604
      %714 = vst.msk [vmem:[%s260 + $0x38] sm:$0xff] %vm706, %v607
      %715 = vst.msk [vmem:[%s260 + $0x40] sm:$0xff] %vm706, %v612
      %716 = vst.msk [vmem:[%s260 + $0x48] sm:$0xff] %vm706, %v615
      %717 = vst.msk [vmem:[%s260 + $0x50] sm:$0xff] %vm706, %v620
      %718 = vst.msk [vmem:[%s260 + $0x58] sm:$0xff] %vm706, %v623
      %719 = vst.msk [vmem:[%s260 + $0x60] sm:$0xff] %vm706, %v628
      %720 = vst.msk [vmem:[%s260 + $0x68] sm:$0xff] %vm706, %v631
      %721 = vst.msk [vmem:[%s260 + $0x70] sm:$0xff] %vm706, %v636
      %722 = vst.msk [vmem:[%s260 + $0x78] sm:$0xff] %vm706, %v639
      %723 = vst.msk [vmem:[%s260 + $0x80] sm:$0xff] %vm706, %v644
      %724 = vst.msk [vmem:[%s260 + $0x88] sm:$0xff] %vm706, %v647
      %725 = vst.msk [vmem:[%s260 + $0x90] sm:$0xff] %vm706, %v652
      %726 = vst.msk [vmem:[%s260 + $0x98] sm:$0xff] %vm706, %v655
      %727 = vst.msk [vmem:[%s260 + $0xa0] sm:$0xff] %vm706, %v660
      %728 = vst.msk [vmem:[%s260 + $0xa8] sm:$0xff] %vm706, %v663
      %729 = vst.msk [vmem:[%s260 + $0xb0] sm:$0xff] %vm706, %v668
      %730 = vst.msk [vmem:[%s260 + $0xb8] sm:$0xff] %vm706, %v671
      %731 = vst.msk [vmem:[%s260 + $0xc0] sm:$0xff] %vm706, %v676
      %732 = vst.msk [vmem:[%s260 + $0xc8] sm:$0xff] %vm706, %v679
      %733 = vst.msk [vmem:[%s260 + $0xd0] sm:$0xff] %vm706, %v684
      %734 = vst.msk [vmem:[%s260 + $0xd8] sm:$0xff] %vm706, %v687
      %735 = vst.msk [vmem:[%s260 + $0xe0] sm:$0xff] %vm706, %v692
      %736 = vst.msk [vmem:[%s260 + $0xe8] sm:$0xff] %vm706, %v695
      %737 = vst.msk [vmem:[%s260 + $0xf0] sm:$0xff] %vm706, %v700
      %738 = vst.msk [vmem:[%s260 + $0xf8] sm:$0xff] %vm706, %v703
      %s739 = smul.u32 %s18, 256
      %v740 = vlaneseq
      %v741 = vshrl.u32 %v740, 7
      %v742 = vadd.s32 %v741, 8
      %v743 = vadd.s32 %v741, 16
      %v744 = vadd.s32 %v741, 24
      %v745 = vadd.s32 %v741, 32
      %v746 = vadd.s32 %v741, 40
      %v747 = vadd.s32 %v741, 48
      %v748 = vadd.s32 %v741, 56
      %v749 = vadd.s32 %v741, 64
      %v750 = vadd.s32 %v741, 72
      %v751 = vadd.s32 %v741, 80
      %v752 = vadd.s32 %v741, 88
      %v753 = vadd.s32 %v741, 96
      %v754 = vadd.s32 %v741, 104
      %v755 = vadd.s32 %v741, 112
      %v756 = vadd.s32 %v741, 120
      %v757 = vadd.s32 %v741, 128
      %v758 = vadd.s32 %v741, 136
      %v759 = vadd.s32 %v741, 144
      %v760 = vadd.s32 %v741, 152
      %v761 = vadd.s32 %v741, 160
      %v762 = vadd.s32 %v741, 168
      %v763 = vadd.s32 %v741, 176
      %v764 = vadd.s32 %v741, 184
      %v765 = vadd.s32 %v741, 192
      %v766 = vadd.s32 %v741, 200
      %v767 = vadd.s32 %v741, 208
      %v768 = vadd.s32 %v741, 216
      %v769 = vadd.s32 %v741, 224
      %v770 = vadd.s32 %v741, 232
      %v771 = vadd.s32 %v741, 240
      %v772 = vadd.s32 %v741, 248
      %v773 = vstv %s739
      %v774 = vadd.s32 %v773, %v741
      %v775 = vadd.s32 %v773, %v742
      %v776 = vadd.s32 %v773, %v743
      %v777 = vadd.s32 %v773, %v744
      %v778 = vadd.s32 %v773, %v745
      %v779 = vadd.s32 %v773, %v746
      %v780 = vadd.s32 %v773, %v747
      %v781 = vadd.s32 %v773, %v748
      %v782 = vadd.s32 %v773, %v749
      %v783 = vadd.s32 %v773, %v750
      %v784 = vadd.s32 %v773, %v751
      %v785 = vadd.s32 %v773, %v752
      %v786 = vadd.s32 %v773, %v753
      %v787 = vadd.s32 %v773, %v754
      %v788 = vadd.s32 %v773, %v755
      %v789 = vadd.s32 %v773, %v756
      %v790 = vadd.s32 %v773, %v757
      %v791 = vadd.s32 %v773, %v758
      %v792 = vadd.s32 %v773, %v759
      %v793 = vadd.s32 %v773, %v760
      %v794 = vadd.s32 %v773, %v761
      %v795 = vadd.s32 %v773, %v762
      %v796 = vadd.s32 %v773, %v763
      %v797 = vadd.s32 %v773, %v764
      %v798 = vadd.s32 %v773, %v765
      %v799 = vadd.s32 %v773, %v766
      %v800 = vadd.s32 %v773, %v767
      %v801 = vadd.s32 %v773, %v768
      %v802 = vadd.s32 %v773, %v769
      %v803 = vadd.s32 %v773, %v770
      %v804 = vadd.s32 %v773, %v771
      %v805 = vadd.s32 %v773, %v772
      %vm806 = vcmp.lt.s32.totalorder %v774, 640
      %vm807 = vcmp.lt.s32.totalorder %v775, 640
      %vm808 = vcmp.lt.s32.totalorder %v776, 640
      %vm809 = vcmp.lt.s32.totalorder %v777, 640
      %vm810 = vcmp.lt.s32.totalorder %v778, 640
      %vm811 = vcmp.lt.s32.totalorder %v779, 640
      %vm812 = vcmp.lt.s32.totalorder %v780, 640
      %vm813 = vcmp.lt.s32.totalorder %v781, 640
      %vm814 = vcmp.lt.s32.totalorder %v782, 640
      %vm815 = vcmp.lt.s32.totalorder %v783, 640
      %vm816 = vcmp.lt.s32.totalorder %v784, 640
      %vm817 = vcmp.lt.s32.totalorder %v785, 640
      %vm818 = vcmp.lt.s32.totalorder %v786, 640
      %vm819 = vcmp.lt.s32.totalorder %v787, 640
      %vm820 = vcmp.lt.s32.totalorder %v788, 640
      %vm821 = vcmp.lt.s32.totalorder %v789, 640
      %vm822 = vcmp.lt.s32.totalorder %v790, 640
      %vm823 = vcmp.lt.s32.totalorder %v791, 640
      %vm824 = vcmp.lt.s32.totalorder %v792, 640
      %vm825 = vcmp.lt.s32.totalorder %v793, 640
      %vm826 = vcmp.lt.s32.totalorder %v794, 640
      %vm827 = vcmp.lt.s32.totalorder %v795, 640
      %vm828 = vcmp.lt.s32.totalorder %v796, 640
      %vm829 = vcmp.lt.s32.totalorder %v797, 640
      %vm830 = vcmp.lt.s32.totalorder %v798, 640
      %vm831 = vcmp.lt.s32.totalorder %v799, 640
      %vm832 = vcmp.lt.s32.totalorder %v800, 640
      %vm833 = vcmp.lt.s32.totalorder %v801, 640
      %vm834 = vcmp.lt.s32.totalorder %v802, 640
      %vm835 = vcmp.lt.s32.totalorder %v803, 640
      %vm836 = vcmp.lt.s32.totalorder %v804, 640
      %vm837 = vcmp.lt.s32.totalorder %v805, 640
      %v838 = vsel %vm806, 1, 0
      %v839 = vsel %vm807, 1, 0
      %v840 = vsel %vm808, 1, 0
      %v841 = vsel %vm809, 1, 0
      %v842 = vsel %vm810, 1, 0
      %v843 = vsel %vm811, 1, 0
      %v844 = vsel %vm812, 1, 0
      %v845 = vsel %vm813, 1, 0
      %v846 = vsel %vm814, 1, 0
      %v847 = vsel %vm815, 1, 0
      %v848 = vsel %vm816, 1, 0
      %v849 = vsel %vm817, 1, 0
      %v850 = vsel %vm818, 1, 0
      %v851 = vsel %vm819, 1, 0
      %v852 = vsel %vm820, 1, 0
      %v853 = vsel %vm821, 1, 0
      %v854 = vsel %vm822, 1, 0
      %v855 = vsel %vm823, 1, 0
      %v856 = vsel %vm824, 1, 0
      %v857 = vsel %vm825, 1, 0
      %v858 = vsel %vm826, 1, 0
      %v859 = vsel %vm827, 1, 0
      %v860 = vsel %vm828, 1, 0
      %v861 = vsel %vm829, 1, 0
      %v862 = vsel %vm830, 1, 0
      %v863 = vsel %vm831, 1, 0
      %v864 = vsel %vm832, 1, 0
      %v865 = vsel %vm833, 1, 0
      %v866 = vsel %vm834, 1, 0
      %v867 = vsel %vm835, 1, 0
      %v868 = vsel %vm836, 1, 0
      %v869 = vsel %vm837, 1, 0
      %vm870 = vcmp.eq.s32.totalorder %v838, 1
      %vm871 = vcmp.eq.s32.totalorder %v839, 1
      %vm872 = vcmp.eq.s32.totalorder %v840, 1
      %vm873 = vcmp.eq.s32.totalorder %v841, 1
      %vm874 = vcmp.eq.s32.totalorder %v842, 1
      %vm875 = vcmp.eq.s32.totalorder %v843, 1
      %vm876 = vcmp.eq.s32.totalorder %v844, 1
      %vm877 = vcmp.eq.s32.totalorder %v845, 1
      %vm878 = vcmp.eq.s32.totalorder %v846, 1
      %vm879 = vcmp.eq.s32.totalorder %v847, 1
      %vm880 = vcmp.eq.s32.totalorder %v848, 1
      %vm881 = vcmp.eq.s32.totalorder %v849, 1
      %vm882 = vcmp.eq.s32.totalorder %v850, 1
      %vm883 = vcmp.eq.s32.totalorder %v851, 1
      %vm884 = vcmp.eq.s32.totalorder %v852, 1
      %vm885 = vcmp.eq.s32.totalorder %v853, 1
      %vm886 = vcmp.eq.s32.totalorder %v854, 1
      %vm887 = vcmp.eq.s32.totalorder %v855, 1
      %vm888 = vcmp.eq.s32.totalorder %v856, 1
      %vm889 = vcmp.eq.s32.totalorder %v857, 1
      %vm890 = vcmp.eq.s32.totalorder %v858, 1
      %vm891 = vcmp.eq.s32.totalorder %v859, 1
      %vm892 = vcmp.eq.s32.totalorder %v860, 1
      %vm893 = vcmp.eq.s32.totalorder %v861, 1
      %vm894 = vcmp.eq.s32.totalorder %v862, 1
      %vm895 = vcmp.eq.s32.totalorder %v863, 1
      %vm896 = vcmp.eq.s32.totalorder %v864, 1
      %vm897 = vcmp.eq.s32.totalorder %v865, 1
      %vm898 = vcmp.eq.s32.totalorder %v866, 1
      %vm899 = vcmp.eq.s32.totalorder %v867, 1
      %vm900 = vcmp.eq.s32.totalorder %v868, 1
      %vm901 = vcmp.eq.s32.totalorder %v869, 1
      %v902 = vsel %vm870, %v580, 0.0
      %v903 = vsel %vm871, %v583, 0.0
      %v904 = vsel %vm872, %v588, 0.0
      %v905 = vsel %vm873, %v591, 0.0
      %v906 = vsel %vm874, %v596, 0.0
      %v907 = vsel %vm875, %v599, 0.0
      %v908 = vsel %vm876, %v604, 0.0
      %v909 = vsel %vm877, %v607, 0.0
      %v910 = vsel %vm878, %v612, 0.0
      %v911 = vsel %vm879, %v615, 0.0
      %v912 = vsel %vm880, %v620, 0.0
      %v913 = vsel %vm881, %v623, 0.0
      %v914 = vsel %vm882, %v628, 0.0
      %v915 = vsel %vm883, %v631, 0.0
      %v916 = vsel %vm884, %v636, 0.0
      %v917 = vsel %vm885, %v639, 0.0
      %v918 = vsel %vm886, %v644, 0.0
      %v919 = vsel %vm887, %v647, 0.0
      %v920 = vsel %vm888, %v652, 0.0
      %v921 = vsel %vm889, %v655, 0.0
      %v922 = vsel %vm890, %v660, 0.0
      %v923 = vsel %vm891, %v663, 0.0
      %v924 = vsel %vm892, %v668, 0.0
      %v925 = vsel %vm893, %v671, 0.0
      %v926 = vsel %vm894, %v676, 0.0
      %v927 = vsel %vm895, %v679, 0.0
      %v928 = vsel %vm896, %v684, 0.0
      %v929 = vsel %vm897, %v687, 0.0
      %v930 = vsel %vm898, %v692, 0.0
      %v931 = vsel %vm899, %v695, 0.0
      %v932 = vsel %vm900, %v700, 0.0
      %v933 = vsel %vm901, %v703, 0.0
      %v934 = vsel %vm706, %v902, 0.0
      %v935 = vsel %vm706, %v903, 0.0
      %v936 = vadd.f32 %v934, %v935
      %v937 = vsel %vm706, %v904, 0.0
      %v938 = vadd.f32 %v936, %v937
      %v939 = vsel %vm706, %v905, 0.0
      %v940 = vadd.f32 %v938, %v939
      %v941 = vsel %vm706, %v906, 0.0
      %v942 = vadd.f32 %v940, %v941
      %v943 = vsel %vm706, %v907, 0.0
      %v944 = vadd.f32 %v942, %v943
      %v945 = vsel %vm706, %v908, 0.0
      %v946 = vadd.f32 %v944, %v945
      %v947 = vsel %vm706, %v909, 0.0
      %v948 = vadd.f32 %v946, %v947
      %v949 = vsel %vm706, %v910, 0.0
      %v950 = vadd.f32 %v948, %v949
      %v951 = vsel %vm706, %v911, 0.0
      %v952 = vadd.f32 %v950, %v951
      %v953 = vsel %vm706, %v912, 0.0
      %v954 = vadd.f32 %v952, %v953
      %v955 = vsel %vm706, %v913, 0.0
      %v956 = vadd.f32 %v954, %v955
      %v957 = vsel %vm706, %v914, 0.0
      %v958 = vadd.f32 %v956, %v957
      %v959 = vsel %vm706, %v915, 0.0
      %v960 = vadd.f32 %v958, %v959
      %v961 = vsel %vm706, %v916, 0.0
      %v962 = vadd.f32 %v960, %v961
      %v963 = vsel %vm706, %v917, 0.0
      %v964 = vadd.f32 %v962, %v963
      %v965 = vsel %vm706, %v918, 0.0
      %v966 = vadd.f32 %v964, %v965
      %v967 = vsel %vm706, %v919, 0.0
      %v968 = vadd.f32 %v966, %v967
      %v969 = vsel %vm706, %v920, 0.0
      %v970 = vadd.f32 %v968, %v969
      %v971 = vsel %vm706, %v921, 0.0
      %v972 = vadd.f32 %v970, %v971
      %v973 = vsel %vm706, %v922, 0.0
      %v974 = vadd.f32 %v972, %v973
      %v975 = vsel %vm706, %v923, 0.0
      %v976 = vadd.f32 %v974, %v975
      %v977 = vsel %vm706, %v924, 0.0
      %v978 = vadd.f32 %v976, %v977
      %v979 = vsel %vm706, %v925, 0.0
      %v980 = vadd.f32 %v978, %v979
      %v981 = vsel %vm706, %v926, 0.0
      %v982 = vadd.f32 %v980, %v981
      %v983 = vsel %vm706, %v927, 0.0
      %v984 = vadd.f32 %v982, %v983
      %v985 = vsel %vm706, %v928, 0.0
      %v986 = vadd.f32 %v984, %v985
      %v987 = vsel %vm706, %v929, 0.0
      %v988 = vadd.f32 %v986, %v987
      %v989 = vsel %vm706, %v930, 0.0
      %v990 = vadd.f32 %v988, %v989
      %v991 = vsel %vm706, %v931, 0.0
      %v992 = vadd.f32 %v990, %v991
      %v993 = vsel %vm706, %v932, 0.0
      %v994 = vadd.f32 %v992, %v993
      %v995 = vsel %vm706, %v933, 0.0
      %v996 = vadd.f32 %v994, %v995
      %v997 = vrot.slane %v996, 4
      %v998 = vadd.f32 %v996, %v997
      %v999 = vrot.slane %v998, 2
      %v1000 = vadd.f32 %v998, %v999
      %v1001 = vrot.slane %v1000, 1
      %v1002 = vadd.f32 %v1000, %v1001
      %v1003 = vmul.f32 %v902, %v902
      %v1004 = vmul.f32 %v903, %v903
      %v1005 = vmul.f32 %v904, %v904
      %v1006 = vmul.f32 %v905, %v905
      %v1007 = vmul.f32 %v906, %v906
      %v1008 = vmul.f32 %v907, %v907
      %v1009 = vmul.f32 %v908, %v908
      %v1010 = vmul.f32 %v909, %v909
      %v1011 = vmul.f32 %v910, %v910
      %v1012 = vmul.f32 %v911, %v911
      %v1013 = vmul.f32 %v912, %v912
      %v1014 = vmul.f32 %v913, %v913
      %v1015 = vmul.f32 %v914, %v914
      %v1016 = vmul.f32 %v915, %v915
      %v1017 = vmul.f32 %v916, %v916
      %v1018 = vmul.f32 %v917, %v917
      %v1019 = vmul.f32 %v918, %v918
      %v1020 = vmul.f32 %v919, %v919
      %v1021 = vmul.f32 %v920, %v920
      %v1022 = vmul.f32 %v921, %v921
      %v1023 = vmul.f32 %v922, %v922
      %v1024 = vmul.f32 %v923, %v923
      %v1025 = vmul.f32 %v924, %v924
      %v1026 = vmul.f32 %v925, %v925
      %v1027 = vmul.f32 %v926, %v926
      %v1028 = vmul.f32 %v927, %v927
      %v1029 = vmul.f32 %v928, %v928
      %v1030 = vmul.f32 %v929, %v929
      %v1031 = vmul.f32 %v930, %v930
      %v1032 = vmul.f32 %v931, %v931
      %v1033 = vmul.f32 %v932, %v932
      %v1034 = vmul.f32 %v933, %v933
      %v1035 = vsel %vm706, %v1003, 0.0
      %v1036 = vsel %vm706, %v1004, 0.0
      %v1037 = vadd.f32 %v1035, %v1036
      %v1038 = vsel %vm706, %v1005, 0.0
      %v1039 = vadd.f32 %v1037, %v1038
      %v1040 = vsel %vm706, %v1006, 0.0
      %v1041 = vadd.f32 %v1039, %v1040
      %v1042 = vsel %vm706, %v1007, 0.0
      %v1043 = vadd.f32 %v1041, %v1042
      %v1044 = vsel %vm706, %v1008, 0.0
      %v1045 = vadd.f32 %v1043, %v1044
      %v1046 = vsel %vm706, %v1009, 0.0
      %v1047 = vadd.f32 %v1045, %v1046
      %v1048 = vsel %vm706, %v1010, 0.0
      %v1049 = vadd.f32 %v1047, %v1048
      %v1050 = vsel %vm706, %v1011, 0.0
      %v1051 = vadd.f32 %v1049, %v1050
      %v1052 = vsel %vm706, %v1012, 0.0
      %v1053 = vadd.f32 %v1051, %v1052
      %v1054 = vsel %vm706, %v1013, 0.0
      %v1055 = vadd.f32 %v1053, %v1054
      %v1056 = vsel %vm706, %v1014, 0.0
      %v1057 = vadd.f32 %v1055, %v1056
      %v1058 = vsel %vm706, %v1015, 0.0
      %v1059 = vadd.f32 %v1057, %v1058
      %v1060 = vsel %vm706, %v1016, 0.0
      %v1061 = vadd.f32 %v1059, %v1060
      %v1062 = vsel %vm706, %v1017, 0.0
      %v1063 = vadd.f32 %v1061, %v1062
      %v1064 = vsel %vm706, %v1018, 0.0
      %v1065 = vadd.f32 %v1063, %v1064
      %v1066 = vsel %vm706, %v1019, 0.0
      %v1067 = vadd.f32 %v1065, %v1066
      %v1068 = vsel %vm706, %v1020, 0.0
      %v1069 = vadd.f32 %v1067, %v1068
      %v1070 = vsel %vm706, %v1021, 0.0
      %v1071 = vadd.f32 %v1069, %v1070
      %v1072 = vsel %vm706, %v1022, 0.0
      %v1073 = vadd.f32 %v1071, %v1072
      %v1074 = vsel %vm706, %v1023, 0.0
      %v1075 = vadd.f32 %v1073, %v1074
      %v1076 = vsel %vm706, %v1024, 0.0
      %v1077 = vadd.f32 %v1075, %v1076
      %v1078 = vsel %vm706, %v1025, 0.0
      %v1079 = vadd.f32 %v1077, %v1078
      %v1080 = vsel %vm706, %v1026, 0.0
      %v1081 = vadd.f32 %v1079, %v1080
      %v1082 = vsel %vm706, %v1027, 0.0
      %v1083 = vadd.f32 %v1081, %v1082
      %v1084 = vsel %vm706, %v1028, 0.0
      %v1085 = vadd.f32 %v1083, %v1084
      %v1086 = vsel %vm706, %v1029, 0.0
      %v1087 = vadd.f32 %v1085, %v1086
      %v1088 = vsel %vm706, %v1030, 0.0
      %v1089 = vadd.f32 %v1087, %v1088
      %v1090 = vsel %vm706, %v1031, 0.0
      %v1091 = vadd.f32 %v1089, %v1090
      %v1092 = vsel %vm706, %v1032, 0.0
      %v1093 = vadd.f32 %v1091, %v1092
      %v1094 = vsel %vm706, %v1033, 0.0
      %v1095 = vadd.f32 %v1093, %v1094
      %v1096 = vsel %vm706, %v1034, 0.0
      %v1097 = vadd.f32 %v1095, %v1096
      %v1098 = vrot.slane %v1097, 4
      %v1099 = vadd.f32 %v1097, %v1098
      %v1100 = vrot.slane %v1099, 2
      %v1101 = vadd.f32 %v1099, %v1100
      %v1102 = vrot.slane %v1101, 1
      %v1103 = vadd.f32 %v1101, %v1102
      %vm1104 = vcmask 1040384
      %v1105 = vsel %vm1104, %v1002, %v1103
      %vm1106 = vcmask 254976
      %1107 = vst.msk [vmem:[%s265] sm:$0x3] %vm1106, %v1105
      %s1108 = smul.u32 32, %s18
      %p1109 = scmp.lt.s32.totalorder %s1108, 95
      %s1110 = scalar_select %p1109, %s1108, 95
      %s1111 = smul.addr %s1110, 8
      %s1112 = scalar_lea.vmem %s5, %s1111
      %p1113 = scmp.lt.s32.totalorder %s18, 2
      %s1114 = scalar_select %p1113, %s18, 2
      %s1115 = smul.addr %s1114, 2
      %s1116 = scalar_lea.vmem %s6, %s1115
      // Predicated region
      $region41: #{c3d_smart_forward.8} parent=39 // pred_check
        %p1117 = pneg %p146
      $region42: #{c3d_smart_forward.8} parent=39 // pred_check_branch
        %1119 = sbr.rel (%p1117) target = $region44
      $region43: #{c3d_smart_forward.8} parent=39 // pred_region
        %s1120 = smul.u32 32, %s18
      $region44: #{c3d_smart_forward.8} parent=39 // pred_fallthru
        _
      // Predicated region
      $region45: #{c3d_smart_forward.8} parent=39 // pred_check
        %p1121 = pneg %p172
      $region46: #{c3d_smart_forward.8} parent=39 // pred_check_branch
        %1123 = sbr.rel (%p1121) target = $region48
      $region47: #{c3d_smart_forward.8} parent=39 // pred_region
        _
      $region48: #{c3d_smart_forward.8} parent=39 // pred_fallthru
        _
    $region40: #{c3d_smart_forward.8} parent=5 // pred_fallthru
      _
    %p1124 = scmp.le.s32.totalorder 2, %s13
    // Predicated region
    $region49: #{c3d_smart_forward.8} parent=5 // pred_check
      %p1125 = pneg %p1124
    $region50: #{c3d_smart_forward.8} parent=5 // pred_check_branch
      %1127 = sbr.rel (%p1125) target = $region52
    $region51: #{c3d_smart_forward.8} parent=5 // pred_region
      %s1128 = ssub.s32 %s13, 2
      // Predicated region
      $region53: #{c3d_smart_forward.8} parent=51 // pred_check
        %p1129 = pneg %p152
      $region54: #{c3d_smart_forward.8} parent=51 // pred_check_branch
        %1131 = sbr.rel (%p1129) target = $region56
      $region55: #{c3d_smart_forward.8} parent=51 // pred_region
        %s1132 = smul.u32 32, %s19
        %p1133 = scmp.lt.s32.totalorder %s1132, 95
        %s1134 = scalar_select %p1133, %s1132, 95
        %s1135 = smul.addr %s1134, 8
        %s1136 = scalar_lea.vmem %s5, %s1135
      $region56: #{c3d_smart_forward.8} parent=51 // pred_fallthru
        _
      // Predicated region
      $region57: #{c3d_smart_forward.8} parent=51 // pred_check
        %p1137 = pneg %p178
      $region58: #{c3d_smart_forward.8} parent=51 // pred_check_branch
        %1139 = sbr.rel (%p1137) target = $region60
      $region59: #{c3d_smart_forward.8} parent=51 // pred_region
        %p1140 = scmp.lt.s32.totalorder %s19, 2
        %s1141 = scalar_select %p1140, %s19, 2
        %s1142 = smul.addr %s1141, 2
        %s1143 = scalar_lea.vmem %s6, %s1142
      $region60: #{c3d_smart_forward.8} parent=51 // pred_fallthru
        _
    $region52: #{c3d_smart_forward.8} parent=5 // pred_fallthru
      _
  $region6: #{c3d_smart_forward.8} parent=0 // loop_footer
    %s17 = sadd.s32 1, %s13
  $region7: #{c3d_smart_forward.8} parent=0 // loop_footer_branch
    %12 = sbr.rel target = $region3
  $region8: #{c3d_smart_forward.8} parent=0 // loop_exit
    _

// kernel: c3d_smart_forward.9
$region0: #{c3d_smart_forward.9}
  #allocation0 [shape = 'u32[]', space=smem, size = 0x4, offset = 0x4, fixed_abs, tag = 'smem constant byte address 0x4 - core index']
  #allocation1 [shape = 'u32[144,128]{1,0:T(1,128)}', space=vmem, size = 0x12000, scoped, tag = 'internal scratch']
  %s0 = inlined_call_operand.vmem [shape: f32[768,32], index: 0, kind: input, shape index: {}]
  %s1 = inlined_call_operand.vmem [shape: bf16[768,64], index: 1, kind: input, shape index: {}]
  %s2 = inlined_call_operand.vmem [shape: f32[1,32], index: 2, kind: input, shape index: {}]
  %s3 = inlined_call_operand.vmem [shape: f32[1,32], index: 3, kind: input, shape index: {}]
  %s4 = inlined_call_operand.vmem [shape: f32[1,64], index: 4, kind: input, shape index: {}]
  %s5 = inlined_call_operand.vmem [shape: f32[1,64], index: 5, kind: input, shape index: {}]
  %s6 = inlined_call_operand.vmem [shape: bf16[32,128], index: 6, kind: input, shape index: {}]
  %s7 = inlined_call_operand.vmem [shape: bf16[64,128], index: 7, kind: input, shape index: {}]
  %s8 = inlined_call_operand.vmem [shape: f32[768,128], index: 8, kind: output, shape index: {}]
  %s9 = sld [smem:[#allocation0]]
  $region65: #{c3d_smart_forward.9} parent=0
    _
  %s11 = ssub.s32 1, %s9
  %s12 = scalar_select 0, %s11, %s9
  loop: start=0, step=1, limit=5
  $region2: #{c3d_smart_forward.9} parent=0 // loop_pre_header
    _
  $region3: #{c3d_smart_forward.9} parent=0 // loop_header
    %s14 = sphi 0, %s18
    %p15 = scmp.ge.s32.totalorder %s14, 5
    %s24 = sphi 0, %s26
    %s27 = sphi 0, %s24
    %s28 = sphi 0, %s27
    %s44 = sphi 0, %s28
    %s50 = sphi 0, %s52
    %s53 = sphi 0, %s50
    %s54 = sphi 0, %s53
    %s70 = sphi 0, %s54
    %s74 = sphi 0, %s74
    %s76 = sphi 0, %s74
    %s77 = sphi 0, %s76
    %s91 = sphi 0, %s77
    %s95 = sphi 0, %s95
    %s97 = sphi 0, %s95
    %s98 = sphi 0, %s97
    %s112 = sphi 0, %s98
    %s116 = sphi 0, %s116
    %s118 = sphi 0, %s116
    %s119 = sphi 0, %s118
    %s133 = sphi 0, %s119
    %s137 = sphi 0, %s137
    %s139 = sphi 0, %s137
    %s140 = sphi 0, %s139
    %s154 = sphi 0, %s140
    %s158 = sphi 0, %s158
    %s160 = sphi 0, %s158
    %s161 = sphi 0, %s160
    %s175 = sphi 0, %s161
    %s179 = sphi 0, %s179
    %s181 = sphi 0, %s179
    %s182 = sphi 0, %s181
    %s196 = sphi 0, %s182
    %s202 = sphi 0, %s204
    %s205 = sphi 0, %s202
    %s206 = sphi 0, %s205
    %s222 = sphi 0, %s206
  $region4: #{c3d_smart_forward.9} parent=0 // loop_header_branch
    %17 = sbr.rel (%p15) target = $region8
  $region5: #{c3d_smart_forward.9} parent=0 // loop_body
    %s19 = ssub.s32 %s14, 1
    %s20 = ssub.s32 %s14, 2
    %s21 = sadd.s32 %s14, 1
    %s22 = ssub.s32 %s14, %s21
    %p23 = scmp.eq.s32.totalorder %s22, 0
    %s25 = sadd.s32 %s24, 1
    %s26 = scalar_select %p23, %s24, %s25
    %p29 = pneg %p23
    %p30 = scmp.eq.s32.totalorder %s14, 2
    %p31 = por %p29, %p30
    %p32 = scmp.ne.s32.totalorder %s24, %s27
    %p33 = scmp.eq.s32.totalorder %s14, 0
    %p34 = por %p32, %p33
    %p35 = scmp.ne.s32.totalorder %s24, %s27
    %p36 = scmp.eq.s32.totalorder %s19, 2
    %p37 = por %p35, %p36
    %p38 = scmp.ne.s32.totalorder %s27, %s28
    %p39 = scmp.eq.s32.totalorder %s19, 0
    %p40 = por %p38, %p39
    %p41 = scmp.ne.s32.totalorder %s27, %s28
    %p42 = scmp.eq.s32.totalorder %s20, 2
    %p43 = por %p41, %p42
    %p45 = scmp.ne.s32.totalorder %s28, %s44
    %p46 = scmp.eq.s32.totalorder %s20, 0
    %p47 = por %p45, %p46
    %s48 = ssub.s32 %s14, %s21
    %p49 = scmp.eq.s32.totalorder %s48, 0
    %s51 = sadd.s32 %s50, 1
    %s52 = scalar_select %p49, %s50, %s51
    %p55 = pneg %p49
    %p56 = scmp.eq.s32.totalorder %s14, 2
    %p57 = por %p55, %p56
    %p58 = scmp.ne.s32.totalorder %s50, %s53
    %p59 = scmp.eq.s32.totalorder %s14, 0
    %p60 = por %p58, %p59
    %p61 = scmp.ne.s32.totalorder %s50, %s53
    %p62 = scmp.eq.s32.totalorder %s19, 2
    %p63 = por %p61, %p62
    %p64 = scmp.ne.s32.totalorder %s53, %s54
    %p65 = scmp.eq.s32.totalorder %s19, 0
    %p66 = por %p64, %p65
    %p67 = scmp.ne.s32.totalorder %s53, %s54
    %p68 = scmp.eq.s32.totalorder %s20, 2
    %p69 = por %p67, %p68
    %p71 = scmp.ne.s32.totalorder %s54, %s70
    %p72 = scmp.eq.s32.totalorder %s20, 0
    %p73 = por %p71, %p72
    %s75 = sadd.s32 %s74, 1
    %p78 = scmp.eq.s32.totalorder %s14, 2
    %p79 = scmp.ne.s32.totalorder %s74, %s76
    %p80 = scmp.eq.s32.totalorder %s14, 0
    %p81 = por %p79, %p80
    %p82 = scmp.ne.s32.totalorder %s74, %s76
    %p83 = scmp.eq.s32.totalorder %s19, 2
    %p84 = por %p82, %p83
    %p85 = scmp.ne.s32.totalorder %s76, %s77
    %p86 = scmp.eq.s32.totalorder %s19, 0
    %p87 = por %p85, %p86
    %p88 = scmp.ne.s32.totalorder %s76, %s77
    %p89 = scmp.eq.s32.totalorder %s20, 2
    %p90 = por %p88, %p89
    %p92 = scmp.ne.s32.totalorder %s77, %s91
    %p93 = scmp.eq.s32.totalorder %s20, 0
    %p94 = por %p92, %p93
    %s96 = sadd.s32 %s95, 1
    %p99 = scmp.eq.s32.totalorder %s14, 2
    %p100 = scmp.ne.s32.totalorder %s95, %s97
    %p101 = scmp.eq.s32.totalorder %s14, 0
    %p102 = por %p100, %p101
    %p103 = scmp.ne.s32.totalorder %s95, %s97
    %p104 = scmp.eq.s32.totalorder %s19, 2
    %p105 = por %p103, %p104
    %p106 = scmp.ne.s32.totalorder %s97, %s98
    %p107 = scmp.eq.s32.totalorder %s19, 0
    %p108 = por %p106, %p107
    %p109 = scmp.ne.s32.totalorder %s97, %s98
    %p110 = scmp.eq.s32.totalorder %s20, 2
    %p111 = por %p109, %p110
    %p113 = scmp.ne.s32.totalorder %s98, %s112
    %p114 = scmp.eq.s32.totalorder %s20, 0
    %p115 = por %p113, %p114
    %s117 = sadd.s32 %s116, 1
    %p120 = scmp.eq.s32.totalorder %s14, 2
    %p121 = scmp.ne.s32.totalorder %s116, %s118
    %p122 = scmp.eq.s32.totalorder %s14, 0
    %p123 = por %p121, %p122
    %p124 = scmp.ne.s32.totalorder %s116, %s118
    %p125 = scmp.eq.s32.totalorder %s19, 2
    %p126 = por %p124, %p125
    %p127 = scmp.ne.s32.totalorder %s118, %s119
    %p128 = scmp.eq.s32.totalorder %s19, 0
    %p129 = por %p127, %p128
    %p130 = scmp.ne.s32.totalorder %s118, %s119
    %p131 = scmp.eq.s32.totalorder %s20, 2
    %p132 = por %p130, %p131
    %p134 = scmp.ne.s32.totalorder %s119, %s133
    %p135 = scmp.eq.s32.totalorder %s20, 0
    %p136 = por %p134, %p135
    %s138 = sadd.s32 %s137, 1
    %p141 = scmp.eq.s32.totalorder %s14, 2
    %p142 = scmp.ne.s32.totalorder %s137, %s139
    %p143 = scmp.eq.s32.totalorder %s14, 0
    %p144 = por %p142, %p143
    %p145 = scmp.ne.s32.totalorder %s137, %s139
    %p146 = scmp.eq.s32.totalorder %s19, 2
    %p147 = por %p145, %p146
    %p148 = scmp.ne.s32.totalorder %s139, %s140
    %p149 = scmp.eq.s32.totalorder %s19, 0
    %p150 = por %p148, %p149
    %p151 = scmp.ne.s32.totalorder %s139, %s140
    %p152 = scmp.eq.s32.totalorder %s20, 2
    %p153 = por %p151, %p152
    %p155 = scmp.ne.s32.totalorder %s140, %s154
    %p156 = scmp.eq.s32.totalorder %s20, 0
    %p157 = por %p155, %p156
    %s159 = sadd.s32 %s158, 1
    %p162 = scmp.eq.s32.totalorder %s14, 2
    %p163 = scmp.ne.s32.totalorder %s158, %s160
    %p164 = scmp.eq.s32.totalorder %s14, 0
    %p165 = por %p163, %p164
    %p166 = scmp.ne.s32.totalorder %s158, %s160
    %p167 = scmp.eq.s32.totalorder %s19, 2
    %p168 = por %p166, %p167
    %p169 = scmp.ne.s32.totalorder %s160, %s161
    %p170 = scmp.eq.s32.totalorder %s19, 0
    %p171 = por %p169, %p170
    %p172 = scmp.ne.s32.totalorder %s160, %s161
    %p173 = scmp.eq.s32.totalorder %s20, 2
    %p174 = por %p172, %p173
    %p176 = scmp.ne.s32.totalorder %s161, %s175
    %p177 = scmp.eq.s32.totalorder %s20, 0
    %p178 = por %p176, %p177
    %s180 = sadd.s32 %s179, 1
    %p183 = scmp.eq.s32.totalorder %s14, 2
    %p184 = scmp.ne.s32.totalorder %s179, %s181
    %p185 = scmp.eq.s32.totalorder %s14, 0
    %p186 = por %p184, %p185
    %p187 = scmp.ne.s32.totalorder %s179, %s181
    %p188 = scmp.eq.s32.totalorder %s19, 2
    %p189 = por %p187, %p188
    %p190 = scmp.ne.s32.totalorder %s181, %s182
    %p191 = scmp.eq.s32.totalorder %s19, 0
    %p192 = por %p190, %p191
    %p193 = scmp.ne.s32.totalorder %s181, %s182
    %p194 = scmp.eq.s32.totalorder %s20, 2
    %p195 = por %p193, %p194
    %p197 = scmp.ne.s32.totalorder %s182, %s196
    %p198 = scmp.eq.s32.totalorder %s20, 0
    %p199 = por %p197, %p198
    %s200 = ssub.s32 %s14, %s21
    %p201 = scmp.eq.s32.totalorder %s200, 0
    %s203 = sadd.s32 %s202, 1
    %s204 = scalar_select %p201, %s202, %s203
    %p207 = pneg %p201
    %p208 = scmp.eq.s32.totalorder %s14, 2
    %p209 = por %p207, %p208
    %p210 = scmp.ne.s32.totalorder %s202, %s205
    %p211 = scmp.eq.s32.totalorder %s14, 0
    %p212 = por %p210, %p211
    %p213 = scmp.ne.s32.totalorder %s202, %s205
    %p214 = scmp.eq.s32.totalorder %s19, 2
    %p215 = por %p213, %p214
    %p216 = scmp.ne.s32.totalorder %s205, %s206
    %p217 = scmp.eq.s32.totalorder %s19, 0
    %p218 = por %p216, %p217
    %p219 = scmp.ne.s32.totalorder %s205, %s206
    %p220 = scmp.eq.s32.totalorder %s20, 2
    %p221 = por %p219, %p220
    %p223 = scmp.ne.s32.totalorder %s206, %s222
    %p224 = scmp.eq.s32.totalorder %s20, 0
    %p225 = por %p223, %p224
    %p226 = scmp.le.s32.totalorder 1, %s14
    %p227 = scmp.lt.s32.totalorder %s14, 4
    %p228 = pnand %p226, %p227
    %p229 = pneg %p228
    // Predicated region
    $region9: #{c3d_smart_forward.9} parent=5 // pred_check
      _
    $region10: #{c3d_smart_forward.9} parent=5 // pred_check_branch
      %231 = sbr.rel (%p228) target = $region12
    $region11: #{c3d_smart_forward.9} parent=5 // pred_region
      %s232 = ssub.s32 %s14, 1
      // Predicated region
      $region13: #{c3d_smart_forward.9} parent=11 // pred_check
        %p233 = pneg %p87
      $region14: #{c3d_smart_forward.9} parent=11 // pred_check_branch
        %235 = sbr.rel (%p233) target = $region16
      $region15: #{c3d_smart_forward.9} parent=11 // pred_region
        _
      $region16: #{c3d_smart_forward.9} parent=11 // pred_fallthru
        _
      // Predicated region
      $region17: #{c3d_smart_forward.9} parent=11 // pred_check
        %p236 = pneg %p108
      $region18: #{c3d_smart_forward.9} parent=11 // pred_check_branch
        %238 = sbr.rel (%p236) target = $region20
      $region19: #{c3d_smart_forward.9} parent=11 // pred_region
        _
      $region20: #{c3d_smart_forward.9} parent=11 // pred_fallthru
        _
      // Predicated region
      $region21: #{c3d_smart_forward.9} parent=11 // pred_check
        %p239 = pneg %p129
      $region22: #{c3d_smart_forward.9} parent=11 // pred_check_branch
        %241 = sbr.rel (%p239) target = $region24
      $region23: #{c3d_smart_forward.9} parent=11 // pred_region
        _
      $region24: #{c3d_smart_forward.9} parent=11 // pred_fallthru
        _
      // Predicated region
      $region25: #{c3d_smart_forward.9} parent=11 // pred_check
        %p242 = pneg %p150
      $region26: #{c3d_smart_forward.9} parent=11 // pred_check_branch
        %244 = sbr.rel (%p242) target = $region28
      $region27: #{c3d_smart_forward.9} parent=11 // pred_region
        _
      $region28: #{c3d_smart_forward.9} parent=11 // pred_fallthru
        _
      // Predicated region
      $region29: #{c3d_smart_forward.9} parent=11 // pred_check
        %p245 = pneg %p171
      $region30: #{c3d_smart_forward.9} parent=11 // pred_check_branch
        %247 = sbr.rel (%p245) target = $region32
      $region31: #{c3d_smart_forward.9} parent=11 // pred_region
        _
      $region32: #{c3d_smart_forward.9} parent=11 // pred_fallthru
        _
      // Predicated region
      $region33: #{c3d_smart_forward.9} parent=11 // pred_check
        %p248 = pneg %p192
      $region34: #{c3d_smart_forward.9} parent=11 // pred_check_branch
        %250 = sbr.rel (%p248) target = $region36
      $region35: #{c3d_smart_forward.9} parent=11 // pred_region
        _
      $region36: #{c3d_smart_forward.9} parent=11 // pred_fallthru
        _
    $region12: #{c3d_smart_forward.9} parent=5 // pred_fallthru
      _
    %p251 = scmp.lt.s32.totalorder %s14, 3
    // Predicated region
    $region37: #{c3d_smart_forward.9} parent=5 // pred_check
      %p252 = pneg %p251
    $region38: #{c3d_smart_forward.9} parent=5 // pred_check_branch
      %254 = sbr.rel (%p252) target = $region40
    $region39: #{c3d_smart_forward.9} parent=5 // pred_region
      // Predicated region
      $region41: #{c3d_smart_forward.9} parent=39 // pred_check
        %p255 = pneg %p34
      $region42: #{c3d_smart_forward.9} parent=39 // pred_check_branch
        %257 = sbr.rel (%p255) target = $region44
      $region43: #{c3d_smart_forward.9} parent=39 // pred_region
        %s258 = smul.u32 32, %s14
        %p259 = scmp.lt.s32.totalorder %s258, 95
        %s260 = scalar_select %p259, %s258, 95
        %s261 = smul.addr %s260, 8
        %s262 = scalar_lea.vmem %s0, %s261
        %s263 = smul.u32 32, %s14
      $region44: #{c3d_smart_forward.9} parent=39 // pred_fallthru
        _
      // Predicated region
      $region45: #{c3d_smart_forward.9} parent=39 // pred_check
        %p264 = pneg %p60
      $region46: #{c3d_smart_forward.9} parent=39 // pred_check_branch
        %266 = sbr.rel (%p264) target = $region48
      $region47: #{c3d_smart_forward.9} parent=39 // pred_region
        %s267 = smul.u32 32, %s14
        %p268 = scmp.lt.s32.totalorder %s267, 95
        %s269 = scalar_select %p268, %s267, 95
        %s270 = smul.addr %s269, 4
        %s271 = scalar_lea.vmem %s1, %s270
        %s272 = smul.u32 32, %s14
      $region48: #{c3d_smart_forward.9} parent=39 // pred_fallthru
        _
    $region40: #{c3d_smart_forward.9} parent=5 // pred_fallthru
      _
    %p273 = scmp.le.s32.totalorder 1, %s14
    %p274 = scmp.lt.s32.totalorder %s14, 4
    %p275 = pnand %p273, %p274
    %p276 = pneg %p275
    // Predicated region
    $region49: #{c3d_smart_forward.9} parent=5 // pred_check
      _
    $region50: #{c3d_smart_forward.9} parent=5 // pred_check_branch
      %278 = sbr.rel (%p275) target = $region52
    $region51: #{c3d_smart_forward.9} parent=5 // pred_region
      %s279 = ssub.s32 %s14, 1
      %s280 = smul.u32 32, %s19
      %p281 = scmp.lt.s32.totalorder %s280, 95
      %s282 = scalar_select %p281, %s280, 95
      %s283 = smul.addr %s282, 8
      %s284 = scalar_lea.vmem %s0, %s283
      %p285 = pneg %p40
      %p286 = pneg %p37
      %s287 = smul.u32 32, %s19
      %p288 = scmp.lt.s32.totalorder %s287, 95
      %s289 = scalar_select %p288, %s287, 95
      %s290 = smul.addr %s289, 4
      %s291 = scalar_lea.vmem %s1, %s290
      %p292 = pneg %p66
      %p293 = pneg %p63
      %p294 = pneg %p87
      %p295 = pneg %p84
      %p296 = pneg %p108
      %p297 = pneg %p105
      %p298 = pneg %p129
      %p299 = pneg %p126
      %p300 = pneg %p150
      %p301 = pneg %p147
      %p302 = pneg %p171
      %p303 = pneg %p168
      %p304 = pneg %p192
      %p305 = pneg %p189
      %p306 = pneg %p218
      %p307 = pneg %p215
      %s308 = smul.u32 32, %s19
      %p309 = scmp.lt.s32.totalorder %s308, 95
      %s310 = scalar_select %p309, %s308, 95
      %s311 = smul.addr %s310, 8
      %s312 = scalar_lea.vmem %s8, %s311
      %s313 = smul.u32 32, %s19
      %p314 = scmp.lt.s32.totalorder %s313, 95
      %s315 = scalar_select %p314, %s313, 95
      %s316 = smul.addr %s315, 8
      %s317 = scalar_lea.vmem %s0, %s316
      %s318 = smul.u32 32, %s19
      %s319 = smul.u32 32, %s19
      %p320 = scmp.lt.s32.totalorder %s319, 95
      %s321 = scalar_select %p320, %s319, 95
      %s322 = smul.addr %s321, 4
      %s323 = scalar_lea.vmem %s1, %s322
      %s324 = smul.u32 32, %s19
      %s325 = smul.u32 32, %s19
      %p326 = scmp.lt.s32.totalorder %s325, 95
      %s327 = scalar_select %p326, %s325, 95
      %s328 = smul.addr %s327, 8
      %s329 = scalar_lea.vmem %s8, %s328
      %s330 = smul.u32 32, %s19
      %v332 = vld [vmem:[%s317] sm:$0xff]
      %v333 = vld [vmem:[%s317 + $0x8] sm:$0xff]
      %v334 = vld [vmem:[%s317 + $0x10] sm:$0xff]
      %v335 = vld [vmem:[%s317 + $0x18] sm:$0xff]
      %v336 = vld [vmem:[%s317 + $0x20] sm:$0xff]
      %v337 = vld [vmem:[%s317 + $0x28] sm:$0xff]
      %v338 = vld [vmem:[%s317 + $0x30] sm:$0xff]
      %v339 = vld [vmem:[%s317 + $0x38] sm:$0xff]
      %v340 = vld [vmem:[%s317 + $0x40] sm:$0xff]
      %v341 = vld [vmem:[%s317 + $0x48] sm:$0xff]
      %v342 = vld [vmem:[%s317 + $0x50] sm:$0xff]
      %v343 = vld [vmem:[%s317 + $0x58] sm:$0xff]
      %v344 = vld [vmem:[%s317 + $0x60] sm:$0xff]
      %v345 = vld [vmem:[%s317 + $0x68] sm:$0xff]
      %v346 = vld [vmem:[%s317 + $0x70] sm:$0xff]
      %v347 = vld [vmem:[%s317 + $0x78] sm:$0xff]
      %v348 = vld [vmem:[%s317 + $0x80] sm:$0xff]
      %v349 = vld [vmem:[%s317 + $0x88] sm:$0xff]
      %v350 = vld [vmem:[%s317 + $0x90] sm:$0xff]
      %v351 = vld [vmem:[%s317 + $0x98] sm:$0xff]
      %v352 = vld [vmem:[%s317 + $0xa0] sm:$0xff]
      %v353 = vld [vmem:[%s317 + $0xa8] sm:$0xff]
      %v354 = vld [vmem:[%s317 + $0xb0] sm:$0xff]
      %v355 = vld [vmem:[%s317 + $0xb8] sm:$0xff]
      %v356 = vld [vmem:[%s317 + $0xc0] sm:$0xff]
      %v357 = vld [vmem:[%s317 + $0xc8] sm:$0xff]
      %v358 = vld [vmem:[%s317 + $0xd0] sm:$0xff]
      %v359 = vld [vmem:[%s317 + $0xd8] sm:$0xff]
      %v360 = vld [vmem:[%s317 + $0xe0] sm:$0xff]
      %v361 = vld [vmem:[%s317 + $0xe8] sm:$0xff]
      %v362 = vld [vmem:[%s317 + $0xf0] sm:$0xff]
      %v363 = vld [vmem:[%s317 + $0xf8] sm:$0xff]
      %v364 = vld [vmem:[%s2] sm:$0x1]
      %v366 = vlaneseq
      %v367 = vshrl.u32 %v366, 7
      %v368 = vsub.s32 0, %v367
      %v369 = vrot.slane %v364, %v368
      %v371 = vsub.f32 %v332, %v369
      %v372 = vsub.f32 %v333, %v369
      %v373 = vsub.f32 %v334, %v369
      %v374 = vsub.f32 %v335, %v369
      %v375 = vsub.f32 %v336, %v369
      %v376 = vsub.f32 %v337, %v369
      %v377 = vsub.f32 %v338, %v369
      %v378 = vsub.f32 %v339, %v369
      %v379 = vsub.f32 %v340, %v369
      %v380 = vsub.f32 %v341, %v369
      %v381 = vsub.f32 %v342, %v369
      %v382 = vsub.f32 %v343, %v369
      %v383 = vsub.f32 %v344, %v369
      %v384 = vsub.f32 %v345, %v369
      %v385 = vsub.f32 %v346, %v369
      %v386 = vsub.f32 %v347, %v369
      %v387 = vsub.f32 %v348, %v369
      %v388 = vsub.f32 %v349, %v369
      %v389 = vsub.f32 %v350, %v369
      %v390 = vsub.f32 %v351, %v369
      %v391 = vsub.f32 %v352, %v369
      %v392 = vsub.f32 %v353, %v369
      %v393 = vsub.f32 %v354, %v369
      %v394 = vsub.f32 %v355, %v369
      %v395 = vsub.f32 %v356, %v369
      %v396 = vsub.f32 %v357, %v369
      %v397 = vsub.f32 %v358, %v369
      %v398 = vsub.f32 %v359, %v369
      %v399 = vsub.f32 %v360, %v369
      %v400 = vsub.f32 %v361, %v369
      %v401 = vsub.f32 %v362, %v369
      %v402 = vsub.f32 %v363, %v369
      %v403 = vld [vmem:[%s3] sm:$0x1]
      %v405 = vlaneseq
      %v406 = vshrl.u32 %v405, 7
      %v407 = vsub.s32 0, %v406
      %v408 = vrot.slane %v403, %v407
      %v410 = vmul.f32 %v371, %v408
      %v411 = vmul.f32 %v372, %v408
      %v412 = vmul.f32 %v373, %v408
      %v413 = vmul.f32 %v374, %v408
      %v414 = vmul.f32 %v375, %v408
      %v415 = vmul.f32 %v376, %v408
      %v416 = vmul.f32 %v377, %v408
      %v417 = vmul.f32 %v378, %v408
      %v418 = vmul.f32 %v379, %v408
      %v419 = vmul.f32 %v380, %v408
      %v420 = vmul.f32 %v381, %v408
      %v421 = vmul.f32 %v382, %v408
      %v422 = vmul.f32 %v383, %v408
      %v423 = vmul.f32 %v384, %v408
      %v424 = vmul.f32 %v385, %v408
      %v425 = vmul.f32 %v386, %v408
      %v426 = vmul.f32 %v387, %v408
      %v427 = vmul.f32 %v388, %v408
      %v428 = vmul.f32 %v389, %v408
      %v429 = vmul.f32 %v390, %v408
      %v430 = vmul.f32 %v391, %v408
      %v431 = vmul.f32 %v392, %v408
      %v432 = vmul.f32 %v393, %v408
      %v433 = vmul.f32 %v394, %v408
      %v434 = vmul.f32 %v395, %v408
      %v435 = vmul.f32 %v396, %v408
      %v436 = vmul.f32 %v397, %v408
      %v437 = vmul.f32 %v398, %v408
      %v438 = vmul.f32 %v399, %v408
      %v439 = vmul.f32 %v400, %v408
      %v440 = vmul.f32 %v401, %v408
      %v441 = vmul.f32 %v402, %v408
      %v442 = vmax.f32 %v410, 0.0
      %v443 = vmax.f32 %v411, 0.0
      %v444 = vmax.f32 %v412, 0.0
      %v445 = vmax.f32 %v413, 0.0
      %v446 = vmax.f32 %v414, 0.0
      %v447 = vmax.f32 %v415, 0.0
      %v448 = vmax.f32 %v416, 0.0
      %v449 = vmax.f32 %v417, 0.0
      %v450 = vmax.f32 %v418, 0.0
      %v451 = vmax.f32 %v419, 0.0
      %v452 = vmax.f32 %v420, 0.0
      %v453 = vmax.f32 %v421, 0.0
      %v454 = vmax.f32 %v422, 0.0
      %v455 = vmax.f32 %v423, 0.0
      %v456 = vmax.f32 %v424, 0.0
      %v457 = vmax.f32 %v425, 0.0
      %v458 = vmax.f32 %v426, 0.0
      %v459 = vmax.f32 %v427, 0.0
      %v460 = vmax.f32 %v428, 0.0
      %v461 = vmax.f32 %v429, 0.0
      %v462 = vmax.f32 %v430, 0.0
      %v463 = vmax.f32 %v431, 0.0
      %v464 = vmax.f32 %v432, 0.0
      %v465 = vmax.f32 %v433, 0.0
      %v466 = vmax.f32 %v434, 0.0
      %v467 = vmax.f32 %v435, 0.0
      %v468 = vmax.f32 %v436, 0.0
      %v469 = vmax.f32 %v437, 0.0
      %v470 = vmax.f32 %v438, 0.0
      %v471 = vmax.f32 %v439, 0.0
      %v472 = vmax.f32 %v440, 0.0
      %v473 = vmax.f32 %v441, 0.0
      %v474 = vld [vmem:[%s323] sm:$0xf]
      %v475 = vld [vmem:[%s323 + $0x4] sm:$0xf]
      %v476 = vld [vmem:[%s323 + $0x8] sm:$0xf]
      %v477 = vld [vmem:[%s323 + $0xc] sm:$0xf]
      %v478 = vld [vmem:[%s323 + $0x10] sm:$0xf]
      %v479 = vld [vmem:[%s323 + $0x14] sm:$0xf]
      %v480 = vld [vmem:[%s323 + $0x18] sm:$0xf]
      %v481 = vld [vmem:[%s323 + $0x1c] sm:$0xf]
      %v482 = vld [vmem:[%s323 + $0x20] sm:$0xf]
      %v483 = vld [vmem:[%s323 + $0x24] sm:$0xf]
      %v484 = vld [vmem:[%s323 + $0x28] sm:$0xf]
      %v485 = vld [vmem:[%s323 + $0x2c] sm:$0xf]
      %v486 = vld [vmem:[%s323 + $0x30] sm:$0xf]
      %v487 = vld [vmem:[%s323 + $0x34] sm:$0xf]
      %v488 = vld [vmem:[%s323 + $0x38] sm:$0xf]
      %v489 = vld [vmem:[%s323 + $0x3c] sm:$0xf]
      %v490 = vld [vmem:[%s323 + $0x40] sm:$0xf]
      %v491 = vld [vmem:[%s323 + $0x44] sm:$0xf]
      %v492 = vld [vmem:[%s323 + $0x48] sm:$0xf]
      %v493 = vld [vmem:[%s323 + $0x4c] sm:$0xf]
      %v494 = vld [vmem:[%s323 + $0x50] sm:$0xf]
      %v495 = vld [vmem:[%s323 + $0x54] sm:$0xf]
      %v496 = vld [vmem:[%s323 + $0x58] sm:$0xf]
      %v497 = vld [vmem:[%s323 + $0x5c] sm:$0xf]
      %v498 = vld [vmem:[%s323 + $0x60] sm:$0xf]
      %v499 = vld [vmem:[%s323 + $0x64] sm:$0xf]
      %v500 = vld [vmem:[%s323 + $0x68] sm:$0xf]
      %v501 = vld [vmem:[%s323 + $0x6c] sm:$0xf]
      %v502 = vld [vmem:[%s323 + $0x70] sm:$0xf]
      %v503 = vld [vmem:[%s323 + $0x74] sm:$0xf]
      %v504 = vld [vmem:[%s323 + $0x78] sm:$0xf]
      %v505 = vld [vmem:[%s323 + $0x7c] sm:$0xf]
      %v506 = vunpack.c.l.bf16 %v474
      %v507 = vunpack.c.l.bf16 %v475
      %v508 = vunpack.c.l.bf16 %v476
      %v509 = vunpack.c.l.bf16 %v477
      %v510 = vunpack.c.l.bf16 %v478
      %v511 = vunpack.c.l.bf16 %v479
      %v512 = vunpack.c.l.bf16 %v480
      %v513 = vunpack.c.l.bf16 %v481
      %v514 = vunpack.c.l.bf16 %v482
      %v515 = vunpack.c.l.bf16 %v483
      %v516 = vunpack.c.l.bf16 %v484
      %v517 = vunpack.c.l.bf16 %v485
      %v518 = vunpack.c.l.bf16 %v486
      %v519 = vunpack.c.l.bf16 %v487
      %v520 = vunpack.c.l.bf16 %v488
      %v521 = vunpack.c.l.bf16 %v489
      %v522 = vunpack.c.l.bf16 %v490
      %v523 = vunpack.c.l.bf16 %v491
      %v524 = vunpack.c.l.bf16 %v492
      %v525 = vunpack.c.l.bf16 %v493
      %v526 = vunpack.c.l.bf16 %v494
      %v527 = vunpack.c.l.bf16 %v495
      %v528 = vunpack.c.l.bf16 %v496
      %v529 = vunpack.c.l.bf16 %v497
      %v530 = vunpack.c.l.bf16 %v498
      %v531 = vunpack.c.l.bf16 %v499
      %v532 = vunpack.c.l.bf16 %v500
      %v533 = vunpack.c.l.bf16 %v501
      %v534 = vunpack.c.l.bf16 %v502
      %v535 = vunpack.c.l.bf16 %v503
      %v536 = vunpack.c.l.bf16 %v504
      %v537 = vunpack.c.l.bf16 %v505
      %v538 = vld [vmem:[%s4] sm:$0x1]
      %v540 = vlaneseq
      %v541 = vshrl.u32 %v540, 7
      %v542 = vsub.s32 0, %v541
      %v543 = vrot.slane %v538, %v542
      %v545 = vsub.f32 %v506, %v543
      %v546 = vsub.f32 %v507, %v543
      %v547 = vsub.f32 %v508, %v543
      %v548 = vsub.f32 %v509, %v543
      %v549 = vsub.f32 %v510, %v543
      %v550 = vsub.f32 %v511, %v543
      %v551 = vsub.f32 %v512, %v543
      %v552 = vsub.f32 %v513, %v543
      %v553 = vsub.f32 %v514, %v543
      %v554 = vsub.f32 %v515, %v543
      %v555 = vsub.f32 %v516, %v543
      %v556 = vsub.f32 %v517, %v543
      %v557 = vsub.f32 %v518, %v543
      %v558 = vsub.f32 %v519, %v543
      %v559 = vsub.f32 %v520, %v543
      %v560 = vsub.f32 %v521, %v543
      %v561 = vsub.f32 %v522, %v543
      %v562 = vsub.f32 %v523, %v543
      %v563 = vsub.f32 %v524, %v543
      %v564 = vsub.f32 %v525, %v543
      %v565 = vsub.f32 %v526, %v543
      %v566 = vsub.f32 %v527, %v543
      %v567 = vsub.f32 %v528, %v543
      %v568 = vsub.f32 %v529, %v543
      %v569 = vsub.f32 %v530, %v543
      %v570 = vsub.f32 %v531, %v543
      %v571 = vsub.f32 %v532, %v543
      %v572 = vsub.f32 %v533, %v543
      %v573 = vsub.f32 %v534, %v543
      %v574 = vsub.f32 %v535, %v543
      %v575 = vsub.f32 %v536, %v543
      %v576 = vsub.f32 %v537, %v543
      %v577 = vld [vmem:[%s5] sm:$0x1]
      %v579 = vlaneseq
      %v580 = vshrl.u32 %v579, 7
      %v581 = vsub.s32 0, %v580
      %v582 = vrot.slane %v577, %v581
      %v584 = vmul.f32 %v545, %v582
      %v585 = vmul.f32 %v546, %v582
      %v586 = vmul.f32 %v547, %v582
      %v587 = vmul.f32 %v548, %v582
      %v588 = vmul.f32 %v549, %v582
      %v589 = vmul.f32 %v550, %v582
      %v590 = vmul.f32 %v551, %v582
      %v591 = vmul.f32 %v552, %v582
      %v592 = vmul.f32 %v553, %v582
      %v593 = vmul.f32 %v554, %v582
      %v594 = vmul.f32 %v555, %v582
      %v595 = vmul.f32 %v556, %v582
      %v596 = vmul.f32 %v557, %v582
      %v597 = vmul.f32 %v558, %v582
      %v598 = vmul.f32 %v559, %v582
      %v599 = vmul.f32 %v560, %v582
      %v600 = vmul.f32 %v561, %v582
      %v601 = vmul.f32 %v562, %v582
      %v602 = vmul.f32 %v563, %v582
      %v603 = vmul.f32 %v564, %v582
      %v604 = vmul.f32 %v565, %v582
      %v605 = vmul.f32 %v566, %v582
      %v606 = vmul.f32 %v567, %v582
      %v607 = vmul.f32 %v568, %v582
      %v608 = vmul.f32 %v569, %v582
      %v609 = vmul.f32 %v570, %v582
      %v610 = vmul.f32 %v571, %v582
      %v611 = vmul.f32 %v572, %v582
      %v612 = vmul.f32 %v573, %v582
      %v613 = vmul.f32 %v574, %v582
      %v614 = vmul.f32 %v575, %v582
      %v615 = vmul.f32 %v576, %v582
      %v616 = vmax.f32 %v584, 0.0
      %v617 = vmax.f32 %v585, 0.0
      %v618 = vmax.f32 %v586, 0.0
      %v619 = vmax.f32 %v587, 0.0
      %v620 = vmax.f32 %v588, 0.0
      %v621 = vmax.f32 %v589, 0.0
      %v622 = vmax.f32 %v590, 0.0
      %v623 = vmax.f32 %v591, 0.0
      %v624 = vmax.f32 %v592, 0.0
      %v625 = vmax.f32 %v593, 0.0
      %v626 = vmax.f32 %v594, 0.0
      %v627 = vmax.f32 %v595, 0.0
      %v628 = vmax.f32 %v596, 0.0
      %v629 = vmax.f32 %v597, 0.0
      %v630 = vmax.f32 %v598, 0.0
      %v631 = vmax.f32 %v599, 0.0
      %v632 = vmax.f32 %v600, 0.0
      %v633 = vmax.f32 %v601, 0.0
      %v634 = vmax.f32 %v602, 0.0
      %v635 = vmax.f32 %v603, 0.0
      %v636 = vmax.f32 %v604, 0.0
      %v637 = vmax.f32 %v605, 0.0
      %v638 = vmax.f32 %v606, 0.0
      %v639 = vmax.f32 %v607, 0.0
      %v640 = vmax.f32 %v608, 0.0
      %v641 = vmax.f32 %v609, 0.0
      %v642 = vmax.f32 %v610, 0.0
      %v643 = vmax.f32 %v611, 0.0
      %v644 = vmax.f32 %v612, 0.0
      %v645 = vmax.f32 %v613, 0.0
      %v646 = vmax.f32 %v614, 0.0
      %v647 = vmax.f32 %v615, 0.0
      %v648 = vpack.c.bf16 %v443, %v442
      %v649 = vpack.c.bf16 %v445, %v444
      %v650 = vpack.c.bf16 %v447, %v446
      %v651 = vpack.c.bf16 %v449, %v448
      %v652 = vpack.c.bf16 %v451, %v450
      %v653 = vpack.c.bf16 %v453, %v452
      %v654 = vpack.c.bf16 %v455, %v454
      %v655 = vpack.c.bf16 %v457, %v456
      %v656 = vpack.c.bf16 %v459, %v458
      %v657 = vpack.c.bf16 %v461, %v460
      %v658 = vpack.c.bf16 %v463, %v462
      %v659 = vpack.c.bf16 %v465, %v464
      %v660 = vpack.c.bf16 %v467, %v466
      %v661 = vpack.c.bf16 %v469, %v468
      %v662 = vpack.c.bf16 %v471, %v470
      %v663 = vpack.c.bf16 %v473, %v472
      %v664 = vld [vmem:[%s6] sm:$0xf]
      %v665 = vld [vmem:[%s6 + $0x4] sm:$0xf]
      %v666 = vld [vmem:[%s6 + $0x8] sm:$0xf]
      %v667 = vld [vmem:[%s6 + $0xc] sm:$0xf]
      %v668 = vpack.c.bf16 %v617, %v616
      %v669 = vpack.c.bf16 %v619, %v618
      %v670 = vpack.c.bf16 %v621, %v620
      %v671 = vpack.c.bf16 %v623, %v622
      %v672 = vpack.c.bf16 %v625, %v624
      %v673 = vpack.c.bf16 %v627, %v626
      %v674 = vpack.c.bf16 %v629, %v628
      %v675 = vpack.c.bf16 %v631, %v630
      %v676 = vpack.c.bf16 %v633, %v632
      %v677 = vpack.c.bf16 %v635, %v634
      %v678 = vpack.c.bf16 %v637, %v636
      %v679 = vpack.c.bf16 %v639, %v638
      %v680 = vpack.c.bf16 %v641, %v640
      %v681 = vpack.c.bf16 %v643, %v642
      %v682 = vpack.c.bf16 %v645, %v644
      %v683 = vpack.c.bf16 %v647, %v646
      %v684 = vld [vmem:[%s7] sm:$0xf]
      %v685 = vld [vmem:[%s7 + $0x4] sm:$0xf]
      %v686 = vld [vmem:[%s7 + $0x8] sm:$0xf]
      %v687 = vld [vmem:[%s7 + $0xc] sm:$0xf]
      %v688 = vld [vmem:[%s7 + $0x10] sm:$0xf]
      %v689 = vld [vmem:[%s7 + $0x14] sm:$0xf]
      %v690 = vld [vmem:[%s7 + $0x18] sm:$0xf]
      %v691 = vld [vmem:[%s7 + $0x1c] sm:$0xf]
      %v700 = vunpack.c.l.b16 %v684
      %v701 = vunpack.c.l.b16 %v685
      %v702 = vunpack.c.l.b16 %v686
      %v703 = vunpack.c.l.b16 %v687
      %v704 = vunpack.c.l.b16 %v688
      %v705 = vunpack.c.l.b16 %v689
      %v706 = vunpack.c.l.b16 %v690
      %v707 = vunpack.c.l.b16 %v691
      %v708 = vpack.c.b16 %v701, %v700
      %v709 = vpack.c.b16 %v703, %v702
      %v710 = vpack.c.b16 %v705, %v704
      %v711 = vpack.c.b16 %v707, %v706
      %vm716 = vcmask 523264
      %v718 = vsel %vm716, %v668, 0
      %v721 = vsel %vm716, %v669, 0
      %v724 = vsel %vm716, %v670, 0
      %v727 = vsel %vm716, %v671, 0
      %v730 = vsel %vm716, %v672, 0
      %v733 = vsel %vm716, %v673, 0
      %v736 = vsel %vm716, %v674, 0
      %v739 = vsel %vm716, %v675, 0
      %v742 = vsel %vm716, %v676, 0
      %v745 = vsel %vm716, %v677, 0
      %v748 = vsel %vm716, %v678, 0
      %v751 = vsel %vm716, %v679, 0
      %v754 = vsel %vm716, %v680, 0
      %v757 = vsel %vm716, %v681, 0
      %v760 = vsel %vm716, %v682, 0
      %v763 = vsel %vm716, %v683, 0
      %765 = vmatprep.subr.bf16.mxu0 0
      %766 = vmatpush1.bf16.msra.mxu0 0
      %767 = vmatprep.subr.bf16.mxu0 0
      %768 = vmatpush1.bf16.msra.mxu0 0
      %769 = vmatprep.subr.bf16.mxu0 0
      %770 = vmatpush1.bf16.msra.mxu0 0
      %771 = vmatprep.subr.bf16.mxu0 0
      %772 = vmatpush1.bf16.msra.mxu0 0
      %773 = vmatprep.subr.bf16.mxu0 0
      %774 = vmatpush1.bf16.msra.mxu0 %v711
      %775 = vmatprep.subr.bf16.mxu0 0
      %776 = vmatpush1.bf16.msra.mxu0 %v710
      %777 = vmatprep.subr.bf16.mxu0 0
      %778 = vmatpush1.bf16.msra.mxu0 %v709
      %779 = vmatprep.subr.bf16.mxu0 0
      %780 = vmatpush1.bf16.msra.mxu0 %v708
      %781 = vmatprep.subr.bf16.mxu0 0
      %782 = vmatpush2.bf16.msra.mxu0 0
      %783 = vmatprep.subr.bf16.mxu0 0
      %784 = vmatpush2.bf16.msra.mxu0 0
      %785 = vmatprep.subr.bf16.mxu0 0
      %786 = vmatpush2.bf16.msra.mxu0 0
      %787 = vmatprep.subr.bf16.mxu0 0
      %788 = vmatpush2.bf16.msra.mxu0 0
      %789 = vmatprep.subr.bf16.mxu0 0
      %790 = vmatpush2.bf16.msra.mxu0 0
      %791 = vmatprep.subr.bf16.mxu0 0
      %792 = vmatpush2.bf16.msra.mxu0 0
      %793 = vmatprep.subr.bf16.mxu0 0
      %794 = vmatpush2.bf16.msra.mxu0 0
      %795 = vmatprep.subr.bf16.mxu0 0
      %796 = vmatpush2.bf16.msra.mxu0 0
      %797 = vmatprep.mubr.bf16.mxu0 0
      %798 = vmatmul.mubr.bf16.gmra.mxu0 %v718
      %v799 = vpop.f32.mrf.mxu0
      %v800 = vadd.f32 0.0, %v799
      %v801 = vpop.f32.mrf.mxu0
      %v802 = vpop.f32.mrf.mxu0
      %v803 = vadd.f32 0.0, %v802
      %v804 = vpop.f32.mrf.mxu0
      %805 = vmatprep.mubr.bf16.mxu0 0
      %806 = vmatmul.mubr.bf16.gmra.mxu0 %v721
      %v807 = vpop.f32.mrf.mxu0
      %v808 = vadd.f32 0.0, %v807
      %v809 = vpop.f32.mrf.mxu0
      %v810 = vpop.f32.mrf.mxu0
      %v811 = vadd.f32 0.0, %v810
      %v812 = vpop.f32.mrf.mxu0
      %813 = vmatprep.mubr.bf16.mxu0 0
      %814 = vmatmul.mubr.bf16.gmra.mxu0 %v724
      %v815 = vpop.f32.mrf.mxu0
      %v816 = vadd.f32 0.0, %v815
      %v817 = vpop.f32.mrf.mxu0
      %v818 = vpop.f32.mrf.mxu0
      %v819 = vadd.f32 0.0, %v818
      %v820 = vpop.f32.mrf.mxu0
      %821 = vmatprep.mubr.bf16.mxu0 0
      %822 = vmatmul.mubr.bf16.gmra.mxu0 %v727
      %v823 = vpop.f32.mrf.mxu0
      %v824 = vadd.f32 0.0, %v823
      %v825 = vpop.f32.mrf.mxu0
      %v826 = vpop.f32.mrf.mxu0
      %v827 = vadd.f32 0.0, %v826
      %v828 = vpop.f32.mrf.mxu0
      %829 = vmatprep.mubr.bf16.mxu0 0
      %830 = vmatmul.mubr.bf16.gmra.mxu0 %v730
      %v831 = vpop.f32.mrf.mxu0
      %v832 = vadd.f32 0.0, %v831
      %v833 = vpop.f32.mrf.mxu0
      %v834 = vpop.f32.mrf.mxu0
      %v835 = vadd.f32 0.0, %v834
      %v836 = vpop.f32.mrf.mxu0
      %837 = vmatprep.mubr.bf16.mxu0 0
      %838 = vmatmul.mubr.bf16.gmra.mxu0 %v733
      %v839 = vpop.f32.mrf.mxu0
      %v840 = vadd.f32 0.0, %v839
      %v841 = vpop.f32.mrf.mxu0
      %v842 = vpop.f32.mrf.mxu0
      %v843 = vadd.f32 0.0, %v842
      %v844 = vpop.f32.mrf.mxu0
      %845 = vmatprep.mubr.bf16.mxu0 0
      %846 = vmatmul.mubr.bf16.gmra.mxu0 %v736
      %v847 = vpop.f32.mrf.mxu0
      %v848 = vadd.f32 0.0, %v847
      %v849 = vpop.f32.mrf.mxu0
      %v850 = vpop.f32.mrf.mxu0
      %v851 = vadd.f32 0.0, %v850
      %v852 = vpop.f32.mrf.mxu0
      %853 = vmatprep.mubr.bf16.mxu0 0
      %854 = vmatmul.mubr.bf16.gmra.mxu0 %v739
      %v855 = vpop.f32.mrf.mxu0
      %v856 = vadd.f32 0.0, %v855
      %v857 = vpop.f32.mrf.mxu0
      %v858 = vpop.f32.mrf.mxu0
      %v859 = vadd.f32 0.0, %v858
      %v860 = vpop.f32.mrf.mxu0
      %861 = vmatprep.mubr.bf16.mxu0 0
      %862 = vmatmul.mubr.bf16.gmra.mxu0 %v742
      %v863 = vpop.f32.mrf.mxu0
      %v864 = vadd.f32 0.0, %v863
      %v865 = vpop.f32.mrf.mxu0
      %v866 = vpop.f32.mrf.mxu0
      %v867 = vadd.f32 0.0, %v866
      %v868 = vpop.f32.mrf.mxu0
      %869 = vmatprep.mubr.bf16.mxu0 0
      %870 = vmatmul.mubr.bf16.gmra.mxu0 %v745
      %v871 = vpop.f32.mrf.mxu0
      %v872 = vadd.f32 0.0, %v871
      %v873 = vpop.f32.mrf.mxu0
      %v874 = vpop.f32.mrf.mxu0
      %v875 = vadd.f32 0.0, %v874
      %v876 = vpop.f32.mrf.mxu0
      %877 = vmatprep.mubr.bf16.mxu0 0
      %878 = vmatmul.mubr.bf16.gmra.mxu0 %v748
      %v879 = vpop.f32.mrf.mxu0
      %v880 = vadd.f32 0.0, %v879
      %v881 = vpop.f32.mrf.mxu0
      %v882 = vpop.f32.mrf.mxu0
      %v883 = vadd.f32 0.0, %v882
      %v884 = vpop.f32.mrf.mxu0
      %885 = vmatprep.mubr.bf16.mxu0 0
      %886 = vmatmul.mubr.bf16.gmra.mxu0 %v751
      %v887 = vpop.f32.mrf.mxu0
      %v888 = vadd.f32 0.0, %v887
      %v889 = vpop.f32.mrf.mxu0
      %v890 = vpop.f32.mrf.mxu0
      %v891 = vadd.f32 0.0, %v890
      %v892 = vpop.f32.mrf.mxu0
      %893 = vmatprep.mubr.bf16.mxu0 0
      %894 = vmatmul.mubr.bf16.gmra.mxu0 %v754
      %v895 = vpop.f32.mrf.mxu0
      %v896 = vadd.f32 0.0, %v895
      %v897 = vpop.f32.mrf.mxu0
      %v898 = vpop.f32.mrf.mxu0
      %v899 = vadd.f32 0.0, %v898
      %v900 = vpop.f32.mrf.mxu0
      %901 = vmatprep.mubr.bf16.mxu0 0
      %902 = vmatmul.mubr.bf16.gmra.mxu0 %v757
      %v903 = vpop.f32.mrf.mxu0
      %v904 = vadd.f32 0.0, %v903
      %v905 = vpop.f32.mrf.mxu0
      %v906 = vpop.f32.mrf.mxu0
      %v907 = vadd.f32 0.0, %v906
      %v908 = vpop.f32.mrf.mxu0
      %909 = vmatprep.mubr.bf16.mxu0 0
      %910 = vmatmul.mubr.bf16.gmra.mxu0 %v760
      %v911 = vpop.f32.mrf.mxu0
      %v912 = vadd.f32 0.0, %v911
      %v913 = vpop.f32.mrf.mxu0
      %v914 = vpop.f32.mrf.mxu0
      %v915 = vadd.f32 0.0, %v914
      %v916 = vpop.f32.mrf.mxu0
      %917 = vmatprep.mubr.bf16.mxu0 0
      %918 = vmatmul.mubr.bf16.gmra.mxu0 %v763
      %v919 = vpop.f32.mrf.mxu0
      %v920 = vadd.f32 0.0, %v919
      %v921 = vpop.f32.mrf.mxu0
      %v922 = vpop.f32.mrf.mxu0
      %v923 = vadd.f32 0.0, %v922
      %v924 = vpop.f32.mrf.mxu0
      %925 = vdwg.mxu0
      %v930 = vunpack.c.l.b16 %v664
      %v931 = vunpack.c.l.b16 %v665
      %v932 = vunpack.c.l.b16 %v666
      %v933 = vunpack.c.l.b16 %v667
      %v934 = vpack.c.b16 %v931, %v930
      %v935 = vpack.c.b16 %v933, %v932
      %vm938 = vcmask 261120
      %v940 = vsel %vm938, %v648, 0
      %v943 = vsel %vm938, %v649, 0
      %v946 = vsel %vm938, %v650, 0
      %v949 = vsel %vm938, %v651, 0
      %v952 = vsel %vm938, %v652, 0
      %v955 = vsel %vm938, %v653, 0
      %v958 = vsel %vm938, %v654, 0
      %v961 = vsel %vm938, %v655, 0
      %v964 = vsel %vm938, %v656, 0
      %v967 = vsel %vm938, %v657, 0
      %v970 = vsel %vm938, %v658, 0
      %v973 = vsel %vm938, %v659, 0
      %v976 = vsel %vm938, %v660, 0
      %v979 = vsel %vm938, %v661, 0
      %v982 = vsel %vm938, %v662, 0
      %v985 = vsel %vm938, %v663, 0
      %987 = vmatprep.subr.bf16.mxu0 0
      %988 = vmatpush1.bf16.msra.mxu0 0
      %989 = vmatprep.subr.bf16.mxu0 0
      %990 = vmatpush1.bf16.msra.mxu0 0
      %991 = vmatprep.subr.bf16.mxu0 0
      %992 = vmatpush1.bf16.msra.mxu0 0
      %993 = vmatprep.subr.bf16.mxu0 0
      %994 = vmatpush1.bf16.msra.mxu0 0
      %995 = vmatprep.subr.bf16.mxu0 0
      %996 = vmatpush1.bf16.msra.mxu0 0
      %997 = vmatprep.subr.bf16.mxu0 0
      %998 = vmatpush1.bf16.msra.mxu0 0
      %999 = vmatprep.subr.bf16.mxu0 0
      %1000 = vmatpush1.bf16.msra.mxu0 %v935
      %1001 = vmatprep.subr.bf16.mxu0 0
      %1002 = vmatpush1.bf16.msra.mxu0 %v934
      %1003 = vmatprep.subr.bf16.mxu0 0
      %1004 = vmatpush2.bf16.msra.mxu0 0
      %1005 = vmatprep.subr.bf16.mxu0 0
      %1006 = vmatpush2.bf16.msra.mxu0 0
      %1007 = vmatprep.subr.bf16.mxu0 0
      %1008 = vmatpush2.bf16.msra.mxu0 0
      %1009 = vmatprep.subr.bf16.mxu0 0
      %1010 = vmatpush2.bf16.msra.mxu0 0
      %1011 = vmatprep.subr.bf16.mxu0 0
      %1012 = vmatpush2.bf16.msra.mxu0 0
      %1013 = vmatprep.subr.bf16.mxu0 0
      %1014 = vmatpush2.bf16.msra.mxu0 0
      %1015 = vmatprep.subr.bf16.mxu0 0
      %1016 = vmatpush2.bf16.msra.mxu0 0
      %1017 = vmatprep.subr.bf16.mxu0 0
      %1018 = vmatpush2.bf16.msra.mxu0 0
      %1019 = vmatprep.mubr.bf16.mxu0 0
      %1020 = vmatmul.mubr.bf16.gmra.mxu0 %v940
      %v1021 = vpop.f32.mrf.mxu0
      %v1022 = vadd.f32 %v800, %v1021
      %v1023 = vpop.f32.mrf.mxu0
      %v1024 = vpop.f32.mrf.mxu0
      %v1025 = vadd.f32 %v803, %v1024
      %v1026 = vpop.f32.mrf.mxu0
      %1027 = vmatprep.mubr.bf16.mxu0 0
      %1028 = vmatmul.mubr.bf16.gmra.mxu0 %v943
      %v1029 = vpop.f32.mrf.mxu0
      %v1030 = vadd.f32 %v808, %v1029
      %v1031 = vpop.f32.mrf.mxu0
      %v1032 = vpop.f32.mrf.mxu0
      %v1033 = vadd.f32 %v811, %v1032
      %v1034 = vpop.f32.mrf.mxu0
      %1035 = vmatprep.mubr.bf16.mxu0 0
      %1036 = vmatmul.mubr.bf16.gmra.mxu0 %v946
      %v1037 = vpop.f32.mrf.mxu0
      %v1038 = vadd.f32 %v816, %v1037
      %v1039 = vpop.f32.mrf.mxu0
      %v1040 = vpop.f32.mrf.mxu0
      %v1041 = vadd.f32 %v819, %v1040
      %v1042 = vpop.f32.mrf.mxu0
      %1043 = vmatprep.mubr.bf16.mxu0 0
      %1044 = vmatmul.mubr.bf16.gmra.mxu0 %v949
      %v1045 = vpop.f32.mrf.mxu0
      %v1046 = vadd.f32 %v824, %v1045
      %v1047 = vpop.f32.mrf.mxu0
      %v1048 = vpop.f32.mrf.mxu0
      %v1049 = vadd.f32 %v827, %v1048
      %v1050 = vpop.f32.mrf.mxu0
      %1051 = vmatprep.mubr.bf16.mxu0 0
      %1052 = vmatmul.mubr.bf16.gmra.mxu0 %v952
      %v1053 = vpop.f32.mrf.mxu0
      %v1054 = vadd.f32 %v832, %v1053
      %v1055 = vpop.f32.mrf.mxu0
      %v1056 = vpop.f32.mrf.mxu0
      %v1057 = vadd.f32 %v835, %v1056
      %v1058 = vpop.f32.mrf.mxu0
      %1059 = vmatprep.mubr.bf16.mxu0 0
      %1060 = vmatmul.mubr.bf16.gmra.mxu0 %v955
      %v1061 = vpop.f32.mrf.mxu0
      %v1062 = vadd.f32 %v840, %v1061
      %v1063 = vpop.f32.mrf.mxu0
      %v1064 = vpop.f32.mrf.mxu0
      %v1065 = vadd.f32 %v843, %v1064
      %v1066 = vpop.f32.mrf.mxu0
      %1067 = vmatprep.mubr.bf16.mxu0 0
      %1068 = vmatmul.mubr.bf16.gmra.mxu0 %v958
      %v1069 = vpop.f32.mrf.mxu0
      %v1070 = vadd.f32 %v848, %v1069
      %v1071 = vpop.f32.mrf.mxu0
      %v1072 = vpop.f32.mrf.mxu0
      %v1073 = vadd.f32 %v851, %v1072
      %v1074 = vpop.f32.mrf.mxu0
      %1075 = vmatprep.mubr.bf16.mxu0 0
      %1076 = vmatmul.mubr.bf16.gmra.mxu0 %v961
      %v1077 = vpop.f32.mrf.mxu0
      %v1078 = vadd.f32 %v856, %v1077
      %v1079 = vpop.f32.mrf.mxu0
      %v1080 = vpop.f32.mrf.mxu0
      %v1081 = vadd.f32 %v859, %v1080
      %v1082 = vpop.f32.mrf.mxu0
      %1083 = vmatprep.mubr.bf16.mxu0 0
      %1084 = vmatmul.mubr.bf16.gmra.mxu0 %v964
      %v1085 = vpop.f32.mrf.mxu0
      %v1086 = vadd.f32 %v864, %v1085
      %v1087 = vpop.f32.mrf.mxu0
      %v1088 = vpop.f32.mrf.mxu0
      %v1089 = vadd.f32 %v867, %v1088
      %v1090 = vpop.f32.mrf.mxu0
      %1091 = vmatprep.mubr.bf16.mxu0 0
      %1092 = vmatmul.mubr.bf16.gmra.mxu0 %v967
      %v1093 = vpop.f32.mrf.mxu0
      %v1094 = vadd.f32 %v872, %v1093
      %v1095 = vpop.f32.mrf.mxu0
      %v1096 = vpop.f32.mrf.mxu0
      %v1097 = vadd.f32 %v875, %v1096
      %v1098 = vpop.f32.mrf.mxu0
      %1099 = vmatprep.mubr.bf16.mxu0 0
      %1100 = vmatmul.mubr.bf16.gmra.mxu0 %v970
      %v1101 = vpop.f32.mrf.mxu0
      %v1102 = vadd.f32 %v880, %v1101
      %v1103 = vpop.f32.mrf.mxu0
      %v1104 = vpop.f32.mrf.mxu0
      %v1105 = vadd.f32 %v883, %v1104
      %v1106 = vpop.f32.mrf.mxu0
      %1107 = vmatprep.mubr.bf16.mxu0 0
      %1108 = vmatmul.mubr.bf16.gmra.mxu0 %v973
      %v1109 = vpop.f32.mrf.mxu0
      %v1110 = vadd.f32 %v888, %v1109
      %v1111 = vpop.f32.mrf.mxu0
      %v1112 = vpop.f32.mrf.mxu0
      %v1113 = vadd.f32 %v891, %v1112
      %v1114 = vpop.f32.mrf.mxu0
      %1115 = vmatprep.mubr.bf16.mxu0 0
      %1116 = vmatmul.mubr.bf16.gmra.mxu0 %v976
      %v1117 = vpop.f32.mrf.mxu0
      %v1118 = vadd.f32 %v896, %v1117
      %v1119 = vpop.f32.mrf.mxu0
      %v1120 = vpop.f32.mrf.mxu0
      %v1121 = vadd.f32 %v899, %v1120
      %v1122 = vpop.f32.mrf.mxu0
      %1123 = vmatprep.mubr.bf16.mxu0 0
      %1124 = vmatmul.mubr.bf16.gmra.mxu0 %v979
      %v1125 = vpop.f32.mrf.mxu0
      %v1126 = vadd.f32 %v904, %v1125
      %v1127 = vpop.f32.mrf.mxu0
      %v1128 = vpop.f32.mrf.mxu0
      %v1129 = vadd.f32 %v907, %v1128
      %v1130 = vpop.f32.mrf.mxu0
      %1131 = vmatprep.mubr.bf16.mxu0 0
      %1132 = vmatmul.mubr.bf16.gmra.mxu0 %v982
      %v1133 = vpop.f32.mrf.mxu0
      %v1134 = vadd.f32 %v912, %v1133
      %v1135 = vpop.f32.mrf.mxu0
      %v1136 = vpop.f32.mrf.mxu0
      %v1137 = vadd.f32 %v915, %v1136
      %v1138 = vpop.f32.mrf.mxu0
      %1139 = vmatprep.mubr.bf16.mxu0 0
      %1140 = vmatmul.mubr.bf16.gmra.mxu0 %v985
      %v1141 = vpop.f32.mrf.mxu0
      %v1142 = vadd.f32 %v920, %v1141
      %v1143 = vpop.f32.mrf.mxu0
      %v1144 = vpop.f32.mrf.mxu0
      %v1145 = vadd.f32 %v923, %v1144
      %v1146 = vpop.f32.mrf.mxu0
      %1147 = vdwg.mxu0
      %1148 = vst [vmem:[%s329] sm:$0xff] %v1022
      %1149 = vst [vmem:[%s329 + $0x8] sm:$0xff] %v1025
      %1150 = vst [vmem:[%s329 + $0x10] sm:$0xff] %v1030
      %1151 = vst [vmem:[%s329 + $0x18] sm:$0xff] %v1033
      %1152 = vst [vmem:[%s329 + $0x20] sm:$0xff] %v1038
      %1153 = vst [vmem:[%s329 + $0x28] sm:$0xff] %v1041
      %1154 = vst [vmem:[%s329 + $0x30] sm:$0xff] %v1046
      %1155 = vst [vmem:[%s329 + $0x38] sm:$0xff] %v1049
      %1156 = vst [vmem:[%s329 + $0x40] sm:$0xff] %v1054
      %1157 = vst [vmem:[%s329 + $0x48] sm:$0xff] %v1057
      %1158 = vst [vmem:[%s329 + $0x50] sm:$0xff] %v1062
      %1159 = vst [vmem:[%s329 + $0x58] sm:$0xff] %v1065
      %1160 = vst [vmem:[%s329 + $0x60] sm:$0xff] %v1070
      %1161 = vst [vmem:[%s329 + $0x68] sm:$0xff] %v1073
      %1162 = vst [vmem:[%s329 + $0x70] sm:$0xff] %v1078
      %1163 = vst [vmem:[%s329 + $0x78] sm:$0xff] %v1081
      %1164 = vst [vmem:[%s329 + $0x80] sm:$0xff] %v1086
      %1165 = vst [vmem:[%s329 + $0x88] sm:$0xff] %v1089
      %1166 = vst [vmem:[%s329 + $0x90] sm:$0xff] %v1094
      %1167 = vst [vmem:[%s329 + $0x98] sm:$0xff] %v1097
      %1168 = vst [vmem:[%s329 + $0xa0] sm:$0xff] %v1102
      %1169 = vst [vmem:[%s329 + $0xa8] sm:$0xff] %v1105
      %1170 = vst [vmem:[%s329 + $0xb0] sm:$0xff] %v1110
      %1171 = vst [vmem:[%s329 + $0xb8] sm:$0xff] %v1113
      %1172 = vst [vmem:[%s329 + $0xc0] sm:$0xff] %v1118
      %1173 = vst [vmem:[%s329 + $0xc8] sm:$0xff] %v1121
      %1174 = vst [vmem:[%s329 + $0xd0] sm:$0xff] %v1126
      %1175 = vst [vmem:[%s329 + $0xd8] sm:$0xff] %v1129
      %1176 = vst [vmem:[%s329 + $0xe0] sm:$0xff] %v1134
      %1177 = vst [vmem:[%s329 + $0xe8] sm:$0xff] %v1137
      %1178 = vst [vmem:[%s329 + $0xf0] sm:$0xff] %v1142
      %1179 = vst [vmem:[%s329 + $0xf8] sm:$0xff] %v1145
      %s1180 = smul.u32 32, %s19
      %p1181 = scmp.lt.s32.totalorder %s1180, 95
      %s1182 = scalar_select %p1181, %s1180, 95
      %s1183 = smul.addr %s1182, 8
      %s1184 = scalar_lea.vmem %s8, %s1183
      // Predicated region
      $region53: #{c3d_smart_forward.9} parent=51 // pred_check
        %p1185 = pneg %p215
      $region54: #{c3d_smart_forward.9} parent=51 // pred_check_branch
        %1187 = sbr.rel (%p1185) target = $region56
      $region55: #{c3d_smart_forward.9} parent=51 // pred_region
        %s1188 = smul.u32 32, %s19
      $region56: #{c3d_smart_forward.9} parent=51 // pred_fallthru
        _
    $region52: #{c3d_smart_forward.9} parent=5 // pred_fallthru
      _
    %p1189 = scmp.le.s32.totalorder 2, %s14
    // Predicated region
    $region57: #{c3d_smart_forward.9} parent=5 // pred_check
      %p1190 = pneg %p1189
    $region58: #{c3d_smart_forward.9} parent=5 // pred_check_branch
      %1192 = sbr.rel (%p1190) target = $region60
    $region59: #{c3d_smart_forward.9} parent=5 // pred_region
      %s1193 = ssub.s32 %s14, 2
      // Predicated region
      $region61: #{c3d_smart_forward.9} parent=59 // pred_check
        %p1194 = pneg %p221
      $region62: #{c3d_smart_forward.9} parent=59 // pred_check_branch
        %1196 = sbr.rel (%p1194) target = $region64
      $region63: #{c3d_smart_forward.9} parent=59 // pred_region
        %s1197 = smul.u32 32, %s20
        %p1198 = scmp.lt.s32.totalorder %s1197, 95
        %s1199 = scalar_select %p1198, %s1197, 95
        %s1200 = smul.addr %s1199, 8
        %s1201 = scalar_lea.vmem %s8, %s1200
      $region64: #{c3d_smart_forward.9} parent=59 // pred_fallthru
        _
    $region60: #{c3d_smart_forward.9} parent=5 // pred_fallthru
      _
  $region6: #{c3d_smart_forward.9} parent=0 // loop_footer
    %s18 = sadd.s32 1, %s14
  $region7: #{c3d_smart_forward.9} parent=0 // loop_footer_branch
    %13 = sbr.rel target = $region3
  $region8: #{c3d_smart_forward.9} parent=0 // loop_exit
    _

</llo_original>
